<compile_context>
chip_gen: v5e
topology: v5e:2x2
jax: 0.10.0
libtpu: 0.0.40
codegen_flags: <defaults>
</compile_context>

<pallas_src>
import functools

import numpy as np

import jax
import jax.numpy as jnp
from jax import lax
from jax.experimental import pallas as pl
from jax.experimental.pallas import tpu as pltpu


_LAYER_CFG = [
    # (c_in, c_out, stride, use_bn, act)
    (6,   64,  2, False, "leaky"),
    (64,  128, 2, True,  "leaky"),
    (128, 256, 2, True,  "leaky"),
    (256, 512, 2, True,  "leaky"),
    (512, 1,   1, True,  "sigmoid"),
]

_EPS = 1e-5        # nn.BatchNorm2d default
_SLOPE = 0.01      # nn.LeakyReLU default negative_slope
_OC_PAD = 128      # lane-dense padding for the 1-channel final conv


# ----------------------------------------------------------------------------
# Fused whole-network kernel (single invocation, everything in VMEM)
# ----------------------------------------------------------------------------
def _disc_kernel(x_ref,
                 s1_ref, w1_ref, b1_ref,
                 s2_ref, w2_ref, gb2_ref,
                 s3_ref, w3_ref, gb3_ref,
                 s4_ref, w4_ref, gb4_ref,
                 s5_ref, w5_ref, gb5_ref,
                 o_ref, *, n_taps):

    def conv(a_bf16, s_ref, w_ref, nk):
        """sum_k (S_k @ A) @ W_k — bf16 operands, f32 accumulation."""
        acc = None
        for k in range(nk):                      # static unroll over active taps
            g = jnp.dot(s_ref[k], a_bf16, preferred_element_type=jnp.float32)
            p = jnp.dot(g.astype(jnp.bfloat16), w_ref[k],
                        preferred_element_type=jnp.float32)
            acc = p if acc is None else acc + p
        return acc                               # f32 (M_out, OC)

    def bn(y, gb_ref):
        # Training-mode BatchNorm2d: per-channel stats over rows (= N*OH*OW),
        # biased variance; all in f32.
        mean = jnp.mean(y, axis=0, keepdims=True)
        c = y - mean
        var = jnp.mean(c * c, axis=0, keepdims=True)
        return c * lax.rsqrt(var + _EPS) * gb_ref[0] + gb_ref[1]

    def leaky(y):
        return jnp.maximum(y, _SLOPE * y)

    a = x_ref[...]                                               # (N*16*16, Cin) bf16
    a = leaky(conv(a, s1_ref, w1_ref, n_taps[0]) + b1_ref[...])  # conv1 (+bias, no BN)
    a = a.astype(jnp.bfloat16)
    a = leaky(bn(conv(a, s2_ref, w2_ref, n_taps[1]), gb2_ref)).astype(jnp.bfloat16)
    a = leaky(bn(conv(a, s3_ref, w3_ref, n_taps[2]), gb3_ref)).astype(jnp.bfloat16)
    a = leaky(bn(conv(a, s4_ref, w4_ref, n_taps[3]), gb4_ref)).astype(jnp.bfloat16)
    y = bn(conv(a, s5_ref, w5_ref, n_taps[4]), gb5_ref)          # (N, 128) f32
    o_ref[...] = jax.nn.sigmoid(y)


def _full_block_spec(shape):
    nd = len(shape)
    return pl.BlockSpec(shape, lambda i: (0,) * nd)


# ----------------------------------------------------------------------------
# Host-side setup (layout plumbing only, done once)
# ----------------------------------------------------------------------------
def _conv_out(h, stride):
    return (h + 2 * 1 - 3) // stride + 1


def _selection_matrices(n, h, w, oh, ow, stride, pad=1, k=3):
    """0/1 gather matrices, one per active 3x3 tap.

    S_k[m_out, m_in] = 1 iff input pixel m_in (flattened (n, h, w)) is the
    tap-k input of output pixel m_out (flattened (n, oh, ow)).  Taps that only
    ever hit zero padding are dropped (they contribute exactly zero).
    """
    m_in, m_out = n * h * w, n * oh * ow
    mats, active = [], []
    for ki in range(k):
        for kj in range(k):
            s = np.zeros((m_out, m_in), np.float32)
            for b in range(n):
                for i in range(oh):
                    hi = stride * i + ki - pad
                    if hi < 0 or hi >= h:
                        continue
                    for j in range(ow):
                        wj = stride * j + kj - pad
                        if wj < 0 or wj >= w:
                            continue
                        s[b * oh * ow + i * ow + j, b * h * w + hi * w + wj] = 1.0
            if s.any():
                mats.append(s)
                active.append(ki * k + kj)
    return np.stack(mats), active


def init_params(key, in_dim=6):
    cfg = list(_LAYER_CFG)
    cfg[0] = (in_dim,) + cfg[0][1:]
    params = []
    for (cin, cout, _s, _bn, _act) in cfg:
        key, kw, kb = jax.random.split(key, 3)
        wgt = jax.random.normal(kw, (cout, cin, 3, 3), jnp.float32) / np.sqrt(cin * 9)
        b = jax.random.normal(kb, (cout,), jnp.float32) * 0.01
        gamma = jnp.ones((cout,), jnp.float32)   # BatchNorm weight init
        beta = jnp.zeros((cout,), jnp.float32)   # BatchNorm bias init
        params.append((wgt, b, gamma, beta))
    return params, cfg


def _prepare_operands(params, cfg, n, h, w):
    operands, n_taps = [], []
    cur_h, cur_w = h, w
    last = len(cfg) - 1
    for li, ((wgt, bias, gamma, beta), (cin, cout, stride, use_bn, _act)) in enumerate(
            zip(params, cfg)):
        oh, ow = _conv_out(cur_h, stride), _conv_out(cur_w, stride)
        sel, active = _selection_matrices(n, cur_h, cur_w, oh, ow, stride)
        n_taps.append(len(active))

        oc_pad = _OC_PAD if li == last else cout     # lane-dense final layer
        wk = np.asarray(wgt, np.float32)             # (OC, C, 3, 3) torch layout
        taps = []
        for t in active:
            ki, kj = divmod(t, 3)
            m = wk[:, :, ki, kj].T                   # (C_in, OC)
            if oc_pad != cout:
                m = np.pad(m, ((0, 0), (0, oc_pad - cout)))
            taps.append(m)

        operands.append(jnp.asarray(sel, jnp.bfloat16))              # S (nt, Mo, Mi)
        operands.append(jnp.asarray(np.stack(taps), jnp.bfloat16))   # W (nt, C, OCp)

        if use_bn:
            # bias dropped: it cancels exactly against the batch-mean subtraction
            g = np.asarray(gamma, np.float32)
            bt = np.asarray(beta, np.float32)
            if oc_pad != cout:
                g = np.pad(g, (0, oc_pad - cout), constant_values=1.0)
                bt = np.pad(bt, (0, oc_pad - cout))
            operands.append(jnp.asarray(np.stack([g, bt]).reshape(2, 1, oc_pad),
                                        jnp.float32))
        else:
            operands.append(jnp.asarray(
                np.asarray(bias, np.float32).reshape(1, cout), jnp.float32))

        cur_h, cur_w = oh, ow

    return tuple(operands), tuple(n_taps), (cur_h, cur_w)


def make_forward(params, cfg, n, h, w):
    operands, n_taps, (oh, ow) = _prepare_operands(params, cfg, n, h, w)
    m_out = n * oh * ow
    kernel = functools.partial(_disc_kernel, n_taps=n_taps)

    def forward(x_nchw, ops):
        nb, c, hh, ww = x_nchw.shape
        # NCHW -> (N*H*W, C) rows; bf16 for the MXU
        rows = x_nchw.transpose(0, 2, 3, 1).reshape(nb * hh * ww, c)
        rows = rows.astype(jnp.bfloat16)
        inputs = (rows,) + ops
        out = pl.pallas_call(
            kernel,
            out_shape=jax.ShapeDtypeStruct((m_out, _OC_PAD), jnp.float32),
            grid=(1,),
            in_specs=[_full_block_spec(a.shape) for a in inputs],
            out_specs=pl.BlockSpec((m_out, _OC_PAD), lambda i: (0, 0)),
            compiler_params=pltpu.CompilerParams(
                dimension_semantics=("arbitrary",),
                vmem_limit_bytes=32 * 1024 * 1024,
            ),
        )(*inputs)
        # lane 0 is the single real output channel; back to NCHW
        return out[:, 0].reshape(nb, 1, oh, ow)

    jitted = jax.jit(forward)
    return lambda x: jitted(x, operands)


if __name__ == "__main__":
    key = jax.random.PRNGKey(0)
    kp, kx = jax.random.split(key)

    params, cfg = init_params(kp, in_dim=6)
    x = jax.random.normal(kx, (2, 6, 16, 16), jnp.float32)   # NCHW, like PyTorch

    fwd = make_forward(params, cfg, n=2, h=16, w=16)
    y = fwd(x)
    jax.block_until_ready(y)

    assert y.shape == (2, 1, 1, 1), y.shape
    assert bool(jnp.all((y >= 0.0) & (y <= 1.0)))   # sigmoid output range
    print("KERNEL_OK")
</pallas_src>

<mosaic_0001>
module attributes {stable_mosaic.version = 11 : i64} {
  func.func @_disc_kernel(%arg0: i32, %arg1: memref<512x6xbf16, #tpu.memory_space<vmem>>, %arg2: memref<9x128x512xbf16, #tpu.memory_space<vmem>>, %arg3: memref<9x6x64xbf16, #tpu.memory_space<vmem>>, %arg4: memref<1x64xf32, #tpu.memory_space<vmem>>, %arg5: memref<9x32x128xbf16, #tpu.memory_space<vmem>>, %arg6: memref<9x64x128xbf16, #tpu.memory_space<vmem>>, %arg7: memref<2x1x128xf32, #tpu.memory_space<vmem>>, %arg8: memref<9x8x32xbf16, #tpu.memory_space<vmem>>, %arg9: memref<9x128x256xbf16, #tpu.memory_space<vmem>>, %arg10: memref<2x1x256xf32, #tpu.memory_space<vmem>>, %arg11: memref<4x2x8xbf16, #tpu.memory_space<vmem>>, %arg12: memref<4x256x512xbf16, #tpu.memory_space<vmem>>, %arg13: memref<2x1x512xf32, #tpu.memory_space<vmem>>, %arg14: memref<1x2x2xbf16, #tpu.memory_space<vmem>>, %arg15: memref<1x512x128xbf16, #tpu.memory_space<vmem>>, %arg16: memref<2x1x128xf32, #tpu.memory_space<vmem>>, %arg17: memref<2x128xf32, #tpu.memory_space<vmem>>) attributes {dimension_semantics = [#tpu.dimension_semantics<arbitrary>], iteration_bounds = array<i64: 1>, scalar_prefetch = 0 : i64, scratch_operands = 0 : i64, tpu.core_type = #tpu.core_type<tc>, window_params = [{pipeline_mode = #tpu.pipeline_mode<synchronous>, transform_indices = @transform_0, window_bounds = array<i64: 512, 6>}, {pipeline_mode = #tpu.pipeline_mode<synchronous>, transform_indices = @transform_1, window_bounds = array<i64: 9, 128, 512>}, {pipeline_mode = #tpu.pipeline_mode<synchronous>, transform_indices = @transform_2, window_bounds = array<i64: 9, 6, 64>}, {pipeline_mode = #tpu.pipeline_mode<synchronous>, transform_indices = @transform_3, window_bounds = array<i64: 1, 64>}, {pipeline_mode = #tpu.pipeline_mode<synchronous>, transform_indices = @transform_4, window_bounds = array<i64: 9, 32, 128>}, {pipeline_mode = #tpu.pipeline_mode<synchronous>, transform_indices = @transform_5, window_bounds = array<i64: 9, 64, 128>}, {pipeline_mode = #tpu.pipeline_mode<synchronous>, transform_indices = @transform_6, window_bounds = array<i64: 2, 1, 128>}, {pipeline_mode = #tpu.pipeline_mode<synchronous>, transform_indices = @transform_7, window_bounds = array<i64: 9, 8, 32>}, {pipeline_mode = #tpu.pipeline_mode<synchronous>, transform_indices = @transform_8, window_bounds = array<i64: 9, 128, 256>}, {pipeline_mode = #tpu.pipeline_mode<synchronous>, transform_indices = @transform_9, window_bounds = array<i64: 2, 1, 256>}, {pipeline_mode = #tpu.pipeline_mode<synchronous>, transform_indices = @transform_10, window_bounds = array<i64: 4, 2, 8>}, {pipeline_mode = #tpu.pipeline_mode<synchronous>, transform_indices = @transform_11, window_bounds = array<i64: 4, 256, 512>}, {pipeline_mode = #tpu.pipeline_mode<synchronous>, transform_indices = @transform_12, window_bounds = array<i64: 2, 1, 512>}, {pipeline_mode = #tpu.pipeline_mode<synchronous>, transform_indices = @transform_13, window_bounds = array<i64: 1, 2, 2>}, {pipeline_mode = #tpu.pipeline_mode<synchronous>, transform_indices = @transform_14, window_bounds = array<i64: 1, 512, 128>}, {pipeline_mode = #tpu.pipeline_mode<synchronous>, transform_indices = @transform_15, window_bounds = array<i64: 2, 1, 128>}, {pipeline_mode = #tpu.pipeline_mode<synchronous>, transform_indices = @transform_16, window_bounds = array<i64: 2, 128>}]} {
    %c0 = arith.constant 0 : index
    %c0_0 = arith.constant 0 : index
    %0 = vector.load %arg1[%c0, %c0_0] : memref<512x6xbf16, #tpu.memory_space<vmem>>, vector<512x6xbf16>
    %c0_1 = arith.constant 0 : index
    %c0_2 = arith.constant 0 : index
    %c0_3 = arith.constant 0 : index
    %1 = vector.load %arg2[%c0_1, %c0_2, %c0_3] : memref<9x128x512xbf16, #tpu.memory_space<vmem>>, vector<1x128x512xbf16>
    %2 = vector.shape_cast %1 : vector<1x128x512xbf16> to vector<128x512xbf16>
    %cst = arith.constant dense<0.000000e+00> : vector<128x6xf32>
    %3 = tpu.matmul %2, %0, %cst {dimension_numbers = #tpu.dot_dimension_numbers<[1], [0], [0], [1], [0, 0, 1, 1], [], []>} : vector<128x512xbf16>, vector<512x6xbf16>, vector<128x6xf32> -> vector<128x6xf32>
    %4 = arith.truncf %3 : vector<128x6xf32> to vector<128x6xbf16>
    %c0_4 = arith.constant 0 : index
    %c0_5 = arith.constant 0 : index
    %c0_6 = arith.constant 0 : index
    %5 = vector.load %arg3[%c0_4, %c0_5, %c0_6] : memref<9x6x64xbf16, #tpu.memory_space<vmem>>, vector<1x6x64xbf16>
    %6 = vector.shape_cast %5 : vector<1x6x64xbf16> to vector<6x64xbf16>
    %cst_7 = arith.constant dense<0.000000e+00> : vector<128x64xf32>
    %7 = tpu.matmul %4, %6, %cst_7 {dimension_numbers = #tpu.dot_dimension_numbers<[1], [0], [0], [1], [0, 0, 1, 1], [], []>} : vector<128x6xbf16>, vector<6x64xbf16>, vector<128x64xf32> -> vector<128x64xf32>
    %c1 = arith.constant 1 : index
    %c0_8 = arith.constant 0 : index
    %c0_9 = arith.constant 0 : index
    %8 = vector.load %arg2[%c1, %c0_8, %c0_9] : memref<9x128x512xbf16, #tpu.memory_space<vmem>>, vector<1x128x512xbf16>
    %9 = vector.shape_cast %8 : vector<1x128x512xbf16> to vector<128x512xbf16>
    %cst_10 = arith.constant dense<0.000000e+00> : vector<128x6xf32>
    %10 = tpu.matmul %9, %0, %cst_10 {dimension_numbers = #tpu.dot_dimension_numbers<[1], [0], [0], [1], [0, 0, 1, 1], [], []>} : vector<128x512xbf16>, vector<512x6xbf16>, vector<128x6xf32> -> vector<128x6xf32>
    %11 = arith.truncf %10 : vector<128x6xf32> to vector<128x6xbf16>
    %c1_11 = arith.constant 1 : index
    %c0_12 = arith.constant 0 : index
    %c0_13 = arith.constant 0 : index
    %12 = vector.load %arg3[%c1_11, %c0_12, %c0_13] : memref<9x6x64xbf16, #tpu.memory_space<vmem>>, vector<1x6x64xbf16>
    %13 = vector.shape_cast %12 : vector<1x6x64xbf16> to vector<6x64xbf16>
    %cst_14 = arith.constant dense<0.000000e+00> : vector<128x64xf32>
    %14 = tpu.matmul %11, %13, %cst_14 {dimension_numbers = #tpu.dot_dimension_numbers<[1], [0], [0], [1], [0, 0, 1, 1], [], []>} : vector<128x6xbf16>, vector<6x64xbf16>, vector<128x64xf32> -> vector<128x64xf32>
    %15 = arith.addf %7, %14 : vector<128x64xf32>
    %c2 = arith.constant 2 : index
    %c0_15 = arith.constant 0 : index
    %c0_16 = arith.constant 0 : index
    %16 = vector.load %arg2[%c2, %c0_15, %c0_16] : memref<9x128x512xbf16, #tpu.memory_space<vmem>>, vector<1x128x512xbf16>
    %17 = vector.shape_cast %16 : vector<1x128x512xbf16> to vector<128x512xbf16>
    %cst_17 = arith.constant dense<0.000000e+00> : vector<128x6xf32>
    %18 = tpu.matmul %17, %0, %cst_17 {dimension_numbers = #tpu.dot_dimension_numbers<[1], [0], [0], [1], [0, 0, 1, 1], [], []>} : vector<128x512xbf16>, vector<512x6xbf16>, vector<128x6xf32> -> vector<128x6xf32>
    %19 = arith.truncf %18 : vector<128x6xf32> to vector<128x6xbf16>
    %c2_18 = arith.constant 2 : index
    %c0_19 = arith.constant 0 : index
    %c0_20 = arith.constant 0 : index
    %20 = vector.load %arg3[%c2_18, %c0_19, %c0_20] : memref<9x6x64xbf16, #tpu.memory_space<vmem>>, vector<1x6x64xbf16>
    %21 = vector.shape_cast %20 : vector<1x6x64xbf16> to vector<6x64xbf16>
    %cst_21 = arith.constant dense<0.000000e+00> : vector<128x64xf32>
    %22 = tpu.matmul %19, %21, %cst_21 {dimension_numbers = #tpu.dot_dimension_numbers<[1], [0], [0], [1], [0, 0, 1, 1], [], []>} : vector<128x6xbf16>, vector<6x64xbf16>, vector<128x64xf32> -> vector<128x64xf32>
    %23 = arith.addf %15, %22 : vector<128x64xf32>
    %c3 = arith.constant 3 : index
    %c0_22 = arith.constant 0 : index
    %c0_23 = arith.constant 0 : index
    %24 = vector.load %arg2[%c3, %c0_22, %c0_23] : memref<9x128x512xbf16, #tpu.memory_space<vmem>>, vector<1x128x512xbf16>
    %25 = vector.shape_cast %24 : vector<1x128x512xbf16> to vector<128x512xbf16>
    %cst_24 = arith.constant dense<0.000000e+00> : vector<128x6xf32>
    %26 = tpu.matmul %25, %0, %cst_24 {dimension_numbers = #tpu.dot_dimension_numbers<[1], [0], [0], [1], [0, 0, 1, 1], [], []>} : vector<128x512xbf16>, vector<512x6xbf16>, vector<128x6xf32> -> vector<128x6xf32>
    %27 = arith.truncf %26 : vector<128x6xf32> to vector<128x6xbf16>
    %c3_25 = arith.constant 3 : index
    %c0_26 = arith.constant 0 : index
    %c0_27 = arith.constant 0 : index
    %28 = vector.load %arg3[%c3_25, %c0_26, %c0_27] : memref<9x6x64xbf16, #tpu.memory_space<vmem>>, vector<1x6x64xbf16>
    %29 = vector.shape_cast %28 : vector<1x6x64xbf16> to vector<6x64xbf16>
    %cst_28 = arith.constant dense<0.000000e+00> : vector<128x64xf32>
    %30 = tpu.matmul %27, %29, %cst_28 {dimension_numbers = #tpu.dot_dimension_numbers<[1], [0], [0], [1], [0, 0, 1, 1], [], []>} : vector<128x6xbf16>, vector<6x64xbf16>, vector<128x64xf32> -> vector<128x64xf32>
    %31 = arith.addf %23, %30 : vector<128x64xf32>
    %c4 = arith.constant 4 : index
    %c0_29 = arith.constant 0 : index
    %c0_30 = arith.constant 0 : index
    %32 = vector.load %arg2[%c4, %c0_29, %c0_30] : memref<9x128x512xbf16, #tpu.memory_space<vmem>>, vector<1x128x512xbf16>
    %33 = vector.shape_cast %32 : vector<1x128x512xbf16> to vector<128x512xbf16>
    %cst_31 = arith.constant dense<0.000000e+00> : vector<128x6xf32>
    %34 = tpu.matmul %33, %0, %cst_31 {dimension_numbers = #tpu.dot_dimension_numbers<[1], [0], [0], [1], [0, 0, 1, 1], [], []>} : vector<128x512xbf16>, vector<512x6xbf16>, vector<128x6xf32> -> vector<128x6xf32>
    %35 = arith.truncf %34 : vector<128x6xf32> to vector<128x6xbf16>
    %c4_32 = arith.constant 4 : index
    %c0_33 = arith.constant 0 : index
    %c0_34 = arith.constant 0 : index
    %36 = vector.load %arg3[%c4_32, %c0_33, %c0_34] : memref<9x6x64xbf16, #tpu.memory_space<vmem>>, vector<1x6x64xbf16>
    %37 = vector.shape_cast %36 : vector<1x6x64xbf16> to vector<6x64xbf16>
    %cst_35 = arith.constant dense<0.000000e+00> : vector<128x64xf32>
    %38 = tpu.matmul %35, %37, %cst_35 {dimension_numbers = #tpu.dot_dimension_numbers<[1], [0], [0], [1], [0, 0, 1, 1], [], []>} : vector<128x6xbf16>, vector<6x64xbf16>, vector<128x64xf32> -> vector<128x64xf32>
    %39 = arith.addf %31, %38 : vector<128x64xf32>
    %c5 = arith.constant 5 : index
    %c0_36 = arith.constant 0 : index
    %c0_37 = arith.constant 0 : index
    %40 = vector.load %arg2[%c5, %c0_36, %c0_37] : memref<9x128x512xbf16, #tpu.memory_space<vmem>>, vector<1x128x512xbf16>
    %41 = vector.shape_cast %40 : vector<1x128x512xbf16> to vector<128x512xbf16>
    %cst_38 = arith.constant dense<0.000000e+00> : vector<128x6xf32>
    %42 = tpu.matmul %41, %0, %cst_38 {dimension_numbers = #tpu.dot_dimension_numbers<[1], [0], [0], [1], [0, 0, 1, 1], [], []>} : vector<128x512xbf16>, vector<512x6xbf16>, vector<128x6xf32> -> vector<128x6xf32>
    %43 = arith.truncf %42 : vector<128x6xf32> to vector<128x6xbf16>
    %c5_39 = arith.constant 5 : index
    %c0_40 = arith.constant 0 : index
    %c0_41 = arith.constant 0 : index
    %44 = vector.load %arg3[%c5_39, %c0_40, %c0_41] : memref<9x6x64xbf16, #tpu.memory_space<vmem>>, vector<1x6x64xbf16>
    %45 = vector.shape_cast %44 : vector<1x6x64xbf16> to vector<6x64xbf16>
    %cst_42 = arith.constant dense<0.000000e+00> : vector<128x64xf32>
    %46 = tpu.matmul %43, %45, %cst_42 {dimension_numbers = #tpu.dot_dimension_numbers<[1], [0], [0], [1], [0, 0, 1, 1], [], []>} : vector<128x6xbf16>, vector<6x64xbf16>, vector<128x64xf32> -> vector<128x64xf32>
    %47 = arith.addf %39, %46 : vector<128x64xf32>
    %c6 = arith.constant 6 : index
    %c0_43 = arith.constant 0 : index
    %c0_44 = arith.constant 0 : index
    %48 = vector.load %arg2[%c6, %c0_43, %c0_44] : memref<9x128x512xbf16, #tpu.memory_space<vmem>>, vector<1x128x512xbf16>
    %49 = vector.shape_cast %48 : vector<1x128x512xbf16> to vector<128x512xbf16>
    %cst_45 = arith.constant dense<0.000000e+00> : vector<128x6xf32>
    %50 = tpu.matmul %49, %0, %cst_45 {dimension_numbers = #tpu.dot_dimension_numbers<[1], [0], [0], [1], [0, 0, 1, 1], [], []>} : vector<128x512xbf16>, vector<512x6xbf16>, vector<128x6xf32> -> vector<128x6xf32>
    %51 = arith.truncf %50 : vector<128x6xf32> to vector<128x6xbf16>
    %c6_46 = arith.constant 6 : index
    %c0_47 = arith.constant 0 : index
    %c0_48 = arith.constant 0 : index
    %52 = vector.load %arg3[%c6_46, %c0_47, %c0_48] : memref<9x6x64xbf16, #tpu.memory_space<vmem>>, vector<1x6x64xbf16>
    %53 = vector.shape_cast %52 : vector<1x6x64xbf16> to vector<6x64xbf16>
    %cst_49 = arith.constant dense<0.000000e+00> : vector<128x64xf32>
    %54 = tpu.matmul %51, %53, %cst_49 {dimension_numbers = #tpu.dot_dimension_numbers<[1], [0], [0], [1], [0, 0, 1, 1], [], []>} : vector<128x6xbf16>, vector<6x64xbf16>, vector<128x64xf32> -> vector<128x64xf32>
    %55 = arith.addf %47, %54 : vector<128x64xf32>
    %c7 = arith.constant 7 : index
    %c0_50 = arith.constant 0 : index
    %c0_51 = arith.constant 0 : index
    %56 = vector.load %arg2[%c7, %c0_50, %c0_51] : memref<9x128x512xbf16, #tpu.memory_space<vmem>>, vector<1x128x512xbf16>
    %57 = vector.shape_cast %56 : vector<1x128x512xbf16> to vector<128x512xbf16>
    %cst_52 = arith.constant dense<0.000000e+00> : vector<128x6xf32>
    %58 = tpu.matmul %57, %0, %cst_52 {dimension_numbers = #tpu.dot_dimension_numbers<[1], [0], [0], [1], [0, 0, 1, 1], [], []>} : vector<128x512xbf16>, vector<512x6xbf16>, vector<128x6xf32> -> vector<128x6xf32>
    %59 = arith.truncf %58 : vector<128x6xf32> to vector<128x6xbf16>
    %c7_53 = arith.constant 7 : index
    %c0_54 = arith.constant 0 : index
    %c0_55 = arith.constant 0 : index
    %60 = vector.load %arg3[%c7_53, %c0_54, %c0_55] : memref<9x6x64xbf16, #tpu.memory_space<vmem>>, vector<1x6x64xbf16>
    %61 = vector.shape_cast %60 : vector<1x6x64xbf16> to vector<6x64xbf16>
    %cst_56 = arith.constant dense<0.000000e+00> : vector<128x64xf32>
    %62 = tpu.matmul %59, %61, %cst_56 {dimension_numbers = #tpu.dot_dimension_numbers<[1], [0], [0], [1], [0, 0, 1, 1], [], []>} : vector<128x6xbf16>, vector<6x64xbf16>, vector<128x64xf32> -> vector<128x64xf32>
    %63 = arith.addf %55, %62 : vector<128x64xf32>
    %c8 = arith.constant 8 : index
    %c0_57 = arith.constant 0 : index
    %c0_58 = arith.constant 0 : index
    %64 = vector.load %arg2[%c8, %c0_57, %c0_58] : memref<9x128x512xbf16, #tpu.memory_space<vmem>>, vector<1x128x512xbf16>
    %65 = vector.shape_cast %64 : vector<1x128x512xbf16> to vector<128x512xbf16>
    %cst_59 = arith.constant dense<0.000000e+00> : vector<128x6xf32>
    %66 = tpu.matmul %65, %0, %cst_59 {dimension_numbers = #tpu.dot_dimension_numbers<[1], [0], [0], [1], [0, 0, 1, 1], [], []>} : vector<128x512xbf16>, vector<512x6xbf16>, vector<128x6xf32> -> vector<128x6xf32>
    %67 = arith.truncf %66 : vector<128x6xf32> to vector<128x6xbf16>
    %c8_60 = arith.constant 8 : index
    %c0_61 = arith.constant 0 : index
    %c0_62 = arith.constant 0 : index
    %68 = vector.load %arg3[%c8_60, %c0_61, %c0_62] : memref<9x6x64xbf16, #tpu.memory_space<vmem>>, vector<1x6x64xbf16>
    %69 = vector.shape_cast %68 : vector<1x6x64xbf16> to vector<6x64xbf16>
    %cst_63 = arith.constant dense<0.000000e+00> : vector<128x64xf32>
    %70 = tpu.matmul %67, %69, %cst_63 {dimension_numbers = #tpu.dot_dimension_numbers<[1], [0], [0], [1], [0, 0, 1, 1], [], []>} : vector<128x6xbf16>, vector<6x64xbf16>, vector<128x64xf32> -> vector<128x64xf32>
    %71 = arith.addf %63, %70 : vector<128x64xf32>
    %c0_64 = arith.constant 0 : index
    %c0_65 = arith.constant 0 : index
    %72 = vector.load %arg4[%c0_64, %c0_65] : memref<1x64xf32, #tpu.memory_space<vmem>>, vector<1x64xf32>
    %73 = vector.broadcast %72 : vector<1x64xf32> to vector<128x64xf32>
    %74 = arith.addf %71, %73 : vector<128x64xf32>
    %cst_66 = arith.constant 0.00999999977 : f32
    %75 = vector.broadcast %cst_66 : f32 to vector<128x64xf32>
    %76 = arith.mulf %75, %74 : vector<128x64xf32>
    %77 = arith.maximumf %74, %76 : vector<128x64xf32>
    %78 = arith.truncf %77 : vector<128x64xf32> to vector<128x64xbf16>
    %c0_67 = arith.constant 0 : index
    %c0_68 = arith.constant 0 : index
    %c0_69 = arith.constant 0 : index
    %79 = vector.load %arg5[%c0_67, %c0_68, %c0_69] : memref<9x32x128xbf16, #tpu.memory_space<vmem>>, vector<1x32x128xbf16>
    %80 = vector.shape_cast %79 : vector<1x32x128xbf16> to vector<32x128xbf16>
    %cst_70 = arith.constant dense<0.000000e+00> : vector<32x64xf32>
    %81 = tpu.matmul %80, %78, %cst_70 {dimension_numbers = #tpu.dot_dimension_numbers<[1], [0], [0], [1], [0, 0, 1, 1], [], []>} : vector<32x128xbf16>, vector<128x64xbf16>, vector<32x64xf32> -> vector<32x64xf32>
    %82 = arith.truncf %81 : vector<32x64xf32> to vector<32x64xbf16>
    %c0_71 = arith.constant 0 : index
    %c0_72 = arith.constant 0 : index
    %c0_73 = arith.constant 0 : index
    %83 = vector.load %arg6[%c0_71, %c0_72, %c0_73] : memref<9x64x128xbf16, #tpu.memory_space<vmem>>, vector<1x64x128xbf16>
    %84 = vector.shape_cast %83 : vector<1x64x128xbf16> to vector<64x128xbf16>
    %cst_74 = arith.constant dense<0.000000e+00> : vector<32x128xf32>
    %85 = tpu.matmul %82, %84, %cst_74 {dimension_numbers = #tpu.dot_dimension_numbers<[1], [0], [0], [1], [0, 0, 1, 1], [], []>} : vector<32x64xbf16>, vector<64x128xbf16>, vector<32x128xf32> -> vector<32x128xf32>
    %c1_75 = arith.constant 1 : index
    %c0_76 = arith.constant 0 : index
    %c0_77 = arith.constant 0 : index
    %86 = vector.load %arg5[%c1_75, %c0_76, %c0_77] : memref<9x32x128xbf16, #tpu.memory_space<vmem>>, vector<1x32x128xbf16>
    %87 = vector.shape_cast %86 : vector<1x32x128xbf16> to vector<32x128xbf16>
    %cst_78 = arith.constant dense<0.000000e+00> : vector<32x64xf32>
    %88 = tpu.matmul %87, %78, %cst_78 {dimension_numbers = #tpu.dot_dimension_numbers<[1], [0], [0], [1], [0, 0, 1, 1], [], []>} : vector<32x128xbf16>, vector<128x64xbf16>, vector<32x64xf32> -> vector<32x64xf32>
    %89 = arith.truncf %88 : vector<32x64xf32> to vector<32x64xbf16>
    %c1_79 = arith.constant 1 : index
    %c0_80 = arith.constant 0 : index
    %c0_81 = arith.constant 0 : index
    %90 = vector.load %arg6[%c1_79, %c0_80, %c0_81] : memref<9x64x128xbf16, #tpu.memory_space<vmem>>, vector<1x64x128xbf16>
    %91 = vector.shape_cast %90 : vector<1x64x128xbf16> to vector<64x128xbf16>
    %cst_82 = arith.constant dense<0.000000e+00> : vector<32x128xf32>
    %92 = tpu.matmul %89, %91, %cst_82 {dimension_numbers = #tpu.dot_dimension_numbers<[1], [0], [0], [1], [0, 0, 1, 1], [], []>} : vector<32x64xbf16>, vector<64x128xbf16>, vector<32x128xf32> -> vector<32x128xf32>
    %93 = arith.addf %85, %92 : vector<32x128xf32>
    %c2_83 = arith.constant 2 : index
    %c0_84 = arith.constant 0 : index
    %c0_85 = arith.constant 0 : index
    %94 = vector.load %arg5[%c2_83, %c0_84, %c0_85] : memref<9x32x128xbf16, #tpu.memory_space<vmem>>, vector<1x32x128xbf16>
    %95 = vector.shape_cast %94 : vector<1x32x128xbf16> to vector<32x128xbf16>
    %cst_86 = arith.constant dense<0.000000e+00> : vector<32x64xf32>
    %96 = tpu.matmul %95, %78, %cst_86 {dimension_numbers = #tpu.dot_dimension_numbers<[1], [0], [0], [1], [0, 0, 1, 1], [], []>} : vector<32x128xbf16>, vector<128x64xbf16>, vector<32x64xf32> -> vector<32x64xf32>
    %97 = arith.truncf %96 : vector<32x64xf32> to vector<32x64xbf16>
    %c2_87 = arith.constant 2 : index
    %c0_88 = arith.constant 0 : index
    %c0_89 = arith.constant 0 : index
    %98 = vector.load %arg6[%c2_87, %c0_88, %c0_89] : memref<9x64x128xbf16, #tpu.memory_space<vmem>>, vector<1x64x128xbf16>
    %99 = vector.shape_cast %98 : vector<1x64x128xbf16> to vector<64x128xbf16>
    %cst_90 = arith.constant dense<0.000000e+00> : vector<32x128xf32>
    %100 = tpu.matmul %97, %99, %cst_90 {dimension_numbers = #tpu.dot_dimension_numbers<[1], [0], [0], [1], [0, 0, 1, 1], [], []>} : vector<32x64xbf16>, vector<64x128xbf16>, vector<32x128xf32> -> vector<32x128xf32>
    %101 = arith.addf %93, %100 : vector<32x128xf32>
    %c3_91 = arith.constant 3 : index
    %c0_92 = arith.constant 0 : index
    %c0_93 = arith.constant 0 : index
    %102 = vector.load %arg5[%c3_91, %c0_92, %c0_93] : memref<9x32x128xbf16, #tpu.memory_space<vmem>>, vector<1x32x128xbf16>
    %103 = vector.shape_cast %102 : vector<1x32x128xbf16> to vector<32x128xbf16>
    %cst_94 = arith.constant dense<0.000000e+00> : vector<32x64xf32>
    %104 = tpu.matmul %103, %78, %cst_94 {dimension_numbers = #tpu.dot_dimension_numbers<[1], [0], [0], [1], [0, 0, 1, 1], [], []>} : vector<32x128xbf16>, vector<128x64xbf16>, vector<32x64xf32> -> vector<32x64xf32>
    %105 = arith.truncf %104 : vector<32x64xf32> to vector<32x64xbf16>
    %c3_95 = arith.constant 3 : index
    %c0_96 = arith.constant 0 : index
    %c0_97 = arith.constant 0 : index
    %106 = vector.load %arg6[%c3_95, %c0_96, %c0_97] : memref<9x64x128xbf16, #tpu.memory_space<vmem>>, vector<1x64x128xbf16>
    %107 = vector.shape_cast %106 : vector<1x64x128xbf16> to vector<64x128xbf16>
    %cst_98 = arith.constant dense<0.000000e+00> : vector<32x128xf32>
    %108 = tpu.matmul %105, %107, %cst_98 {dimension_numbers = #tpu.dot_dimension_numbers<[1], [0], [0], [1], [0, 0, 1, 1], [], []>} : vector<32x64xbf16>, vector<64x128xbf16>, vector<32x128xf32> -> vector<32x128xf32>
    %109 = arith.addf %101, %108 : vector<32x128xf32>
    %c4_99 = arith.constant 4 : index
    %c0_100 = arith.constant 0 : index
    %c0_101 = arith.constant 0 : index
    %110 = vector.load %arg5[%c4_99, %c0_100, %c0_101] : memref<9x32x128xbf16, #tpu.memory_space<vmem>>, vector<1x32x128xbf16>
    %111 = vector.shape_cast %110 : vector<1x32x128xbf16> to vector<32x128xbf16>
    %cst_102 = arith.constant dense<0.000000e+00> : vector<32x64xf32>
    %112 = tpu.matmul %111, %78, %cst_102 {dimension_numbers = #tpu.dot_dimension_numbers<[1], [0], [0], [1], [0, 0, 1, 1], [], []>} : vector<32x128xbf16>, vector<128x64xbf16>, vector<32x64xf32> -> vector<32x64xf32>
    %113 = arith.truncf %112 : vector<32x64xf32> to vector<32x64xbf16>
    %c4_103 = arith.constant 4 : index
    %c0_104 = arith.constant 0 : index
    %c0_105 = arith.constant 0 : index
    %114 = vector.load %arg6[%c4_103, %c0_104, %c0_105] : memref<9x64x128xbf16, #tpu.memory_space<vmem>>, vector<1x64x128xbf16>
    %115 = vector.shape_cast %114 : vector<1x64x128xbf16> to vector<64x128xbf16>
    %cst_106 = arith.constant dense<0.000000e+00> : vector<32x128xf32>
    %116 = tpu.matmul %113, %115, %cst_106 {dimension_numbers = #tpu.dot_dimension_numbers<[1], [0], [0], [1], [0, 0, 1, 1], [], []>} : vector<32x64xbf16>, vector<64x128xbf16>, vector<32x128xf32> -> vector<32x128xf32>
    %117 = arith.addf %109, %116 : vector<32x128xf32>
    %c5_107 = arith.constant 5 : index
    %c0_108 = arith.constant 0 : index
    %c0_109 = arith.constant 0 : index
    %118 = vector.load %arg5[%c5_107, %c0_108, %c0_109] : memref<9x32x128xbf16, #tpu.memory_space<vmem>>, vector<1x32x128xbf16>
    %119 = vector.shape_cast %118 : vector<1x32x128xbf16> to vector<32x128xbf16>
    %cst_110 = arith.constant dense<0.000000e+00> : vector<32x64xf32>
    %120 = tpu.matmul %119, %78, %cst_110 {dimension_numbers = #tpu.dot_dimension_numbers<[1], [0], [0], [1], [0, 0, 1, 1], [], []>} : vector<32x128xbf16>, vector<128x64xbf16>, vector<32x64xf32> -> vector<32x64xf32>
    %121 = arith.truncf %120 : vector<32x64xf32> to vector<32x64xbf16>
    %c5_111 = arith.constant 5 : index
    %c0_112 = arith.constant 0 : index
    %c0_113 = arith.constant 0 : index
    %122 = vector.load %arg6[%c5_111, %c0_112, %c0_113] : memref<9x64x128xbf16, #tpu.memory_space<vmem>>, vector<1x64x128xbf16>
    %123 = vector.shape_cast %122 : vector<1x64x128xbf16> to vector<64x128xbf16>
    %cst_114 = arith.constant dense<0.000000e+00> : vector<32x128xf32>
    %124 = tpu.matmul %121, %123, %cst_114 {dimension_numbers = #tpu.dot_dimension_numbers<[1], [0], [0], [1], [0, 0, 1, 1], [], []>} : vector<32x64xbf16>, vector<64x128xbf16>, vector<32x128xf32> -> vector<32x128xf32>
    %125 = arith.addf %117, %124 : vector<32x128xf32>
    %c6_115 = arith.constant 6 : index
    %c0_116 = arith.constant 0 : index
    %c0_117 = arith.constant 0 : index
    %126 = vector.load %arg5[%c6_115, %c0_116, %c0_117] : memref<9x32x128xbf16, #tpu.memory_space<vmem>>, vector<1x32x128xbf16>
    %127 = vector.shape_cast %126 : vector<1x32x128xbf16> to vector<32x128xbf16>
    %cst_118 = arith.constant dense<0.000000e+00> : vector<32x64xf32>
    %128 = tpu.matmul %127, %78, %cst_118 {dimension_numbers = #tpu.dot_dimension_numbers<[1], [0], [0], [1], [0, 0, 1, 1], [], []>} : vector<32x128xbf16>, vector<128x64xbf16>, vector<32x64xf32> -> vector<32x64xf32>
    %129 = arith.truncf %128 : vector<32x64xf32> to vector<32x64xbf16>
    %c6_119 = arith.constant 6 : index
    %c0_120 = arith.constant 0 : index
    %c0_121 = arith.constant 0 : index
    %130 = vector.load %arg6[%c6_119, %c0_120, %c0_121] : memref<9x64x128xbf16, #tpu.memory_space<vmem>>, vector<1x64x128xbf16>
    %131 = vector.shape_cast %130 : vector<1x64x128xbf16> to vector<64x128xbf16>
    %cst_122 = arith.constant dense<0.000000e+00> : vector<32x128xf32>
    %132 = tpu.matmul %129, %131, %cst_122 {dimension_numbers = #tpu.dot_dimension_numbers<[1], [0], [0], [1], [0, 0, 1, 1], [], []>} : vector<32x64xbf16>, vector<64x128xbf16>, vector<32x128xf32> -> vector<32x128xf32>
    %133 = arith.addf %125, %132 : vector<32x128xf32>
    %c7_123 = arith.constant 7 : index
    %c0_124 = arith.constant 0 : index
    %c0_125 = arith.constant 0 : index
    %134 = vector.load %arg5[%c7_123, %c0_124, %c0_125] : memref<9x32x128xbf16, #tpu.memory_space<vmem>>, vector<1x32x128xbf16>
    %135 = vector.shape_cast %134 : vector<1x32x128xbf16> to vector<32x128xbf16>
    %cst_126 = arith.constant dense<0.000000e+00> : vector<32x64xf32>
    %136 = tpu.matmul %135, %78, %cst_126 {dimension_numbers = #tpu.dot_dimension_numbers<[1], [0], [0], [1], [0, 0, 1, 1], [], []>} : vector<32x128xbf16>, vector<128x64xbf16>, vector<32x64xf32> -> vector<32x64xf32>
    %137 = arith.truncf %136 : vector<32x64xf32> to vector<32x64xbf16>
    %c7_127 = arith.constant 7 : index
    %c0_128 = arith.constant 0 : index
    %c0_129 = arith.constant 0 : index
    %138 = vector.load %arg6[%c7_127, %c0_128, %c0_129] : memref<9x64x128xbf16, #tpu.memory_space<vmem>>, vector<1x64x128xbf16>
    %139 = vector.shape_cast %138 : vector<1x64x128xbf16> to vector<64x128xbf16>
    %cst_130 = arith.constant dense<0.000000e+00> : vector<32x128xf32>
    %140 = tpu.matmul %137, %139, %cst_130 {dimension_numbers = #tpu.dot_dimension_numbers<[1], [0], [0], [1], [0, 0, 1, 1], [], []>} : vector<32x64xbf16>, vector<64x128xbf16>, vector<32x128xf32> -> vector<32x128xf32>
    %141 = arith.addf %133, %140 : vector<32x128xf32>
    %c8_131 = arith.constant 8 : index
    %c0_132 = arith.constant 0 : index
    %c0_133 = arith.constant 0 : index
    %142 = vector.load %arg5[%c8_131, %c0_132, %c0_133] : memref<9x32x128xbf16, #tpu.memory_space<vmem>>, vector<1x32x128xbf16>
    %143 = vector.shape_cast %142 : vector<1x32x128xbf16> to vector<32x128xbf16>
    %cst_134 = arith.constant dense<0.000000e+00> : vector<32x64xf32>
    %144 = tpu.matmul %143, %78, %cst_134 {dimension_numbers = #tpu.dot_dimension_numbers<[1], [0], [0], [1], [0, 0, 1, 1], [], []>} : vector<32x128xbf16>, vector<128x64xbf16>, vector<32x64xf32> -> vector<32x64xf32>
    %145 = arith.truncf %144 : vector<32x64xf32> to vector<32x64xbf16>
    %c8_135 = arith.constant 8 : index
    %c0_136 = arith.constant 0 : index
    %c0_137 = arith.constant 0 : index
    %146 = vector.load %arg6[%c8_135, %c0_136, %c0_137] : memref<9x64x128xbf16, #tpu.memory_space<vmem>>, vector<1x64x128xbf16>
    %147 = vector.shape_cast %146 : vector<1x64x128xbf16> to vector<64x128xbf16>
    %cst_138 = arith.constant dense<0.000000e+00> : vector<32x128xf32>
    %148 = tpu.matmul %145, %147, %cst_138 {dimension_numbers = #tpu.dot_dimension_numbers<[1], [0], [0], [1], [0, 0, 1, 1], [], []>} : vector<32x64xbf16>, vector<64x128xbf16>, vector<32x128xf32> -> vector<32x128xf32>
    %149 = arith.addf %141, %148 : vector<32x128xf32>
    %cst_139 = arith.constant dense<0.000000e+00> : vector<128xf32>
    %150 = vector.multi_reduction <add>, %149, %cst_139 [0] : vector<32x128xf32> to vector<128xf32>
    %151 = vector.shape_cast %150 : vector<128xf32> to vector<1x128xf32>
    %cst_140 = arith.constant 3.200000e+01 : f32
    %152 = vector.broadcast %cst_140 : f32 to vector<1x128xf32>
    %153 = arith.divf %151, %152 : vector<1x128xf32>
    %154 = vector.broadcast %153 : vector<1x128xf32> to vector<32x128xf32>
    %155 = arith.subf %149, %154 : vector<32x128xf32>
    %156 = arith.mulf %155, %155 : vector<32x128xf32>
    %cst_141 = arith.constant dense<0.000000e+00> : vector<128xf32>
    %157 = vector.multi_reduction <add>, %156, %cst_141 [0] : vector<32x128xf32> to vector<128xf32>
    %158 = vector.shape_cast %157 : vector<128xf32> to vector<1x128xf32>
    %cst_142 = arith.constant 3.200000e+01 : f32
    %159 = vector.broadcast %cst_142 : f32 to vector<1x128xf32>
    %160 = arith.divf %158, %159 : vector<1x128xf32>
    %cst_143 = arith.constant 9.99999974E-6 : f32
    %161 = vector.broadcast %cst_143 : f32 to vector<1x128xf32>
    %162 = arith.addf %160, %161 : vector<1x128xf32>
    %163 = math.rsqrt %162 : vector<1x128xf32>
    %164 = vector.broadcast %163 : vector<1x128xf32> to vector<32x128xf32>
    %165 = arith.mulf %155, %164 : vector<32x128xf32>
    %c0_144 = arith.constant 0 : index
    %c0_145 = arith.constant 0 : index
    %c0_146 = arith.constant 0 : index
    %166 = vector.load %arg7[%c0_144, %c0_145, %c0_146] : memref<2x1x128xf32, #tpu.memory_space<vmem>>, vector<1x1x128xf32>
    %167 = vector.shape_cast %166 : vector<1x1x128xf32> to vector<1x128xf32>
    %168 = vector.broadcast %167 : vector<1x128xf32> to vector<32x128xf32>
    %169 = arith.mulf %165, %168 : vector<32x128xf32>
    %c1_147 = arith.constant 1 : index
    %c0_148 = arith.constant 0 : index
    %c0_149 = arith.constant 0 : index
    %170 = vector.load %arg7[%c1_147, %c0_148, %c0_149] : memref<2x1x128xf32, #tpu.memory_space<vmem>>, vector<1x1x128xf32>
    %171 = vector.shape_cast %170 : vector<1x1x128xf32> to vector<1x128xf32>
    %172 = vector.broadcast %171 : vector<1x128xf32> to vector<32x128xf32>
    %173 = arith.addf %169, %172 : vector<32x128xf32>
    %cst_150 = arith.constant 0.00999999977 : f32
    %174 = vector.broadcast %cst_150 : f32 to vector<32x128xf32>
    %175 = arith.mulf %174, %173 : vector<32x128xf32>
    %176 = arith.maximumf %173, %175 : vector<32x128xf32>
    %177 = arith.truncf %176 : vector<32x128xf32> to vector<32x128xbf16>
    %c0_151 = arith.constant 0 : index
    %c0_152 = arith.constant 0 : index
    %c0_153 = arith.constant 0 : index
    %178 = vector.load %arg8[%c0_151, %c0_152, %c0_153] : memref<9x8x32xbf16, #tpu.memory_space<vmem>>, vector<1x8x32xbf16>
    %179 = vector.shape_cast %178 : vector<1x8x32xbf16> to vector<8x32xbf16>
    %cst_154 = arith.constant dense<0.000000e+00> : vector<8x128xf32>
    %180 = tpu.matmul %179, %177, %cst_154 {dimension_numbers = #tpu.dot_dimension_numbers<[1], [0], [0], [1], [0, 0, 1, 1], [], []>} : vector<8x32xbf16>, vector<32x128xbf16>, vector<8x128xf32> -> vector<8x128xf32>
    %181 = arith.truncf %180 : vector<8x128xf32> to vector<8x128xbf16>
    %c0_155 = arith.constant 0 : index
    %c0_156 = arith.constant 0 : index
    %c0_157 = arith.constant 0 : index
    %182 = vector.load %arg9[%c0_155, %c0_156, %c0_157] : memref<9x128x256xbf16, #tpu.memory_space<vmem>>, vector<1x128x256xbf16>
    %183 = vector.shape_cast %182 : vector<1x128x256xbf16> to vector<128x256xbf16>
    %cst_158 = arith.constant dense<0.000000e+00> : vector<8x256xf32>
    %184 = tpu.matmul %181, %183, %cst_158 {dimension_numbers = #tpu.dot_dimension_numbers<[1], [0], [0], [1], [0, 0, 1, 1], [], []>} : vector<8x128xbf16>, vector<128x256xbf16>, vector<8x256xf32> -> vector<8x256xf32>
    %c1_159 = arith.constant 1 : index
    %c0_160 = arith.constant 0 : index
    %c0_161 = arith.constant 0 : index
    %185 = vector.load %arg8[%c1_159, %c0_160, %c0_161] : memref<9x8x32xbf16, #tpu.memory_space<vmem>>, vector<1x8x32xbf16>
    %186 = vector.shape_cast %185 : vector<1x8x32xbf16> to vector<8x32xbf16>
    %cst_162 = arith.constant dense<0.000000e+00> : vector<8x128xf32>
    %187 = tpu.matmul %186, %177, %cst_162 {dimension_numbers = #tpu.dot_dimension_numbers<[1], [0], [0], [1], [0, 0, 1, 1], [], []>} : vector<8x32xbf16>, vector<32x128xbf16>, vector<8x128xf32> -> vector<8x128xf32>
    %188 = arith.truncf %187 : vector<8x128xf32> to vector<8x128xbf16>
    %c1_163 = arith.constant 1 : index
    %c0_164 = arith.constant 0 : index
    %c0_165 = arith.constant 0 : index
    %189 = vector.load %arg9[%c1_163, %c0_164, %c0_165] : memref<9x128x256xbf16, #tpu.memory_space<vmem>>, vector<1x128x256xbf16>
    %190 = vector.shape_cast %189 : vector<1x128x256xbf16> to vector<128x256xbf16>
    %cst_166 = arith.constant dense<0.000000e+00> : vector<8x256xf32>
    %191 = tpu.matmul %188, %190, %cst_166 {dimension_numbers = #tpu.dot_dimension_numbers<[1], [0], [0], [1], [0, 0, 1, 1], [], []>} : vector<8x128xbf16>, vector<128x256xbf16>, vector<8x256xf32> -> vector<8x256xf32>
    %192 = arith.addf %184, %191 : vector<8x256xf32>
    %c2_167 = arith.constant 2 : index
    %c0_168 = arith.constant 0 : index
    %c0_169 = arith.constant 0 : index
    %193 = vector.load %arg8[%c2_167, %c0_168, %c0_169] : memref<9x8x32xbf16, #tpu.memory_space<vmem>>, vector<1x8x32xbf16>
    %194 = vector.shape_cast %193 : vector<1x8x32xbf16> to vector<8x32xbf16>
    %cst_170 = arith.constant dense<0.000000e+00> : vector<8x128xf32>
    %195 = tpu.matmul %194, %177, %cst_170 {dimension_numbers = #tpu.dot_dimension_numbers<[1], [0], [0], [1], [0, 0, 1, 1], [], []>} : vector<8x32xbf16>, vector<32x128xbf16>, vector<8x128xf32> -> vector<8x128xf32>
    %196 = arith.truncf %195 : vector<8x128xf32> to vector<8x128xbf16>
    %c2_171 = arith.constant 2 : index
    %c0_172 = arith.constant 0 : index
    %c0_173 = arith.constant 0 : index
    %197 = vector.load %arg9[%c2_171, %c0_172, %c0_173] : memref<9x128x256xbf16, #tpu.memory_space<vmem>>, vector<1x128x256xbf16>
    %198 = vector.shape_cast %197 : vector<1x128x256xbf16> to vector<128x256xbf16>
    %cst_174 = arith.constant dense<0.000000e+00> : vector<8x256xf32>
    %199 = tpu.matmul %196, %198, %cst_174 {dimension_numbers = #tpu.dot_dimension_numbers<[1], [0], [0], [1], [0, 0, 1, 1], [], []>} : vector<8x128xbf16>, vector<128x256xbf16>, vector<8x256xf32> -> vector<8x256xf32>
    %200 = arith.addf %192, %199 : vector<8x256xf32>
    %c3_175 = arith.constant 3 : index
    %c0_176 = arith.constant 0 : index
    %c0_177 = arith.constant 0 : index
    %201 = vector.load %arg8[%c3_175, %c0_176, %c0_177] : memref<9x8x32xbf16, #tpu.memory_space<vmem>>, vector<1x8x32xbf16>
    %202 = vector.shape_cast %201 : vector<1x8x32xbf16> to vector<8x32xbf16>
    %cst_178 = arith.constant dense<0.000000e+00> : vector<8x128xf32>
    %203 = tpu.matmul %202, %177, %cst_178 {dimension_numbers = #tpu.dot_dimension_numbers<[1], [0], [0], [1], [0, 0, 1, 1], [], []>} : vector<8x32xbf16>, vector<32x128xbf16>, vector<8x128xf32> -> vector<8x128xf32>
    %204 = arith.truncf %203 : vector<8x128xf32> to vector<8x128xbf16>
    %c3_179 = arith.constant 3 : index
    %c0_180 = arith.constant 0 : index
    %c0_181 = arith.constant 0 : index
    %205 = vector.load %arg9[%c3_179, %c0_180, %c0_181] : memref<9x128x256xbf16, #tpu.memory_space<vmem>>, vector<1x128x256xbf16>
    %206 = vector.shape_cast %205 : vector<1x128x256xbf16> to vector<128x256xbf16>
    %cst_182 = arith.constant dense<0.000000e+00> : vector<8x256xf32>
    %207 = tpu.matmul %204, %206, %cst_182 {dimension_numbers = #tpu.dot_dimension_numbers<[1], [0], [0], [1], [0, 0, 1, 1], [], []>} : vector<8x128xbf16>, vector<128x256xbf16>, vector<8x256xf32> -> vector<8x256xf32>
    %208 = arith.addf %200, %207 : vector<8x256xf32>
    %c4_183 = arith.constant 4 : index
    %c0_184 = arith.constant 0 : index
    %c0_185 = arith.constant 0 : index
    %209 = vector.load %arg8[%c4_183, %c0_184, %c0_185] : memref<9x8x32xbf16, #tpu.memory_space<vmem>>, vector<1x8x32xbf16>
    %210 = vector.shape_cast %209 : vector<1x8x32xbf16> to vector<8x32xbf16>
    %cst_186 = arith.constant dense<0.000000e+00> : vector<8x128xf32>
    %211 = tpu.matmul %210, %177, %cst_186 {dimension_numbers = #tpu.dot_dimension_numbers<[1], [0], [0], [1], [0, 0, 1, 1], [], []>} : vector<8x32xbf16>, vector<32x128xbf16>, vector<8x128xf32> -> vector<8x128xf32>
    %212 = arith.truncf %211 : vector<8x128xf32> to vector<8x128xbf16>
    %c4_187 = arith.constant 4 : index
    %c0_188 = arith.constant 0 : index
    %c0_189 = arith.constant 0 : index
    %213 = vector.load %arg9[%c4_187, %c0_188, %c0_189] : memref<9x128x256xbf16, #tpu.memory_space<vmem>>, vector<1x128x256xbf16>
    %214 = vector.shape_cast %213 : vector<1x128x256xbf16> to vector<128x256xbf16>
    %cst_190 = arith.constant dense<0.000000e+00> : vector<8x256xf32>
    %215 = tpu.matmul %212, %214, %cst_190 {dimension_numbers = #tpu.dot_dimension_numbers<[1], [0], [0], [1], [0, 0, 1, 1], [], []>} : vector<8x128xbf16>, vector<128x256xbf16>, vector<8x256xf32> -> vector<8x256xf32>
    %216 = arith.addf %208, %215 : vector<8x256xf32>
    %c5_191 = arith.constant 5 : index
    %c0_192 = arith.constant 0 : index
    %c0_193 = arith.constant 0 : index
    %217 = vector.load %arg8[%c5_191, %c0_192, %c0_193] : memref<9x8x32xbf16, #tpu.memory_space<vmem>>, vector<1x8x32xbf16>
    %218 = vector.shape_cast %217 : vector<1x8x32xbf16> to vector<8x32xbf16>
    %cst_194 = arith.constant dense<0.000000e+00> : vector<8x128xf32>
    %219 = tpu.matmul %218, %177, %cst_194 {dimension_numbers = #tpu.dot_dimension_numbers<[1], [0], [0], [1], [0, 0, 1, 1], [], []>} : vector<8x32xbf16>, vector<32x128xbf16>, vector<8x128xf32> -> vector<8x128xf32>
    %220 = arith.truncf %219 : vector<8x128xf32> to vector<8x128xbf16>
    %c5_195 = arith.constant 5 : index
    %c0_196 = arith.constant 0 : index
    %c0_197 = arith.constant 0 : index
    %221 = vector.load %arg9[%c5_195, %c0_196, %c0_197] : memref<9x128x256xbf16, #tpu.memory_space<vmem>>, vector<1x128x256xbf16>
    %222 = vector.shape_cast %221 : vector<1x128x256xbf16> to vector<128x256xbf16>
    %cst_198 = arith.constant dense<0.000000e+00> : vector<8x256xf32>
    %223 = tpu.matmul %220, %222, %cst_198 {dimension_numbers = #tpu.dot_dimension_numbers<[1], [0], [0], [1], [0, 0, 1, 1], [], []>} : vector<8x128xbf16>, vector<128x256xbf16>, vector<8x256xf32> -> vector<8x256xf32>
    %224 = arith.addf %216, %223 : vector<8x256xf32>
    %c6_199 = arith.constant 6 : index
    %c0_200 = arith.constant 0 : index
    %c0_201 = arith.constant 0 : index
    %225 = vector.load %arg8[%c6_199, %c0_200, %c0_201] : memref<9x8x32xbf16, #tpu.memory_space<vmem>>, vector<1x8x32xbf16>
    %226 = vector.shape_cast %225 : vector<1x8x32xbf16> to vector<8x32xbf16>
    %cst_202 = arith.constant dense<0.000000e+00> : vector<8x128xf32>
    %227 = tpu.matmul %226, %177, %cst_202 {dimension_numbers = #tpu.dot_dimension_numbers<[1], [0], [0], [1], [0, 0, 1, 1], [], []>} : vector<8x32xbf16>, vector<32x128xbf16>, vector<8x128xf32> -> vector<8x128xf32>
    %228 = arith.truncf %227 : vector<8x128xf32> to vector<8x128xbf16>
    %c6_203 = arith.constant 6 : index
    %c0_204 = arith.constant 0 : index
    %c0_205 = arith.constant 0 : index
    %229 = vector.load %arg9[%c6_203, %c0_204, %c0_205] : memref<9x128x256xbf16, #tpu.memory_space<vmem>>, vector<1x128x256xbf16>
    %230 = vector.shape_cast %229 : vector<1x128x256xbf16> to vector<128x256xbf16>
    %cst_206 = arith.constant dense<0.000000e+00> : vector<8x256xf32>
    %231 = tpu.matmul %228, %230, %cst_206 {dimension_numbers = #tpu.dot_dimension_numbers<[1], [0], [0], [1], [0, 0, 1, 1], [], []>} : vector<8x128xbf16>, vector<128x256xbf16>, vector<8x256xf32> -> vector<8x256xf32>
    %232 = arith.addf %224, %231 : vector<8x256xf32>
    %c7_207 = arith.constant 7 : index
    %c0_208 = arith.constant 0 : index
    %c0_209 = arith.constant 0 : index
    %233 = vector.load %arg8[%c7_207, %c0_208, %c0_209] : memref<9x8x32xbf16, #tpu.memory_space<vmem>>, vector<1x8x32xbf16>
    %234 = vector.shape_cast %233 : vector<1x8x32xbf16> to vector<8x32xbf16>
    %cst_210 = arith.constant dense<0.000000e+00> : vector<8x128xf32>
    %235 = tpu.matmul %234, %177, %cst_210 {dimension_numbers = #tpu.dot_dimension_numbers<[1], [0], [0], [1], [0, 0, 1, 1], [], []>} : vector<8x32xbf16>, vector<32x128xbf16>, vector<8x128xf32> -> vector<8x128xf32>
    %236 = arith.truncf %235 : vector<8x128xf32> to vector<8x128xbf16>
    %c7_211 = arith.constant 7 : index
    %c0_212 = arith.constant 0 : index
    %c0_213 = arith.constant 0 : index
    %237 = vector.load %arg9[%c7_211, %c0_212, %c0_213] : memref<9x128x256xbf16, #tpu.memory_space<vmem>>, vector<1x128x256xbf16>
    %238 = vector.shape_cast %237 : vector<1x128x256xbf16> to vector<128x256xbf16>
    %cst_214 = arith.constant dense<0.000000e+00> : vector<8x256xf32>
    %239 = tpu.matmul %236, %238, %cst_214 {dimension_numbers = #tpu.dot_dimension_numbers<[1], [0], [0], [1], [0, 0, 1, 1], [], []>} : vector<8x128xbf16>, vector<128x256xbf16>, vector<8x256xf32> -> vector<8x256xf32>
    %240 = arith.addf %232, %239 : vector<8x256xf32>
    %c8_215 = arith.constant 8 : index
    %c0_216 = arith.constant 0 : index
    %c0_217 = arith.constant 0 : index
    %241 = vector.load %arg8[%c8_215, %c0_216, %c0_217] : memref<9x8x32xbf16, #tpu.memory_space<vmem>>, vector<1x8x32xbf16>
    %242 = vector.shape_cast %241 : vector<1x8x32xbf16> to vector<8x32xbf16>
    %cst_218 = arith.constant dense<0.000000e+00> : vector<8x128xf32>
    %243 = tpu.matmul %242, %177, %cst_218 {dimension_numbers = #tpu.dot_dimension_numbers<[1], [0], [0], [1], [0, 0, 1, 1], [], []>} : vector<8x32xbf16>, vector<32x128xbf16>, vector<8x128xf32> -> vector<8x128xf32>
    %244 = arith.truncf %243 : vector<8x128xf32> to vector<8x128xbf16>
    %c8_219 = arith.constant 8 : index
    %c0_220 = arith.constant 0 : index
    %c0_221 = arith.constant 0 : index
    %245 = vector.load %arg9[%c8_219, %c0_220, %c0_221] : memref<9x128x256xbf16, #tpu.memory_space<vmem>>, vector<1x128x256xbf16>
    %246 = vector.shape_cast %245 : vector<1x128x256xbf16> to vector<128x256xbf16>
    %cst_222 = arith.constant dense<0.000000e+00> : vector<8x256xf32>
    %247 = tpu.matmul %244, %246, %cst_222 {dimension_numbers = #tpu.dot_dimension_numbers<[1], [0], [0], [1], [0, 0, 1, 1], [], []>} : vector<8x128xbf16>, vector<128x256xbf16>, vector<8x256xf32> -> vector<8x256xf32>
    %248 = arith.addf %240, %247 : vector<8x256xf32>
    %cst_223 = arith.constant dense<0.000000e+00> : vector<256xf32>
    %249 = vector.multi_reduction <add>, %248, %cst_223 [0] : vector<8x256xf32> to vector<256xf32>
    %250 = vector.shape_cast %249 : vector<256xf32> to vector<1x256xf32>
    %cst_224 = arith.constant 8.000000e+00 : f32
    %251 = vector.broadcast %cst_224 : f32 to vector<1x256xf32>
    %252 = arith.divf %250, %251 : vector<1x256xf32>
    %253 = vector.broadcast %252 : vector<1x256xf32> to vector<8x256xf32>
    %254 = arith.subf %248, %253 : vector<8x256xf32>
    %255 = arith.mulf %254, %254 : vector<8x256xf32>
    %cst_225 = arith.constant dense<0.000000e+00> : vector<256xf32>
    %256 = vector.multi_reduction <add>, %255, %cst_225 [0] : vector<8x256xf32> to vector<256xf32>
    %257 = vector.shape_cast %256 : vector<256xf32> to vector<1x256xf32>
    %cst_226 = arith.constant 8.000000e+00 : f32
    %258 = vector.broadcast %cst_226 : f32 to vector<1x256xf32>
    %259 = arith.divf %257, %258 : vector<1x256xf32>
    %cst_227 = arith.constant 9.99999974E-6 : f32
    %260 = vector.broadcast %cst_227 : f32 to vector<1x256xf32>
    %261 = arith.addf %259, %260 : vector<1x256xf32>
    %262 = math.rsqrt %261 : vector<1x256xf32>
    %263 = vector.broadcast %262 : vector<1x256xf32> to vector<8x256xf32>
    %264 = arith.mulf %254, %263 : vector<8x256xf32>
    %c0_228 = arith.constant 0 : index
    %c0_229 = arith.constant 0 : index
    %c0_230 = arith.constant 0 : index
    %265 = vector.load %arg10[%c0_228, %c0_229, %c0_230] : memref<2x1x256xf32, #tpu.memory_space<vmem>>, vector<1x1x256xf32>
    %266 = vector.shape_cast %265 : vector<1x1x256xf32> to vector<1x256xf32>
    %267 = vector.broadcast %266 : vector<1x256xf32> to vector<8x256xf32>
    %268 = arith.mulf %264, %267 : vector<8x256xf32>
    %c1_231 = arith.constant 1 : index
    %c0_232 = arith.constant 0 : index
    %c0_233 = arith.constant 0 : index
    %269 = vector.load %arg10[%c1_231, %c0_232, %c0_233] : memref<2x1x256xf32, #tpu.memory_space<vmem>>, vector<1x1x256xf32>
    %270 = vector.shape_cast %269 : vector<1x1x256xf32> to vector<1x256xf32>
    %271 = vector.broadcast %270 : vector<1x256xf32> to vector<8x256xf32>
    %272 = arith.addf %268, %271 : vector<8x256xf32>
    %cst_234 = arith.constant 0.00999999977 : f32
    %273 = vector.broadcast %cst_234 : f32 to vector<8x256xf32>
    %274 = arith.mulf %273, %272 : vector<8x256xf32>
    %275 = arith.maximumf %272, %274 : vector<8x256xf32>
    %276 = arith.truncf %275 : vector<8x256xf32> to vector<8x256xbf16>
    %c0_235 = arith.constant 0 : index
    %c0_236 = arith.constant 0 : index
    %c0_237 = arith.constant 0 : index
    %277 = vector.load %arg11[%c0_235, %c0_236, %c0_237] : memref<4x2x8xbf16, #tpu.memory_space<vmem>>, vector<1x2x8xbf16>
    %278 = vector.shape_cast %277 : vector<1x2x8xbf16> to vector<2x8xbf16>
    %cst_238 = arith.constant dense<0.000000e+00> : vector<2x256xf32>
    %279 = tpu.matmul %278, %276, %cst_238 {dimension_numbers = #tpu.dot_dimension_numbers<[1], [0], [0], [1], [0, 0, 1, 1], [], []>} : vector<2x8xbf16>, vector<8x256xbf16>, vector<2x256xf32> -> vector<2x256xf32>
    %280 = arith.truncf %279 : vector<2x256xf32> to vector<2x256xbf16>
    %c0_239 = arith.constant 0 : index
    %c0_240 = arith.constant 0 : index
    %c0_241 = arith.constant 0 : index
    %281 = vector.load %arg12[%c0_239, %c0_240, %c0_241] : memref<4x256x512xbf16, #tpu.memory_space<vmem>>, vector<1x256x512xbf16>
    %282 = vector.shape_cast %281 : vector<1x256x512xbf16> to vector<256x512xbf16>
    %cst_242 = arith.constant dense<0.000000e+00> : vector<2x512xf32>
    %283 = tpu.matmul %280, %282, %cst_242 {dimension_numbers = #tpu.dot_dimension_numbers<[1], [0], [0], [1], [0, 0, 1, 1], [], []>} : vector<2x256xbf16>, vector<256x512xbf16>, vector<2x512xf32> -> vector<2x512xf32>
    %c1_243 = arith.constant 1 : index
    %c0_244 = arith.constant 0 : index
    %c0_245 = arith.constant 0 : index
    %284 = vector.load %arg11[%c1_243, %c0_244, %c0_245] : memref<4x2x8xbf16, #tpu.memory_space<vmem>>, vector<1x2x8xbf16>
    %285 = vector.shape_cast %284 : vector<1x2x8xbf16> to vector<2x8xbf16>
    %cst_246 = arith.constant dense<0.000000e+00> : vector<2x256xf32>
    %286 = tpu.matmul %285, %276, %cst_246 {dimension_numbers = #tpu.dot_dimension_numbers<[1], [0], [0], [1], [0, 0, 1, 1], [], []>} : vector<2x8xbf16>, vector<8x256xbf16>, vector<2x256xf32> -> vector<2x256xf32>
    %287 = arith.truncf %286 : vector<2x256xf32> to vector<2x256xbf16>
    %c1_247 = arith.constant 1 : index
    %c0_248 = arith.constant 0 : index
    %c0_249 = arith.constant 0 : index
    %288 = vector.load %arg12[%c1_247, %c0_248, %c0_249] : memref<4x256x512xbf16, #tpu.memory_space<vmem>>, vector<1x256x512xbf16>
    %289 = vector.shape_cast %288 : vector<1x256x512xbf16> to vector<256x512xbf16>
    %cst_250 = arith.constant dense<0.000000e+00> : vector<2x512xf32>
    %290 = tpu.matmul %287, %289, %cst_250 {dimension_numbers = #tpu.dot_dimension_numbers<[1], [0], [0], [1], [0, 0, 1, 1], [], []>} : vector<2x256xbf16>, vector<256x512xbf16>, vector<2x512xf32> -> vector<2x512xf32>
    %291 = arith.addf %283, %290 : vector<2x512xf32>
    %c2_251 = arith.constant 2 : index
    %c0_252 = arith.constant 0 : index
    %c0_253 = arith.constant 0 : index
    %292 = vector.load %arg11[%c2_251, %c0_252, %c0_253] : memref<4x2x8xbf16, #tpu.memory_space<vmem>>, vector<1x2x8xbf16>
    %293 = vector.shape_cast %292 : vector<1x2x8xbf16> to vector<2x8xbf16>
    %cst_254 = arith.constant dense<0.000000e+00> : vector<2x256xf32>
    %294 = tpu.matmul %293, %276, %cst_254 {dimension_numbers = #tpu.dot_dimension_numbers<[1], [0], [0], [1], [0, 0, 1, 1], [], []>} : vector<2x8xbf16>, vector<8x256xbf16>, vector<2x256xf32> -> vector<2x256xf32>
    %295 = arith.truncf %294 : vector<2x256xf32> to vector<2x256xbf16>
    %c2_255 = arith.constant 2 : index
    %c0_256 = arith.constant 0 : index
    %c0_257 = arith.constant 0 : index
    %296 = vector.load %arg12[%c2_255, %c0_256, %c0_257] : memref<4x256x512xbf16, #tpu.memory_space<vmem>>, vector<1x256x512xbf16>
    %297 = vector.shape_cast %296 : vector<1x256x512xbf16> to vector<256x512xbf16>
    %cst_258 = arith.constant dense<0.000000e+00> : vector<2x512xf32>
    %298 = tpu.matmul %295, %297, %cst_258 {dimension_numbers = #tpu.dot_dimension_numbers<[1], [0], [0], [1], [0, 0, 1, 1], [], []>} : vector<2x256xbf16>, vector<256x512xbf16>, vector<2x512xf32> -> vector<2x512xf32>
    %299 = arith.addf %291, %298 : vector<2x512xf32>
    %c3_259 = arith.constant 3 : index
    %c0_260 = arith.constant 0 : index
    %c0_261 = arith.constant 0 : index
    %300 = vector.load %arg11[%c3_259, %c0_260, %c0_261] : memref<4x2x8xbf16, #tpu.memory_space<vmem>>, vector<1x2x8xbf16>
    %301 = vector.shape_cast %300 : vector<1x2x8xbf16> to vector<2x8xbf16>
    %cst_262 = arith.constant dense<0.000000e+00> : vector<2x256xf32>
    %302 = tpu.matmul %301, %276, %cst_262 {dimension_numbers = #tpu.dot_dimension_numbers<[1], [0], [0], [1], [0, 0, 1, 1], [], []>} : vector<2x8xbf16>, vector<8x256xbf16>, vector<2x256xf32> -> vector<2x256xf32>
    %303 = arith.truncf %302 : vector<2x256xf32> to vector<2x256xbf16>
    %c3_263 = arith.constant 3 : index
    %c0_264 = arith.constant 0 : index
    %c0_265 = arith.constant 0 : index
    %304 = vector.load %arg12[%c3_263, %c0_264, %c0_265] : memref<4x256x512xbf16, #tpu.memory_space<vmem>>, vector<1x256x512xbf16>
    %305 = vector.shape_cast %304 : vector<1x256x512xbf16> to vector<256x512xbf16>
    %cst_266 = arith.constant dense<0.000000e+00> : vector<2x512xf32>
    %306 = tpu.matmul %303, %305, %cst_266 {dimension_numbers = #tpu.dot_dimension_numbers<[1], [0], [0], [1], [0, 0, 1, 1], [], []>} : vector<2x256xbf16>, vector<256x512xbf16>, vector<2x512xf32> -> vector<2x512xf32>
    %307 = arith.addf %299, %306 : vector<2x512xf32>
    %cst_267 = arith.constant dense<0.000000e+00> : vector<512xf32>
    %308 = vector.multi_reduction <add>, %307, %cst_267 [0] : vector<2x512xf32> to vector<512xf32>
    %309 = vector.shape_cast %308 : vector<512xf32> to vector<1x512xf32>
    %cst_268 = arith.constant 2.000000e+00 : f32
    %310 = vector.broadcast %cst_268 : f32 to vector<1x512xf32>
    %311 = arith.divf %309, %310 : vector<1x512xf32>
    %312 = vector.broadcast %311 : vector<1x512xf32> to vector<2x512xf32>
    %313 = arith.subf %307, %312 : vector<2x512xf32>
    %314 = arith.mulf %313, %313 : vector<2x512xf32>
    %cst_269 = arith.constant dense<0.000000e+00> : vector<512xf32>
    %315 = vector.multi_reduction <add>, %314, %cst_269 [0] : vector<2x512xf32> to vector<512xf32>
    %316 = vector.shape_cast %315 : vector<512xf32> to vector<1x512xf32>
    %cst_270 = arith.constant 2.000000e+00 : f32
    %317 = vector.broadcast %cst_270 : f32 to vector<1x512xf32>
    %318 = arith.divf %316, %317 : vector<1x512xf32>
    %cst_271 = arith.constant 9.99999974E-6 : f32
    %319 = vector.broadcast %cst_271 : f32 to vector<1x512xf32>
    %320 = arith.addf %318, %319 : vector<1x512xf32>
    %321 = math.rsqrt %320 : vector<1x512xf32>
    %322 = vector.broadcast %321 : vector<1x512xf32> to vector<2x512xf32>
    %323 = arith.mulf %313, %322 : vector<2x512xf32>
    %c0_272 = arith.constant 0 : index
    %c0_273 = arith.constant 0 : index
    %c0_274 = arith.constant 0 : index
    %324 = vector.load %arg13[%c0_272, %c0_273, %c0_274] : memref<2x1x512xf32, #tpu.memory_space<vmem>>, vector<1x1x512xf32>
    %325 = vector.shape_cast %324 : vector<1x1x512xf32> to vector<1x512xf32>
    %326 = vector.broadcast %325 : vector<1x512xf32> to vector<2x512xf32>
    %327 = arith.mulf %323, %326 : vector<2x512xf32>
    %c1_275 = arith.constant 1 : index
    %c0_276 = arith.constant 0 : index
    %c0_277 = arith.constant 0 : index
    %328 = vector.load %arg13[%c1_275, %c0_276, %c0_277] : memref<2x1x512xf32, #tpu.memory_space<vmem>>, vector<1x1x512xf32>
    %329 = vector.shape_cast %328 : vector<1x1x512xf32> to vector<1x512xf32>
    %330 = vector.broadcast %329 : vector<1x512xf32> to vector<2x512xf32>
    %331 = arith.addf %327, %330 : vector<2x512xf32>
    %cst_278 = arith.constant 0.00999999977 : f32
    %332 = vector.broadcast %cst_278 : f32 to vector<2x512xf32>
    %333 = arith.mulf %332, %331 : vector<2x512xf32>
    %334 = arith.maximumf %331, %333 : vector<2x512xf32>
    %335 = arith.truncf %334 : vector<2x512xf32> to vector<2x512xbf16>
    %c0_279 = arith.constant 0 : index
    %c0_280 = arith.constant 0 : index
    %c0_281 = arith.constant 0 : index
    %336 = vector.load %arg14[%c0_279, %c0_280, %c0_281] : memref<1x2x2xbf16, #tpu.memory_space<vmem>>, vector<1x2x2xbf16>
    %337 = vector.shape_cast %336 : vector<1x2x2xbf16> to vector<2x2xbf16>
    %cst_282 = arith.constant dense<0.000000e+00> : vector<2x512xf32>
    %338 = tpu.matmul %337, %335, %cst_282 {dimension_numbers = #tpu.dot_dimension_numbers<[1], [0], [0], [1], [0, 0, 1, 1], [], []>} : vector<2x2xbf16>, vector<2x512xbf16>, vector<2x512xf32> -> vector<2x512xf32>
    %339 = arith.truncf %338 : vector<2x512xf32> to vector<2x512xbf16>
    %c0_283 = arith.constant 0 : index
    %c0_284 = arith.constant 0 : index
    %c0_285 = arith.constant 0 : index
    %340 = vector.load %arg15[%c0_283, %c0_284, %c0_285] : memref<1x512x128xbf16, #tpu.memory_space<vmem>>, vector<1x512x128xbf16>
    %341 = vector.shape_cast %340 : vector<1x512x128xbf16> to vector<512x128xbf16>
    %cst_286 = arith.constant dense<0.000000e+00> : vector<2x128xf32>
    %342 = tpu.matmul %339, %341, %cst_286 {dimension_numbers = #tpu.dot_dimension_numbers<[1], [0], [0], [1], [0, 0, 1, 1], [], []>} : vector<2x512xbf16>, vector<512x128xbf16>, vector<2x128xf32> -> vector<2x128xf32>
    %cst_287 = arith.constant dense<0.000000e+00> : vector<128xf32>
    %343 = vector.multi_reduction <add>, %342, %cst_287 [0] : vector<2x128xf32> to vector<128xf32>
    %344 = vector.shape_cast %343 : vector<128xf32> to vector<1x128xf32>
    %cst_288 = arith.constant 2.000000e+00 : f32
    %345 = vector.broadcast %cst_288 : f32 to vector<1x128xf32>
    %346 = arith.divf %344, %345 : vector<1x128xf32>
    %347 = vector.broadcast %346 : vector<1x128xf32> to vector<2x128xf32>
    %348 = arith.subf %342, %347 : vector<2x128xf32>
    %349 = arith.mulf %348, %348 : vector<2x128xf32>
    %cst_289 = arith.constant dense<0.000000e+00> : vector<128xf32>
    %350 = vector.multi_reduction <add>, %349, %cst_289 [0] : vector<2x128xf32> to vector<128xf32>
    %351 = vector.shape_cast %350 : vector<128xf32> to vector<1x128xf32>
    %cst_290 = arith.constant 2.000000e+00 : f32
    %352 = vector.broadcast %cst_290 : f32 to vector<1x128xf32>
    %353 = arith.divf %351, %352 : vector<1x128xf32>
    %cst_291 = arith.constant 9.99999974E-6 : f32
    %354 = vector.broadcast %cst_291 : f32 to vector<1x128xf32>
    %355 = arith.addf %353, %354 : vector<1x128xf32>
    %356 = math.rsqrt %355 : vector<1x128xf32>
    %357 = vector.broadcast %356 : vector<1x128xf32> to vector<2x128xf32>
    %358 = arith.mulf %348, %357 : vector<2x128xf32>
    %c0_292 = arith.constant 0 : index
    %c0_293 = arith.constant 0 : index
    %c0_294 = arith.constant 0 : index
    %359 = vector.load %arg16[%c0_292, %c0_293, %c0_294] : memref<2x1x128xf32, #tpu.memory_space<vmem>>, vector<1x1x128xf32>
    %360 = vector.shape_cast %359 : vector<1x1x128xf32> to vector<1x128xf32>
    %361 = vector.broadcast %360 : vector<1x128xf32> to vector<2x128xf32>
    %362 = arith.mulf %358, %361 : vector<2x128xf32>
    %c1_295 = arith.constant 1 : index
    %c0_296 = arith.constant 0 : index
    %c0_297 = arith.constant 0 : index
    %363 = vector.load %arg16[%c1_295, %c0_296, %c0_297] : memref<2x1x128xf32, #tpu.memory_space<vmem>>, vector<1x1x128xf32>
    %364 = vector.shape_cast %363 : vector<1x1x128xf32> to vector<1x128xf32>
    %365 = vector.broadcast %364 : vector<1x128xf32> to vector<2x128xf32>
    %366 = arith.addf %362, %365 : vector<2x128xf32>
    %367 = arith.negf %366 : vector<2x128xf32>
    %368 = math.exp %367 : vector<2x128xf32>
    %cst_298 = arith.constant 1.000000e+00 : f32
    %369 = vector.broadcast %cst_298 : f32 to vector<2x128xf32>
    %370 = arith.addf %369, %368 : vector<2x128xf32>
    %371 = arith.divf %369, %370 : vector<2x128xf32>
    %c0_299 = arith.constant 0 : index
    %c0_300 = arith.constant 0 : index
    %372 = vector.load %arg17[%c0_299, %c0_300] : memref<2x128xf32, #tpu.memory_space<vmem>>, vector<2x128xf32>
    tpu.vector_store %arg17[%c0_299, %c0_300], %371 {strides = array<i32>} : memref<2x128xf32, #tpu.memory_space<vmem>>, vector<2x128xf32>,
    return
  }
  func.func @transform_0(%arg0: i32) -> (i32, i32) {
    %c0_i32 = arith.constant 0 : i32
    %c0_i32_0 = arith.constant 0 : i32
    %c0_i32_1 = arith.constant 0 : i32
    return %c0_i32, %c0_i32_0 : i32, i32
  }
  func.func @transform_1(%arg0: i32) -> (i32, i32, i32) {
    %c0_i32 = arith.constant 0 : i32
    %c0_i32_0 = arith.constant 0 : i32
    %c0_i32_1 = arith.constant 0 : i32
    %c0_i32_2 = arith.constant 0 : i32
    return %c0_i32, %c0_i32_0, %c0_i32_1 : i32, i32, i32
  }
  func.func @transform_2(%arg0: i32) -> (i32, i32, i32) {
    %c0_i32 = arith.constant 0 : i32
    %c0_i32_0 = arith.constant 0 : i32
    %c0_i32_1 = arith.constant 0 : i32
    %c0_i32_2 = arith.constant 0 : i32
    return %c0_i32, %c0_i32_0, %c0_i32_1 : i32, i32, i32
  }
  func.func @transform_3(%arg0: i32) -> (i32, i32) {
    %c0_i32 = arith.constant 0 : i32
    %c0_i32_0 = arith.constant 0 : i32
    %c0_i32_1 = arith.constant 0 : i32
    return %c0_i32, %c0_i32_0 : i32, i32
  }
  func.func @transform_4(%arg0: i32) -> (i32, i32, i32) {
    %c0_i32 = arith.constant 0 : i32
    %c0_i32_0 = arith.constant 0 : i32
    %c0_i32_1 = arith.constant 0 : i32
    %c0_i32_2 = arith.constant 0 : i32
    return %c0_i32, %c0_i32_0, %c0_i32_1 : i32, i32, i32
  }
  func.func @transform_5(%arg0: i32) -> (i32, i32, i32) {
    %c0_i32 = arith.constant 0 : i32
    %c0_i32_0 = arith.constant 0 : i32
    %c0_i32_1 = arith.constant 0 : i32
    %c0_i32_2 = arith.constant 0 : i32
    return %c0_i32, %c0_i32_0, %c0_i32_1 : i32, i32, i32
  }
  func.func @transform_6(%arg0: i32) -> (i32, i32, i32) {
    %c0_i32 = arith.constant 0 : i32
    %c0_i32_0 = arith.constant 0 : i32
    %c0_i32_1 = arith.constant 0 : i32
    %c0_i32_2 = arith.constant 0 : i32
    return %c0_i32, %c0_i32_0, %c0_i32_1 : i32, i32, i32
  }
  func.func @transform_7(%arg0: i32) -> (i32, i32, i32) {
    %c0_i32 = arith.constant 0 : i32
    %c0_i32_0 = arith.constant 0 : i32
    %c0_i32_1 = arith.constant 0 : i32
    %c0_i32_2 = arith.constant 0 : i32
    return %c0_i32, %c0_i32_0, %c0_i32_1 : i32, i32, i32
  }
  func.func @transform_8(%arg0: i32) -> (i32, i32, i32) {
    %c0_i32 = arith.constant 0 : i32
    %c0_i32_0 = arith.constant 0 : i32
    %c0_i32_1 = arith.constant 0 : i32
    %c0_i32_2 = arith.constant 0 : i32
    return %c0_i32, %c0_i32_0, %c0_i32_1 : i32, i32, i32
  }
  func.func @transform_9(%arg0: i32) -> (i32, i32, i32) {
    %c0_i32 = arith.constant 0 : i32
    %c0_i32_0 = arith.constant 0 : i32
    %c0_i32_1 = arith.constant 0 : i32
    %c0_i32_2 = arith.constant 0 : i32
    return %c0_i32, %c0_i32_0, %c0_i32_1 : i32, i32, i32
  }
  func.func @transform_10(%arg0: i32) -> (i32, i32, i32) {
    %c0_i32 = arith.constant 0 : i32
    %c0_i32_0 = arith.constant 0 : i32
    %c0_i32_1 = arith.constant 0 : i32
    %c0_i32_2 = arith.constant 0 : i32
    return %c0_i32, %c0_i32_0, %c0_i32_1 : i32, i32, i32
  }
  func.func @transform_11(%arg0: i32) -> (i32, i32, i32) {
    %c0_i32 = arith.constant 0 : i32
    %c0_i32_0 = arith.constant 0 : i32
    %c0_i32_1 = arith.constant 0 : i32
    %c0_i32_2 = arith.constant 0 : i32
    return %c0_i32, %c0_i32_0, %c0_i32_1 : i32, i32, i32
  }
  func.func @transform_12(%arg0: i32) -> (i32, i32, i32) {
    %c0_i32 = arith.constant 0 : i32
    %c0_i32_0 = arith.constant 0 : i32
    %c0_i32_1 = arith.constant 0 : i32
    %c0_i32_2 = arith.constant 0 : i32
    return %c0_i32, %c0_i32_0, %c0_i32_1 : i32, i32, i32
  }
  func.func @transform_13(%arg0: i32) -> (i32, i32, i32) {
    %c0_i32 = arith.constant 0 : i32
    %c0_i32_0 = arith.constant 0 : i32
    %c0_i32_1 = arith.constant 0 : i32
    %c0_i32_2 = arith.constant 0 : i32
    return %c0_i32, %c0_i32_0, %c0_i32_1 : i32, i32, i32
  }
  func.func @transform_14(%arg0: i32) -> (i32, i32, i32) {
    %c0_i32 = arith.constant 0 : i32
    %c0_i32_0 = arith.constant 0 : i32
    %c0_i32_1 = arith.constant 0 : i32
    %c0_i32_2 = arith.constant 0 : i32
    return %c0_i32, %c0_i32_0, %c0_i32_1 : i32, i32, i32
  }
  func.func @transform_15(%arg0: i32) -> (i32, i32, i32) {
    %c0_i32 = arith.constant 0 : i32
    %c0_i32_0 = arith.constant 0 : i32
    %c0_i32_1 = arith.constant 0 : i32
    %c0_i32_2 = arith.constant 0 : i32
    return %c0_i32, %c0_i32_0, %c0_i32_1 : i32, i32, i32
  }
  func.func @transform_16(%arg0: i32) -> (i32, i32) {
    %c0_i32 = arith.constant 0 : i32
    %c0_i32_0 = arith.constant 0 : i32
    %c0_i32_1 = arith.constant 0 : i32
    return %c0_i32, %c0_i32_0 : i32, i32
  }
}

</mosaic_0001>

<llo_original>
// kernel: forward.1
$region0: #{forward.1}
  #allocation0 [shape = 'u32[]', space=smem, size = 0x4, offset = 0x4, fixed_abs, tag = 'smem constant byte address 0x4 - core index']
  #allocation1 [shape = 'u32[72,128]{1,0:T(1,128)}', space=vmem, size = 0x9000, scoped, tag = 'internal scratch']
  %s0 = inlined_call_operand.vmem [shape: bf16[512,6], index: 0, kind: input, shape index: {}]
  %s1 = inlined_call_operand.hbm [shape: bf16[9,128,512], index: 1, kind: input, shape index: {}]
  %s2 = inlined_call_operand.hbm [shape: bf16[9,6,64], index: 2, kind: input, shape index: {}]
  %s3 = inlined_call_operand.hbm [shape: f32[1,64], index: 3, kind: input, shape index: {}]
  %s4 = inlined_call_operand.hbm [shape: bf16[9,32,128], index: 4, kind: input, shape index: {}]
  %s5 = inlined_call_operand.hbm [shape: bf16[9,64,128], index: 5, kind: input, shape index: {}]
  %s6 = inlined_call_operand.hbm [shape: f32[2,1,128], index: 6, kind: input, shape index: {}]
  %s7 = inlined_call_operand.hbm [shape: bf16[9,8,32], index: 7, kind: input, shape index: {}]
  %s8 = inlined_call_operand.hbm [shape: bf16[9,128,256], index: 8, kind: input, shape index: {}]
  %s9 = inlined_call_operand.hbm [shape: f32[2,1,256], index: 9, kind: input, shape index: {}]
  %s10 = inlined_call_operand.hbm [shape: bf16[4,2,8], index: 10, kind: input, shape index: {}]
  %s11 = inlined_call_operand.hbm [shape: bf16[4,256,512], index: 11, kind: input, shape index: {}]
  %s12 = inlined_call_operand.hbm [shape: f32[2,1,512], index: 12, kind: input, shape index: {}]
  %s13 = inlined_call_operand.hbm [shape: bf16[1,2,2], index: 13, kind: input, shape index: {}]
  %s14 = inlined_call_operand.hbm [shape: bf16[1,512,128], index: 14, kind: input, shape index: {}]
  %s15 = inlined_call_operand.hbm [shape: f32[2,1,128], index: 15, kind: input, shape index: {}]
  %s16 = inlined_call_operand.vmem [shape: f32[2,128], index: 16, kind: output, shape index: {}]
  %s17 = sld [smem:[#allocation0]]
  $region134: #{forward.1} parent=0
    _
  %s19 = ssub.s32 1, %s17
  %s20 = scalar_select 0, %s19, %s17
  $region1: #{forward.1} parent=0
    #allocation2 [shape = 'u8[1179648]{0}', space=vmem, size = 0x120000, scoped, tag = 'input window, operand 1, single buffered']
    #allocation3 [shape = 's32[1]{0}', space=sflag, size = 0x4, scoped, tag = 'scoped memory for forward.1']
    #allocation4 [shape = 'u8[18432]{0}', space=vmem, size = 0x4800, scoped, tag = 'input window, operand 2, single buffered']
    #allocation5 [shape = 's32[1]{0}', space=sflag, size = 0x4, scoped, tag = 'scoped memory for forward.1']
    #allocation6 [shape = 'u8[512]{0}', space=vmem, size = 0x400, scoped, tag = 'input window, operand 3, single buffered']
    #allocation7 [shape = 'u8[73728]{0}', space=vmem, size = 0x12000, scoped, tag = 'input window, operand 4, single buffered']
    #allocation8 [shape = 's32[1]{0}', space=sflag, size = 0x4, scoped, tag = 'scoped memory for forward.1']
    #allocation9 [shape = 'u8[147456]{0}', space=vmem, size = 0x24000, scoped, tag = 'input window, operand 5, single buffered']
    #allocation10 [shape = 'u8[1024]{0}', space=vmem, size = 0x400, scoped, tag = 'input window, operand 6, single buffered']
    #allocation11 [shape = 's32[1]{0}', space=sflag, size = 0x4, scoped, tag = 'scoped memory for forward.1']
    #allocation12 [shape = 'u8[18432]{0}', space=vmem, size = 0x4800, scoped, tag = 'input window, operand 7, single buffered']
    #allocation13 [shape = 'u8[589824]{0}', space=vmem, size = 0x90000, scoped, tag = 'input window, operand 8, single buffered']
    #allocation14 [shape = 's32[1]{0}', space=sflag, size = 0x4, scoped, tag = 'scoped memory for forward.1']
    #allocation15 [shape = 'u8[2048]{0}', space=vmem, size = 0x800, scoped, tag = 'input window, operand 9, single buffered']
    #allocation16 [shape = 'u8[2048]{0}', space=vmem, size = 0x800, scoped, tag = 'input window, operand 10, single buffered']
    #allocation17 [shape = 's32[1]{0}', space=sflag, size = 0x4, scoped, tag = 'scoped memory for forward.1']
    #allocation18 [shape = 'u8[1048576]{0}', space=vmem, size = 0x100000, scoped, tag = 'input window, operand 11, single buffered']
    #allocation19 [shape = 'u8[4096]{0}', space=vmem, size = 0x1000, scoped, tag = 'input window, operand 12, single buffered']
    #allocation20 [shape = 's32[1]{0}', space=sflag, size = 0x4, scoped, tag = 'scoped memory for forward.1']
    #allocation21 [shape = 'u8[512]{0}', space=vmem, size = 0x400, scoped, tag = 'input window, operand 13, single buffered']
    #allocation22 [shape = 'u8[131072]{0}', space=vmem, size = 0x20000, scoped, tag = 'input window, operand 14, single buffered']
    #allocation23 [shape = 's32[1]{0}', space=sflag, size = 0x4, scoped, tag = 'scoped memory for forward.1']
    #allocation24 [shape = 'u8[1024]{0}', space=vmem, size = 0x400, scoped, tag = 'input window, operand 15, single buffered']
    %21 = vsyncpa [#allocation3], 0
    %22 = vsyncpa [#allocation5], 0
    %23 = vsyncpa [#allocation8], 0
    %24 = vsyncpa [#allocation11], 0
    %25 = vsyncpa [#allocation14], 0
    %26 = vsyncpa [#allocation17], 0
    %27 = vsyncpa [#allocation20], 0
    %28 = vsyncpa [#allocation23], 0
    // Predicated region
    $region2: #{forward.1} parent=1 // pred_check
      _
    $region3: #{forward.1} parent=1 // pred_check_branch
      %30 = sbr.rel (0) target = $region5
    $region4: #{forward.1} parent=1 // pred_region
      _
    $region5: #{forward.1} parent=1 // pred_fallthru
      _
    // Predicated region
    $region6: #{forward.1} parent=1 // pred_check
      _
    $region7: #{forward.1} parent=1 // pred_check_branch
      %32 = sbr.rel (0) target = $region9
    $region8: #{forward.1} parent=1 // pred_region
      %34 = vsyncadd [#allocation3], 0
      %s35 = sshll.u32 %s1, 4
      %s36 = int_to_ptr.hbm [resolvable:$true] %s35
      %s37 = sshll.u32 [#allocation2], 4
      %s38 = int_to_ptr.vmem [resolvable:$true] %s37
      %43 = dma.hbm_to_vmem [thread:$0]  %s36, 36864, %s38, [#allocation3], 256, 256, 16
    $region9: #{forward.1} parent=1 // pred_fallthru
      _
    // Predicated region
    $region10: #{forward.1} parent=1 // pred_check
      _
    $region11: #{forward.1} parent=1 // pred_check_branch
      %45 = sbr.rel (0) target = $region13
    $region12: #{forward.1} parent=1 // pred_region
      %47 = vsyncadd [#allocation5], 0
      %s48 = sshll.u32 %s2, 4
      %s49 = int_to_ptr.hbm [resolvable:$true] %s48
      %s50 = sshll.u32 [#allocation4], 4
      %s51 = int_to_ptr.vmem [resolvable:$true] %s50
      %56 = dma.hbm_to_vmem [thread:$0]  %s49, 576, %s51, [#allocation5], 64, 64, 4
    $region13: #{forward.1} parent=1 // pred_fallthru
      _
    // Predicated region
    $region14: #{forward.1} parent=1 // pred_check
      _
    $region15: #{forward.1} parent=1 // pred_check_branch
      %58 = sbr.rel (0) target = $region17
    $region16: #{forward.1} parent=1 // pred_region
      %60 = vsyncadd [#allocation5], 0
      %s62 = sshll.u32 %s3, 4
      %s63 = int_to_ptr.hbm [resolvable:$true] %s62
      %s64 = sshll.u32 [#allocation6], 4
      %s65 = int_to_ptr.vmem [resolvable:$true] %s64
      %67 = dma.hbm_to_vmem [thread:$0]  %s63, 16, %s65, [#allocation5]
    $region17: #{forward.1} parent=1 // pred_fallthru
      _
    // Predicated region
    $region18: #{forward.1} parent=1 // pred_check
      _
    $region19: #{forward.1} parent=1 // pred_check_branch
      %69 = sbr.rel (0) target = $region21
    $region20: #{forward.1} parent=1 // pred_region
      %71 = vsyncadd [#allocation8], 0
      %s72 = sshll.u32 %s4, 4
      %s73 = int_to_ptr.hbm [resolvable:$true] %s72
      %s74 = sshll.u32 [#allocation7], 4
      %s75 = int_to_ptr.vmem [resolvable:$true] %s74
      %80 = dma.hbm_to_vmem [thread:$0]  %s73, 2304, %s75, [#allocation8], 64, 64, 4
    $region21: #{forward.1} parent=1 // pred_fallthru
      _
    // Predicated region
    $region22: #{forward.1} parent=1 // pred_check
      _
    $region23: #{forward.1} parent=1 // pred_check_branch
      %82 = sbr.rel (0) target = $region25
    $region24: #{forward.1} parent=1 // pred_region
      %84 = vsyncadd [#allocation8], 0
      %s85 = sshll.u32 %s5, 4
      %s86 = int_to_ptr.hbm [resolvable:$true] %s85
      %s87 = sshll.u32 [#allocation9], 4
      %s88 = int_to_ptr.vmem [resolvable:$true] %s87
      %93 = dma.hbm_to_vmem [thread:$0]  %s86, 4608, %s88, [#allocation8], 64, 64, 4
    $region25: #{forward.1} parent=1 // pred_fallthru
      _
    // Predicated region
    $region26: #{forward.1} parent=1 // pred_check
      _
    $region27: #{forward.1} parent=1 // pred_check_branch
      %95 = sbr.rel (0) target = $region29
    $region28: #{forward.1} parent=1 // pred_region
      %97 = vsyncadd [#allocation11], 0
      %s98 = sshll.u32 %s6, 4
      %s99 = int_to_ptr.hbm [resolvable:$true] %s98
      %s100 = sshll.u32 [#allocation10], 4
      %s101 = int_to_ptr.vmem [resolvable:$true] %s100
      %106 = dma.hbm_to_vmem [thread:$0]  %s99, 32, %s101, [#allocation11], 16, 16, 1
    $region29: #{forward.1} parent=1 // pred_fallthru
      _
    // Predicated region
    $region30: #{forward.1} parent=1 // pred_check
      _
    $region31: #{forward.1} parent=1 // pred_check_branch
      %108 = sbr.rel (0) target = $region33
    $region32: #{forward.1} parent=1 // pred_region
      %110 = vsyncadd [#allocation11], 0
      %s111 = sshll.u32 %s7, 4
      %s112 = int_to_ptr.hbm [resolvable:$true] %s111
      %s113 = sshll.u32 [#allocation12], 4
      %s114 = int_to_ptr.vmem [resolvable:$true] %s113
      %119 = dma.hbm_to_vmem [thread:$0]  %s112, 576, %s114, [#allocation11], 64, 64, 4
    $region33: #{forward.1} parent=1 // pred_fallthru
      _
    // Predicated region
    $region34: #{forward.1} parent=1 // pred_check
      _
    $region35: #{forward.1} parent=1 // pred_check_branch
      %121 = sbr.rel (0) target = $region37
    $region36: #{forward.1} parent=1 // pred_region
      %123 = vsyncadd [#allocation14], 0
      %s124 = sshll.u32 %s8, 4
      %s125 = int_to_ptr.hbm [resolvable:$true] %s124
      %s126 = sshll.u32 [#allocation13], 4
      %s127 = int_to_ptr.vmem [resolvable:$true] %s126
      %132 = dma.hbm_to_vmem [thread:$0]  %s125, 18432, %s127, [#allocation14], 128, 128, 8
    $region37: #{forward.1} parent=1 // pred_fallthru
      _
    // Predicated region
    $region38: #{forward.1} parent=1 // pred_check
      _
    $region39: #{forward.1} parent=1 // pred_check_branch
      %134 = sbr.rel (0) target = $region41
    $region40: #{forward.1} parent=1 // pred_region
      %136 = vsyncadd [#allocation14], 0
      %s137 = sshll.u32 %s9, 4
      %s138 = int_to_ptr.hbm [resolvable:$true] %s137
      %s139 = sshll.u32 [#allocation15], 4
      %s140 = int_to_ptr.vmem [resolvable:$true] %s139
      %145 = dma.hbm_to_vmem [thread:$0]  %s138, 64, %s140, [#allocation14], 32, 32, 2
    $region41: #{forward.1} parent=1 // pred_fallthru
      _
    // Predicated region
    $region42: #{forward.1} parent=1 // pred_check
      _
    $region43: #{forward.1} parent=1 // pred_check_branch
      %147 = sbr.rel (0) target = $region45
    $region44: #{forward.1} parent=1 // pred_region
      %149 = vsyncadd [#allocation17], 0
      %s150 = sshll.u32 %s10, 4
      %s151 = int_to_ptr.hbm [resolvable:$true] %s150
      %s152 = sshll.u32 [#allocation16], 4
      %s153 = int_to_ptr.vmem [resolvable:$true] %s152
      %158 = dma.hbm_to_vmem [thread:$0]  %s151, 64, %s153, [#allocation17], 16, 16, 1
    $region45: #{forward.1} parent=1 // pred_fallthru
      _
    // Predicated region
    $region46: #{forward.1} parent=1 // pred_check
      _
    $region47: #{forward.1} parent=1 // pred_check_branch
      %160 = sbr.rel (0) target = $region49
    $region48: #{forward.1} parent=1 // pred_region
      %162 = vsyncadd [#allocation17], 0
      %s163 = sshll.u32 %s11, 4
      %s164 = int_to_ptr.hbm [resolvable:$true] %s163
      %s165 = sshll.u32 [#allocation18], 4
      %s166 = int_to_ptr.vmem [resolvable:$true] %s165
      %171 = dma.hbm_to_vmem [thread:$0]  %s164, 32768, %s166, [#allocation17], 256, 256, 16
    $region49: #{forward.1} parent=1 // pred_fallthru
      _
    // Predicated region
    $region50: #{forward.1} parent=1 // pred_check
      _
    $region51: #{forward.1} parent=1 // pred_check_branch
      %173 = sbr.rel (0) target = $region53
    $region52: #{forward.1} parent=1 // pred_region
      %175 = vsyncadd [#allocation20], 0
      %s176 = sshll.u32 %s12, 4
      %s177 = int_to_ptr.hbm [resolvable:$true] %s176
      %s178 = sshll.u32 [#allocation19], 4
      %s179 = int_to_ptr.vmem [resolvable:$true] %s178
      %184 = dma.hbm_to_vmem [thread:$0]  %s177, 128, %s179, [#allocation20], 64, 64, 4
    $region53: #{forward.1} parent=1 // pred_fallthru
      _
    // Predicated region
    $region54: #{forward.1} parent=1 // pred_check
      _
    $region55: #{forward.1} parent=1 // pred_check_branch
      %186 = sbr.rel (0) target = $region57
    $region56: #{forward.1} parent=1 // pred_region
      %188 = vsyncadd [#allocation20], 0
      %s190 = sshll.u32 %s13, 4
      %s191 = int_to_ptr.hbm [resolvable:$true] %s190
      %s192 = sshll.u32 [#allocation21], 4
      %s193 = int_to_ptr.vmem [resolvable:$true] %s192
      %195 = dma.hbm_to_vmem [thread:$0]  %s191, 16, %s193, [#allocation20]
    $region57: #{forward.1} parent=1 // pred_fallthru
      _
    // Predicated region
    $region58: #{forward.1} parent=1 // pred_check
      _
    $region59: #{forward.1} parent=1 // pred_check_branch
      %197 = sbr.rel (0) target = $region61
    $region60: #{forward.1} parent=1 // pred_region
      %199 = vsyncadd [#allocation23], 0
      %s200 = sshll.u32 %s14, 4
      %s201 = int_to_ptr.hbm [resolvable:$true] %s200
      %s202 = sshll.u32 [#allocation22], 4
      %s203 = int_to_ptr.vmem [resolvable:$true] %s202
      %208 = dma.hbm_to_vmem [thread:$0]  %s201, 4096, %s203, [#allocation23], 64, 64, 4
    $region61: #{forward.1} parent=1 // pred_fallthru
      _
    // Predicated region
    $region62: #{forward.1} parent=1 // pred_check
      _
    $region63: #{forward.1} parent=1 // pred_check_branch
      %210 = sbr.rel (0) target = $region65
    $region64: #{forward.1} parent=1 // pred_region
      %212 = vsyncadd [#allocation23], 0
      %s213 = sshll.u32 %s15, 4
      %s214 = int_to_ptr.hbm [resolvable:$true] %s213
      %s215 = sshll.u32 [#allocation24], 4
      %s216 = int_to_ptr.vmem [resolvable:$true] %s215
      %221 = dma.hbm_to_vmem [thread:$0]  %s214, 32, %s216, [#allocation23], 16, 16, 1
    $region65: #{forward.1} parent=1 // pred_fallthru
      _
    // Predicated region
    $region66: #{forward.1} parent=1 // pred_check
      _
    $region67: #{forward.1} parent=1 // pred_check_branch
      %223 = sbr.rel (0) target = $region69
    $region68: #{forward.1} parent=1 // pred_region
      %225 = dma.done [#allocation3], 36864
    $region69: #{forward.1} parent=1 // pred_fallthru
      _
    // Predicated region
    $region70: #{forward.1} parent=1 // pred_check
      _
    $region71: #{forward.1} parent=1 // pred_check_branch
      %227 = sbr.rel (0) target = $region73
    $region72: #{forward.1} parent=1 // pred_region
      %229 = dma.done [#allocation5], 576
    $region73: #{forward.1} parent=1 // pred_fallthru
      _
    // Predicated region
    $region74: #{forward.1} parent=1 // pred_check
      _
    $region75: #{forward.1} parent=1 // pred_check_branch
      %231 = sbr.rel (0) target = $region77
    $region76: #{forward.1} parent=1 // pred_region
      %233 = dma.done [#allocation5], 16
    $region77: #{forward.1} parent=1 // pred_fallthru
      _
    // Predicated region
    $region78: #{forward.1} parent=1 // pred_check
      _
    $region79: #{forward.1} parent=1 // pred_check_branch
      %235 = sbr.rel (0) target = $region81
    $region80: #{forward.1} parent=1 // pred_region
      %237 = dma.done [#allocation8], 2304
    $region81: #{forward.1} parent=1 // pred_fallthru
      _
    // Predicated region
    $region82: #{forward.1} parent=1 // pred_check
      _
    $region83: #{forward.1} parent=1 // pred_check_branch
      %239 = sbr.rel (0) target = $region85
    $region84: #{forward.1} parent=1 // pred_region
      %241 = dma.done [#allocation8], 4608
    $region85: #{forward.1} parent=1 // pred_fallthru
      _
    // Predicated region
    $region86: #{forward.1} parent=1 // pred_check
      _
    $region87: #{forward.1} parent=1 // pred_check_branch
      %243 = sbr.rel (0) target = $region89
    $region88: #{forward.1} parent=1 // pred_region
      %245 = dma.done [#allocation11], 32
    $region89: #{forward.1} parent=1 // pred_fallthru
      _
    // Predicated region
    $region90: #{forward.1} parent=1 // pred_check
      _
    $region91: #{forward.1} parent=1 // pred_check_branch
      %247 = sbr.rel (0) target = $region93
    $region92: #{forward.1} parent=1 // pred_region
      %249 = dma.done [#allocation11], 576
    $region93: #{forward.1} parent=1 // pred_fallthru
      _
    // Predicated region
    $region94: #{forward.1} parent=1 // pred_check
      _
    $region95: #{forward.1} parent=1 // pred_check_branch
      %251 = sbr.rel (0) target = $region97
    $region96: #{forward.1} parent=1 // pred_region
      %253 = dma.done [#allocation14], 18432
    $region97: #{forward.1} parent=1 // pred_fallthru
      _
    // Predicated region
    $region98: #{forward.1} parent=1 // pred_check
      _
    $region99: #{forward.1} parent=1 // pred_check_branch
      %255 = sbr.rel (0) target = $region101
    $region100: #{forward.1} parent=1 // pred_region
      %257 = dma.done [#allocation14], 64
    $region101: #{forward.1} parent=1 // pred_fallthru
      _
    // Predicated region
    $region102: #{forward.1} parent=1 // pred_check
      _
    $region103: #{forward.1} parent=1 // pred_check_branch
      %259 = sbr.rel (0) target = $region105
    $region104: #{forward.1} parent=1 // pred_region
      %261 = dma.done [#allocation17], 64
    $region105: #{forward.1} parent=1 // pred_fallthru
      _
    // Predicated region
    $region106: #{forward.1} parent=1 // pred_check
      _
    $region107: #{forward.1} parent=1 // pred_check_branch
      %263 = sbr.rel (0) target = $region109
    $region108: #{forward.1} parent=1 // pred_region
      %265 = dma.done [#allocation17], 32768
    $region109: #{forward.1} parent=1 // pred_fallthru
      _
    // Predicated region
    $region110: #{forward.1} parent=1 // pred_check
      _
    $region111: #{forward.1} parent=1 // pred_check_branch
      %267 = sbr.rel (0) target = $region113
    $region112: #{forward.1} parent=1 // pred_region
      %269 = dma.done [#allocation20], 128
    $region113: #{forward.1} parent=1 // pred_fallthru
      _
    // Predicated region
    $region114: #{forward.1} parent=1 // pred_check
      _
    $region115: #{forward.1} parent=1 // pred_check_branch
      %271 = sbr.rel (0) target = $region117
    $region116: #{forward.1} parent=1 // pred_region
      %273 = dma.done [#allocation20], 16
    $region117: #{forward.1} parent=1 // pred_fallthru
      _
    // Predicated region
    $region118: #{forward.1} parent=1 // pred_check
      _
    $region119: #{forward.1} parent=1 // pred_check_branch
      %275 = sbr.rel (0) target = $region121
    $region120: #{forward.1} parent=1 // pred_region
      %277 = dma.done [#allocation23], 4096
    $region121: #{forward.1} parent=1 // pred_fallthru
      _
    // Predicated region
    $region122: #{forward.1} parent=1 // pred_check
      _
    $region123: #{forward.1} parent=1 // pred_check_branch
      %279 = sbr.rel (0) target = $region125
    $region124: #{forward.1} parent=1 // pred_region
      %281 = dma.done [#allocation23], 32
    $region125: #{forward.1} parent=1 // pred_fallthru
      _
    %v283 = vld [vmem:[%s0] sm:$0xf]
    %v284 = vld [vmem:[%s0 + $0x4] sm:$0xf]
    %v285 = vld [vmem:[%s0 + $0x8] sm:$0xf]
    %v286 = vld [vmem:[%s0 + $0xc] sm:$0xf]
    %v287 = vld [vmem:[%s0 + $0x10] sm:$0xf]
    %v288 = vld [vmem:[%s0 + $0x14] sm:$0xf]
    %v289 = vld [vmem:[%s0 + $0x18] sm:$0xf]
    %v290 = vld [vmem:[%s0 + $0x1c] sm:$0xf]
    %v291 = vld [vmem:[%s0 + $0x20] sm:$0xf]
    %v292 = vld [vmem:[%s0 + $0x24] sm:$0xf]
    %v293 = vld [vmem:[%s0 + $0x28] sm:$0xf]
    %v294 = vld [vmem:[%s0 + $0x2c] sm:$0xf]
    %v295 = vld [vmem:[%s0 + $0x30] sm:$0xf]
    %v296 = vld [vmem:[%s0 + $0x34] sm:$0xf]
    %v297 = vld [vmem:[%s0 + $0x38] sm:$0xf]
    %v298 = vld [vmem:[%s0 + $0x3c] sm:$0xf]
    %v299 = vld [vmem:[%s0 + $0x40] sm:$0xf]
    %v300 = vld [vmem:[%s0 + $0x44] sm:$0xf]
    %v301 = vld [vmem:[%s0 + $0x48] sm:$0xf]
    %v302 = vld [vmem:[%s0 + $0x4c] sm:$0xf]
    %v303 = vld [vmem:[%s0 + $0x50] sm:$0xf]
    %v304 = vld [vmem:[%s0 + $0x54] sm:$0xf]
    %v305 = vld [vmem:[%s0 + $0x58] sm:$0xf]
    %v306 = vld [vmem:[%s0 + $0x5c] sm:$0xf]
    %v307 = vld [vmem:[%s0 + $0x60] sm:$0xf]
    %v308 = vld [vmem:[%s0 + $0x64] sm:$0xf]
    %v309 = vld [vmem:[%s0 + $0x68] sm:$0xf]
    %v310 = vld [vmem:[%s0 + $0x6c] sm:$0xf]
    %v311 = vld [vmem:[%s0 + $0x70] sm:$0xf]
    %v312 = vld [vmem:[%s0 + $0x74] sm:$0xf]
    %v313 = vld [vmem:[%s0 + $0x78] sm:$0xf]
    %v314 = vld [vmem:[%s0 + $0x7c] sm:$0xf]
    %v315 = vld [vmem:[%s0 + $0x80] sm:$0xf]
    %v316 = vld [vmem:[%s0 + $0x84] sm:$0xf]
    %v317 = vld [vmem:[%s0 + $0x88] sm:$0xf]
    %v318 = vld [vmem:[%s0 + $0x8c] sm:$0xf]
    %v319 = vld [vmem:[%s0 + $0x90] sm:$0xf]
    %v320 = vld [vmem:[%s0 + $0x94] sm:$0xf]
    %v321 = vld [vmem:[%s0 + $0x98] sm:$0xf]
    %v322 = vld [vmem:[%s0 + $0x9c] sm:$0xf]
    %v323 = vld [vmem:[%s0 + $0xa0] sm:$0xf]
    %v324 = vld [vmem:[%s0 + $0xa4] sm:$0xf]
    %v325 = vld [vmem:[%s0 + $0xa8] sm:$0xf]
    %v326 = vld [vmem:[%s0 + $0xac] sm:$0xf]
    %v327 = vld [vmem:[%s0 + $0xb0] sm:$0xf]
    %v328 = vld [vmem:[%s0 + $0xb4] sm:$0xf]
    %v329 = vld [vmem:[%s0 + $0xb8] sm:$0xf]
    %v330 = vld [vmem:[%s0 + $0xbc] sm:$0xf]
    %v331 = vld [vmem:[%s0 + $0xc0] sm:$0xf]
    %v332 = vld [vmem:[%s0 + $0xc4] sm:$0xf]
    %v333 = vld [vmem:[%s0 + $0xc8] sm:$0xf]
    %v334 = vld [vmem:[%s0 + $0xcc] sm:$0xf]
    %v335 = vld [vmem:[%s0 + $0xd0] sm:$0xf]
    %v336 = vld [vmem:[%s0 + $0xd4] sm:$0xf]
    %v337 = vld [vmem:[%s0 + $0xd8] sm:$0xf]
    %v338 = vld [vmem:[%s0 + $0xdc] sm:$0xf]
    %v339 = vld [vmem:[%s0 + $0xe0] sm:$0xf]
    %v340 = vld [vmem:[%s0 + $0xe4] sm:$0xf]
    %v341 = vld [vmem:[%s0 + $0xe8] sm:$0xf]
    %v342 = vld [vmem:[%s0 + $0xec] sm:$0xf]
    %v343 = vld [vmem:[%s0 + $0xf0] sm:$0xf]
    %v344 = vld [vmem:[%s0 + $0xf4] sm:$0xf]
    %v345 = vld [vmem:[%s0 + $0xf8] sm:$0xf]
    %v346 = vld [vmem:[%s0 + $0xfc] sm:$0xf]
    %v347 = vld [vmem:[#allocation2] sm:$0xff]
    %v348 = vld [vmem:[#allocation2 + $0x8] sm:$0xff]
    %v349 = vld [vmem:[#allocation2 + $0x10] sm:$0xff]
    %v350 = vld [vmem:[#allocation2 + $0x18] sm:$0xff]
    %v351 = vld [vmem:[#allocation2 + $0x20] sm:$0xff]
    %v352 = vld [vmem:[#allocation2 + $0x28] sm:$0xff]
    %v353 = vld [vmem:[#allocation2 + $0x30] sm:$0xff]
    %v354 = vld [vmem:[#allocation2 + $0x38] sm:$0xff]
    %v355 = vld [vmem:[#allocation2 + $0x40] sm:$0xff]
    %v356 = vld [vmem:[#allocation2 + $0x48] sm:$0xff]
    %v357 = vld [vmem:[#allocation2 + $0x50] sm:$0xff]
    %v358 = vld [vmem:[#allocation2 + $0x58] sm:$0xff]
    %v359 = vld [vmem:[#allocation2 + $0x60] sm:$0xff]
    %v360 = vld [vmem:[#allocation2 + $0x68] sm:$0xff]
    %v361 = vld [vmem:[#allocation2 + $0x70] sm:$0xff]
    %v362 = vld [vmem:[#allocation2 + $0x78] sm:$0xff]
    %v363 = vld [vmem:[#allocation2 + $0x80] sm:$0xff]
    %v364 = vld [vmem:[#allocation2 + $0x88] sm:$0xff]
    %v365 = vld [vmem:[#allocation2 + $0x90] sm:$0xff]
    %v366 = vld [vmem:[#allocation2 + $0x98] sm:$0xff]
    %v367 = vld [vmem:[#allocation2 + $0xa0] sm:$0xff]
    %v368 = vld [vmem:[#allocation2 + $0xa8] sm:$0xff]
    %v369 = vld [vmem:[#allocation2 + $0xb0] sm:$0xff]
    %v370 = vld [vmem:[#allocation2 + $0xb8] sm:$0xff]
    %v371 = vld [vmem:[#allocation2 + $0xc0] sm:$0xff]
    %v372 = vld [vmem:[#allocation2 + $0xc8] sm:$0xff]
    %v373 = vld [vmem:[#allocation2 + $0xd0] sm:$0xff]
    %v374 = vld [vmem:[#allocation2 + $0xd8] sm:$0xff]
    %v375 = vld [vmem:[#allocation2 + $0xe0] sm:$0xff]
    %v376 = vld [vmem:[#allocation2 + $0xe8] sm:$0xff]
    %v377 = vld [vmem:[#allocation2 + $0xf0] sm:$0xff]
    %v378 = vld [vmem:[#allocation2 + $0xf8] sm:$0xff]
    %v411 = vunpack.c.l.b16 %v347
    %v412 = vunpack.c.h.b16 %v347
    %v413 = vunpack.c.l.b16 %v348
    %v414 = vunpack.c.h.b16 %v348
    %v415 = vunpack.c.l.b16 %v349
    %v416 = vunpack.c.h.b16 %v349
    %v417 = vunpack.c.l.b16 %v350
    %v418 = vunpack.c.h.b16 %v350
    %v419 = vunpack.c.l.b16 %v351
    %v420 = vunpack.c.h.b16 %v351
    %v421 = vunpack.c.l.b16 %v352
    %v422 = vunpack.c.h.b16 %v352
    %v423 = vunpack.c.l.b16 %v353
    %v424 = vunpack.c.h.b16 %v353
    %v425 = vunpack.c.l.b16 %v354
    %v426 = vunpack.c.h.b16 %v354
    %v427 = vunpack.c.l.b16 %v355
    %v428 = vunpack.c.h.b16 %v355
    %v429 = vunpack.c.l.b16 %v356
    %v430 = vunpack.c.h.b16 %v356
    %v431 = vunpack.c.l.b16 %v357
    %v432 = vunpack.c.h.b16 %v357
    %v433 = vunpack.c.l.b16 %v358
    %v434 = vunpack.c.h.b16 %v358
    %v435 = vunpack.c.l.b16 %v359
    %v436 = vunpack.c.h.b16 %v359
    %v437 = vunpack.c.l.b16 %v360
    %v438 = vunpack.c.h.b16 %v360
    %v439 = vunpack.c.l.b16 %v361
    %v440 = vunpack.c.h.b16 %v361
    %v441 = vunpack.c.l.b16 %v362
    %v442 = vunpack.c.h.b16 %v362
    %v443 = vunpack.c.l.b16 %v363
    %v444 = vunpack.c.h.b16 %v363
    %v445 = vunpack.c.l.b16 %v364
    %v446 = vunpack.c.h.b16 %v364
    %v447 = vunpack.c.l.b16 %v365
    %v448 = vunpack.c.h.b16 %v365
    %v449 = vunpack.c.l.b16 %v366
    %v450 = vunpack.c.h.b16 %v366
    %v451 = vunpack.c.l.b16 %v367
    %v452 = vunpack.c.h.b16 %v367
    %v453 = vunpack.c.l.b16 %v368
    %v454 = vunpack.c.h.b16 %v368
    %v455 = vunpack.c.l.b16 %v369
    %v456 = vunpack.c.h.b16 %v369
    %v457 = vunpack.c.l.b16 %v370
    %v458 = vunpack.c.h.b16 %v370
    %v459 = vunpack.c.l.b16 %v371
    %v460 = vunpack.c.h.b16 %v371
    %v461 = vunpack.c.l.b16 %v372
    %v462 = vunpack.c.h.b16 %v372
    %v463 = vunpack.c.l.b16 %v373
    %v464 = vunpack.c.h.b16 %v373
    %v465 = vunpack.c.l.b16 %v374
    %v466 = vunpack.c.h.b16 %v374
    %v467 = vunpack.c.l.b16 %v375
    %v468 = vunpack.c.h.b16 %v375
    %v469 = vunpack.c.l.b16 %v376
    %v470 = vunpack.c.h.b16 %v376
    %v471 = vunpack.c.l.b16 %v377
    %v472 = vunpack.c.h.b16 %v377
    %v473 = vunpack.c.l.b16 %v378
    %v474 = vunpack.c.h.b16 %v378
    %v475 = vpack.c.b16 %v415, %v411
    %v476 = vpack.c.b16 %v416, %v412
    %v477 = vpack.c.b16 %v417, %v413
    %v478 = vpack.c.b16 %v418, %v414
    %v479 = vpack.c.b16 %v423, %v419
    %v480 = vpack.c.b16 %v424, %v420
    %v481 = vpack.c.b16 %v425, %v421
    %v482 = vpack.c.b16 %v426, %v422
    %v483 = vpack.c.b16 %v431, %v427
    %v484 = vpack.c.b16 %v432, %v428
    %v485 = vpack.c.b16 %v433, %v429
    %v486 = vpack.c.b16 %v434, %v430
    %v487 = vpack.c.b16 %v439, %v435
    %v488 = vpack.c.b16 %v440, %v436
    %v489 = vpack.c.b16 %v441, %v437
    %v490 = vpack.c.b16 %v442, %v438
    %v491 = vpack.c.b16 %v447, %v443
    %v492 = vpack.c.b16 %v448, %v444
    %v493 = vpack.c.b16 %v449, %v445
    %v494 = vpack.c.b16 %v450, %v446
    %v495 = vpack.c.b16 %v455, %v451
    %v496 = vpack.c.b16 %v456, %v452
    %v497 = vpack.c.b16 %v457, %v453
    %v498 = vpack.c.b16 %v458, %v454
    %v499 = vpack.c.b16 %v463, %v459
    %v500 = vpack.c.b16 %v464, %v460
    %v501 = vpack.c.b16 %v465, %v461
    %v502 = vpack.c.b16 %v466, %v462
    %v503 = vpack.c.b16 %v471, %v467
    %v504 = vpack.c.b16 %v472, %v468
    %v505 = vpack.c.b16 %v473, %v469
    %v506 = vpack.c.b16 %v474, %v470
    %v603 = vunpack.c.l.b16 %v283
    %v604 = vunpack.c.l.b16 %v284
    %v605 = vunpack.c.l.b16 %v285
    %v606 = vunpack.c.l.b16 %v286
    %v607 = vunpack.c.l.b16 %v287
    %v608 = vunpack.c.l.b16 %v288
    %v609 = vunpack.c.l.b16 %v289
    %v610 = vunpack.c.l.b16 %v290
    %v611 = vunpack.c.l.b16 %v291
    %v612 = vunpack.c.l.b16 %v292
    %v613 = vunpack.c.l.b16 %v293
    %v614 = vunpack.c.l.b16 %v294
    %v615 = vunpack.c.l.b16 %v295
    %v616 = vunpack.c.l.b16 %v296
    %v617 = vunpack.c.l.b16 %v297
    %v618 = vunpack.c.l.b16 %v298
    %v619 = vunpack.c.l.b16 %v299
    %v620 = vunpack.c.l.b16 %v300
    %v621 = vunpack.c.l.b16 %v301
    %v622 = vunpack.c.l.b16 %v302
    %v623 = vunpack.c.l.b16 %v303
    %v624 = vunpack.c.l.b16 %v304
    %v625 = vunpack.c.l.b16 %v305
    %v626 = vunpack.c.l.b16 %v306
    %v627 = vunpack.c.l.b16 %v307
    %v628 = vunpack.c.l.b16 %v308
    %v629 = vunpack.c.l.b16 %v309
    %v630 = vunpack.c.l.b16 %v310
    %v631 = vunpack.c.l.b16 %v311
    %v632 = vunpack.c.l.b16 %v312
    %v633 = vunpack.c.l.b16 %v313
    %v634 = vunpack.c.l.b16 %v314
    %v635 = vunpack.c.l.b16 %v315
    %v636 = vunpack.c.l.b16 %v316
    %v637 = vunpack.c.l.b16 %v317
    %v638 = vunpack.c.l.b16 %v318
    %v639 = vunpack.c.l.b16 %v319
    %v640 = vunpack.c.l.b16 %v320
    %v641 = vunpack.c.l.b16 %v321
    %v642 = vunpack.c.l.b16 %v322
    %v643 = vunpack.c.l.b16 %v323
    %v644 = vunpack.c.l.b16 %v324
    %v645 = vunpack.c.l.b16 %v325
    %v646 = vunpack.c.l.b16 %v326
    %v647 = vunpack.c.l.b16 %v327
    %v648 = vunpack.c.l.b16 %v328
    %v649 = vunpack.c.l.b16 %v329
    %v650 = vunpack.c.l.b16 %v330
    %v651 = vunpack.c.l.b16 %v331
    %v652 = vunpack.c.l.b16 %v332
    %v653 = vunpack.c.l.b16 %v333
    %v654 = vunpack.c.l.b16 %v334
    %v655 = vunpack.c.l.b16 %v335
    %v656 = vunpack.c.l.b16 %v336
    %v657 = vunpack.c.l.b16 %v337
    %v658 = vunpack.c.l.b16 %v338
    %v659 = vunpack.c.l.b16 %v339
    %v660 = vunpack.c.l.b16 %v340
    %v661 = vunpack.c.l.b16 %v341
    %v662 = vunpack.c.l.b16 %v342
    %v663 = vunpack.c.l.b16 %v343
    %v664 = vunpack.c.l.b16 %v344
    %v665 = vunpack.c.l.b16 %v345
    %v666 = vunpack.c.l.b16 %v346
    %v667 = vpack.c.b16 %v604, %v603
    %v668 = vpack.c.b16 %v606, %v605
    %v669 = vpack.c.b16 %v608, %v607
    %v670 = vpack.c.b16 %v610, %v609
    %v671 = vpack.c.b16 %v612, %v611
    %v672 = vpack.c.b16 %v614, %v613
    %v673 = vpack.c.b16 %v616, %v615
    %v674 = vpack.c.b16 %v618, %v617
    %v675 = vpack.c.b16 %v620, %v619
    %v676 = vpack.c.b16 %v622, %v621
    %v677 = vpack.c.b16 %v624, %v623
    %v678 = vpack.c.b16 %v626, %v625
    %v679 = vpack.c.b16 %v628, %v627
    %v680 = vpack.c.b16 %v630, %v629
    %v681 = vpack.c.b16 %v632, %v631
    %v682 = vpack.c.b16 %v634, %v633
    %v683 = vpack.c.b16 %v636, %v635
    %v684 = vpack.c.b16 %v638, %v637
    %v685 = vpack.c.b16 %v640, %v639
    %v686 = vpack.c.b16 %v642, %v641
    %v687 = vpack.c.b16 %v644, %v643
    %v688 = vpack.c.b16 %v646, %v645
    %v689 = vpack.c.b16 %v648, %v647
    %v690 = vpack.c.b16 %v650, %v649
    %v691 = vpack.c.b16 %v652, %v651
    %v692 = vpack.c.b16 %v654, %v653
    %v693 = vpack.c.b16 %v656, %v655
    %v694 = vpack.c.b16 %v658, %v657
    %v695 = vpack.c.b16 %v660, %v659
    %v696 = vpack.c.b16 %v662, %v661
    %v697 = vpack.c.b16 %v664, %v663
    %v698 = vpack.c.b16 %v666, %v665
    %731 = vmatpush.bf16.msra.mxu0 %v674
    %732 = vmatpush.bf16.msra.mxu0 %v673
    %733 = vmatpush.bf16.msra.mxu0 %v672
    %734 = vmatpush.bf16.msra.mxu0 %v671
    %735 = vmatpush.bf16.msra.mxu0 %v670
    %736 = vmatpush.bf16.msra.mxu0 %v669
    %737 = vmatpush.bf16.msra.mxu0 %v668
    %738 = vmatpush.bf16.msra.mxu0 %v667
    %739 = vmatmul.bf16.gmra.mxu0 %v475
    %v740 = vpop.f32.mrf.mxu0
    %v741 = vadd.f32 0.0, %v740
    %v742 = vpop.f32.mrf.mxu0
    %v743 = vadd.f32 0.0, %v742
    %744 = vmatmul.bf16.gmra.mxu0 %v479
    %v745 = vpop.f32.mrf.mxu0
    %v746 = vadd.f32 0.0, %v745
    %v747 = vpop.f32.mrf.mxu0
    %v748 = vadd.f32 0.0, %v747
    %749 = vmatmul.bf16.gmra.mxu0 %v483
    %v750 = vpop.f32.mrf.mxu0
    %v751 = vadd.f32 0.0, %v750
    %v752 = vpop.f32.mrf.mxu0
    %v753 = vadd.f32 0.0, %v752
    %754 = vmatmul.bf16.gmra.mxu0 %v487
    %v755 = vpop.f32.mrf.mxu0
    %v756 = vadd.f32 0.0, %v755
    %v757 = vpop.f32.mrf.mxu0
    %v758 = vadd.f32 0.0, %v757
    %759 = vmatmul.bf16.gmra.mxu0 %v491
    %v760 = vpop.f32.mrf.mxu0
    %v761 = vadd.f32 0.0, %v760
    %v762 = vpop.f32.mrf.mxu0
    %v763 = vadd.f32 0.0, %v762
    %764 = vmatmul.bf16.gmra.mxu0 %v495
    %v765 = vpop.f32.mrf.mxu0
    %v766 = vadd.f32 0.0, %v765
    %v767 = vpop.f32.mrf.mxu0
    %v768 = vadd.f32 0.0, %v767
    %769 = vmatmul.bf16.gmra.mxu0 %v499
    %v770 = vpop.f32.mrf.mxu0
    %v771 = vadd.f32 0.0, %v770
    %v772 = vpop.f32.mrf.mxu0
    %v773 = vadd.f32 0.0, %v772
    %774 = vmatmul.bf16.gmra.mxu0 %v503
    %v775 = vpop.f32.mrf.mxu0
    %v776 = vadd.f32 0.0, %v775
    %v777 = vpop.f32.mrf.mxu0
    %v778 = vadd.f32 0.0, %v777
    %779 = vdwg.mxu0
    %780 = vmatpush.bf16.msra.mxu0 %v682
    %781 = vmatpush.bf16.msra.mxu0 %v681
    %782 = vmatpush.bf16.msra.mxu0 %v680
    %783 = vmatpush.bf16.msra.mxu0 %v679
    %784 = vmatpush.bf16.msra.mxu0 %v678
    %785 = vmatpush.bf16.msra.mxu0 %v677
    %786 = vmatpush.bf16.msra.mxu0 %v676
    %787 = vmatpush.bf16.msra.mxu0 %v675
    %788 = vmatmul.bf16.gmra.mxu0 %v476
    %v789 = vpop.f32.mrf.mxu0
    %v790 = vadd.f32 %v741, %v789
    %v791 = vpop.f32.mrf.mxu0
    %v792 = vadd.f32 %v743, %v791
    %793 = vmatmul.bf16.gmra.mxu0 %v480
    %v794 = vpop.f32.mrf.mxu0
    %v795 = vadd.f32 %v746, %v794
    %v796 = vpop.f32.mrf.mxu0
    %v797 = vadd.f32 %v748, %v796
    %798 = vmatmul.bf16.gmra.mxu0 %v484
    %v799 = vpop.f32.mrf.mxu0
    %v800 = vadd.f32 %v751, %v799
    %v801 = vpop.f32.mrf.mxu0
    %v802 = vadd.f32 %v753, %v801
    %803 = vmatmul.bf16.gmra.mxu0 %v488
    %v804 = vpop.f32.mrf.mxu0
    %v805 = vadd.f32 %v756, %v804
    %v806 = vpop.f32.mrf.mxu0
    %v807 = vadd.f32 %v758, %v806
    %808 = vmatmul.bf16.gmra.mxu0 %v492
    %v809 = vpop.f32.mrf.mxu0
    %v810 = vadd.f32 %v761, %v809
    %v811 = vpop.f32.mrf.mxu0
    %v812 = vadd.f32 %v763, %v811
    %813 = vmatmul.bf16.gmra.mxu0 %v496
    %v814 = vpop.f32.mrf.mxu0
    %v815 = vadd.f32 %v766, %v814
    %v816 = vpop.f32.mrf.mxu0
    %v817 = vadd.f32 %v768, %v816
    %818 = vmatmul.bf16.gmra.mxu0 %v500
    %v819 = vpop.f32.mrf.mxu0
    %v820 = vadd.f32 %v771, %v819
    %v821 = vpop.f32.mrf.mxu0
    %v822 = vadd.f32 %v773, %v821
    %823 = vmatmul.bf16.gmra.mxu0 %v504
    %v824 = vpop.f32.mrf.mxu0
    %v825 = vadd.f32 %v776, %v824
    %v826 = vpop.f32.mrf.mxu0
    %v827 = vadd.f32 %v778, %v826
    %828 = vdwg.mxu0
    %829 = vmatpush.bf16.msra.mxu0 %v690
    %830 = vmatpush.bf16.msra.mxu0 %v689
    %831 = vmatpush.bf16.msra.mxu0 %v688
    %832 = vmatpush.bf16.msra.mxu0 %v687
    %833 = vmatpush.bf16.msra.mxu0 %v686
    %834 = vmatpush.bf16.msra.mxu0 %v685
    %835 = vmatpush.bf16.msra.mxu0 %v684
    %836 = vmatpush.bf16.msra.mxu0 %v683
    %837 = vmatmul.bf16.gmra.mxu0 %v477
    %v838 = vpop.f32.mrf.mxu0
    %v839 = vadd.f32 %v790, %v838
    %v840 = vpop.f32.mrf.mxu0
    %v841 = vadd.f32 %v792, %v840
    %842 = vmatmul.bf16.gmra.mxu0 %v481
    %v843 = vpop.f32.mrf.mxu0
    %v844 = vadd.f32 %v795, %v843
    %v845 = vpop.f32.mrf.mxu0
    %v846 = vadd.f32 %v797, %v845
    %847 = vmatmul.bf16.gmra.mxu0 %v485
    %v848 = vpop.f32.mrf.mxu0
    %v849 = vadd.f32 %v800, %v848
    %v850 = vpop.f32.mrf.mxu0
    %v851 = vadd.f32 %v802, %v850
    %852 = vmatmul.bf16.gmra.mxu0 %v489
    %v853 = vpop.f32.mrf.mxu0
    %v854 = vadd.f32 %v805, %v853
    %v855 = vpop.f32.mrf.mxu0
    %v856 = vadd.f32 %v807, %v855
    %857 = vmatmul.bf16.gmra.mxu0 %v493
    %v858 = vpop.f32.mrf.mxu0
    %v859 = vadd.f32 %v810, %v858
    %v860 = vpop.f32.mrf.mxu0
    %v861 = vadd.f32 %v812, %v860
    %862 = vmatmul.bf16.gmra.mxu0 %v497
    %v863 = vpop.f32.mrf.mxu0
    %v864 = vadd.f32 %v815, %v863
    %v865 = vpop.f32.mrf.mxu0
    %v866 = vadd.f32 %v817, %v865
    %867 = vmatmul.bf16.gmra.mxu0 %v501
    %v868 = vpop.f32.mrf.mxu0
    %v869 = vadd.f32 %v820, %v868
    %v870 = vpop.f32.mrf.mxu0
    %v871 = vadd.f32 %v822, %v870
    %872 = vmatmul.bf16.gmra.mxu0 %v505
    %v873 = vpop.f32.mrf.mxu0
    %v874 = vadd.f32 %v825, %v873
    %v875 = vpop.f32.mrf.mxu0
    %v876 = vadd.f32 %v827, %v875
    %877 = vdwg.mxu0
    %878 = vmatpush.bf16.msra.mxu0 %v698
    %879 = vmatpush.bf16.msra.mxu0 %v697
    %880 = vmatpush.bf16.msra.mxu0 %v696
    %881 = vmatpush.bf16.msra.mxu0 %v695
    %882 = vmatpush.bf16.msra.mxu0 %v694
    %883 = vmatpush.bf16.msra.mxu0 %v693
    %884 = vmatpush.bf16.msra.mxu0 %v692
    %885 = vmatpush.bf16.msra.mxu0 %v691
    %886 = vmatmul.bf16.gmra.mxu0 %v478
    %v887 = vpop.f32.mrf.mxu0
    %v888 = vadd.f32 %v839, %v887
    %v889 = vpop.f32.mrf.mxu0
    %v890 = vadd.f32 %v841, %v889
    %891 = vmatmul.bf16.gmra.mxu0 %v482
    %v892 = vpop.f32.mrf.mxu0
    %v893 = vadd.f32 %v844, %v892
    %v894 = vpop.f32.mrf.mxu0
    %v895 = vadd.f32 %v846, %v894
    %896 = vmatmul.bf16.gmra.mxu0 %v486
    %v897 = vpop.f32.mrf.mxu0
    %v898 = vadd.f32 %v849, %v897
    %v899 = vpop.f32.mrf.mxu0
    %v900 = vadd.f32 %v851, %v899
    %901 = vmatmul.bf16.gmra.mxu0 %v490
    %v902 = vpop.f32.mrf.mxu0
    %v903 = vadd.f32 %v854, %v902
    %v904 = vpop.f32.mrf.mxu0
    %v905 = vadd.f32 %v856, %v904
    %906 = vmatmul.bf16.gmra.mxu0 %v494
    %v907 = vpop.f32.mrf.mxu0
    %v908 = vadd.f32 %v859, %v907
    %v909 = vpop.f32.mrf.mxu0
    %v910 = vadd.f32 %v861, %v909
    %911 = vmatmul.bf16.gmra.mxu0 %v498
    %v912 = vpop.f32.mrf.mxu0
    %v913 = vadd.f32 %v864, %v912
    %v914 = vpop.f32.mrf.mxu0
    %v915 = vadd.f32 %v866, %v914
    %916 = vmatmul.bf16.gmra.mxu0 %v502
    %v917 = vpop.f32.mrf.mxu0
    %v918 = vadd.f32 %v869, %v917
    %v919 = vpop.f32.mrf.mxu0
    %v920 = vadd.f32 %v871, %v919
    %921 = vmatmul.bf16.gmra.mxu0 %v506
    %v922 = vpop.f32.mrf.mxu0
    %v923 = vadd.f32 %v874, %v922
    %v924 = vpop.f32.mrf.mxu0
    %v925 = vadd.f32 %v876, %v924
    %926 = vdwg.mxu0
    %v927 = vpack.c.bf16 %v890, %v888
    %v928 = vpack.c.bf16 %v895, %v893
    %v929 = vpack.c.bf16 %v900, %v898
    %v930 = vpack.c.bf16 %v905, %v903
    %v931 = vpack.c.bf16 %v910, %v908
    %v932 = vpack.c.bf16 %v915, %v913
    %v933 = vpack.c.bf16 %v920, %v918
    %v934 = vpack.c.bf16 %v925, %v923
    %v935 = vld [vmem:[#allocation4] sm:$0x7]
    %s936 = scalar_lea.vmem [#allocation2], 256
    %v937 = vld [vmem:[%s936] sm:$0xff]
    %v938 = vld [vmem:[%s936 + $0x8] sm:$0xff]
    %v939 = vld [vmem:[%s936 + $0x10] sm:$0xff]
    %v940 = vld [vmem:[%s936 + $0x18] sm:$0xff]
    %v941 = vld [vmem:[%s936 + $0x20] sm:$0xff]
    %v942 = vld [vmem:[%s936 + $0x28] sm:$0xff]
    %v943 = vld [vmem:[%s936 + $0x30] sm:$0xff]
    %v944 = vld [vmem:[%s936 + $0x38] sm:$0xff]
    %v945 = vld [vmem:[%s936 + $0x40] sm:$0xff]
    %v946 = vld [vmem:[%s936 + $0x48] sm:$0xff]
    %v947 = vld [vmem:[%s936 + $0x50] sm:$0xff]
    %v948 = vld [vmem:[%s936 + $0x58] sm:$0xff]
    %v949 = vld [vmem:[%s936 + $0x60] sm:$0xff]
    %v950 = vld [vmem:[%s936 + $0x68] sm:$0xff]
    %v951 = vld [vmem:[%s936 + $0x70] sm:$0xff]
    %v952 = vld [vmem:[%s936 + $0x78] sm:$0xff]
    %v953 = vld [vmem:[%s936 + $0x80] sm:$0xff]
    %v954 = vld [vmem:[%s936 + $0x88] sm:$0xff]
    %v955 = vld [vmem:[%s936 + $0x90] sm:$0xff]
    %v956 = vld [vmem:[%s936 + $0x98] sm:$0xff]
    %v957 = vld [vmem:[%s936 + $0xa0] sm:$0xff]
    %v958 = vld [vmem:[%s936 + $0xa8] sm:$0xff]
    %v959 = vld [vmem:[%s936 + $0xb0] sm:$0xff]
    %v960 = vld [vmem:[%s936 + $0xb8] sm:$0xff]
    %v961 = vld [vmem:[%s936 + $0xc0] sm:$0xff]
    %v962 = vld [vmem:[%s936 + $0xc8] sm:$0xff]
    %v963 = vld [vmem:[%s936 + $0xd0] sm:$0xff]
    %v964 = vld [vmem:[%s936 + $0xd8] sm:$0xff]
    %v965 = vld [vmem:[%s936 + $0xe0] sm:$0xff]
    %v966 = vld [vmem:[%s936 + $0xe8] sm:$0xff]
    %v967 = vld [vmem:[%s936 + $0xf0] sm:$0xff]
    %v968 = vld [vmem:[%s936 + $0xf8] sm:$0xff]
    %v1001 = vunpack.c.l.b16 %v937
    %v1002 = vunpack.c.h.b16 %v937
    %v1003 = vunpack.c.l.b16 %v938
    %v1004 = vunpack.c.h.b16 %v938
    %v1005 = vunpack.c.l.b16 %v939
    %v1006 = vunpack.c.h.b16 %v939
    %v1007 = vunpack.c.l.b16 %v940
    %v1008 = vunpack.c.h.b16 %v940
    %v1009 = vunpack.c.l.b16 %v941
    %v1010 = vunpack.c.h.b16 %v941
    %v1011 = vunpack.c.l.b16 %v942
    %v1012 = vunpack.c.h.b16 %v942
    %v1013 = vunpack.c.l.b16 %v943
    %v1014 = vunpack.c.h.b16 %v943
    %v1015 = vunpack.c.l.b16 %v944
    %v1016 = vunpack.c.h.b16 %v944
    %v1017 = vunpack.c.l.b16 %v945
    %v1018 = vunpack.c.h.b16 %v945
    %v1019 = vunpack.c.l.b16 %v946
    %v1020 = vunpack.c.h.b16 %v946
    %v1021 = vunpack.c.l.b16 %v947
    %v1022 = vunpack.c.h.b16 %v947
    %v1023 = vunpack.c.l.b16 %v948
    %v1024 = vunpack.c.h.b16 %v948
    %v1025 = vunpack.c.l.b16 %v949
    %v1026 = vunpack.c.h.b16 %v949
    %v1027 = vunpack.c.l.b16 %v950
    %v1028 = vunpack.c.h.b16 %v950
    %v1029 = vunpack.c.l.b16 %v951
    %v1030 = vunpack.c.h.b16 %v951
    %v1031 = vunpack.c.l.b16 %v952
    %v1032 = vunpack.c.h.b16 %v952
    %v1033 = vunpack.c.l.b16 %v953
    %v1034 = vunpack.c.h.b16 %v953
    %v1035 = vunpack.c.l.b16 %v954
    %v1036 = vunpack.c.h.b16 %v954
    %v1037 = vunpack.c.l.b16 %v955
    %v1038 = vunpack.c.h.b16 %v955
    %v1039 = vunpack.c.l.b16 %v956
    %v1040 = vunpack.c.h.b16 %v956
    %v1041 = vunpack.c.l.b16 %v957
    %v1042 = vunpack.c.h.b16 %v957
    %v1043 = vunpack.c.l.b16 %v958
    %v1044 = vunpack.c.h.b16 %v958
    %v1045 = vunpack.c.l.b16 %v959
    %v1046 = vunpack.c.h.b16 %v959
    %v1047 = vunpack.c.l.b16 %v960
    %v1048 = vunpack.c.h.b16 %v960
    %v1049 = vunpack.c.l.b16 %v961
    %v1050 = vunpack.c.h.b16 %v961
    %v1051 = vunpack.c.l.b16 %v962
    %v1052 = vunpack.c.h.b16 %v962
    %v1053 = vunpack.c.l.b16 %v963
    %v1054 = vunpack.c.h.b16 %v963
    %v1055 = vunpack.c.l.b16 %v964
    %v1056 = vunpack.c.h.b16 %v964
    %v1057 = vunpack.c.l.b16 %v965
    %v1058 = vunpack.c.h.b16 %v965
    %v1059 = vunpack.c.l.b16 %v966
    %v1060 = vunpack.c.h.b16 %v966
    %v1061 = vunpack.c.l.b16 %v967
    %v1062 = vunpack.c.h.b16 %v967
    %v1063 = vunpack.c.l.b16 %v968
    %v1064 = vunpack.c.h.b16 %v968
    %v1065 = vpack.c.b16 %v1005, %v1001
    %v1066 = vpack.c.b16 %v1006, %v1002
    %v1067 = vpack.c.b16 %v1007, %v1003
    %v1068 = vpack.c.b16 %v1008, %v1004
    %v1069 = vpack.c.b16 %v1013, %v1009
    %v1070 = vpack.c.b16 %v1014, %v1010
    %v1071 = vpack.c.b16 %v1015, %v1011
    %v1072 = vpack.c.b16 %v1016, %v1012
    %v1073 = vpack.c.b16 %v1021, %v1017
    %v1074 = vpack.c.b16 %v1022, %v1018
    %v1075 = vpack.c.b16 %v1023, %v1019
    %v1076 = vpack.c.b16 %v1024, %v1020
    %v1077 = vpack.c.b16 %v1029, %v1025
    %v1078 = vpack.c.b16 %v1030, %v1026
    %v1079 = vpack.c.b16 %v1031, %v1027
    %v1080 = vpack.c.b16 %v1032, %v1028
    %v1081 = vpack.c.b16 %v1037, %v1033
    %v1082 = vpack.c.b16 %v1038, %v1034
    %v1083 = vpack.c.b16 %v1039, %v1035
    %v1084 = vpack.c.b16 %v1040, %v1036
    %v1085 = vpack.c.b16 %v1045, %v1041
    %v1086 = vpack.c.b16 %v1046, %v1042
    %v1087 = vpack.c.b16 %v1047, %v1043
    %v1088 = vpack.c.b16 %v1048, %v1044
    %v1089 = vpack.c.b16 %v1053, %v1049
    %v1090 = vpack.c.b16 %v1054, %v1050
    %v1091 = vpack.c.b16 %v1055, %v1051
    %v1092 = vpack.c.b16 %v1056, %v1052
    %v1093 = vpack.c.b16 %v1061, %v1057
    %v1094 = vpack.c.b16 %v1062, %v1058
    %v1095 = vpack.c.b16 %v1063, %v1059
    %v1096 = vpack.c.b16 %v1064, %v1060
    %1129 = vmatpush.bf16.msra.mxu0 %v674
    %1130 = vmatpush.bf16.msra.mxu0 %v673
    %1131 = vmatpush.bf16.msra.mxu0 %v672
    %1132 = vmatpush.bf16.msra.mxu0 %v671
    %1133 = vmatpush.bf16.msra.mxu0 %v670
    %1134 = vmatpush.bf16.msra.mxu0 %v669
    %1135 = vmatpush.bf16.msra.mxu0 %v668
    %1136 = vmatpush.bf16.msra.mxu0 %v667
    %1137 = vmatmul.bf16.gmra.mxu0 %v1065
    %v1138 = vpop.f32.mrf.mxu0
    %v1139 = vadd.f32 0.0, %v1138
    %v1140 = vpop.f32.mrf.mxu0
    %v1141 = vadd.f32 0.0, %v1140
    %1142 = vmatmul.bf16.gmra.mxu0 %v1069
    %v1143 = vpop.f32.mrf.mxu0
    %v1144 = vadd.f32 0.0, %v1143
    %v1145 = vpop.f32.mrf.mxu0
    %v1146 = vadd.f32 0.0, %v1145
    %1147 = vmatmul.bf16.gmra.mxu0 %v1073
    %v1148 = vpop.f32.mrf.mxu0
    %v1149 = vadd.f32 0.0, %v1148
    %v1150 = vpop.f32.mrf.mxu0
    %v1151 = vadd.f32 0.0, %v1150
    %1152 = vmatmul.bf16.gmra.mxu0 %v1077
    %v1153 = vpop.f32.mrf.mxu0
    %v1154 = vadd.f32 0.0, %v1153
    %v1155 = vpop.f32.mrf.mxu0
    %v1156 = vadd.f32 0.0, %v1155
    %1157 = vmatmul.bf16.gmra.mxu0 %v1081
    %v1158 = vpop.f32.mrf.mxu0
    %v1159 = vadd.f32 0.0, %v1158
    %v1160 = vpop.f32.mrf.mxu0
    %v1161 = vadd.f32 0.0, %v1160
    %1162 = vmatmul.bf16.gmra.mxu0 %v1085
    %v1163 = vpop.f32.mrf.mxu0
    %v1164 = vadd.f32 0.0, %v1163
    %v1165 = vpop.f32.mrf.mxu0
    %v1166 = vadd.f32 0.0, %v1165
    %1167 = vmatmul.bf16.gmra.mxu0 %v1089
    %v1168 = vpop.f32.mrf.mxu0
    %v1169 = vadd.f32 0.0, %v1168
    %v1170 = vpop.f32.mrf.mxu0
    %v1171 = vadd.f32 0.0, %v1170
    %1172 = vmatmul.bf16.gmra.mxu0 %v1093
    %v1173 = vpop.f32.mrf.mxu0
    %v1174 = vadd.f32 0.0, %v1173
    %v1175 = vpop.f32.mrf.mxu0
    %v1176 = vadd.f32 0.0, %v1175
    %1177 = vdwg.mxu0
    %1178 = vmatpush.bf16.msra.mxu0 %v682
    %1179 = vmatpush.bf16.msra.mxu0 %v681
    %1180 = vmatpush.bf16.msra.mxu0 %v680
    %1181 = vmatpush.bf16.msra.mxu0 %v679
    %1182 = vmatpush.bf16.msra.mxu0 %v678
    %1183 = vmatpush.bf16.msra.mxu0 %v677
    %1184 = vmatpush.bf16.msra.mxu0 %v676
    %1185 = vmatpush.bf16.msra.mxu0 %v675
    %1186 = vmatmul.bf16.gmra.mxu0 %v1066
    %v1187 = vpop.f32.mrf.mxu0
    %v1188 = vadd.f32 %v1139, %v1187
    %v1189 = vpop.f32.mrf.mxu0
    %v1190 = vadd.f32 %v1141, %v1189
    %1191 = vmatmul.bf16.gmra.mxu0 %v1070
    %v1192 = vpop.f32.mrf.mxu0
    %v1193 = vadd.f32 %v1144, %v1192
    %v1194 = vpop.f32.mrf.mxu0
    %v1195 = vadd.f32 %v1146, %v1194
    %1196 = vmatmul.bf16.gmra.mxu0 %v1074
    %v1197 = vpop.f32.mrf.mxu0
    %v1198 = vadd.f32 %v1149, %v1197
    %v1199 = vpop.f32.mrf.mxu0
    %v1200 = vadd.f32 %v1151, %v1199
    %1201 = vmatmul.bf16.gmra.mxu0 %v1078
    %v1202 = vpop.f32.mrf.mxu0
    %v1203 = vadd.f32 %v1154, %v1202
    %v1204 = vpop.f32.mrf.mxu0
    %v1205 = vadd.f32 %v1156, %v1204
    %1206 = vmatmul.bf16.gmra.mxu0 %v1082
    %v1207 = vpop.f32.mrf.mxu0
    %v1208 = vadd.f32 %v1159, %v1207
    %v1209 = vpop.f32.mrf.mxu0
    %v1210 = vadd.f32 %v1161, %v1209
    %1211 = vmatmul.bf16.gmra.mxu0 %v1086
    %v1212 = vpop.f32.mrf.mxu0
    %v1213 = vadd.f32 %v1164, %v1212
    %v1214 = vpop.f32.mrf.mxu0
    %v1215 = vadd.f32 %v1166, %v1214
    %1216 = vmatmul.bf16.gmra.mxu0 %v1090
    %v1217 = vpop.f32.mrf.mxu0
    %v1218 = vadd.f32 %v1169, %v1217
    %v1219 = vpop.f32.mrf.mxu0
    %v1220 = vadd.f32 %v1171, %v1219
    %1221 = vmatmul.bf16.gmra.mxu0 %v1094
    %v1222 = vpop.f32.mrf.mxu0
    %v1223 = vadd.f32 %v1174, %v1222
    %v1224 = vpop.f32.mrf.mxu0
    %v1225 = vadd.f32 %v1176, %v1224
    %1226 = vdwg.mxu0
    %1227 = vmatpush.bf16.msra.mxu0 %v690
    %1228 = vmatpush.bf16.msra.mxu0 %v689
    %1229 = vmatpush.bf16.msra.mxu0 %v688
    %1230 = vmatpush.bf16.msra.mxu0 %v687
    %1231 = vmatpush.bf16.msra.mxu0 %v686
    %1232 = vmatpush.bf16.msra.mxu0 %v685
    %1233 = vmatpush.bf16.msra.mxu0 %v684
    %1234 = vmatpush.bf16.msra.mxu0 %v683
    %1235 = vmatmul.bf16.gmra.mxu0 %v1067
    %v1236 = vpop.f32.mrf.mxu0
    %v1237 = vadd.f32 %v1188, %v1236
    %v1238 = vpop.f32.mrf.mxu0
    %v1239 = vadd.f32 %v1190, %v1238
    %1240 = vmatmul.bf16.gmra.mxu0 %v1071
    %v1241 = vpop.f32.mrf.mxu0
    %v1242 = vadd.f32 %v1193, %v1241
    %v1243 = vpop.f32.mrf.mxu0
    %v1244 = vadd.f32 %v1195, %v1243
    %1245 = vmatmul.bf16.gmra.mxu0 %v1075
    %v1246 = vpop.f32.mrf.mxu0
    %v1247 = vadd.f32 %v1198, %v1246
    %v1248 = vpop.f32.mrf.mxu0
    %v1249 = vadd.f32 %v1200, %v1248
    %1250 = vmatmul.bf16.gmra.mxu0 %v1079
    %v1251 = vpop.f32.mrf.mxu0
    %v1252 = vadd.f32 %v1203, %v1251
    %v1253 = vpop.f32.mrf.mxu0
    %v1254 = vadd.f32 %v1205, %v1253
    %1255 = vmatmul.bf16.gmra.mxu0 %v1083
    %v1256 = vpop.f32.mrf.mxu0
    %v1257 = vadd.f32 %v1208, %v1256
    %v1258 = vpop.f32.mrf.mxu0
    %v1259 = vadd.f32 %v1210, %v1258
    %1260 = vmatmul.bf16.gmra.mxu0 %v1087
    %v1261 = vpop.f32.mrf.mxu0
    %v1262 = vadd.f32 %v1213, %v1261
    %v1263 = vpop.f32.mrf.mxu0
    %v1264 = vadd.f32 %v1215, %v1263
    %1265 = vmatmul.bf16.gmra.mxu0 %v1091
    %v1266 = vpop.f32.mrf.mxu0
    %v1267 = vadd.f32 %v1218, %v1266
    %v1268 = vpop.f32.mrf.mxu0
    %v1269 = vadd.f32 %v1220, %v1268
    %1270 = vmatmul.bf16.gmra.mxu0 %v1095
    %v1271 = vpop.f32.mrf.mxu0
    %v1272 = vadd.f32 %v1223, %v1271
    %v1273 = vpop.f32.mrf.mxu0
    %v1274 = vadd.f32 %v1225, %v1273
    %1275 = vdwg.mxu0
    %1276 = vmatpush.bf16.msra.mxu0 %v698
    %1277 = vmatpush.bf16.msra.mxu0 %v697
    %1278 = vmatpush.bf16.msra.mxu0 %v696
    %1279 = vmatpush.bf16.msra.mxu0 %v695
    %1280 = vmatpush.bf16.msra.mxu0 %v694
    %1281 = vmatpush.bf16.msra.mxu0 %v693
    %1282 = vmatpush.bf16.msra.mxu0 %v692
    %1283 = vmatpush.bf16.msra.mxu0 %v691
    %1284 = vmatmul.bf16.gmra.mxu0 %v1068
    %v1285 = vpop.f32.mrf.mxu0
    %v1286 = vadd.f32 %v1237, %v1285
    %v1287 = vpop.f32.mrf.mxu0
    %v1288 = vadd.f32 %v1239, %v1287
    %1289 = vmatmul.bf16.gmra.mxu0 %v1072
    %v1290 = vpop.f32.mrf.mxu0
    %v1291 = vadd.f32 %v1242, %v1290
    %v1292 = vpop.f32.mrf.mxu0
    %v1293 = vadd.f32 %v1244, %v1292
    %1294 = vmatmul.bf16.gmra.mxu0 %v1076
    %v1295 = vpop.f32.mrf.mxu0
    %v1296 = vadd.f32 %v1247, %v1295
    %v1297 = vpop.f32.mrf.mxu0
    %v1298 = vadd.f32 %v1249, %v1297
    %1299 = vmatmul.bf16.gmra.mxu0 %v1080
    %v1300 = vpop.f32.mrf.mxu0
    %v1301 = vadd.f32 %v1252, %v1300
    %v1302 = vpop.f32.mrf.mxu0
    %v1303 = vadd.f32 %v1254, %v1302
    %1304 = vmatmul.bf16.gmra.mxu0 %v1084
    %v1305 = vpop.f32.mrf.mxu0
    %v1306 = vadd.f32 %v1257, %v1305
    %v1307 = vpop.f32.mrf.mxu0
    %v1308 = vadd.f32 %v1259, %v1307
    %1309 = vmatmul.bf16.gmra.mxu0 %v1088
    %v1310 = vpop.f32.mrf.mxu0
    %v1311 = vadd.f32 %v1262, %v1310
    %v1312 = vpop.f32.mrf.mxu0
    %v1313 = vadd.f32 %v1264, %v1312
    %1314 = vmatmul.bf16.gmra.mxu0 %v1092
    %v1315 = vpop.f32.mrf.mxu0
    %v1316 = vadd.f32 %v1267, %v1315
    %v1317 = vpop.f32.mrf.mxu0
    %v1318 = vadd.f32 %v1269, %v1317
    %1319 = vmatmul.bf16.gmra.mxu0 %v1096
    %v1320 = vpop.f32.mrf.mxu0
    %v1321 = vadd.f32 %v1272, %v1320
    %v1322 = vpop.f32.mrf.mxu0
    %v1323 = vadd.f32 %v1274, %v1322
    %1324 = vdwg.mxu0
    %v1325 = vpack.c.bf16 %v1288, %v1286
    %v1326 = vpack.c.bf16 %v1293, %v1291
    %v1327 = vpack.c.bf16 %v1298, %v1296
    %v1328 = vpack.c.bf16 %v1303, %v1301
    %v1329 = vpack.c.bf16 %v1308, %v1306
    %v1330 = vpack.c.bf16 %v1313, %v1311
    %v1331 = vpack.c.bf16 %v1318, %v1316
    %v1332 = vpack.c.bf16 %v1323, %v1321
    %s1333 = scalar_lea.vmem [#allocation4], 4
    %v1334 = vld [vmem:[%s1333] sm:$0x7]
    %vm1335 = vcmask 48128
    %v1337 = vsel %vm1335, %v1325, 0
    %v1340 = vsel %vm1335, %v1326, 0
    %v1343 = vsel %vm1335, %v1327, 0
    %v1346 = vsel %vm1335, %v1328, 0
    %v1349 = vsel %vm1335, %v1329, 0
    %v1352 = vsel %vm1335, %v1330, 0
    %v1355 = vsel %vm1335, %v1331, 0
    %v1358 = vsel %vm1335, %v1332, 0
    %vm1360 = vcmask 1042432
    %v1362 = vsel %vm1360, %v1334, 0
    %1364 = vmatpush.bf16.msra.mxu0 0
    %1365 = vmatpush.bf16.msra.mxu0 0
    %1366 = vmatpush.bf16.msra.mxu0 0
    %1367 = vmatpush.bf16.msra.mxu0 0
    %1368 = vmatpush.bf16.msra.mxu0 0
    %1369 = vmatpush.bf16.msra.mxu0 0
    %1370 = vmatpush.bf16.msra.mxu0 0
    %1371 = vmatpush.bf16.msra.mxu0 %v1362
    %1372 = vmatmul.bf16.gmra.mxu0 %v1337
    %v1373 = vpop.f32.mrf.mxu0
    %v1374 = vadd.f32 0.0, %v1373
    %v1375 = vpop.f32.mrf.mxu0
    %v1376 = vadd.f32 0.0, %v1375
    %1377 = vmatmul.bf16.gmra.mxu0 %v1340
    %v1378 = vpop.f32.mrf.mxu0
    %v1379 = vadd.f32 0.0, %v1378
    %v1380 = vpop.f32.mrf.mxu0
    %v1381 = vadd.f32 0.0, %v1380
    %1382 = vmatmul.bf16.gmra.mxu0 %v1343
    %v1383 = vpop.f32.mrf.mxu0
    %v1384 = vadd.f32 0.0, %v1383
    %v1385 = vpop.f32.mrf.mxu0
    %v1386 = vadd.f32 0.0, %v1385
    %1387 = vmatmul.bf16.gmra.mxu0 %v1346
    %v1388 = vpop.f32.mrf.mxu0
    %v1389 = vadd.f32 0.0, %v1388
    %v1390 = vpop.f32.mrf.mxu0
    %v1391 = vadd.f32 0.0, %v1390
    %1392 = vmatmul.bf16.gmra.mxu0 %v1349
    %v1393 = vpop.f32.mrf.mxu0
    %v1394 = vadd.f32 0.0, %v1393
    %v1395 = vpop.f32.mrf.mxu0
    %v1396 = vadd.f32 0.0, %v1395
    %1397 = vmatmul.bf16.gmra.mxu0 %v1352
    %v1398 = vpop.f32.mrf.mxu0
    %v1399 = vadd.f32 0.0, %v1398
    %v1400 = vpop.f32.mrf.mxu0
    %v1401 = vadd.f32 0.0, %v1400
    %1402 = vmatmul.bf16.gmra.mxu0 %v1355
    %v1403 = vpop.f32.mrf.mxu0
    %v1404 = vadd.f32 0.0, %v1403
    %v1405 = vpop.f32.mrf.mxu0
    %v1406 = vadd.f32 0.0, %v1405
    %1407 = vmatmul.bf16.gmra.mxu0 %v1358
    %v1408 = vpop.f32.mrf.mxu0
    %v1409 = vadd.f32 0.0, %v1408
    %v1410 = vpop.f32.mrf.mxu0
    %v1411 = vadd.f32 0.0, %v1410
    %1412 = vdwg.mxu0
    %v1414 = vsel %vm1335, %v927, 0
    %v1417 = vsel %vm1335, %v928, 0
    %v1420 = vsel %vm1335, %v929, 0
    %v1423 = vsel %vm1335, %v930, 0
    %v1426 = vsel %vm1335, %v931, 0
    %v1429 = vsel %vm1335, %v932, 0
    %v1432 = vsel %vm1335, %v933, 0
    %v1435 = vsel %vm1335, %v934, 0
    %v1438 = vsel %vm1360, %v935, 0
    %1440 = vmatpush.bf16.msra.mxu0 0
    %1441 = vmatpush.bf16.msra.mxu0 0
    %1442 = vmatpush.bf16.msra.mxu0 0
    %1443 = vmatpush.bf16.msra.mxu0 0
    %1444 = vmatpush.bf16.msra.mxu0 0
    %1445 = vmatpush.bf16.msra.mxu0 0
    %1446 = vmatpush.bf16.msra.mxu0 0
    %1447 = vmatpush.bf16.msra.mxu0 %v1438
    %1448 = vmatmul.bf16.gmra.mxu0 %v1414
    %v1449 = vpop.f32.mrf.mxu0
    %v1450 = vadd.f32 %v1374, %v1449
    %v1451 = vpop.f32.mrf.mxu0
    %v1452 = vadd.f32 %v1376, %v1451
    %1453 = vmatmul.bf16.gmra.mxu0 %v1417
    %v1454 = vpop.f32.mrf.mxu0
    %v1455 = vadd.f32 %v1379, %v1454
    %v1456 = vpop.f32.mrf.mxu0
    %v1457 = vadd.f32 %v1381, %v1456
    %1458 = vmatmul.bf16.gmra.mxu0 %v1420
    %v1459 = vpop.f32.mrf.mxu0
    %v1460 = vadd.f32 %v1384, %v1459
    %v1461 = vpop.f32.mrf.mxu0
    %v1462 = vadd.f32 %v1386, %v1461
    %1463 = vmatmul.bf16.gmra.mxu0 %v1423
    %v1464 = vpop.f32.mrf.mxu0
    %v1465 = vadd.f32 %v1389, %v1464
    %v1466 = vpop.f32.mrf.mxu0
    %v1467 = vadd.f32 %v1391, %v1466
    %1468 = vmatmul.bf16.gmra.mxu0 %v1426
    %v1469 = vpop.f32.mrf.mxu0
    %v1470 = vadd.f32 %v1394, %v1469
    %v1471 = vpop.f32.mrf.mxu0
    %v1472 = vadd.f32 %v1396, %v1471
    %1473 = vmatmul.bf16.gmra.mxu0 %v1429
    %v1474 = vpop.f32.mrf.mxu0
    %v1475 = vadd.f32 %v1399, %v1474
    %v1476 = vpop.f32.mrf.mxu0
    %v1477 = vadd.f32 %v1401, %v1476
    %1478 = vmatmul.bf16.gmra.mxu0 %v1432
    %v1479 = vpop.f32.mrf.mxu0
    %v1480 = vadd.f32 %v1404, %v1479
    %v1481 = vpop.f32.mrf.mxu0
    %v1482 = vadd.f32 %v1406, %v1481
    %1483 = vmatmul.bf16.gmra.mxu0 %v1435
    %v1484 = vpop.f32.mrf.mxu0
    %v1485 = vadd.f32 %v1409, %v1484
    %v1486 = vpop.f32.mrf.mxu0
    %v1487 = vadd.f32 %v1411, %v1486
    %1488 = vdwg.mxu0
    %s1489 = scalar_lea.vmem [#allocation2], 512
    %v1490 = vld [vmem:[%s1489] sm:$0xff]
    %v1491 = vld [vmem:[%s1489 + $0x8] sm:$0xff]
    %v1492 = vld [vmem:[%s1489 + $0x10] sm:$0xff]
    %v1493 = vld [vmem:[%s1489 + $0x18] sm:$0xff]
    %v1494 = vld [vmem:[%s1489 + $0x20] sm:$0xff]
    %v1495 = vld [vmem:[%s1489 + $0x28] sm:$0xff]
    %v1496 = vld [vmem:[%s1489 + $0x30] sm:$0xff]
    %v1497 = vld [vmem:[%s1489 + $0x38] sm:$0xff]
    %v1498 = vld [vmem:[%s1489 + $0x40] sm:$0xff]
    %v1499 = vld [vmem:[%s1489 + $0x48] sm:$0xff]
    %v1500 = vld [vmem:[%s1489 + $0x50] sm:$0xff]
    %v1501 = vld [vmem:[%s1489 + $0x58] sm:$0xff]
    %v1502 = vld [vmem:[%s1489 + $0x60] sm:$0xff]
    %v1503 = vld [vmem:[%s1489 + $0x68] sm:$0xff]
    %v1504 = vld [vmem:[%s1489 + $0x70] sm:$0xff]
    %v1505 = vld [vmem:[%s1489 + $0x78] sm:$0xff]
    %v1506 = vld [vmem:[%s1489 + $0x80] sm:$0xff]
    %v1507 = vld [vmem:[%s1489 + $0x88] sm:$0xff]
    %v1508 = vld [vmem:[%s1489 + $0x90] sm:$0xff]
    %v1509 = vld [vmem:[%s1489 + $0x98] sm:$0xff]
    %v1510 = vld [vmem:[%s1489 + $0xa0] sm:$0xff]
    %v1511 = vld [vmem:[%s1489 + $0xa8] sm:$0xff]
    %v1512 = vld [vmem:[%s1489 + $0xb0] sm:$0xff]
    %v1513 = vld [vmem:[%s1489 + $0xb8] sm:$0xff]
    %v1514 = vld [vmem:[%s1489 + $0xc0] sm:$0xff]
    %v1515 = vld [vmem:[%s1489 + $0xc8] sm:$0xff]
    %v1516 = vld [vmem:[%s1489 + $0xd0] sm:$0xff]
    %v1517 = vld [vmem:[%s1489 + $0xd8] sm:$0xff]
    %v1518 = vld [vmem:[%s1489 + $0xe0] sm:$0xff]
    %v1519 = vld [vmem:[%s1489 + $0xe8] sm:$0xff]
    %v1520 = vld [vmem:[%s1489 + $0xf0] sm:$0xff]
    %v1521 = vld [vmem:[%s1489 + $0xf8] sm:$0xff]
    %v1554 = vunpack.c.l.b16 %v1490
    %v1555 = vunpack.c.h.b16 %v1490
    %v1556 = vunpack.c.l.b16 %v1491
    %v1557 = vunpack.c.h.b16 %v1491
    %v1558 = vunpack.c.l.b16 %v1492
    %v1559 = vunpack.c.h.b16 %v1492
    %v1560 = vunpack.c.l.b16 %v1493
    %v1561 = vunpack.c.h.b16 %v1493
    %v1562 = vunpack.c.l.b16 %v1494
    %v1563 = vunpack.c.h.b16 %v1494
    %v1564 = vunpack.c.l.b16 %v1495
    %v1565 = vunpack.c.h.b16 %v1495
    %v1566 = vunpack.c.l.b16 %v1496
    %v1567 = vunpack.c.h.b16 %v1496
    %v1568 = vunpack.c.l.b16 %v1497
    %v1569 = vunpack.c.h.b16 %v1497
    %v1570 = vunpack.c.l.b16 %v1498
    %v1571 = vunpack.c.h.b16 %v1498
    %v1572 = vunpack.c.l.b16 %v1499
    %v1573 = vunpack.c.h.b16 %v1499
    %v1574 = vunpack.c.l.b16 %v1500
    %v1575 = vunpack.c.h.b16 %v1500
    %v1576 = vunpack.c.l.b16 %v1501
    %v1577 = vunpack.c.h.b16 %v1501
    %v1578 = vunpack.c.l.b16 %v1502
    %v1579 = vunpack.c.h.b16 %v1502
    %v1580 = vunpack.c.l.b16 %v1503
    %v1581 = vunpack.c.h.b16 %v1503
    %v1582 = vunpack.c.l.b16 %v1504
    %v1583 = vunpack.c.h.b16 %v1504
    %v1584 = vunpack.c.l.b16 %v1505
    %v1585 = vunpack.c.h.b16 %v1505
    %v1586 = vunpack.c.l.b16 %v1506
    %v1587 = vunpack.c.h.b16 %v1506
    %v1588 = vunpack.c.l.b16 %v1507
    %v1589 = vunpack.c.h.b16 %v1507
    %v1590 = vunpack.c.l.b16 %v1508
    %v1591 = vunpack.c.h.b16 %v1508
    %v1592 = vunpack.c.l.b16 %v1509
    %v1593 = vunpack.c.h.b16 %v1509
    %v1594 = vunpack.c.l.b16 %v1510
    %v1595 = vunpack.c.h.b16 %v1510
    %v1596 = vunpack.c.l.b16 %v1511
    %v1597 = vunpack.c.h.b16 %v1511
    %v1598 = vunpack.c.l.b16 %v1512
    %v1599 = vunpack.c.h.b16 %v1512
    %v1600 = vunpack.c.l.b16 %v1513
    %v1601 = vunpack.c.h.b16 %v1513
    %v1602 = vunpack.c.l.b16 %v1514
    %v1603 = vunpack.c.h.b16 %v1514
    %v1604 = vunpack.c.l.b16 %v1515
    %v1605 = vunpack.c.h.b16 %v1515
    %v1606 = vunpack.c.l.b16 %v1516
    %v1607 = vunpack.c.h.b16 %v1516
    %v1608 = vunpack.c.l.b16 %v1517
    %v1609 = vunpack.c.h.b16 %v1517
    %v1610 = vunpack.c.l.b16 %v1518
    %v1611 = vunpack.c.h.b16 %v1518
    %v1612 = vunpack.c.l.b16 %v1519
    %v1613 = vunpack.c.h.b16 %v1519
    %v1614 = vunpack.c.l.b16 %v1520
    %v1615 = vunpack.c.h.b16 %v1520
    %v1616 = vunpack.c.l.b16 %v1521
    %v1617 = vunpack.c.h.b16 %v1521
    %v1618 = vpack.c.b16 %v1558, %v1554
    %v1619 = vpack.c.b16 %v1559, %v1555
    %v1620 = vpack.c.b16 %v1560, %v1556
    %v1621 = vpack.c.b16 %v1561, %v1557
    %v1622 = vpack.c.b16 %v1566, %v1562
    %v1623 = vpack.c.b16 %v1567, %v1563
    %v1624 = vpack.c.b16 %v1568, %v1564
    %v1625 = vpack.c.b16 %v1569, %v1565
    %v1626 = vpack.c.b16 %v1574, %v1570
    %v1627 = vpack.c.b16 %v1575, %v1571
    %v1628 = vpack.c.b16 %v1576, %v1572
    %v1629 = vpack.c.b16 %v1577, %v1573
    %v1630 = vpack.c.b16 %v1582, %v1578
    %v1631 = vpack.c.b16 %v1583, %v1579
    %v1632 = vpack.c.b16 %v1584, %v1580
    %v1633 = vpack.c.b16 %v1585, %v1581
    %v1634 = vpack.c.b16 %v1590, %v1586
    %v1635 = vpack.c.b16 %v1591, %v1587
    %v1636 = vpack.c.b16 %v1592, %v1588
    %v1637 = vpack.c.b16 %v1593, %v1589
    %v1638 = vpack.c.b16 %v1598, %v1594
    %v1639 = vpack.c.b16 %v1599, %v1595
    %v1640 = vpack.c.b16 %v1600, %v1596
    %v1641 = vpack.c.b16 %v1601, %v1597
    %v1642 = vpack.c.b16 %v1606, %v1602
    %v1643 = vpack.c.b16 %v1607, %v1603
    %v1644 = vpack.c.b16 %v1608, %v1604
    %v1645 = vpack.c.b16 %v1609, %v1605
    %v1646 = vpack.c.b16 %v1614, %v1610
    %v1647 = vpack.c.b16 %v1615, %v1611
    %v1648 = vpack.c.b16 %v1616, %v1612
    %v1649 = vpack.c.b16 %v1617, %v1613
    %1682 = vmatpush.bf16.msra.mxu0 %v674
    %1683 = vmatpush.bf16.msra.mxu0 %v673
    %1684 = vmatpush.bf16.msra.mxu0 %v672
    %1685 = vmatpush.bf16.msra.mxu0 %v671
    %1686 = vmatpush.bf16.msra.mxu0 %v670
    %1687 = vmatpush.bf16.msra.mxu0 %v669
    %1688 = vmatpush.bf16.msra.mxu0 %v668
    %1689 = vmatpush.bf16.msra.mxu0 %v667
    %1690 = vmatmul.bf16.gmra.mxu0 %v1618
    %v1691 = vpop.f32.mrf.mxu0
    %v1692 = vadd.f32 0.0, %v1691
    %v1693 = vpop.f32.mrf.mxu0
    %v1694 = vadd.f32 0.0, %v1693
    %1695 = vmatmul.bf16.gmra.mxu0 %v1622
    %v1696 = vpop.f32.mrf.mxu0
    %v1697 = vadd.f32 0.0, %v1696
    %v1698 = vpop.f32.mrf.mxu0
    %v1699 = vadd.f32 0.0, %v1698
    %1700 = vmatmul.bf16.gmra.mxu0 %v1626
    %v1701 = vpop.f32.mrf.mxu0
    %v1702 = vadd.f32 0.0, %v1701
    %v1703 = vpop.f32.mrf.mxu0
    %v1704 = vadd.f32 0.0, %v1703
    %1705 = vmatmul.bf16.gmra.mxu0 %v1630
    %v1706 = vpop.f32.mrf.mxu0
    %v1707 = vadd.f32 0.0, %v1706
    %v1708 = vpop.f32.mrf.mxu0
    %v1709 = vadd.f32 0.0, %v1708
    %1710 = vmatmul.bf16.gmra.mxu0 %v1634
    %v1711 = vpop.f32.mrf.mxu0
    %v1712 = vadd.f32 0.0, %v1711
    %v1713 = vpop.f32.mrf.mxu0
    %v1714 = vadd.f32 0.0, %v1713
    %1715 = vmatmul.bf16.gmra.mxu0 %v1638
    %v1716 = vpop.f32.mrf.mxu0
    %v1717 = vadd.f32 0.0, %v1716
    %v1718 = vpop.f32.mrf.mxu0
    %v1719 = vadd.f32 0.0, %v1718
    %1720 = vmatmul.bf16.gmra.mxu0 %v1642
    %v1721 = vpop.f32.mrf.mxu0
    %v1722 = vadd.f32 0.0, %v1721
    %v1723 = vpop.f32.mrf.mxu0
    %v1724 = vadd.f32 0.0, %v1723
    %1725 = vmatmul.bf16.gmra.mxu0 %v1646
    %v1726 = vpop.f32.mrf.mxu0
    %v1727 = vadd.f32 0.0, %v1726
    %v1728 = vpop.f32.mrf.mxu0
    %v1729 = vadd.f32 0.0, %v1728
    %1730 = vdwg.mxu0
    %1731 = vmatpush.bf16.msra.mxu0 %v682
    %1732 = vmatpush.bf16.msra.mxu0 %v681
    %1733 = vmatpush.bf16.msra.mxu0 %v680
    %1734 = vmatpush.bf16.msra.mxu0 %v679
    %1735 = vmatpush.bf16.msra.mxu0 %v678
    %1736 = vmatpush.bf16.msra.mxu0 %v677
    %1737 = vmatpush.bf16.msra.mxu0 %v676
    %1738 = vmatpush.bf16.msra.mxu0 %v675
    %1739 = vmatmul.bf16.gmra.mxu0 %v1619
    %v1740 = vpop.f32.mrf.mxu0
    %v1741 = vadd.f32 %v1692, %v1740
    %v1742 = vpop.f32.mrf.mxu0
    %v1743 = vadd.f32 %v1694, %v1742
    %1744 = vmatmul.bf16.gmra.mxu0 %v1623
    %v1745 = vpop.f32.mrf.mxu0
    %v1746 = vadd.f32 %v1697, %v1745
    %v1747 = vpop.f32.mrf.mxu0
    %v1748 = vadd.f32 %v1699, %v1747
    %1749 = vmatmul.bf16.gmra.mxu0 %v1627
    %v1750 = vpop.f32.mrf.mxu0
    %v1751 = vadd.f32 %v1702, %v1750
    %v1752 = vpop.f32.mrf.mxu0
    %v1753 = vadd.f32 %v1704, %v1752
    %1754 = vmatmul.bf16.gmra.mxu0 %v1631
    %v1755 = vpop.f32.mrf.mxu0
    %v1756 = vadd.f32 %v1707, %v1755
    %v1757 = vpop.f32.mrf.mxu0
    %v1758 = vadd.f32 %v1709, %v1757
    %1759 = vmatmul.bf16.gmra.mxu0 %v1635
    %v1760 = vpop.f32.mrf.mxu0
    %v1761 = vadd.f32 %v1712, %v1760
    %v1762 = vpop.f32.mrf.mxu0
    %v1763 = vadd.f32 %v1714, %v1762
    %1764 = vmatmul.bf16.gmra.mxu0 %v1639
    %v1765 = vpop.f32.mrf.mxu0
    %v1766 = vadd.f32 %v1717, %v1765
    %v1767 = vpop.f32.mrf.mxu0
    %v1768 = vadd.f32 %v1719, %v1767
    %1769 = vmatmul.bf16.gmra.mxu0 %v1643
    %v1770 = vpop.f32.mrf.mxu0
    %v1771 = vadd.f32 %v1722, %v1770
    %v1772 = vpop.f32.mrf.mxu0
    %v1773 = vadd.f32 %v1724, %v1772
    %1774 = vmatmul.bf16.gmra.mxu0 %v1647
    %v1775 = vpop.f32.mrf.mxu0
    %v1776 = vadd.f32 %v1727, %v1775
    %v1777 = vpop.f32.mrf.mxu0
    %v1778 = vadd.f32 %v1729, %v1777
    %1779 = vdwg.mxu0
    %1780 = vmatpush.bf16.msra.mxu0 %v690
    %1781 = vmatpush.bf16.msra.mxu0 %v689
    %1782 = vmatpush.bf16.msra.mxu0 %v688
    %1783 = vmatpush.bf16.msra.mxu0 %v687
    %1784 = vmatpush.bf16.msra.mxu0 %v686
    %1785 = vmatpush.bf16.msra.mxu0 %v685
    %1786 = vmatpush.bf16.msra.mxu0 %v684
    %1787 = vmatpush.bf16.msra.mxu0 %v683
    %1788 = vmatmul.bf16.gmra.mxu0 %v1620
    %v1789 = vpop.f32.mrf.mxu0
    %v1790 = vadd.f32 %v1741, %v1789
    %v1791 = vpop.f32.mrf.mxu0
    %v1792 = vadd.f32 %v1743, %v1791
    %1793 = vmatmul.bf16.gmra.mxu0 %v1624
    %v1794 = vpop.f32.mrf.mxu0
    %v1795 = vadd.f32 %v1746, %v1794
    %v1796 = vpop.f32.mrf.mxu0
    %v1797 = vadd.f32 %v1748, %v1796
    %1798 = vmatmul.bf16.gmra.mxu0 %v1628
    %v1799 = vpop.f32.mrf.mxu0
    %v1800 = vadd.f32 %v1751, %v1799
    %v1801 = vpop.f32.mrf.mxu0
    %v1802 = vadd.f32 %v1753, %v1801
    %1803 = vmatmul.bf16.gmra.mxu0 %v1632
    %v1804 = vpop.f32.mrf.mxu0
    %v1805 = vadd.f32 %v1756, %v1804
    %v1806 = vpop.f32.mrf.mxu0
    %v1807 = vadd.f32 %v1758, %v1806
    %1808 = vmatmul.bf16.gmra.mxu0 %v1636
    %v1809 = vpop.f32.mrf.mxu0
    %v1810 = vadd.f32 %v1761, %v1809
    %v1811 = vpop.f32.mrf.mxu0
    %v1812 = vadd.f32 %v1763, %v1811
    %1813 = vmatmul.bf16.gmra.mxu0 %v1640
    %v1814 = vpop.f32.mrf.mxu0
    %v1815 = vadd.f32 %v1766, %v1814
    %v1816 = vpop.f32.mrf.mxu0
    %v1817 = vadd.f32 %v1768, %v1816
    %1818 = vmatmul.bf16.gmra.mxu0 %v1644
    %v1819 = vpop.f32.mrf.mxu0
    %v1820 = vadd.f32 %v1771, %v1819
    %v1821 = vpop.f32.mrf.mxu0
    %v1822 = vadd.f32 %v1773, %v1821
    %1823 = vmatmul.bf16.gmra.mxu0 %v1648
    %v1824 = vpop.f32.mrf.mxu0
    %v1825 = vadd.f32 %v1776, %v1824
    %v1826 = vpop.f32.mrf.mxu0
    %v1827 = vadd.f32 %v1778, %v1826
    %1828 = vdwg.mxu0
    %1829 = vmatpush.bf16.msra.mxu0 %v698
    %1830 = vmatpush.bf16.msra.mxu0 %v697
    %1831 = vmatpush.bf16.msra.mxu0 %v696
    %1832 = vmatpush.bf16.msra.mxu0 %v695
    %1833 = vmatpush.bf16.msra.mxu0 %v694
    %1834 = vmatpush.bf16.msra.mxu0 %v693
    %1835 = vmatpush.bf16.msra.mxu0 %v692
    %1836 = vmatpush.bf16.msra.mxu0 %v691
    %1837 = vmatmul.bf16.gmra.mxu0 %v1621
    %v1838 = vpop.f32.mrf.mxu0
    %v1839 = vadd.f32 %v1790, %v1838
    %v1840 = vpop.f32.mrf.mxu0
    %v1841 = vadd.f32 %v1792, %v1840
    %1842 = vmatmul.bf16.gmra.mxu0 %v1625
    %v1843 = vpop.f32.mrf.mxu0
    %v1844 = vadd.f32 %v1795, %v1843
    %v1845 = vpop.f32.mrf.mxu0
    %v1846 = vadd.f32 %v1797, %v1845
    %1847 = vmatmul.bf16.gmra.mxu0 %v1629
    %v1848 = vpop.f32.mrf.mxu0
    %v1849 = vadd.f32 %v1800, %v1848
    %v1850 = vpop.f32.mrf.mxu0
    %v1851 = vadd.f32 %v1802, %v1850
    %1852 = vmatmul.bf16.gmra.mxu0 %v1633
    %v1853 = vpop.f32.mrf.mxu0
    %v1854 = vadd.f32 %v1805, %v1853
    %v1855 = vpop.f32.mrf.mxu0
    %v1856 = vadd.f32 %v1807, %v1855
    %1857 = vmatmul.bf16.gmra.mxu0 %v1637
    %v1858 = vpop.f32.mrf.mxu0
    %v1859 = vadd.f32 %v1810, %v1858
    %v1860 = vpop.f32.mrf.mxu0
    %v1861 = vadd.f32 %v1812, %v1860
    %1862 = vmatmul.bf16.gmra.mxu0 %v1641
    %v1863 = vpop.f32.mrf.mxu0
    %v1864 = vadd.f32 %v1815, %v1863
    %v1865 = vpop.f32.mrf.mxu0
    %v1866 = vadd.f32 %v1817, %v1865
    %1867 = vmatmul.bf16.gmra.mxu0 %v1645
    %v1868 = vpop.f32.mrf.mxu0
    %v1869 = vadd.f32 %v1820, %v1868
    %v1870 = vpop.f32.mrf.mxu0
    %v1871 = vadd.f32 %v1822, %v1870
    %1872 = vmatmul.bf16.gmra.mxu0 %v1649
    %v1873 = vpop.f32.mrf.mxu0
    %v1874 = vadd.f32 %v1825, %v1873
    %v1875 = vpop.f32.mrf.mxu0
    %v1876 = vadd.f32 %v1827, %v1875
    %1877 = vdwg.mxu0
    %v1878 = vpack.c.bf16 %v1841, %v1839
    %v1879 = vpack.c.bf16 %v1846, %v1844
    %v1880 = vpack.c.bf16 %v1851, %v1849
    %v1881 = vpack.c.bf16 %v1856, %v1854
    %v1882 = vpack.c.bf16 %v1861, %v1859
    %v1883 = vpack.c.bf16 %v1866, %v1864
    %v1884 = vpack.c.bf16 %v1871, %v1869
    %v1885 = vpack.c.bf16 %v1876, %v1874
    %s1886 = scalar_lea.vmem [#allocation4], 8
    %v1887 = vld [vmem:[%s1886] sm:$0x7]
    %v1889 = vsel %vm1335, %v1878, 0
    %v1892 = vsel %vm1335, %v1879, 0
    %v1895 = vsel %vm1335, %v1880, 0
    %v1898 = vsel %vm1335, %v1881, 0
    %v1901 = vsel %vm1335, %v1882, 0
    %v1904 = vsel %vm1335, %v1883, 0
    %v1907 = vsel %vm1335, %v1884, 0
    %v1910 = vsel %vm1335, %v1885, 0
    %v1913 = vsel %vm1360, %v1887, 0
    %1915 = vmatpush.bf16.msra.mxu0 0
    %1916 = vmatpush.bf16.msra.mxu0 0
    %1917 = vmatpush.bf16.msra.mxu0 0
    %1918 = vmatpush.bf16.msra.mxu0 0
    %1919 = vmatpush.bf16.msra.mxu0 0
    %1920 = vmatpush.bf16.msra.mxu0 0
    %1921 = vmatpush.bf16.msra.mxu0 0
    %1922 = vmatpush.bf16.msra.mxu0 %v1913
    %1923 = vmatmul.bf16.gmra.mxu0 %v1889
    %v1924 = vpop.f32.mrf.mxu0
    %v1925 = vadd.f32 0.0, %v1924
    %v1926 = vpop.f32.mrf.mxu0
    %v1927 = vadd.f32 0.0, %v1926
    %1928 = vmatmul.bf16.gmra.mxu0 %v1892
    %v1929 = vpop.f32.mrf.mxu0
    %v1930 = vadd.f32 0.0, %v1929
    %v1931 = vpop.f32.mrf.mxu0
    %v1932 = vadd.f32 0.0, %v1931
    %1933 = vmatmul.bf16.gmra.mxu0 %v1895
    %v1934 = vpop.f32.mrf.mxu0
    %v1935 = vadd.f32 0.0, %v1934
    %v1936 = vpop.f32.mrf.mxu0
    %v1937 = vadd.f32 0.0, %v1936
    %1938 = vmatmul.bf16.gmra.mxu0 %v1898
    %v1939 = vpop.f32.mrf.mxu0
    %v1940 = vadd.f32 0.0, %v1939
    %v1941 = vpop.f32.mrf.mxu0
    %v1942 = vadd.f32 0.0, %v1941
    %1943 = vmatmul.bf16.gmra.mxu0 %v1901
    %v1944 = vpop.f32.mrf.mxu0
    %v1945 = vadd.f32 0.0, %v1944
    %v1946 = vpop.f32.mrf.mxu0
    %v1947 = vadd.f32 0.0, %v1946
    %1948 = vmatmul.bf16.gmra.mxu0 %v1904
    %v1949 = vpop.f32.mrf.mxu0
    %v1950 = vadd.f32 0.0, %v1949
    %v1951 = vpop.f32.mrf.mxu0
    %v1952 = vadd.f32 0.0, %v1951
    %1953 = vmatmul.bf16.gmra.mxu0 %v1907
    %v1954 = vpop.f32.mrf.mxu0
    %v1955 = vadd.f32 0.0, %v1954
    %v1956 = vpop.f32.mrf.mxu0
    %v1957 = vadd.f32 0.0, %v1956
    %1958 = vmatmul.bf16.gmra.mxu0 %v1910
    %v1959 = vpop.f32.mrf.mxu0
    %v1960 = vadd.f32 0.0, %v1959
    %v1961 = vpop.f32.mrf.mxu0
    %v1962 = vadd.f32 0.0, %v1961
    %1963 = vdwg.mxu0
    %v1964 = vadd.f32 %v1450, %v1925
    %v1965 = vadd.f32 %v1452, %v1927
    %v1966 = vadd.f32 %v1455, %v1930
    %v1967 = vadd.f32 %v1457, %v1932
    %v1968 = vadd.f32 %v1460, %v1935
    %v1969 = vadd.f32 %v1462, %v1937
    %v1970 = vadd.f32 %v1465, %v1940
    %v1971 = vadd.f32 %v1467, %v1942
    %v1972 = vadd.f32 %v1470, %v1945
    %v1973 = vadd.f32 %v1472, %v1947
    %v1974 = vadd.f32 %v1475, %v1950
    %v1975 = vadd.f32 %v1477, %v1952
    %v1976 = vadd.f32 %v1480, %v1955
    %v1977 = vadd.f32 %v1482, %v1957
    %v1978 = vadd.f32 %v1485, %v1960
    %v1979 = vadd.f32 %v1487, %v1962
    %s1980 = scalar_lea.vmem [#allocation2], 768
    %v1981 = vld [vmem:[%s1980] sm:$0xff]
    %v1982 = vld [vmem:[%s1980 + $0x8] sm:$0xff]
    %v1983 = vld [vmem:[%s1980 + $0x10] sm:$0xff]
    %v1984 = vld [vmem:[%s1980 + $0x18] sm:$0xff]
    %v1985 = vld [vmem:[%s1980 + $0x20] sm:$0xff]
    %v1986 = vld [vmem:[%s1980 + $0x28] sm:$0xff]
    %v1987 = vld [vmem:[%s1980 + $0x30] sm:$0xff]
    %v1988 = vld [vmem:[%s1980 + $0x38] sm:$0xff]
    %v1989 = vld [vmem:[%s1980 + $0x40] sm:$0xff]
    %v1990 = vld [vmem:[%s1980 + $0x48] sm:$0xff]
    %v1991 = vld [vmem:[%s1980 + $0x50] sm:$0xff]
    %v1992 = vld [vmem:[%s1980 + $0x58] sm:$0xff]
    %v1993 = vld [vmem:[%s1980 + $0x60] sm:$0xff]
    %v1994 = vld [vmem:[%s1980 + $0x68] sm:$0xff]
    %v1995 = vld [vmem:[%s1980 + $0x70] sm:$0xff]
    %v1996 = vld [vmem:[%s1980 + $0x78] sm:$0xff]
    %v1997 = vld [vmem:[%s1980 + $0x80] sm:$0xff]
    %v1998 = vld [vmem:[%s1980 + $0x88] sm:$0xff]
    %v1999 = vld [vmem:[%s1980 + $0x90] sm:$0xff]
    %v2000 = vld [vmem:[%s1980 + $0x98] sm:$0xff]
    %v2001 = vld [vmem:[%s1980 + $0xa0] sm:$0xff]
    %v2002 = vld [vmem:[%s1980 + $0xa8] sm:$0xff]
    %v2003 = vld [vmem:[%s1980 + $0xb0] sm:$0xff]
    %v2004 = vld [vmem:[%s1980 + $0xb8] sm:$0xff]
    %v2005 = vld [vmem:[%s1980 + $0xc0] sm:$0xff]
    %v2006 = vld [vmem:[%s1980 + $0xc8] sm:$0xff]
    %v2007 = vld [vmem:[%s1980 + $0xd0] sm:$0xff]
    %v2008 = vld [vmem:[%s1980 + $0xd8] sm:$0xff]
    %v2009 = vld [vmem:[%s1980 + $0xe0] sm:$0xff]
    %v2010 = vld [vmem:[%s1980 + $0xe8] sm:$0xff]
    %v2011 = vld [vmem:[%s1980 + $0xf0] sm:$0xff]
    %v2012 = vld [vmem:[%s1980 + $0xf8] sm:$0xff]
    %v2045 = vunpack.c.l.b16 %v1981
    %v2046 = vunpack.c.h.b16 %v1981
    %v2047 = vunpack.c.l.b16 %v1982
    %v2048 = vunpack.c.h.b16 %v1982
    %v2049 = vunpack.c.l.b16 %v1983
    %v2050 = vunpack.c.h.b16 %v1983
    %v2051 = vunpack.c.l.b16 %v1984
    %v2052 = vunpack.c.h.b16 %v1984
    %v2053 = vunpack.c.l.b16 %v1985
    %v2054 = vunpack.c.h.b16 %v1985
    %v2055 = vunpack.c.l.b16 %v1986
    %v2056 = vunpack.c.h.b16 %v1986
    %v2057 = vunpack.c.l.b16 %v1987
    %v2058 = vunpack.c.h.b16 %v1987
    %v2059 = vunpack.c.l.b16 %v1988
    %v2060 = vunpack.c.h.b16 %v1988
    %v2061 = vunpack.c.l.b16 %v1989
    %v2062 = vunpack.c.h.b16 %v1989
    %v2063 = vunpack.c.l.b16 %v1990
    %v2064 = vunpack.c.h.b16 %v1990
    %v2065 = vunpack.c.l.b16 %v1991
    %v2066 = vunpack.c.h.b16 %v1991
    %v2067 = vunpack.c.l.b16 %v1992
    %v2068 = vunpack.c.h.b16 %v1992
    %v2069 = vunpack.c.l.b16 %v1993
    %v2070 = vunpack.c.h.b16 %v1993
    %v2071 = vunpack.c.l.b16 %v1994
    %v2072 = vunpack.c.h.b16 %v1994
    %v2073 = vunpack.c.l.b16 %v1995
    %v2074 = vunpack.c.h.b16 %v1995
    %v2075 = vunpack.c.l.b16 %v1996
    %v2076 = vunpack.c.h.b16 %v1996
    %v2077 = vunpack.c.l.b16 %v1997
    %v2078 = vunpack.c.h.b16 %v1997
    %v2079 = vunpack.c.l.b16 %v1998
    %v2080 = vunpack.c.h.b16 %v1998
    %v2081 = vunpack.c.l.b16 %v1999
    %v2082 = vunpack.c.h.b16 %v1999
    %v2083 = vunpack.c.l.b16 %v2000
    %v2084 = vunpack.c.h.b16 %v2000
    %v2085 = vunpack.c.l.b16 %v2001
    %v2086 = vunpack.c.h.b16 %v2001
    %v2087 = vunpack.c.l.b16 %v2002
    %v2088 = vunpack.c.h.b16 %v2002
    %v2089 = vunpack.c.l.b16 %v2003
    %v2090 = vunpack.c.h.b16 %v2003
    %v2091 = vunpack.c.l.b16 %v2004
    %v2092 = vunpack.c.h.b16 %v2004
    %v2093 = vunpack.c.l.b16 %v2005
    %v2094 = vunpack.c.h.b16 %v2005
    %v2095 = vunpack.c.l.b16 %v2006
    %v2096 = vunpack.c.h.b16 %v2006
    %v2097 = vunpack.c.l.b16 %v2007
    %v2098 = vunpack.c.h.b16 %v2007
    %v2099 = vunpack.c.l.b16 %v2008
    %v2100 = vunpack.c.h.b16 %v2008
    %v2101 = vunpack.c.l.b16 %v2009
    %v2102 = vunpack.c.h.b16 %v2009
    %v2103 = vunpack.c.l.b16 %v2010
    %v2104 = vunpack.c.h.b16 %v2010
    %v2105 = vunpack.c.l.b16 %v2011
    %v2106 = vunpack.c.h.b16 %v2011
    %v2107 = vunpack.c.l.b16 %v2012
    %v2108 = vunpack.c.h.b16 %v2012
    %v2109 = vpack.c.b16 %v2049, %v2045
    %v2110 = vpack.c.b16 %v2050, %v2046
    %v2111 = vpack.c.b16 %v2051, %v2047
    %v2112 = vpack.c.b16 %v2052, %v2048
    %v2113 = vpack.c.b16 %v2057, %v2053
    %v2114 = vpack.c.b16 %v2058, %v2054
    %v2115 = vpack.c.b16 %v2059, %v2055
    %v2116 = vpack.c.b16 %v2060, %v2056
    %v2117 = vpack.c.b16 %v2065, %v2061
    %v2118 = vpack.c.b16 %v2066, %v2062
    %v2119 = vpack.c.b16 %v2067, %v2063
    %v2120 = vpack.c.b16 %v2068, %v2064
    %v2121 = vpack.c.b16 %v2073, %v2069
    %v2122 = vpack.c.b16 %v2074, %v2070
    %v2123 = vpack.c.b16 %v2075, %v2071
    %v2124 = vpack.c.b16 %v2076, %v2072
    %v2125 = vpack.c.b16 %v2081, %v2077
    %v2126 = vpack.c.b16 %v2082, %v2078
    %v2127 = vpack.c.b16 %v2083, %v2079
    %v2128 = vpack.c.b16 %v2084, %v2080
    %v2129 = vpack.c.b16 %v2089, %v2085
    %v2130 = vpack.c.b16 %v2090, %v2086
    %v2131 = vpack.c.b16 %v2091, %v2087
    %v2132 = vpack.c.b16 %v2092, %v2088
    %v2133 = vpack.c.b16 %v2097, %v2093
    %v2134 = vpack.c.b16 %v2098, %v2094
    %v2135 = vpack.c.b16 %v2099, %v2095
    %v2136 = vpack.c.b16 %v2100, %v2096
    %v2137 = vpack.c.b16 %v2105, %v2101
    %v2138 = vpack.c.b16 %v2106, %v2102
    %v2139 = vpack.c.b16 %v2107, %v2103
    %v2140 = vpack.c.b16 %v2108, %v2104
    %2173 = vmatpush.bf16.msra.mxu0 %v674
    %2174 = vmatpush.bf16.msra.mxu0 %v673
    %2175 = vmatpush.bf16.msra.mxu0 %v672
    %2176 = vmatpush.bf16.msra.mxu0 %v671
    %2177 = vmatpush.bf16.msra.mxu0 %v670
    %2178 = vmatpush.bf16.msra.mxu0 %v669
    %2179 = vmatpush.bf16.msra.mxu0 %v668
    %2180 = vmatpush.bf16.msra.mxu0 %v667
    %2181 = vmatmul.bf16.gmra.mxu0 %v2109
    %v2182 = vpop.f32.mrf.mxu0
    %v2183 = vadd.f32 0.0, %v2182
    %v2184 = vpop.f32.mrf.mxu0
    %v2185 = vadd.f32 0.0, %v2184
    %2186 = vmatmul.bf16.gmra.mxu0 %v2113
    %v2187 = vpop.f32.mrf.mxu0
    %v2188 = vadd.f32 0.0, %v2187
    %v2189 = vpop.f32.mrf.mxu0
    %v2190 = vadd.f32 0.0, %v2189
    %2191 = vmatmul.bf16.gmra.mxu0 %v2117
    %v2192 = vpop.f32.mrf.mxu0
    %v2193 = vadd.f32 0.0, %v2192
    %v2194 = vpop.f32.mrf.mxu0
    %v2195 = vadd.f32 0.0, %v2194
    %2196 = vmatmul.bf16.gmra.mxu0 %v2121
    %v2197 = vpop.f32.mrf.mxu0
    %v2198 = vadd.f32 0.0, %v2197
    %v2199 = vpop.f32.mrf.mxu0
    %v2200 = vadd.f32 0.0, %v2199
    %2201 = vmatmul.bf16.gmra.mxu0 %v2125
    %v2202 = vpop.f32.mrf.mxu0
    %v2203 = vadd.f32 0.0, %v2202
    %v2204 = vpop.f32.mrf.mxu0
    %v2205 = vadd.f32 0.0, %v2204
    %2206 = vmatmul.bf16.gmra.mxu0 %v2129
    %v2207 = vpop.f32.mrf.mxu0
    %v2208 = vadd.f32 0.0, %v2207
    %v2209 = vpop.f32.mrf.mxu0
    %v2210 = vadd.f32 0.0, %v2209
    %2211 = vmatmul.bf16.gmra.mxu0 %v2133
    %v2212 = vpop.f32.mrf.mxu0
    %v2213 = vadd.f32 0.0, %v2212
    %v2214 = vpop.f32.mrf.mxu0
    %v2215 = vadd.f32 0.0, %v2214
    %2216 = vmatmul.bf16.gmra.mxu0 %v2137
    %v2217 = vpop.f32.mrf.mxu0
    %v2218 = vadd.f32 0.0, %v2217
    %v2219 = vpop.f32.mrf.mxu0
    %v2220 = vadd.f32 0.0, %v2219
    %2221 = vdwg.mxu0
    %2222 = vmatpush.bf16.msra.mxu0 %v682
    %2223 = vmatpush.bf16.msra.mxu0 %v681
    %2224 = vmatpush.bf16.msra.mxu0 %v680
    %2225 = vmatpush.bf16.msra.mxu0 %v679
    %2226 = vmatpush.bf16.msra.mxu0 %v678
    %2227 = vmatpush.bf16.msra.mxu0 %v677
    %2228 = vmatpush.bf16.msra.mxu0 %v676
    %2229 = vmatpush.bf16.msra.mxu0 %v675
    %2230 = vmatmul.bf16.gmra.mxu0 %v2110
    %v2231 = vpop.f32.mrf.mxu0
    %v2232 = vadd.f32 %v2183, %v2231
    %v2233 = vpop.f32.mrf.mxu0
    %v2234 = vadd.f32 %v2185, %v2233
    %2235 = vmatmul.bf16.gmra.mxu0 %v2114
    %v2236 = vpop.f32.mrf.mxu0
    %v2237 = vadd.f32 %v2188, %v2236
    %v2238 = vpop.f32.mrf.mxu0
    %v2239 = vadd.f32 %v2190, %v2238
    %2240 = vmatmul.bf16.gmra.mxu0 %v2118
    %v2241 = vpop.f32.mrf.mxu0
    %v2242 = vadd.f32 %v2193, %v2241
    %v2243 = vpop.f32.mrf.mxu0
    %v2244 = vadd.f32 %v2195, %v2243
    %2245 = vmatmul.bf16.gmra.mxu0 %v2122
    %v2246 = vpop.f32.mrf.mxu0
    %v2247 = vadd.f32 %v2198, %v2246
    %v2248 = vpop.f32.mrf.mxu0
    %v2249 = vadd.f32 %v2200, %v2248
    %2250 = vmatmul.bf16.gmra.mxu0 %v2126
    %v2251 = vpop.f32.mrf.mxu0
    %v2252 = vadd.f32 %v2203, %v2251
    %v2253 = vpop.f32.mrf.mxu0
    %v2254 = vadd.f32 %v2205, %v2253
    %2255 = vmatmul.bf16.gmra.mxu0 %v2130
    %v2256 = vpop.f32.mrf.mxu0
    %v2257 = vadd.f32 %v2208, %v2256
    %v2258 = vpop.f32.mrf.mxu0
    %v2259 = vadd.f32 %v2210, %v2258
    %2260 = vmatmul.bf16.gmra.mxu0 %v2134
    %v2261 = vpop.f32.mrf.mxu0
    %v2262 = vadd.f32 %v2213, %v2261
    %v2263 = vpop.f32.mrf.mxu0
    %v2264 = vadd.f32 %v2215, %v2263
    %2265 = vmatmul.bf16.gmra.mxu0 %v2138
    %v2266 = vpop.f32.mrf.mxu0
    %v2267 = vadd.f32 %v2218, %v2266
    %v2268 = vpop.f32.mrf.mxu0
    %v2269 = vadd.f32 %v2220, %v2268
    %2270 = vdwg.mxu0
    %2271 = vmatpush.bf16.msra.mxu0 %v690
    %2272 = vmatpush.bf16.msra.mxu0 %v689
    %2273 = vmatpush.bf16.msra.mxu0 %v688
    %2274 = vmatpush.bf16.msra.mxu0 %v687
    %2275 = vmatpush.bf16.msra.mxu0 %v686
    %2276 = vmatpush.bf16.msra.mxu0 %v685
    %2277 = vmatpush.bf16.msra.mxu0 %v684
    %2278 = vmatpush.bf16.msra.mxu0 %v683
    %2279 = vmatmul.bf16.gmra.mxu0 %v2111
    %v2280 = vpop.f32.mrf.mxu0
    %v2281 = vadd.f32 %v2232, %v2280
    %v2282 = vpop.f32.mrf.mxu0
    %v2283 = vadd.f32 %v2234, %v2282
    %2284 = vmatmul.bf16.gmra.mxu0 %v2115
    %v2285 = vpop.f32.mrf.mxu0
    %v2286 = vadd.f32 %v2237, %v2285
    %v2287 = vpop.f32.mrf.mxu0
    %v2288 = vadd.f32 %v2239, %v2287
    %2289 = vmatmul.bf16.gmra.mxu0 %v2119
    %v2290 = vpop.f32.mrf.mxu0
    %v2291 = vadd.f32 %v2242, %v2290
    %v2292 = vpop.f32.mrf.mxu0
    %v2293 = vadd.f32 %v2244, %v2292
    %2294 = vmatmul.bf16.gmra.mxu0 %v2123
    %v2295 = vpop.f32.mrf.mxu0
    %v2296 = vadd.f32 %v2247, %v2295
    %v2297 = vpop.f32.mrf.mxu0
    %v2298 = vadd.f32 %v2249, %v2297
    %2299 = vmatmul.bf16.gmra.mxu0 %v2127
    %v2300 = vpop.f32.mrf.mxu0
    %v2301 = vadd.f32 %v2252, %v2300
    %v2302 = vpop.f32.mrf.mxu0
    %v2303 = vadd.f32 %v2254, %v2302
    %2304 = vmatmul.bf16.gmra.mxu0 %v2131
    %v2305 = vpop.f32.mrf.mxu0
    %v2306 = vadd.f32 %v2257, %v2305
    %v2307 = vpop.f32.mrf.mxu0
    %v2308 = vadd.f32 %v2259, %v2307
    %2309 = vmatmul.bf16.gmra.mxu0 %v2135
    %v2310 = vpop.f32.mrf.mxu0
    %v2311 = vadd.f32 %v2262, %v2310
    %v2312 = vpop.f32.mrf.mxu0
    %v2313 = vadd.f32 %v2264, %v2312
    %2314 = vmatmul.bf16.gmra.mxu0 %v2139
    %v2315 = vpop.f32.mrf.mxu0
    %v2316 = vadd.f32 %v2267, %v2315
    %v2317 = vpop.f32.mrf.mxu0
    %v2318 = vadd.f32 %v2269, %v2317
    %2319 = vdwg.mxu0
    %2320 = vmatpush.bf16.msra.mxu0 %v698
    %2321 = vmatpush.bf16.msra.mxu0 %v697
    %2322 = vmatpush.bf16.msra.mxu0 %v696
    %2323 = vmatpush.bf16.msra.mxu0 %v695
    %2324 = vmatpush.bf16.msra.mxu0 %v694
    %2325 = vmatpush.bf16.msra.mxu0 %v693
    %2326 = vmatpush.bf16.msra.mxu0 %v692
    %2327 = vmatpush.bf16.msra.mxu0 %v691
    %2328 = vmatmul.bf16.gmra.mxu0 %v2112
    %v2329 = vpop.f32.mrf.mxu0
    %v2330 = vadd.f32 %v2281, %v2329
    %v2331 = vpop.f32.mrf.mxu0
    %v2332 = vadd.f32 %v2283, %v2331
    %2333 = vmatmul.bf16.gmra.mxu0 %v2116
    %v2334 = vpop.f32.mrf.mxu0
    %v2335 = vadd.f32 %v2286, %v2334
    %v2336 = vpop.f32.mrf.mxu0
    %v2337 = vadd.f32 %v2288, %v2336
    %2338 = vmatmul.bf16.gmra.mxu0 %v2120
    %v2339 = vpop.f32.mrf.mxu0
    %v2340 = vadd.f32 %v2291, %v2339
    %v2341 = vpop.f32.mrf.mxu0
    %v2342 = vadd.f32 %v2293, %v2341
    %2343 = vmatmul.bf16.gmra.mxu0 %v2124
    %v2344 = vpop.f32.mrf.mxu0
    %v2345 = vadd.f32 %v2296, %v2344
    %v2346 = vpop.f32.mrf.mxu0
    %v2347 = vadd.f32 %v2298, %v2346
    %2348 = vmatmul.bf16.gmra.mxu0 %v2128
    %v2349 = vpop.f32.mrf.mxu0
    %v2350 = vadd.f32 %v2301, %v2349
    %v2351 = vpop.f32.mrf.mxu0
    %v2352 = vadd.f32 %v2303, %v2351
    %2353 = vmatmul.bf16.gmra.mxu0 %v2132
    %v2354 = vpop.f32.mrf.mxu0
    %v2355 = vadd.f32 %v2306, %v2354
    %v2356 = vpop.f32.mrf.mxu0
    %v2357 = vadd.f32 %v2308, %v2356
    %2358 = vmatmul.bf16.gmra.mxu0 %v2136
    %v2359 = vpop.f32.mrf.mxu0
    %v2360 = vadd.f32 %v2311, %v2359
    %v2361 = vpop.f32.mrf.mxu0
    %v2362 = vadd.f32 %v2313, %v2361
    %2363 = vmatmul.bf16.gmra.mxu0 %v2140
    %v2364 = vpop.f32.mrf.mxu0
    %v2365 = vadd.f32 %v2316, %v2364
    %v2366 = vpop.f32.mrf.mxu0
    %v2367 = vadd.f32 %v2318, %v2366
    %2368 = vdwg.mxu0
    %v2369 = vpack.c.bf16 %v2332, %v2330
    %v2370 = vpack.c.bf16 %v2337, %v2335
    %v2371 = vpack.c.bf16 %v2342, %v2340
    %v2372 = vpack.c.bf16 %v2347, %v2345
    %v2373 = vpack.c.bf16 %v2352, %v2350
    %v2374 = vpack.c.bf16 %v2357, %v2355
    %v2375 = vpack.c.bf16 %v2362, %v2360
    %v2376 = vpack.c.bf16 %v2367, %v2365
    %s2377 = scalar_lea.vmem [#allocation4], 12
    %v2378 = vld [vmem:[%s2377] sm:$0x7]
    %v2380 = vsel %vm1335, %v2369, 0
    %v2383 = vsel %vm1335, %v2370, 0
    %v2386 = vsel %vm1335, %v2371, 0
    %v2389 = vsel %vm1335, %v2372, 0
    %v2392 = vsel %vm1335, %v2373, 0
    %v2395 = vsel %vm1335, %v2374, 0
    %v2398 = vsel %vm1335, %v2375, 0
    %v2401 = vsel %vm1335, %v2376, 0
    %v2404 = vsel %vm1360, %v2378, 0
    %2406 = vmatpush.bf16.msra.mxu0 0
    %2407 = vmatpush.bf16.msra.mxu0 0
    %2408 = vmatpush.bf16.msra.mxu0 0
    %2409 = vmatpush.bf16.msra.mxu0 0
    %2410 = vmatpush.bf16.msra.mxu0 0
    %2411 = vmatpush.bf16.msra.mxu0 0
    %2412 = vmatpush.bf16.msra.mxu0 0
    %2413 = vmatpush.bf16.msra.mxu0 %v2404
    %2414 = vmatmul.bf16.gmra.mxu0 %v2380
    %v2415 = vpop.f32.mrf.mxu0
    %v2416 = vadd.f32 0.0, %v2415
    %v2417 = vpop.f32.mrf.mxu0
    %v2418 = vadd.f32 0.0, %v2417
    %2419 = vmatmul.bf16.gmra.mxu0 %v2383
    %v2420 = vpop.f32.mrf.mxu0
    %v2421 = vadd.f32 0.0, %v2420
    %v2422 = vpop.f32.mrf.mxu0
    %v2423 = vadd.f32 0.0, %v2422
    %2424 = vmatmul.bf16.gmra.mxu0 %v2386
    %v2425 = vpop.f32.mrf.mxu0
    %v2426 = vadd.f32 0.0, %v2425
    %v2427 = vpop.f32.mrf.mxu0
    %v2428 = vadd.f32 0.0, %v2427
    %2429 = vmatmul.bf16.gmra.mxu0 %v2389
    %v2430 = vpop.f32.mrf.mxu0
    %v2431 = vadd.f32 0.0, %v2430
    %v2432 = vpop.f32.mrf.mxu0
    %v2433 = vadd.f32 0.0, %v2432
    %2434 = vmatmul.bf16.gmra.mxu0 %v2392
    %v2435 = vpop.f32.mrf.mxu0
    %v2436 = vadd.f32 0.0, %v2435
    %v2437 = vpop.f32.mrf.mxu0
    %v2438 = vadd.f32 0.0, %v2437
    %2439 = vmatmul.bf16.gmra.mxu0 %v2395
    %v2440 = vpop.f32.mrf.mxu0
    %v2441 = vadd.f32 0.0, %v2440
    %v2442 = vpop.f32.mrf.mxu0
    %v2443 = vadd.f32 0.0, %v2442
    %2444 = vmatmul.bf16.gmra.mxu0 %v2398
    %v2445 = vpop.f32.mrf.mxu0
    %v2446 = vadd.f32 0.0, %v2445
    %v2447 = vpop.f32.mrf.mxu0
    %v2448 = vadd.f32 0.0, %v2447
    %2449 = vmatmul.bf16.gmra.mxu0 %v2401
    %v2450 = vpop.f32.mrf.mxu0
    %v2451 = vadd.f32 0.0, %v2450
    %v2452 = vpop.f32.mrf.mxu0
    %v2453 = vadd.f32 0.0, %v2452
    %2454 = vdwg.mxu0
    %v2455 = vadd.f32 %v1964, %v2416
    %v2456 = vadd.f32 %v1965, %v2418
    %v2457 = vadd.f32 %v1966, %v2421
    %v2458 = vadd.f32 %v1967, %v2423
    %v2459 = vadd.f32 %v1968, %v2426
    %v2460 = vadd.f32 %v1969, %v2428
    %v2461 = vadd.f32 %v1970, %v2431
    %v2462 = vadd.f32 %v1971, %v2433
    %v2463 = vadd.f32 %v1972, %v2436
    %v2464 = vadd.f32 %v1973, %v2438
    %v2465 = vadd.f32 %v1974, %v2441
    %v2466 = vadd.f32 %v1975, %v2443
    %v2467 = vadd.f32 %v1976, %v2446
    %v2468 = vadd.f32 %v1977, %v2448
    %v2469 = vadd.f32 %v1978, %v2451
    %v2470 = vadd.f32 %v1979, %v2453
    %s2471 = scalar_lea.vmem [#allocation2], 1024
    %v2472 = vld [vmem:[%s2471] sm:$0xff]
    %v2473 = vld [vmem:[%s2471 + $0x8] sm:$0xff]
    %v2474 = vld [vmem:[%s2471 + $0x10] sm:$0xff]
    %v2475 = vld [vmem:[%s2471 + $0x18] sm:$0xff]
    %v2476 = vld [vmem:[%s2471 + $0x20] sm:$0xff]
    %v2477 = vld [vmem:[%s2471 + $0x28] sm:$0xff]
    %v2478 = vld [vmem:[%s2471 + $0x30] sm:$0xff]
    %v2479 = vld [vmem:[%s2471 + $0x38] sm:$0xff]
    %v2480 = vld [vmem:[%s2471 + $0x40] sm:$0xff]
    %v2481 = vld [vmem:[%s2471 + $0x48] sm:$0xff]
    %v2482 = vld [vmem:[%s2471 + $0x50] sm:$0xff]
    %v2483 = vld [vmem:[%s2471 + $0x58] sm:$0xff]
    %v2484 = vld [vmem:[%s2471 + $0x60] sm:$0xff]
    %v2485 = vld [vmem:[%s2471 + $0x68] sm:$0xff]
    %v2486 = vld [vmem:[%s2471 + $0x70] sm:$0xff]
    %v2487 = vld [vmem:[%s2471 + $0x78] sm:$0xff]
    %v2488 = vld [vmem:[%s2471 + $0x80] sm:$0xff]
    %v2489 = vld [vmem:[%s2471 + $0x88] sm:$0xff]
    %v2490 = vld [vmem:[%s2471 + $0x90] sm:$0xff]
    %v2491 = vld [vmem:[%s2471 + $0x98] sm:$0xff]
    %v2492 = vld [vmem:[%s2471 + $0xa0] sm:$0xff]
    %v2493 = vld [vmem:[%s2471 + $0xa8] sm:$0xff]
    %v2494 = vld [vmem:[%s2471 + $0xb0] sm:$0xff]
    %v2495 = vld [vmem:[%s2471 + $0xb8] sm:$0xff]
    %v2496 = vld [vmem:[%s2471 + $0xc0] sm:$0xff]
    %v2497 = vld [vmem:[%s2471 + $0xc8] sm:$0xff]
    %v2498 = vld [vmem:[%s2471 + $0xd0] sm:$0xff]
    %v2499 = vld [vmem:[%s2471 + $0xd8] sm:$0xff]
    %v2500 = vld [vmem:[%s2471 + $0xe0] sm:$0xff]
    %v2501 = vld [vmem:[%s2471 + $0xe8] sm:$0xff]
    %v2502 = vld [vmem:[%s2471 + $0xf0] sm:$0xff]
    %v2503 = vld [vmem:[%s2471 + $0xf8] sm:$0xff]
    %v2536 = vunpack.c.l.b16 %v2472
    %v2537 = vunpack.c.h.b16 %v2472
    %v2538 = vunpack.c.l.b16 %v2473
    %v2539 = vunpack.c.h.b16 %v2473
    %v2540 = vunpack.c.l.b16 %v2474
    %v2541 = vunpack.c.h.b16 %v2474
    %v2542 = vunpack.c.l.b16 %v2475
    %v2543 = vunpack.c.h.b16 %v2475
    %v2544 = vunpack.c.l.b16 %v2476
    %v2545 = vunpack.c.h.b16 %v2476
    %v2546 = vunpack.c.l.b16 %v2477
    %v2547 = vunpack.c.h.b16 %v2477
    %v2548 = vunpack.c.l.b16 %v2478
    %v2549 = vunpack.c.h.b16 %v2478
    %v2550 = vunpack.c.l.b16 %v2479
    %v2551 = vunpack.c.h.b16 %v2479
    %v2552 = vunpack.c.l.b16 %v2480
    %v2553 = vunpack.c.h.b16 %v2480
    %v2554 = vunpack.c.l.b16 %v2481
    %v2555 = vunpack.c.h.b16 %v2481
    %v2556 = vunpack.c.l.b16 %v2482
    %v2557 = vunpack.c.h.b16 %v2482
    %v2558 = vunpack.c.l.b16 %v2483
    %v2559 = vunpack.c.h.b16 %v2483
    %v2560 = vunpack.c.l.b16 %v2484
    %v2561 = vunpack.c.h.b16 %v2484
    %v2562 = vunpack.c.l.b16 %v2485
    %v2563 = vunpack.c.h.b16 %v2485
    %v2564 = vunpack.c.l.b16 %v2486
    %v2565 = vunpack.c.h.b16 %v2486
    %v2566 = vunpack.c.l.b16 %v2487
    %v2567 = vunpack.c.h.b16 %v2487
    %v2568 = vunpack.c.l.b16 %v2488
    %v2569 = vunpack.c.h.b16 %v2488
    %v2570 = vunpack.c.l.b16 %v2489
    %v2571 = vunpack.c.h.b16 %v2489
    %v2572 = vunpack.c.l.b16 %v2490
    %v2573 = vunpack.c.h.b16 %v2490
    %v2574 = vunpack.c.l.b16 %v2491
    %v2575 = vunpack.c.h.b16 %v2491
    %v2576 = vunpack.c.l.b16 %v2492
    %v2577 = vunpack.c.h.b16 %v2492
    %v2578 = vunpack.c.l.b16 %v2493
    %v2579 = vunpack.c.h.b16 %v2493
    %v2580 = vunpack.c.l.b16 %v2494
    %v2581 = vunpack.c.h.b16 %v2494
    %v2582 = vunpack.c.l.b16 %v2495
    %v2583 = vunpack.c.h.b16 %v2495
    %v2584 = vunpack.c.l.b16 %v2496
    %v2585 = vunpack.c.h.b16 %v2496
    %v2586 = vunpack.c.l.b16 %v2497
    %v2587 = vunpack.c.h.b16 %v2497
    %v2588 = vunpack.c.l.b16 %v2498
    %v2589 = vunpack.c.h.b16 %v2498
    %v2590 = vunpack.c.l.b16 %v2499
    %v2591 = vunpack.c.h.b16 %v2499
    %v2592 = vunpack.c.l.b16 %v2500
    %v2593 = vunpack.c.h.b16 %v2500
    %v2594 = vunpack.c.l.b16 %v2501
    %v2595 = vunpack.c.h.b16 %v2501
    %v2596 = vunpack.c.l.b16 %v2502
    %v2597 = vunpack.c.h.b16 %v2502
    %v2598 = vunpack.c.l.b16 %v2503
    %v2599 = vunpack.c.h.b16 %v2503
    %v2600 = vpack.c.b16 %v2540, %v2536
    %v2601 = vpack.c.b16 %v2541, %v2537
    %v2602 = vpack.c.b16 %v2542, %v2538
    %v2603 = vpack.c.b16 %v2543, %v2539
    %v2604 = vpack.c.b16 %v2548, %v2544
    %v2605 = vpack.c.b16 %v2549, %v2545
    %v2606 = vpack.c.b16 %v2550, %v2546
    %v2607 = vpack.c.b16 %v2551, %v2547
    %v2608 = vpack.c.b16 %v2556, %v2552
    %v2609 = vpack.c.b16 %v2557, %v2553
    %v2610 = vpack.c.b16 %v2558, %v2554
    %v2611 = vpack.c.b16 %v2559, %v2555
    %v2612 = vpack.c.b16 %v2564, %v2560
    %v2613 = vpack.c.b16 %v2565, %v2561
    %v2614 = vpack.c.b16 %v2566, %v2562
    %v2615 = vpack.c.b16 %v2567, %v2563
    %v2616 = vpack.c.b16 %v2572, %v2568
    %v2617 = vpack.c.b16 %v2573, %v2569
    %v2618 = vpack.c.b16 %v2574, %v2570
    %v2619 = vpack.c.b16 %v2575, %v2571
    %v2620 = vpack.c.b16 %v2580, %v2576
    %v2621 = vpack.c.b16 %v2581, %v2577
    %v2622 = vpack.c.b16 %v2582, %v2578
    %v2623 = vpack.c.b16 %v2583, %v2579
    %v2624 = vpack.c.b16 %v2588, %v2584
    %v2625 = vpack.c.b16 %v2589, %v2585
    %v2626 = vpack.c.b16 %v2590, %v2586
    %v2627 = vpack.c.b16 %v2591, %v2587
    %v2628 = vpack.c.b16 %v2596, %v2592
    %v2629 = vpack.c.b16 %v2597, %v2593
    %v2630 = vpack.c.b16 %v2598, %v2594
    %v2631 = vpack.c.b16 %v2599, %v2595
    %2664 = vmatpush.bf16.msra.mxu0 %v674
    %2665 = vmatpush.bf16.msra.mxu0 %v673
    %2666 = vmatpush.bf16.msra.mxu0 %v672
    %2667 = vmatpush.bf16.msra.mxu0 %v671
    %2668 = vmatpush.bf16.msra.mxu0 %v670
    %2669 = vmatpush.bf16.msra.mxu0 %v669
    %2670 = vmatpush.bf16.msra.mxu0 %v668
    %2671 = vmatpush.bf16.msra.mxu0 %v667
    %2672 = vmatmul.bf16.gmra.mxu0 %v2600
    %v2673 = vpop.f32.mrf.mxu0
    %v2674 = vadd.f32 0.0, %v2673
    %v2675 = vpop.f32.mrf.mxu0
    %v2676 = vadd.f32 0.0, %v2675
    %2677 = vmatmul.bf16.gmra.mxu0 %v2604
    %v2678 = vpop.f32.mrf.mxu0
    %v2679 = vadd.f32 0.0, %v2678
    %v2680 = vpop.f32.mrf.mxu0
    %v2681 = vadd.f32 0.0, %v2680
    %2682 = vmatmul.bf16.gmra.mxu0 %v2608
    %v2683 = vpop.f32.mrf.mxu0
    %v2684 = vadd.f32 0.0, %v2683
    %v2685 = vpop.f32.mrf.mxu0
    %v2686 = vadd.f32 0.0, %v2685
    %2687 = vmatmul.bf16.gmra.mxu0 %v2612
    %v2688 = vpop.f32.mrf.mxu0
    %v2689 = vadd.f32 0.0, %v2688
    %v2690 = vpop.f32.mrf.mxu0
    %v2691 = vadd.f32 0.0, %v2690
    %2692 = vmatmul.bf16.gmra.mxu0 %v2616
    %v2693 = vpop.f32.mrf.mxu0
    %v2694 = vadd.f32 0.0, %v2693
    %v2695 = vpop.f32.mrf.mxu0
    %v2696 = vadd.f32 0.0, %v2695
    %2697 = vmatmul.bf16.gmra.mxu0 %v2620
    %v2698 = vpop.f32.mrf.mxu0
    %v2699 = vadd.f32 0.0, %v2698
    %v2700 = vpop.f32.mrf.mxu0
    %v2701 = vadd.f32 0.0, %v2700
    %2702 = vmatmul.bf16.gmra.mxu0 %v2624
    %v2703 = vpop.f32.mrf.mxu0
    %v2704 = vadd.f32 0.0, %v2703
    %v2705 = vpop.f32.mrf.mxu0
    %v2706 = vadd.f32 0.0, %v2705
    %2707 = vmatmul.bf16.gmra.mxu0 %v2628
    %v2708 = vpop.f32.mrf.mxu0
    %v2709 = vadd.f32 0.0, %v2708
    %v2710 = vpop.f32.mrf.mxu0
    %v2711 = vadd.f32 0.0, %v2710
    %2712 = vdwg.mxu0
    %2713 = vmatpush.bf16.msra.mxu0 %v682
    %2714 = vmatpush.bf16.msra.mxu0 %v681
    %2715 = vmatpush.bf16.msra.mxu0 %v680
    %2716 = vmatpush.bf16.msra.mxu0 %v679
    %2717 = vmatpush.bf16.msra.mxu0 %v678
    %2718 = vmatpush.bf16.msra.mxu0 %v677
    %2719 = vmatpush.bf16.msra.mxu0 %v676
    %2720 = vmatpush.bf16.msra.mxu0 %v675
    %2721 = vmatmul.bf16.gmra.mxu0 %v2601
    %v2722 = vpop.f32.mrf.mxu0
    %v2723 = vadd.f32 %v2674, %v2722
    %v2724 = vpop.f32.mrf.mxu0
    %v2725 = vadd.f32 %v2676, %v2724
    %2726 = vmatmul.bf16.gmra.mxu0 %v2605
    %v2727 = vpop.f32.mrf.mxu0
    %v2728 = vadd.f32 %v2679, %v2727
    %v2729 = vpop.f32.mrf.mxu0
    %v2730 = vadd.f32 %v2681, %v2729
    %2731 = vmatmul.bf16.gmra.mxu0 %v2609
    %v2732 = vpop.f32.mrf.mxu0
    %v2733 = vadd.f32 %v2684, %v2732
    %v2734 = vpop.f32.mrf.mxu0
    %v2735 = vadd.f32 %v2686, %v2734
    %2736 = vmatmul.bf16.gmra.mxu0 %v2613
    %v2737 = vpop.f32.mrf.mxu0
    %v2738 = vadd.f32 %v2689, %v2737
    %v2739 = vpop.f32.mrf.mxu0
    %v2740 = vadd.f32 %v2691, %v2739
    %2741 = vmatmul.bf16.gmra.mxu0 %v2617
    %v2742 = vpop.f32.mrf.mxu0
    %v2743 = vadd.f32 %v2694, %v2742
    %v2744 = vpop.f32.mrf.mxu0
    %v2745 = vadd.f32 %v2696, %v2744
    %2746 = vmatmul.bf16.gmra.mxu0 %v2621
    %v2747 = vpop.f32.mrf.mxu0
    %v2748 = vadd.f32 %v2699, %v2747
    %v2749 = vpop.f32.mrf.mxu0
    %v2750 = vadd.f32 %v2701, %v2749
    %2751 = vmatmul.bf16.gmra.mxu0 %v2625
    %v2752 = vpop.f32.mrf.mxu0
    %v2753 = vadd.f32 %v2704, %v2752
    %v2754 = vpop.f32.mrf.mxu0
    %v2755 = vadd.f32 %v2706, %v2754
    %2756 = vmatmul.bf16.gmra.mxu0 %v2629
    %v2757 = vpop.f32.mrf.mxu0
    %v2758 = vadd.f32 %v2709, %v2757
    %v2759 = vpop.f32.mrf.mxu0
    %v2760 = vadd.f32 %v2711, %v2759
    %2761 = vdwg.mxu0
    %2762 = vmatpush.bf16.msra.mxu0 %v690
    %2763 = vmatpush.bf16.msra.mxu0 %v689
    %2764 = vmatpush.bf16.msra.mxu0 %v688
    %2765 = vmatpush.bf16.msra.mxu0 %v687
    %2766 = vmatpush.bf16.msra.mxu0 %v686
    %2767 = vmatpush.bf16.msra.mxu0 %v685
    %2768 = vmatpush.bf16.msra.mxu0 %v684
    %2769 = vmatpush.bf16.msra.mxu0 %v683
    %2770 = vmatmul.bf16.gmra.mxu0 %v2602
    %v2771 = vpop.f32.mrf.mxu0
    %v2772 = vadd.f32 %v2723, %v2771
    %v2773 = vpop.f32.mrf.mxu0
    %v2774 = vadd.f32 %v2725, %v2773
    %2775 = vmatmul.bf16.gmra.mxu0 %v2606
    %v2776 = vpop.f32.mrf.mxu0
    %v2777 = vadd.f32 %v2728, %v2776
    %v2778 = vpop.f32.mrf.mxu0
    %v2779 = vadd.f32 %v2730, %v2778
    %2780 = vmatmul.bf16.gmra.mxu0 %v2610
    %v2781 = vpop.f32.mrf.mxu0
    %v2782 = vadd.f32 %v2733, %v2781
    %v2783 = vpop.f32.mrf.mxu0
    %v2784 = vadd.f32 %v2735, %v2783
    %2785 = vmatmul.bf16.gmra.mxu0 %v2614
    %v2786 = vpop.f32.mrf.mxu0
    %v2787 = vadd.f32 %v2738, %v2786
    %v2788 = vpop.f32.mrf.mxu0
    %v2789 = vadd.f32 %v2740, %v2788
    %2790 = vmatmul.bf16.gmra.mxu0 %v2618
    %v2791 = vpop.f32.mrf.mxu0
    %v2792 = vadd.f32 %v2743, %v2791
    %v2793 = vpop.f32.mrf.mxu0
    %v2794 = vadd.f32 %v2745, %v2793
    %2795 = vmatmul.bf16.gmra.mxu0 %v2622
    %v2796 = vpop.f32.mrf.mxu0
    %v2797 = vadd.f32 %v2748, %v2796
    %v2798 = vpop.f32.mrf.mxu0
    %v2799 = vadd.f32 %v2750, %v2798
    %2800 = vmatmul.bf16.gmra.mxu0 %v2626
    %v2801 = vpop.f32.mrf.mxu0
    %v2802 = vadd.f32 %v2753, %v2801
    %v2803 = vpop.f32.mrf.mxu0
    %v2804 = vadd.f32 %v2755, %v2803
    %2805 = vmatmul.bf16.gmra.mxu0 %v2630
    %v2806 = vpop.f32.mrf.mxu0
    %v2807 = vadd.f32 %v2758, %v2806
    %v2808 = vpop.f32.mrf.mxu0
    %v2809 = vadd.f32 %v2760, %v2808
    %2810 = vdwg.mxu0
    %2811 = vmatpush.bf16.msra.mxu0 %v698
    %2812 = vmatpush.bf16.msra.mxu0 %v697
    %2813 = vmatpush.bf16.msra.mxu0 %v696
    %2814 = vmatpush.bf16.msra.mxu0 %v695
    %2815 = vmatpush.bf16.msra.mxu0 %v694
    %2816 = vmatpush.bf16.msra.mxu0 %v693
    %2817 = vmatpush.bf16.msra.mxu0 %v692
    %2818 = vmatpush.bf16.msra.mxu0 %v691
    %2819 = vmatmul.bf16.gmra.mxu0 %v2603
    %v2820 = vpop.f32.mrf.mxu0
    %v2821 = vadd.f32 %v2772, %v2820
    %v2822 = vpop.f32.mrf.mxu0
    %v2823 = vadd.f32 %v2774, %v2822
    %2824 = vmatmul.bf16.gmra.mxu0 %v2607
    %v2825 = vpop.f32.mrf.mxu0
    %v2826 = vadd.f32 %v2777, %v2825
    %v2827 = vpop.f32.mrf.mxu0
    %v2828 = vadd.f32 %v2779, %v2827
    %2829 = vmatmul.bf16.gmra.mxu0 %v2611
    %v2830 = vpop.f32.mrf.mxu0
    %v2831 = vadd.f32 %v2782, %v2830
    %v2832 = vpop.f32.mrf.mxu0
    %v2833 = vadd.f32 %v2784, %v2832
    %2834 = vmatmul.bf16.gmra.mxu0 %v2615
    %v2835 = vpop.f32.mrf.mxu0
    %v2836 = vadd.f32 %v2787, %v2835
    %v2837 = vpop.f32.mrf.mxu0
    %v2838 = vadd.f32 %v2789, %v2837
    %2839 = vmatmul.bf16.gmra.mxu0 %v2619
    %v2840 = vpop.f32.mrf.mxu0
    %v2841 = vadd.f32 %v2792, %v2840
    %v2842 = vpop.f32.mrf.mxu0
    %v2843 = vadd.f32 %v2794, %v2842
    %2844 = vmatmul.bf16.gmra.mxu0 %v2623
    %v2845 = vpop.f32.mrf.mxu0
    %v2846 = vadd.f32 %v2797, %v2845
    %v2847 = vpop.f32.mrf.mxu0
    %v2848 = vadd.f32 %v2799, %v2847
    %2849 = vmatmul.bf16.gmra.mxu0 %v2627
    %v2850 = vpop.f32.mrf.mxu0
    %v2851 = vadd.f32 %v2802, %v2850
    %v2852 = vpop.f32.mrf.mxu0
    %v2853 = vadd.f32 %v2804, %v2852
    %2854 = vmatmul.bf16.gmra.mxu0 %v2631
    %v2855 = vpop.f32.mrf.mxu0
    %v2856 = vadd.f32 %v2807, %v2855
    %v2857 = vpop.f32.mrf.mxu0
    %v2858 = vadd.f32 %v2809, %v2857
    %2859 = vdwg.mxu0
    %v2860 = vpack.c.bf16 %v2823, %v2821
    %v2861 = vpack.c.bf16 %v2828, %v2826
    %v2862 = vpack.c.bf16 %v2833, %v2831
    %v2863 = vpack.c.bf16 %v2838, %v2836
    %v2864 = vpack.c.bf16 %v2843, %v2841
    %v2865 = vpack.c.bf16 %v2848, %v2846
    %v2866 = vpack.c.bf16 %v2853, %v2851
    %v2867 = vpack.c.bf16 %v2858, %v2856
    %s2868 = scalar_lea.vmem [#allocation4], 16
    %v2869 = vld [vmem:[%s2868] sm:$0x7]
    %v2871 = vsel %vm1335, %v2860, 0
    %v2874 = vsel %vm1335, %v2861, 0
    %v2877 = vsel %vm1335, %v2862, 0
    %v2880 = vsel %vm1335, %v2863, 0
    %v2883 = vsel %vm1335, %v2864, 0
    %v2886 = vsel %vm1335, %v2865, 0
    %v2889 = vsel %vm1335, %v2866, 0
    %v2892 = vsel %vm1335, %v2867, 0
    %v2895 = vsel %vm1360, %v2869, 0
    %2897 = vmatpush.bf16.msra.mxu0 0
    %2898 = vmatpush.bf16.msra.mxu0 0
    %2899 = vmatpush.bf16.msra.mxu0 0
    %2900 = vmatpush.bf16.msra.mxu0 0
    %2901 = vmatpush.bf16.msra.mxu0 0
    %2902 = vmatpush.bf16.msra.mxu0 0
    %2903 = vmatpush.bf16.msra.mxu0 0
    %2904 = vmatpush.bf16.msra.mxu0 %v2895
    %2905 = vmatmul.bf16.gmra.mxu0 %v2871
    %v2906 = vpop.f32.mrf.mxu0
    %v2907 = vadd.f32 0.0, %v2906
    %v2908 = vpop.f32.mrf.mxu0
    %v2909 = vadd.f32 0.0, %v2908
    %2910 = vmatmul.bf16.gmra.mxu0 %v2874
    %v2911 = vpop.f32.mrf.mxu0
    %v2912 = vadd.f32 0.0, %v2911
    %v2913 = vpop.f32.mrf.mxu0
    %v2914 = vadd.f32 0.0, %v2913
    %2915 = vmatmul.bf16.gmra.mxu0 %v2877
    %v2916 = vpop.f32.mrf.mxu0
    %v2917 = vadd.f32 0.0, %v2916
    %v2918 = vpop.f32.mrf.mxu0
    %v2919 = vadd.f32 0.0, %v2918
    %2920 = vmatmul.bf16.gmra.mxu0 %v2880
    %v2921 = vpop.f32.mrf.mxu0
    %v2922 = vadd.f32 0.0, %v2921
    %v2923 = vpop.f32.mrf.mxu0
    %v2924 = vadd.f32 0.0, %v2923
    %2925 = vmatmul.bf16.gmra.mxu0 %v2883
    %v2926 = vpop.f32.mrf.mxu0
    %v2927 = vadd.f32 0.0, %v2926
    %v2928 = vpop.f32.mrf.mxu0
    %v2929 = vadd.f32 0.0, %v2928
    %2930 = vmatmul.bf16.gmra.mxu0 %v2886
    %v2931 = vpop.f32.mrf.mxu0
    %v2932 = vadd.f32 0.0, %v2931
    %v2933 = vpop.f32.mrf.mxu0
    %v2934 = vadd.f32 0.0, %v2933
    %2935 = vmatmul.bf16.gmra.mxu0 %v2889
    %v2936 = vpop.f32.mrf.mxu0
    %v2937 = vadd.f32 0.0, %v2936
    %v2938 = vpop.f32.mrf.mxu0
    %v2939 = vadd.f32 0.0, %v2938
    %2940 = vmatmul.bf16.gmra.mxu0 %v2892
    %v2941 = vpop.f32.mrf.mxu0
    %v2942 = vadd.f32 0.0, %v2941
    %v2943 = vpop.f32.mrf.mxu0
    %v2944 = vadd.f32 0.0, %v2943
    %2945 = vdwg.mxu0
    %v2946 = vadd.f32 %v2455, %v2907
    %v2947 = vadd.f32 %v2456, %v2909
    %v2948 = vadd.f32 %v2457, %v2912
    %v2949 = vadd.f32 %v2458, %v2914
    %v2950 = vadd.f32 %v2459, %v2917
    %v2951 = vadd.f32 %v2460, %v2919
    %v2952 = vadd.f32 %v2461, %v2922
    %v2953 = vadd.f32 %v2462, %v2924
    %v2954 = vadd.f32 %v2463, %v2927
    %v2955 = vadd.f32 %v2464, %v2929
    %v2956 = vadd.f32 %v2465, %v2932
    %v2957 = vadd.f32 %v2466, %v2934
    %v2958 = vadd.f32 %v2467, %v2937
    %v2959 = vadd.f32 %v2468, %v2939
    %v2960 = vadd.f32 %v2469, %v2942
    %v2961 = vadd.f32 %v2470, %v2944
    %s2962 = scalar_lea.vmem [#allocation2], 1280
    %v2963 = vld [vmem:[%s2962] sm:$0xff]
    %v2964 = vld [vmem:[%s2962 + $0x8] sm:$0xff]
    %v2965 = vld [vmem:[%s2962 + $0x10] sm:$0xff]
    %v2966 = vld [vmem:[%s2962 + $0x18] sm:$0xff]
    %v2967 = vld [vmem:[%s2962 + $0x20] sm:$0xff]
    %v2968 = vld [vmem:[%s2962 + $0x28] sm:$0xff]
    %v2969 = vld [vmem:[%s2962 + $0x30] sm:$0xff]
    %v2970 = vld [vmem:[%s2962 + $0x38] sm:$0xff]
    %v2971 = vld [vmem:[%s2962 + $0x40] sm:$0xff]
    %v2972 = vld [vmem:[%s2962 + $0x48] sm:$0xff]
    %v2973 = vld [vmem:[%s2962 + $0x50] sm:$0xff]
    %v2974 = vld [vmem:[%s2962 + $0x58] sm:$0xff]
    %v2975 = vld [vmem:[%s2962 + $0x60] sm:$0xff]
    %v2976 = vld [vmem:[%s2962 + $0x68] sm:$0xff]
    %v2977 = vld [vmem:[%s2962 + $0x70] sm:$0xff]
    %v2978 = vld [vmem:[%s2962 + $0x78] sm:$0xff]
    %v2979 = vld [vmem:[%s2962 + $0x80] sm:$0xff]
    %v2980 = vld [vmem:[%s2962 + $0x88] sm:$0xff]
    %v2981 = vld [vmem:[%s2962 + $0x90] sm:$0xff]
    %v2982 = vld [vmem:[%s2962 + $0x98] sm:$0xff]
    %v2983 = vld [vmem:[%s2962 + $0xa0] sm:$0xff]
    %v2984 = vld [vmem:[%s2962 + $0xa8] sm:$0xff]
    %v2985 = vld [vmem:[%s2962 + $0xb0] sm:$0xff]
    %v2986 = vld [vmem:[%s2962 + $0xb8] sm:$0xff]
    %v2987 = vld [vmem:[%s2962 + $0xc0] sm:$0xff]
    %v2988 = vld [vmem:[%s2962 + $0xc8] sm:$0xff]
    %v2989 = vld [vmem:[%s2962 + $0xd0] sm:$0xff]
    %v2990 = vld [vmem:[%s2962 + $0xd8] sm:$0xff]
    %v2991 = vld [vmem:[%s2962 + $0xe0] sm:$0xff]
    %v2992 = vld [vmem:[%s2962 + $0xe8] sm:$0xff]
    %v2993 = vld [vmem:[%s2962 + $0xf0] sm:$0xff]
    %v2994 = vld [vmem:[%s2962 + $0xf8] sm:$0xff]
    %v3027 = vunpack.c.l.b16 %v2963
    %v3028 = vunpack.c.h.b16 %v2963
    %v3029 = vunpack.c.l.b16 %v2964
    %v3030 = vunpack.c.h.b16 %v2964
    %v3031 = vunpack.c.l.b16 %v2965
    %v3032 = vunpack.c.h.b16 %v2965
    %v3033 = vunpack.c.l.b16 %v2966
    %v3034 = vunpack.c.h.b16 %v2966
    %v3035 = vunpack.c.l.b16 %v2967
    %v3036 = vunpack.c.h.b16 %v2967
    %v3037 = vunpack.c.l.b16 %v2968
    %v3038 = vunpack.c.h.b16 %v2968
    %v3039 = vunpack.c.l.b16 %v2969
    %v3040 = vunpack.c.h.b16 %v2969
    %v3041 = vunpack.c.l.b16 %v2970
    %v3042 = vunpack.c.h.b16 %v2970
    %v3043 = vunpack.c.l.b16 %v2971
    %v3044 = vunpack.c.h.b16 %v2971
    %v3045 = vunpack.c.l.b16 %v2972
    %v3046 = vunpack.c.h.b16 %v2972
    %v3047 = vunpack.c.l.b16 %v2973
    %v3048 = vunpack.c.h.b16 %v2973
    %v3049 = vunpack.c.l.b16 %v2974
    %v3050 = vunpack.c.h.b16 %v2974
    %v3051 = vunpack.c.l.b16 %v2975
    %v3052 = vunpack.c.h.b16 %v2975
    %v3053 = vunpack.c.l.b16 %v2976
    %v3054 = vunpack.c.h.b16 %v2976
    %v3055 = vunpack.c.l.b16 %v2977
    %v3056 = vunpack.c.h.b16 %v2977
    %v3057 = vunpack.c.l.b16 %v2978
    %v3058 = vunpack.c.h.b16 %v2978
    %v3059 = vunpack.c.l.b16 %v2979
    %v3060 = vunpack.c.h.b16 %v2979
    %v3061 = vunpack.c.l.b16 %v2980
    %v3062 = vunpack.c.h.b16 %v2980
    %v3063 = vunpack.c.l.b16 %v2981
    %v3064 = vunpack.c.h.b16 %v2981
    %v3065 = vunpack.c.l.b16 %v2982
    %v3066 = vunpack.c.h.b16 %v2982
    %v3067 = vunpack.c.l.b16 %v2983
    %v3068 = vunpack.c.h.b16 %v2983
    %v3069 = vunpack.c.l.b16 %v2984
    %v3070 = vunpack.c.h.b16 %v2984
    %v3071 = vunpack.c.l.b16 %v2985
    %v3072 = vunpack.c.h.b16 %v2985
    %v3073 = vunpack.c.l.b16 %v2986
    %v3074 = vunpack.c.h.b16 %v2986
    %v3075 = vunpack.c.l.b16 %v2987
    %v3076 = vunpack.c.h.b16 %v2987
    %v3077 = vunpack.c.l.b16 %v2988
    %v3078 = vunpack.c.h.b16 %v2988
    %v3079 = vunpack.c.l.b16 %v2989
    %v3080 = vunpack.c.h.b16 %v2989
    %v3081 = vunpack.c.l.b16 %v2990
    %v3082 = vunpack.c.h.b16 %v2990
    %v3083 = vunpack.c.l.b16 %v2991
    %v3084 = vunpack.c.h.b16 %v2991
    %v3085 = vunpack.c.l.b16 %v2992
    %v3086 = vunpack.c.h.b16 %v2992
    %v3087 = vunpack.c.l.b16 %v2993
    %v3088 = vunpack.c.h.b16 %v2993
    %v3089 = vunpack.c.l.b16 %v2994
    %v3090 = vunpack.c.h.b16 %v2994
    %v3091 = vpack.c.b16 %v3031, %v3027
    %v3092 = vpack.c.b16 %v3032, %v3028
    %v3093 = vpack.c.b16 %v3033, %v3029
    %v3094 = vpack.c.b16 %v3034, %v3030
    %v3095 = vpack.c.b16 %v3039, %v3035
    %v3096 = vpack.c.b16 %v3040, %v3036
    %v3097 = vpack.c.b16 %v3041, %v3037
    %v3098 = vpack.c.b16 %v3042, %v3038
    %v3099 = vpack.c.b16 %v3047, %v3043
    %v3100 = vpack.c.b16 %v3048, %v3044
    %v3101 = vpack.c.b16 %v3049, %v3045
    %v3102 = vpack.c.b16 %v3050, %v3046
    %v3103 = vpack.c.b16 %v3055, %v3051
    %v3104 = vpack.c.b16 %v3056, %v3052
    %v3105 = vpack.c.b16 %v3057, %v3053
    %v3106 = vpack.c.b16 %v3058, %v3054
    %v3107 = vpack.c.b16 %v3063, %v3059
    %v3108 = vpack.c.b16 %v3064, %v3060
    %v3109 = vpack.c.b16 %v3065, %v3061
    %v3110 = vpack.c.b16 %v3066, %v3062
    %v3111 = vpack.c.b16 %v3071, %v3067
    %v3112 = vpack.c.b16 %v3072, %v3068
    %v3113 = vpack.c.b16 %v3073, %v3069
    %v3114 = vpack.c.b16 %v3074, %v3070
    %v3115 = vpack.c.b16 %v3079, %v3075
    %v3116 = vpack.c.b16 %v3080, %v3076
    %v3117 = vpack.c.b16 %v3081, %v3077
    %v3118 = vpack.c.b16 %v3082, %v3078
    %v3119 = vpack.c.b16 %v3087, %v3083
    %v3120 = vpack.c.b16 %v3088, %v3084
    %v3121 = vpack.c.b16 %v3089, %v3085
    %v3122 = vpack.c.b16 %v3090, %v3086
    %3155 = vmatpush.bf16.msra.mxu0 %v674
    %3156 = vmatpush.bf16.msra.mxu0 %v673
    %3157 = vmatpush.bf16.msra.mxu0 %v672
    %3158 = vmatpush.bf16.msra.mxu0 %v671
    %3159 = vmatpush.bf16.msra.mxu0 %v670
    %3160 = vmatpush.bf16.msra.mxu0 %v669
    %3161 = vmatpush.bf16.msra.mxu0 %v668
    %3162 = vmatpush.bf16.msra.mxu0 %v667
    %3163 = vmatmul.bf16.gmra.mxu0 %v3091
    %v3164 = vpop.f32.mrf.mxu0
    %v3165 = vadd.f32 0.0, %v3164
    %v3166 = vpop.f32.mrf.mxu0
    %v3167 = vadd.f32 0.0, %v3166
    %3168 = vmatmul.bf16.gmra.mxu0 %v3095
    %v3169 = vpop.f32.mrf.mxu0
    %v3170 = vadd.f32 0.0, %v3169
    %v3171 = vpop.f32.mrf.mxu0
    %v3172 = vadd.f32 0.0, %v3171
    %3173 = vmatmul.bf16.gmra.mxu0 %v3099
    %v3174 = vpop.f32.mrf.mxu0
    %v3175 = vadd.f32 0.0, %v3174
    %v3176 = vpop.f32.mrf.mxu0
    %v3177 = vadd.f32 0.0, %v3176
    %3178 = vmatmul.bf16.gmra.mxu0 %v3103
    %v3179 = vpop.f32.mrf.mxu0
    %v3180 = vadd.f32 0.0, %v3179
    %v3181 = vpop.f32.mrf.mxu0
    %v3182 = vadd.f32 0.0, %v3181
    %3183 = vmatmul.bf16.gmra.mxu0 %v3107
    %v3184 = vpop.f32.mrf.mxu0
    %v3185 = vadd.f32 0.0, %v3184
    %v3186 = vpop.f32.mrf.mxu0
    %v3187 = vadd.f32 0.0, %v3186
    %3188 = vmatmul.bf16.gmra.mxu0 %v3111
    %v3189 = vpop.f32.mrf.mxu0
    %v3190 = vadd.f32 0.0, %v3189
    %v3191 = vpop.f32.mrf.mxu0
    %v3192 = vadd.f32 0.0, %v3191
    %3193 = vmatmul.bf16.gmra.mxu0 %v3115
    %v3194 = vpop.f32.mrf.mxu0
    %v3195 = vadd.f32 0.0, %v3194
    %v3196 = vpop.f32.mrf.mxu0
    %v3197 = vadd.f32 0.0, %v3196
    %3198 = vmatmul.bf16.gmra.mxu0 %v3119
    %v3199 = vpop.f32.mrf.mxu0
    %v3200 = vadd.f32 0.0, %v3199
    %v3201 = vpop.f32.mrf.mxu0
    %v3202 = vadd.f32 0.0, %v3201
    %3203 = vdwg.mxu0
    %3204 = vmatpush.bf16.msra.mxu0 %v682
    %3205 = vmatpush.bf16.msra.mxu0 %v681
    %3206 = vmatpush.bf16.msra.mxu0 %v680
    %3207 = vmatpush.bf16.msra.mxu0 %v679
    %3208 = vmatpush.bf16.msra.mxu0 %v678
    %3209 = vmatpush.bf16.msra.mxu0 %v677
    %3210 = vmatpush.bf16.msra.mxu0 %v676
    %3211 = vmatpush.bf16.msra.mxu0 %v675
    %3212 = vmatmul.bf16.gmra.mxu0 %v3092
    %v3213 = vpop.f32.mrf.mxu0
    %v3214 = vadd.f32 %v3165, %v3213
    %v3215 = vpop.f32.mrf.mxu0
    %v3216 = vadd.f32 %v3167, %v3215
    %3217 = vmatmul.bf16.gmra.mxu0 %v3096
    %v3218 = vpop.f32.mrf.mxu0
    %v3219 = vadd.f32 %v3170, %v3218
    %v3220 = vpop.f32.mrf.mxu0
    %v3221 = vadd.f32 %v3172, %v3220
    %3222 = vmatmul.bf16.gmra.mxu0 %v3100
    %v3223 = vpop.f32.mrf.mxu0
    %v3224 = vadd.f32 %v3175, %v3223
    %v3225 = vpop.f32.mrf.mxu0
    %v3226 = vadd.f32 %v3177, %v3225
    %3227 = vmatmul.bf16.gmra.mxu0 %v3104
    %v3228 = vpop.f32.mrf.mxu0
    %v3229 = vadd.f32 %v3180, %v3228
    %v3230 = vpop.f32.mrf.mxu0
    %v3231 = vadd.f32 %v3182, %v3230
    %3232 = vmatmul.bf16.gmra.mxu0 %v3108
    %v3233 = vpop.f32.mrf.mxu0
    %v3234 = vadd.f32 %v3185, %v3233
    %v3235 = vpop.f32.mrf.mxu0
    %v3236 = vadd.f32 %v3187, %v3235
    %3237 = vmatmul.bf16.gmra.mxu0 %v3112
    %v3238 = vpop.f32.mrf.mxu0
    %v3239 = vadd.f32 %v3190, %v3238
    %v3240 = vpop.f32.mrf.mxu0
    %v3241 = vadd.f32 %v3192, %v3240
    %3242 = vmatmul.bf16.gmra.mxu0 %v3116
    %v3243 = vpop.f32.mrf.mxu0
    %v3244 = vadd.f32 %v3195, %v3243
    %v3245 = vpop.f32.mrf.mxu0
    %v3246 = vadd.f32 %v3197, %v3245
    %3247 = vmatmul.bf16.gmra.mxu0 %v3120
    %v3248 = vpop.f32.mrf.mxu0
    %v3249 = vadd.f32 %v3200, %v3248
    %v3250 = vpop.f32.mrf.mxu0
    %v3251 = vadd.f32 %v3202, %v3250
    %3252 = vdwg.mxu0
    %3253 = vmatpush.bf16.msra.mxu0 %v690
    %3254 = vmatpush.bf16.msra.mxu0 %v689
    %3255 = vmatpush.bf16.msra.mxu0 %v688
    %3256 = vmatpush.bf16.msra.mxu0 %v687
    %3257 = vmatpush.bf16.msra.mxu0 %v686
    %3258 = vmatpush.bf16.msra.mxu0 %v685
    %3259 = vmatpush.bf16.msra.mxu0 %v684
    %3260 = vmatpush.bf16.msra.mxu0 %v683
    %3261 = vmatmul.bf16.gmra.mxu0 %v3093
    %v3262 = vpop.f32.mrf.mxu0
    %v3263 = vadd.f32 %v3214, %v3262
    %v3264 = vpop.f32.mrf.mxu0
    %v3265 = vadd.f32 %v3216, %v3264
    %3266 = vmatmul.bf16.gmra.mxu0 %v3097
    %v3267 = vpop.f32.mrf.mxu0
    %v3268 = vadd.f32 %v3219, %v3267
    %v3269 = vpop.f32.mrf.mxu0
    %v3270 = vadd.f32 %v3221, %v3269
    %3271 = vmatmul.bf16.gmra.mxu0 %v3101
    %v3272 = vpop.f32.mrf.mxu0
    %v3273 = vadd.f32 %v3224, %v3272
    %v3274 = vpop.f32.mrf.mxu0
    %v3275 = vadd.f32 %v3226, %v3274
    %3276 = vmatmul.bf16.gmra.mxu0 %v3105
    %v3277 = vpop.f32.mrf.mxu0
    %v3278 = vadd.f32 %v3229, %v3277
    %v3279 = vpop.f32.mrf.mxu0
    %v3280 = vadd.f32 %v3231, %v3279
    %3281 = vmatmul.bf16.gmra.mxu0 %v3109
    %v3282 = vpop.f32.mrf.mxu0
    %v3283 = vadd.f32 %v3234, %v3282
    %v3284 = vpop.f32.mrf.mxu0
    %v3285 = vadd.f32 %v3236, %v3284
    %3286 = vmatmul.bf16.gmra.mxu0 %v3113
    %v3287 = vpop.f32.mrf.mxu0
    %v3288 = vadd.f32 %v3239, %v3287
    %v3289 = vpop.f32.mrf.mxu0
    %v3290 = vadd.f32 %v3241, %v3289
    %3291 = vmatmul.bf16.gmra.mxu0 %v3117
    %v3292 = vpop.f32.mrf.mxu0
    %v3293 = vadd.f32 %v3244, %v3292
    %v3294 = vpop.f32.mrf.mxu0
    %v3295 = vadd.f32 %v3246, %v3294
    %3296 = vmatmul.bf16.gmra.mxu0 %v3121
    %v3297 = vpop.f32.mrf.mxu0
    %v3298 = vadd.f32 %v3249, %v3297
    %v3299 = vpop.f32.mrf.mxu0
    %v3300 = vadd.f32 %v3251, %v3299
    %3301 = vdwg.mxu0
    %3302 = vmatpush.bf16.msra.mxu0 %v698
    %3303 = vmatpush.bf16.msra.mxu0 %v697
    %3304 = vmatpush.bf16.msra.mxu0 %v696
    %3305 = vmatpush.bf16.msra.mxu0 %v695
    %3306 = vmatpush.bf16.msra.mxu0 %v694
    %3307 = vmatpush.bf16.msra.mxu0 %v693
    %3308 = vmatpush.bf16.msra.mxu0 %v692
    %3309 = vmatpush.bf16.msra.mxu0 %v691
    %3310 = vmatmul.bf16.gmra.mxu0 %v3094
    %v3311 = vpop.f32.mrf.mxu0
    %v3312 = vadd.f32 %v3263, %v3311
    %v3313 = vpop.f32.mrf.mxu0
    %v3314 = vadd.f32 %v3265, %v3313
    %3315 = vmatmul.bf16.gmra.mxu0 %v3098
    %v3316 = vpop.f32.mrf.mxu0
    %v3317 = vadd.f32 %v3268, %v3316
    %v3318 = vpop.f32.mrf.mxu0
    %v3319 = vadd.f32 %v3270, %v3318
    %3320 = vmatmul.bf16.gmra.mxu0 %v3102
    %v3321 = vpop.f32.mrf.mxu0
    %v3322 = vadd.f32 %v3273, %v3321
    %v3323 = vpop.f32.mrf.mxu0
    %v3324 = vadd.f32 %v3275, %v3323
    %3325 = vmatmul.bf16.gmra.mxu0 %v3106
    %v3326 = vpop.f32.mrf.mxu0
    %v3327 = vadd.f32 %v3278, %v3326
    %v3328 = vpop.f32.mrf.mxu0
    %v3329 = vadd.f32 %v3280, %v3328
    %3330 = vmatmul.bf16.gmra.mxu0 %v3110
    %v3331 = vpop.f32.mrf.mxu0
    %v3332 = vadd.f32 %v3283, %v3331
    %v3333 = vpop.f32.mrf.mxu0
    %v3334 = vadd.f32 %v3285, %v3333
    %3335 = vmatmul.bf16.gmra.mxu0 %v3114
    %v3336 = vpop.f32.mrf.mxu0
    %v3337 = vadd.f32 %v3288, %v3336
    %v3338 = vpop.f32.mrf.mxu0
    %v3339 = vadd.f32 %v3290, %v3338
    %3340 = vmatmul.bf16.gmra.mxu0 %v3118
    %v3341 = vpop.f32.mrf.mxu0
    %v3342 = vadd.f32 %v3293, %v3341
    %v3343 = vpop.f32.mrf.mxu0
    %v3344 = vadd.f32 %v3295, %v3343
    %3345 = vmatmul.bf16.gmra.mxu0 %v3122
    %v3346 = vpop.f32.mrf.mxu0
    %v3347 = vadd.f32 %v3298, %v3346
    %v3348 = vpop.f32.mrf.mxu0
    %v3349 = vadd.f32 %v3300, %v3348
    %3350 = vdwg.mxu0
    %v3351 = vpack.c.bf16 %v3314, %v3312
    %v3352 = vpack.c.bf16 %v3319, %v3317
    %v3353 = vpack.c.bf16 %v3324, %v3322
    %v3354 = vpack.c.bf16 %v3329, %v3327
    %v3355 = vpack.c.bf16 %v3334, %v3332
    %v3356 = vpack.c.bf16 %v3339, %v3337
    %v3357 = vpack.c.bf16 %v3344, %v3342
    %v3358 = vpack.c.bf16 %v3349, %v3347
    %s3359 = scalar_lea.vmem [#allocation4], 20
    %v3360 = vld [vmem:[%s3359] sm:$0x7]
    %v3362 = vsel %vm1335, %v3351, 0
    %v3365 = vsel %vm1335, %v3352, 0
    %v3368 = vsel %vm1335, %v3353, 0
    %v3371 = vsel %vm1335, %v3354, 0
    %v3374 = vsel %vm1335, %v3355, 0
    %v3377 = vsel %vm1335, %v3356, 0
    %v3380 = vsel %vm1335, %v3357, 0
    %v3383 = vsel %vm1335, %v3358, 0
    %v3386 = vsel %vm1360, %v3360, 0
    %3388 = vmatpush.bf16.msra.mxu0 0
    %3389 = vmatpush.bf16.msra.mxu0 0
    %3390 = vmatpush.bf16.msra.mxu0 0
    %3391 = vmatpush.bf16.msra.mxu0 0
    %3392 = vmatpush.bf16.msra.mxu0 0
    %3393 = vmatpush.bf16.msra.mxu0 0
    %3394 = vmatpush.bf16.msra.mxu0 0
    %3395 = vmatpush.bf16.msra.mxu0 %v3386
    %3396 = vmatmul.bf16.gmra.mxu0 %v3362
    %v3397 = vpop.f32.mrf.mxu0
    %v3398 = vadd.f32 0.0, %v3397
    %v3399 = vpop.f32.mrf.mxu0
    %v3400 = vadd.f32 0.0, %v3399
    %3401 = vmatmul.bf16.gmra.mxu0 %v3365
    %v3402 = vpop.f32.mrf.mxu0
    %v3403 = vadd.f32 0.0, %v3402
    %v3404 = vpop.f32.mrf.mxu0
    %v3405 = vadd.f32 0.0, %v3404
    %3406 = vmatmul.bf16.gmra.mxu0 %v3368
    %v3407 = vpop.f32.mrf.mxu0
    %v3408 = vadd.f32 0.0, %v3407
    %v3409 = vpop.f32.mrf.mxu0
    %v3410 = vadd.f32 0.0, %v3409
    %3411 = vmatmul.bf16.gmra.mxu0 %v3371
    %v3412 = vpop.f32.mrf.mxu0
    %v3413 = vadd.f32 0.0, %v3412
    %v3414 = vpop.f32.mrf.mxu0
    %v3415 = vadd.f32 0.0, %v3414
    %3416 = vmatmul.bf16.gmra.mxu0 %v3374
    %v3417 = vpop.f32.mrf.mxu0
    %v3418 = vadd.f32 0.0, %v3417
    %v3419 = vpop.f32.mrf.mxu0
    %v3420 = vadd.f32 0.0, %v3419
    %3421 = vmatmul.bf16.gmra.mxu0 %v3377
    %v3422 = vpop.f32.mrf.mxu0
    %v3423 = vadd.f32 0.0, %v3422
    %v3424 = vpop.f32.mrf.mxu0
    %v3425 = vadd.f32 0.0, %v3424
    %3426 = vmatmul.bf16.gmra.mxu0 %v3380
    %v3427 = vpop.f32.mrf.mxu0
    %v3428 = vadd.f32 0.0, %v3427
    %v3429 = vpop.f32.mrf.mxu0
    %v3430 = vadd.f32 0.0, %v3429
    %3431 = vmatmul.bf16.gmra.mxu0 %v3383
    %v3432 = vpop.f32.mrf.mxu0
    %v3433 = vadd.f32 0.0, %v3432
    %v3434 = vpop.f32.mrf.mxu0
    %v3435 = vadd.f32 0.0, %v3434
    %3436 = vdwg.mxu0
    %v3437 = vadd.f32 %v2946, %v3398
    %v3438 = vadd.f32 %v2947, %v3400
    %v3439 = vadd.f32 %v2948, %v3403
    %v3440 = vadd.f32 %v2949, %v3405
    %v3441 = vadd.f32 %v2950, %v3408
    %v3442 = vadd.f32 %v2951, %v3410
    %v3443 = vadd.f32 %v2952, %v3413
    %v3444 = vadd.f32 %v2953, %v3415
    %v3445 = vadd.f32 %v2954, %v3418
    %v3446 = vadd.f32 %v2955, %v3420
    %v3447 = vadd.f32 %v2956, %v3423
    %v3448 = vadd.f32 %v2957, %v3425
    %v3449 = vadd.f32 %v2958, %v3428
    %v3450 = vadd.f32 %v2959, %v3430
    %v3451 = vadd.f32 %v2960, %v3433
    %v3452 = vadd.f32 %v2961, %v3435
    %s3453 = scalar_lea.vmem [#allocation2], 1536
    %v3454 = vld [vmem:[%s3453] sm:$0xff]
    %v3455 = vld [vmem:[%s3453 + $0x8] sm:$0xff]
    %v3456 = vld [vmem:[%s3453 + $0x10] sm:$0xff]
    %v3457 = vld [vmem:[%s3453 + $0x18] sm:$0xff]
    %v3458 = vld [vmem:[%s3453 + $0x20] sm:$0xff]
    %v3459 = vld [vmem:[%s3453 + $0x28] sm:$0xff]
    %v3460 = vld [vmem:[%s3453 + $0x30] sm:$0xff]
    %v3461 = vld [vmem:[%s3453 + $0x38] sm:$0xff]
    %v3462 = vld [vmem:[%s3453 + $0x40] sm:$0xff]
    %v3463 = vld [vmem:[%s3453 + $0x48] sm:$0xff]
    %v3464 = vld [vmem:[%s3453 + $0x50] sm:$0xff]
    %v3465 = vld [vmem:[%s3453 + $0x58] sm:$0xff]
    %v3466 = vld [vmem:[%s3453 + $0x60] sm:$0xff]
    %v3467 = vld [vmem:[%s3453 + $0x68] sm:$0xff]
    %v3468 = vld [vmem:[%s3453 + $0x70] sm:$0xff]
    %v3469 = vld [vmem:[%s3453 + $0x78] sm:$0xff]
    %v3470 = vld [vmem:[%s3453 + $0x80] sm:$0xff]
    %v3471 = vld [vmem:[%s3453 + $0x88] sm:$0xff]
    %v3472 = vld [vmem:[%s3453 + $0x90] sm:$0xff]
    %v3473 = vld [vmem:[%s3453 + $0x98] sm:$0xff]
    %v3474 = vld [vmem:[%s3453 + $0xa0] sm:$0xff]
    %v3475 = vld [vmem:[%s3453 + $0xa8] sm:$0xff]
    %v3476 = vld [vmem:[%s3453 + $0xb0] sm:$0xff]
    %v3477 = vld [vmem:[%s3453 + $0xb8] sm:$0xff]
    %v3478 = vld [vmem:[%s3453 + $0xc0] sm:$0xff]
    %v3479 = vld [vmem:[%s3453 + $0xc8] sm:$0xff]
    %v3480 = vld [vmem:[%s3453 + $0xd0] sm:$0xff]
    %v3481 = vld [vmem:[%s3453 + $0xd8] sm:$0xff]
    %v3482 = vld [vmem:[%s3453 + $0xe0] sm:$0xff]
    %v3483 = vld [vmem:[%s3453 + $0xe8] sm:$0xff]
    %v3484 = vld [vmem:[%s3453 + $0xf0] sm:$0xff]
    %v3485 = vld [vmem:[%s3453 + $0xf8] sm:$0xff]
    %v3518 = vunpack.c.l.b16 %v3454
    %v3519 = vunpack.c.h.b16 %v3454
    %v3520 = vunpack.c.l.b16 %v3455
    %v3521 = vunpack.c.h.b16 %v3455
    %v3522 = vunpack.c.l.b16 %v3456
    %v3523 = vunpack.c.h.b16 %v3456
    %v3524 = vunpack.c.l.b16 %v3457
    %v3525 = vunpack.c.h.b16 %v3457
    %v3526 = vunpack.c.l.b16 %v3458
    %v3527 = vunpack.c.h.b16 %v3458
    %v3528 = vunpack.c.l.b16 %v3459
    %v3529 = vunpack.c.h.b16 %v3459
    %v3530 = vunpack.c.l.b16 %v3460
    %v3531 = vunpack.c.h.b16 %v3460
    %v3532 = vunpack.c.l.b16 %v3461
    %v3533 = vunpack.c.h.b16 %v3461
    %v3534 = vunpack.c.l.b16 %v3462
    %v3535 = vunpack.c.h.b16 %v3462
    %v3536 = vunpack.c.l.b16 %v3463
    %v3537 = vunpack.c.h.b16 %v3463
    %v3538 = vunpack.c.l.b16 %v3464
    %v3539 = vunpack.c.h.b16 %v3464
    %v3540 = vunpack.c.l.b16 %v3465
    %v3541 = vunpack.c.h.b16 %v3465
    %v3542 = vunpack.c.l.b16 %v3466
    %v3543 = vunpack.c.h.b16 %v3466
    %v3544 = vunpack.c.l.b16 %v3467
    %v3545 = vunpack.c.h.b16 %v3467
    %v3546 = vunpack.c.l.b16 %v3468
    %v3547 = vunpack.c.h.b16 %v3468
    %v3548 = vunpack.c.l.b16 %v3469
    %v3549 = vunpack.c.h.b16 %v3469
    %v3550 = vunpack.c.l.b16 %v3470
    %v3551 = vunpack.c.h.b16 %v3470
    %v3552 = vunpack.c.l.b16 %v3471
    %v3553 = vunpack.c.h.b16 %v3471
    %v3554 = vunpack.c.l.b16 %v3472
    %v3555 = vunpack.c.h.b16 %v3472
    %v3556 = vunpack.c.l.b16 %v3473
    %v3557 = vunpack.c.h.b16 %v3473
    %v3558 = vunpack.c.l.b16 %v3474
    %v3559 = vunpack.c.h.b16 %v3474
    %v3560 = vunpack.c.l.b16 %v3475
    %v3561 = vunpack.c.h.b16 %v3475
    %v3562 = vunpack.c.l.b16 %v3476
    %v3563 = vunpack.c.h.b16 %v3476
    %v3564 = vunpack.c.l.b16 %v3477
    %v3565 = vunpack.c.h.b16 %v3477
    %v3566 = vunpack.c.l.b16 %v3478
    %v3567 = vunpack.c.h.b16 %v3478
    %v3568 = vunpack.c.l.b16 %v3479
    %v3569 = vunpack.c.h.b16 %v3479
    %v3570 = vunpack.c.l.b16 %v3480
    %v3571 = vunpack.c.h.b16 %v3480
    %v3572 = vunpack.c.l.b16 %v3481
    %v3573 = vunpack.c.h.b16 %v3481
    %v3574 = vunpack.c.l.b16 %v3482
    %v3575 = vunpack.c.h.b16 %v3482
    %v3576 = vunpack.c.l.b16 %v3483
    %v3577 = vunpack.c.h.b16 %v3483
    %v3578 = vunpack.c.l.b16 %v3484
    %v3579 = vunpack.c.h.b16 %v3484
    %v3580 = vunpack.c.l.b16 %v3485
    %v3581 = vunpack.c.h.b16 %v3485
    %v3582 = vpack.c.b16 %v3522, %v3518
    %v3583 = vpack.c.b16 %v3523, %v3519
    %v3584 = vpack.c.b16 %v3524, %v3520
    %v3585 = vpack.c.b16 %v3525, %v3521
    %v3586 = vpack.c.b16 %v3530, %v3526
    %v3587 = vpack.c.b16 %v3531, %v3527
    %v3588 = vpack.c.b16 %v3532, %v3528
    %v3589 = vpack.c.b16 %v3533, %v3529
    %v3590 = vpack.c.b16 %v3538, %v3534
    %v3591 = vpack.c.b16 %v3539, %v3535
    %v3592 = vpack.c.b16 %v3540, %v3536
    %v3593 = vpack.c.b16 %v3541, %v3537
    %v3594 = vpack.c.b16 %v3546, %v3542
    %v3595 = vpack.c.b16 %v3547, %v3543
    %v3596 = vpack.c.b16 %v3548, %v3544
    %v3597 = vpack.c.b16 %v3549, %v3545
    %v3598 = vpack.c.b16 %v3554, %v3550
    %v3599 = vpack.c.b16 %v3555, %v3551
    %v3600 = vpack.c.b16 %v3556, %v3552
    %v3601 = vpack.c.b16 %v3557, %v3553
    %v3602 = vpack.c.b16 %v3562, %v3558
    %v3603 = vpack.c.b16 %v3563, %v3559
    %v3604 = vpack.c.b16 %v3564, %v3560
    %v3605 = vpack.c.b16 %v3565, %v3561
    %v3606 = vpack.c.b16 %v3570, %v3566
    %v3607 = vpack.c.b16 %v3571, %v3567
    %v3608 = vpack.c.b16 %v3572, %v3568
    %v3609 = vpack.c.b16 %v3573, %v3569
    %v3610 = vpack.c.b16 %v3578, %v3574
    %v3611 = vpack.c.b16 %v3579, %v3575
    %v3612 = vpack.c.b16 %v3580, %v3576
    %v3613 = vpack.c.b16 %v3581, %v3577
    %3646 = vmatpush.bf16.msra.mxu0 %v674
    %3647 = vmatpush.bf16.msra.mxu0 %v673
    %3648 = vmatpush.bf16.msra.mxu0 %v672
    %3649 = vmatpush.bf16.msra.mxu0 %v671
    %3650 = vmatpush.bf16.msra.mxu0 %v670
    %3651 = vmatpush.bf16.msra.mxu0 %v669
    %3652 = vmatpush.bf16.msra.mxu0 %v668
    %3653 = vmatpush.bf16.msra.mxu0 %v667
    %3654 = vmatmul.bf16.gmra.mxu0 %v3582
    %v3655 = vpop.f32.mrf.mxu0
    %v3656 = vadd.f32 0.0, %v3655
    %v3657 = vpop.f32.mrf.mxu0
    %v3658 = vadd.f32 0.0, %v3657
    %3659 = vmatmul.bf16.gmra.mxu0 %v3586
    %v3660 = vpop.f32.mrf.mxu0
    %v3661 = vadd.f32 0.0, %v3660
    %v3662 = vpop.f32.mrf.mxu0
    %v3663 = vadd.f32 0.0, %v3662
    %3664 = vmatmul.bf16.gmra.mxu0 %v3590
    %v3665 = vpop.f32.mrf.mxu0
    %v3666 = vadd.f32 0.0, %v3665
    %v3667 = vpop.f32.mrf.mxu0
    %v3668 = vadd.f32 0.0, %v3667
    %3669 = vmatmul.bf16.gmra.mxu0 %v3594
    %v3670 = vpop.f32.mrf.mxu0
    %v3671 = vadd.f32 0.0, %v3670
    %v3672 = vpop.f32.mrf.mxu0
    %v3673 = vadd.f32 0.0, %v3672
    %3674 = vmatmul.bf16.gmra.mxu0 %v3598
    %v3675 = vpop.f32.mrf.mxu0
    %v3676 = vadd.f32 0.0, %v3675
    %v3677 = vpop.f32.mrf.mxu0
    %v3678 = vadd.f32 0.0, %v3677
    %3679 = vmatmul.bf16.gmra.mxu0 %v3602
    %v3680 = vpop.f32.mrf.mxu0
    %v3681 = vadd.f32 0.0, %v3680
    %v3682 = vpop.f32.mrf.mxu0
    %v3683 = vadd.f32 0.0, %v3682
    %3684 = vmatmul.bf16.gmra.mxu0 %v3606
    %v3685 = vpop.f32.mrf.mxu0
    %v3686 = vadd.f32 0.0, %v3685
    %v3687 = vpop.f32.mrf.mxu0
    %v3688 = vadd.f32 0.0, %v3687
    %3689 = vmatmul.bf16.gmra.mxu0 %v3610
    %v3690 = vpop.f32.mrf.mxu0
    %v3691 = vadd.f32 0.0, %v3690
    %v3692 = vpop.f32.mrf.mxu0
    %v3693 = vadd.f32 0.0, %v3692
    %3694 = vdwg.mxu0
    %3695 = vmatpush.bf16.msra.mxu0 %v682
    %3696 = vmatpush.bf16.msra.mxu0 %v681
    %3697 = vmatpush.bf16.msra.mxu0 %v680
    %3698 = vmatpush.bf16.msra.mxu0 %v679
    %3699 = vmatpush.bf16.msra.mxu0 %v678
    %3700 = vmatpush.bf16.msra.mxu0 %v677
    %3701 = vmatpush.bf16.msra.mxu0 %v676
    %3702 = vmatpush.bf16.msra.mxu0 %v675
    %3703 = vmatmul.bf16.gmra.mxu0 %v3583
    %v3704 = vpop.f32.mrf.mxu0
    %v3705 = vadd.f32 %v3656, %v3704
    %v3706 = vpop.f32.mrf.mxu0
    %v3707 = vadd.f32 %v3658, %v3706
    %3708 = vmatmul.bf16.gmra.mxu0 %v3587
    %v3709 = vpop.f32.mrf.mxu0
    %v3710 = vadd.f32 %v3661, %v3709
    %v3711 = vpop.f32.mrf.mxu0
    %v3712 = vadd.f32 %v3663, %v3711
    %3713 = vmatmul.bf16.gmra.mxu0 %v3591
    %v3714 = vpop.f32.mrf.mxu0
    %v3715 = vadd.f32 %v3666, %v3714
    %v3716 = vpop.f32.mrf.mxu0
    %v3717 = vadd.f32 %v3668, %v3716
    %3718 = vmatmul.bf16.gmra.mxu0 %v3595
    %v3719 = vpop.f32.mrf.mxu0
    %v3720 = vadd.f32 %v3671, %v3719
    %v3721 = vpop.f32.mrf.mxu0
    %v3722 = vadd.f32 %v3673, %v3721
    %3723 = vmatmul.bf16.gmra.mxu0 %v3599
    %v3724 = vpop.f32.mrf.mxu0
    %v3725 = vadd.f32 %v3676, %v3724
    %v3726 = vpop.f32.mrf.mxu0
    %v3727 = vadd.f32 %v3678, %v3726
    %3728 = vmatmul.bf16.gmra.mxu0 %v3603
    %v3729 = vpop.f32.mrf.mxu0
    %v3730 = vadd.f32 %v3681, %v3729
    %v3731 = vpop.f32.mrf.mxu0
    %v3732 = vadd.f32 %v3683, %v3731
    %3733 = vmatmul.bf16.gmra.mxu0 %v3607
    %v3734 = vpop.f32.mrf.mxu0
    %v3735 = vadd.f32 %v3686, %v3734
    %v3736 = vpop.f32.mrf.mxu0
    %v3737 = vadd.f32 %v3688, %v3736
    %3738 = vmatmul.bf16.gmra.mxu0 %v3611
    %v3739 = vpop.f32.mrf.mxu0
    %v3740 = vadd.f32 %v3691, %v3739
    %v3741 = vpop.f32.mrf.mxu0
    %v3742 = vadd.f32 %v3693, %v3741
    %3743 = vdwg.mxu0
    %3744 = vmatpush.bf16.msra.mxu0 %v690
    %3745 = vmatpush.bf16.msra.mxu0 %v689
    %3746 = vmatpush.bf16.msra.mxu0 %v688
    %3747 = vmatpush.bf16.msra.mxu0 %v687
    %3748 = vmatpush.bf16.msra.mxu0 %v686
    %3749 = vmatpush.bf16.msra.mxu0 %v685
    %3750 = vmatpush.bf16.msra.mxu0 %v684
    %3751 = vmatpush.bf16.msra.mxu0 %v683
    %3752 = vmatmul.bf16.gmra.mxu0 %v3584
    %v3753 = vpop.f32.mrf.mxu0
    %v3754 = vadd.f32 %v3705, %v3753
    %v3755 = vpop.f32.mrf.mxu0
    %v3756 = vadd.f32 %v3707, %v3755
    %3757 = vmatmul.bf16.gmra.mxu0 %v3588
    %v3758 = vpop.f32.mrf.mxu0
    %v3759 = vadd.f32 %v3710, %v3758
    %v3760 = vpop.f32.mrf.mxu0
    %v3761 = vadd.f32 %v3712, %v3760
    %3762 = vmatmul.bf16.gmra.mxu0 %v3592
    %v3763 = vpop.f32.mrf.mxu0
    %v3764 = vadd.f32 %v3715, %v3763
    %v3765 = vpop.f32.mrf.mxu0
    %v3766 = vadd.f32 %v3717, %v3765
    %3767 = vmatmul.bf16.gmra.mxu0 %v3596
    %v3768 = vpop.f32.mrf.mxu0
    %v3769 = vadd.f32 %v3720, %v3768
    %v3770 = vpop.f32.mrf.mxu0
    %v3771 = vadd.f32 %v3722, %v3770
    %3772 = vmatmul.bf16.gmra.mxu0 %v3600
    %v3773 = vpop.f32.mrf.mxu0
    %v3774 = vadd.f32 %v3725, %v3773
    %v3775 = vpop.f32.mrf.mxu0
    %v3776 = vadd.f32 %v3727, %v3775
    %3777 = vmatmul.bf16.gmra.mxu0 %v3604
    %v3778 = vpop.f32.mrf.mxu0
    %v3779 = vadd.f32 %v3730, %v3778
    %v3780 = vpop.f32.mrf.mxu0
    %v3781 = vadd.f32 %v3732, %v3780
    %3782 = vmatmul.bf16.gmra.mxu0 %v3608
    %v3783 = vpop.f32.mrf.mxu0
    %v3784 = vadd.f32 %v3735, %v3783
    %v3785 = vpop.f32.mrf.mxu0
    %v3786 = vadd.f32 %v3737, %v3785
    %3787 = vmatmul.bf16.gmra.mxu0 %v3612
    %v3788 = vpop.f32.mrf.mxu0
    %v3789 = vadd.f32 %v3740, %v3788
    %v3790 = vpop.f32.mrf.mxu0
    %v3791 = vadd.f32 %v3742, %v3790
    %3792 = vdwg.mxu0
    %3793 = vmatpush.bf16.msra.mxu0 %v698
    %3794 = vmatpush.bf16.msra.mxu0 %v697
    %3795 = vmatpush.bf16.msra.mxu0 %v696
    %3796 = vmatpush.bf16.msra.mxu0 %v695
    %3797 = vmatpush.bf16.msra.mxu0 %v694
    %3798 = vmatpush.bf16.msra.mxu0 %v693
    %3799 = vmatpush.bf16.msra.mxu0 %v692
    %3800 = vmatpush.bf16.msra.mxu0 %v691
    %3801 = vmatmul.bf16.gmra.mxu0 %v3585
    %v3802 = vpop.f32.mrf.mxu0
    %v3803 = vadd.f32 %v3754, %v3802
    %v3804 = vpop.f32.mrf.mxu0
    %v3805 = vadd.f32 %v3756, %v3804
    %3806 = vmatmul.bf16.gmra.mxu0 %v3589
    %v3807 = vpop.f32.mrf.mxu0
    %v3808 = vadd.f32 %v3759, %v3807
    %v3809 = vpop.f32.mrf.mxu0
    %v3810 = vadd.f32 %v3761, %v3809
    %3811 = vmatmul.bf16.gmra.mxu0 %v3593
    %v3812 = vpop.f32.mrf.mxu0
    %v3813 = vadd.f32 %v3764, %v3812
    %v3814 = vpop.f32.mrf.mxu0
    %v3815 = vadd.f32 %v3766, %v3814
    %3816 = vmatmul.bf16.gmra.mxu0 %v3597
    %v3817 = vpop.f32.mrf.mxu0
    %v3818 = vadd.f32 %v3769, %v3817
    %v3819 = vpop.f32.mrf.mxu0
    %v3820 = vadd.f32 %v3771, %v3819
    %3821 = vmatmul.bf16.gmra.mxu0 %v3601
    %v3822 = vpop.f32.mrf.mxu0
    %v3823 = vadd.f32 %v3774, %v3822
    %v3824 = vpop.f32.mrf.mxu0
    %v3825 = vadd.f32 %v3776, %v3824
    %3826 = vmatmul.bf16.gmra.mxu0 %v3605
    %v3827 = vpop.f32.mrf.mxu0
    %v3828 = vadd.f32 %v3779, %v3827
    %v3829 = vpop.f32.mrf.mxu0
    %v3830 = vadd.f32 %v3781, %v3829
    %3831 = vmatmul.bf16.gmra.mxu0 %v3609
    %v3832 = vpop.f32.mrf.mxu0
    %v3833 = vadd.f32 %v3784, %v3832
    %v3834 = vpop.f32.mrf.mxu0
    %v3835 = vadd.f32 %v3786, %v3834
    %3836 = vmatmul.bf16.gmra.mxu0 %v3613
    %v3837 = vpop.f32.mrf.mxu0
    %v3838 = vadd.f32 %v3789, %v3837
    %v3839 = vpop.f32.mrf.mxu0
    %v3840 = vadd.f32 %v3791, %v3839
    %3841 = vdwg.mxu0
    %v3842 = vpack.c.bf16 %v3805, %v3803
    %v3843 = vpack.c.bf16 %v3810, %v3808
    %v3844 = vpack.c.bf16 %v3815, %v3813
    %v3845 = vpack.c.bf16 %v3820, %v3818
    %v3846 = vpack.c.bf16 %v3825, %v3823
    %v3847 = vpack.c.bf16 %v3830, %v3828
    %v3848 = vpack.c.bf16 %v3835, %v3833
    %v3849 = vpack.c.bf16 %v3840, %v3838
    %s3850 = scalar_lea.vmem [#allocation4], 24
    %v3851 = vld [vmem:[%s3850] sm:$0x7]
    %v3853 = vsel %vm1335, %v3842, 0
    %v3856 = vsel %vm1335, %v3843, 0
    %v3859 = vsel %vm1335, %v3844, 0
    %v3862 = vsel %vm1335, %v3845, 0
    %v3865 = vsel %vm1335, %v3846, 0
    %v3868 = vsel %vm1335, %v3847, 0
    %v3871 = vsel %vm1335, %v3848, 0
    %v3874 = vsel %vm1335, %v3849, 0
    %v3877 = vsel %vm1360, %v3851, 0
    %3879 = vmatpush.bf16.msra.mxu0 0
    %3880 = vmatpush.bf16.msra.mxu0 0
    %3881 = vmatpush.bf16.msra.mxu0 0
    %3882 = vmatpush.bf16.msra.mxu0 0
    %3883 = vmatpush.bf16.msra.mxu0 0
    %3884 = vmatpush.bf16.msra.mxu0 0
    %3885 = vmatpush.bf16.msra.mxu0 0
    %3886 = vmatpush.bf16.msra.mxu0 %v3877
    %3887 = vmatmul.bf16.gmra.mxu0 %v3853
    %v3888 = vpop.f32.mrf.mxu0
    %v3889 = vadd.f32 0.0, %v3888
    %v3890 = vpop.f32.mrf.mxu0
    %v3891 = vadd.f32 0.0, %v3890
    %3892 = vmatmul.bf16.gmra.mxu0 %v3856
    %v3893 = vpop.f32.mrf.mxu0
    %v3894 = vadd.f32 0.0, %v3893
    %v3895 = vpop.f32.mrf.mxu0
    %v3896 = vadd.f32 0.0, %v3895
    %3897 = vmatmul.bf16.gmra.mxu0 %v3859
    %v3898 = vpop.f32.mrf.mxu0
    %v3899 = vadd.f32 0.0, %v3898
    %v3900 = vpop.f32.mrf.mxu0
    %v3901 = vadd.f32 0.0, %v3900
    %3902 = vmatmul.bf16.gmra.mxu0 %v3862
    %v3903 = vpop.f32.mrf.mxu0
    %v3904 = vadd.f32 0.0, %v3903
    %v3905 = vpop.f32.mrf.mxu0
    %v3906 = vadd.f32 0.0, %v3905
    %3907 = vmatmul.bf16.gmra.mxu0 %v3865
    %v3908 = vpop.f32.mrf.mxu0
    %v3909 = vadd.f32 0.0, %v3908
    %v3910 = vpop.f32.mrf.mxu0
    %v3911 = vadd.f32 0.0, %v3910
    %3912 = vmatmul.bf16.gmra.mxu0 %v3868
    %v3913 = vpop.f32.mrf.mxu0
    %v3914 = vadd.f32 0.0, %v3913
    %v3915 = vpop.f32.mrf.mxu0
    %v3916 = vadd.f32 0.0, %v3915
    %3917 = vmatmul.bf16.gmra.mxu0 %v3871
    %v3918 = vpop.f32.mrf.mxu0
    %v3919 = vadd.f32 0.0, %v3918
    %v3920 = vpop.f32.mrf.mxu0
    %v3921 = vadd.f32 0.0, %v3920
    %3922 = vmatmul.bf16.gmra.mxu0 %v3874
    %v3923 = vpop.f32.mrf.mxu0
    %v3924 = vadd.f32 0.0, %v3923
    %v3925 = vpop.f32.mrf.mxu0
    %v3926 = vadd.f32 0.0, %v3925
    %3927 = vdwg.mxu0
    %v3928 = vadd.f32 %v3437, %v3889
    %v3929 = vadd.f32 %v3438, %v3891
    %v3930 = vadd.f32 %v3439, %v3894
    %v3931 = vadd.f32 %v3440, %v3896
    %v3932 = vadd.f32 %v3441, %v3899
    %v3933 = vadd.f32 %v3442, %v3901
    %v3934 = vadd.f32 %v3443, %v3904
    %v3935 = vadd.f32 %v3444, %v3906
    %v3936 = vadd.f32 %v3445, %v3909
    %v3937 = vadd.f32 %v3446, %v3911
    %v3938 = vadd.f32 %v3447, %v3914
    %v3939 = vadd.f32 %v3448, %v3916
    %v3940 = vadd.f32 %v3449, %v3919
    %v3941 = vadd.f32 %v3450, %v3921
    %v3942 = vadd.f32 %v3451, %v3924
    %v3943 = vadd.f32 %v3452, %v3926
    %s3944 = scalar_lea.vmem [#allocation2], 1792
    %v3945 = vld [vmem:[%s3944] sm:$0xff]
    %v3946 = vld [vmem:[%s3944 + $0x8] sm:$0xff]
    %v3947 = vld [vmem:[%s3944 + $0x10] sm:$0xff]
    %v3948 = vld [vmem:[%s3944 + $0x18] sm:$0xff]
    %v3949 = vld [vmem:[%s3944 + $0x20] sm:$0xff]
    %v3950 = vld [vmem:[%s3944 + $0x28] sm:$0xff]
    %v3951 = vld [vmem:[%s3944 + $0x30] sm:$0xff]
    %v3952 = vld [vmem:[%s3944 + $0x38] sm:$0xff]
    %v3953 = vld [vmem:[%s3944 + $0x40] sm:$0xff]
    %v3954 = vld [vmem:[%s3944 + $0x48] sm:$0xff]
    %v3955 = vld [vmem:[%s3944 + $0x50] sm:$0xff]
    %v3956 = vld [vmem:[%s3944 + $0x58] sm:$0xff]
    %v3957 = vld [vmem:[%s3944 + $0x60] sm:$0xff]
    %v3958 = vld [vmem:[%s3944 + $0x68] sm:$0xff]
    %v3959 = vld [vmem:[%s3944 + $0x70] sm:$0xff]
    %v3960 = vld [vmem:[%s3944 + $0x78] sm:$0xff]
    %v3961 = vld [vmem:[%s3944 + $0x80] sm:$0xff]
    %v3962 = vld [vmem:[%s3944 + $0x88] sm:$0xff]
    %v3963 = vld [vmem:[%s3944 + $0x90] sm:$0xff]
    %v3964 = vld [vmem:[%s3944 + $0x98] sm:$0xff]
    %v3965 = vld [vmem:[%s3944 + $0xa0] sm:$0xff]
    %v3966 = vld [vmem:[%s3944 + $0xa8] sm:$0xff]
    %v3967 = vld [vmem:[%s3944 + $0xb0] sm:$0xff]
    %v3968 = vld [vmem:[%s3944 + $0xb8] sm:$0xff]
    %v3969 = vld [vmem:[%s3944 + $0xc0] sm:$0xff]
    %v3970 = vld [vmem:[%s3944 + $0xc8] sm:$0xff]
    %v3971 = vld [vmem:[%s3944 + $0xd0] sm:$0xff]
    %v3972 = vld [vmem:[%s3944 + $0xd8] sm:$0xff]
    %v3973 = vld [vmem:[%s3944 + $0xe0] sm:$0xff]
    %v3974 = vld [vmem:[%s3944 + $0xe8] sm:$0xff]
    %v3975 = vld [vmem:[%s3944 + $0xf0] sm:$0xff]
    %v3976 = vld [vmem:[%s3944 + $0xf8] sm:$0xff]
    %v4009 = vunpack.c.l.b16 %v3945
    %v4010 = vunpack.c.h.b16 %v3945
    %v4011 = vunpack.c.l.b16 %v3946
    %v4012 = vunpack.c.h.b16 %v3946
    %v4013 = vunpack.c.l.b16 %v3947
    %v4014 = vunpack.c.h.b16 %v3947
    %v4015 = vunpack.c.l.b16 %v3948
    %v4016 = vunpack.c.h.b16 %v3948
    %v4017 = vunpack.c.l.b16 %v3949
    %v4018 = vunpack.c.h.b16 %v3949
    %v4019 = vunpack.c.l.b16 %v3950
    %v4020 = vunpack.c.h.b16 %v3950
    %v4021 = vunpack.c.l.b16 %v3951
    %v4022 = vunpack.c.h.b16 %v3951
    %v4023 = vunpack.c.l.b16 %v3952
    %v4024 = vunpack.c.h.b16 %v3952
    %v4025 = vunpack.c.l.b16 %v3953
    %v4026 = vunpack.c.h.b16 %v3953
    %v4027 = vunpack.c.l.b16 %v3954
    %v4028 = vunpack.c.h.b16 %v3954
    %v4029 = vunpack.c.l.b16 %v3955
    %v4030 = vunpack.c.h.b16 %v3955
    %v4031 = vunpack.c.l.b16 %v3956
    %v4032 = vunpack.c.h.b16 %v3956
    %v4033 = vunpack.c.l.b16 %v3957
    %v4034 = vunpack.c.h.b16 %v3957
    %v4035 = vunpack.c.l.b16 %v3958
    %v4036 = vunpack.c.h.b16 %v3958
    %v4037 = vunpack.c.l.b16 %v3959
    %v4038 = vunpack.c.h.b16 %v3959
    %v4039 = vunpack.c.l.b16 %v3960
    %v4040 = vunpack.c.h.b16 %v3960
    %v4041 = vunpack.c.l.b16 %v3961
    %v4042 = vunpack.c.h.b16 %v3961
    %v4043 = vunpack.c.l.b16 %v3962
    %v4044 = vunpack.c.h.b16 %v3962
    %v4045 = vunpack.c.l.b16 %v3963
    %v4046 = vunpack.c.h.b16 %v3963
    %v4047 = vunpack.c.l.b16 %v3964
    %v4048 = vunpack.c.h.b16 %v3964
    %v4049 = vunpack.c.l.b16 %v3965
    %v4050 = vunpack.c.h.b16 %v3965
    %v4051 = vunpack.c.l.b16 %v3966
    %v4052 = vunpack.c.h.b16 %v3966
    %v4053 = vunpack.c.l.b16 %v3967
    %v4054 = vunpack.c.h.b16 %v3967
    %v4055 = vunpack.c.l.b16 %v3968
    %v4056 = vunpack.c.h.b16 %v3968
    %v4057 = vunpack.c.l.b16 %v3969
    %v4058 = vunpack.c.h.b16 %v3969
    %v4059 = vunpack.c.l.b16 %v3970
    %v4060 = vunpack.c.h.b16 %v3970
    %v4061 = vunpack.c.l.b16 %v3971
    %v4062 = vunpack.c.h.b16 %v3971
    %v4063 = vunpack.c.l.b16 %v3972
    %v4064 = vunpack.c.h.b16 %v3972
    %v4065 = vunpack.c.l.b16 %v3973
    %v4066 = vunpack.c.h.b16 %v3973
    %v4067 = vunpack.c.l.b16 %v3974
    %v4068 = vunpack.c.h.b16 %v3974
    %v4069 = vunpack.c.l.b16 %v3975
    %v4070 = vunpack.c.h.b16 %v3975
    %v4071 = vunpack.c.l.b16 %v3976
    %v4072 = vunpack.c.h.b16 %v3976
    %v4073 = vpack.c.b16 %v4013, %v4009
    %v4074 = vpack.c.b16 %v4014, %v4010
    %v4075 = vpack.c.b16 %v4015, %v4011
    %v4076 = vpack.c.b16 %v4016, %v4012
    %v4077 = vpack.c.b16 %v4021, %v4017
    %v4078 = vpack.c.b16 %v4022, %v4018
    %v4079 = vpack.c.b16 %v4023, %v4019
    %v4080 = vpack.c.b16 %v4024, %v4020
    %v4081 = vpack.c.b16 %v4029, %v4025
    %v4082 = vpack.c.b16 %v4030, %v4026
    %v4083 = vpack.c.b16 %v4031, %v4027
    %v4084 = vpack.c.b16 %v4032, %v4028
    %v4085 = vpack.c.b16 %v4037, %v4033
    %v4086 = vpack.c.b16 %v4038, %v4034
    %v4087 = vpack.c.b16 %v4039, %v4035
    %v4088 = vpack.c.b16 %v4040, %v4036
    %v4089 = vpack.c.b16 %v4045, %v4041
    %v4090 = vpack.c.b16 %v4046, %v4042
    %v4091 = vpack.c.b16 %v4047, %v4043
    %v4092 = vpack.c.b16 %v4048, %v4044
    %v4093 = vpack.c.b16 %v4053, %v4049
    %v4094 = vpack.c.b16 %v4054, %v4050
    %v4095 = vpack.c.b16 %v4055, %v4051
    %v4096 = vpack.c.b16 %v4056, %v4052
    %v4097 = vpack.c.b16 %v4061, %v4057
    %v4098 = vpack.c.b16 %v4062, %v4058
    %v4099 = vpack.c.b16 %v4063, %v4059
    %v4100 = vpack.c.b16 %v4064, %v4060
    %v4101 = vpack.c.b16 %v4069, %v4065
    %v4102 = vpack.c.b16 %v4070, %v4066
    %v4103 = vpack.c.b16 %v4071, %v4067
    %v4104 = vpack.c.b16 %v4072, %v4068
    %4137 = vmatpush.bf16.msra.mxu0 %v674
    %4138 = vmatpush.bf16.msra.mxu0 %v673
    %4139 = vmatpush.bf16.msra.mxu0 %v672
    %4140 = vmatpush.bf16.msra.mxu0 %v671
    %4141 = vmatpush.bf16.msra.mxu0 %v670
    %4142 = vmatpush.bf16.msra.mxu0 %v669
    %4143 = vmatpush.bf16.msra.mxu0 %v668
    %4144 = vmatpush.bf16.msra.mxu0 %v667
    %4145 = vmatmul.bf16.gmra.mxu0 %v4073
    %v4146 = vpop.f32.mrf.mxu0
    %v4147 = vadd.f32 0.0, %v4146
    %v4148 = vpop.f32.mrf.mxu0
    %v4149 = vadd.f32 0.0, %v4148
    %4150 = vmatmul.bf16.gmra.mxu0 %v4077
    %v4151 = vpop.f32.mrf.mxu0
    %v4152 = vadd.f32 0.0, %v4151
    %v4153 = vpop.f32.mrf.mxu0
    %v4154 = vadd.f32 0.0, %v4153
    %4155 = vmatmul.bf16.gmra.mxu0 %v4081
    %v4156 = vpop.f32.mrf.mxu0
    %v4157 = vadd.f32 0.0, %v4156
    %v4158 = vpop.f32.mrf.mxu0
    %v4159 = vadd.f32 0.0, %v4158
    %4160 = vmatmul.bf16.gmra.mxu0 %v4085
    %v4161 = vpop.f32.mrf.mxu0
    %v4162 = vadd.f32 0.0, %v4161
    %v4163 = vpop.f32.mrf.mxu0
    %v4164 = vadd.f32 0.0, %v4163
    %4165 = vmatmul.bf16.gmra.mxu0 %v4089
    %v4166 = vpop.f32.mrf.mxu0
    %v4167 = vadd.f32 0.0, %v4166
    %v4168 = vpop.f32.mrf.mxu0
    %v4169 = vadd.f32 0.0, %v4168
    %4170 = vmatmul.bf16.gmra.mxu0 %v4093
    %v4171 = vpop.f32.mrf.mxu0
    %v4172 = vadd.f32 0.0, %v4171
    %v4173 = vpop.f32.mrf.mxu0
    %v4174 = vadd.f32 0.0, %v4173
    %4175 = vmatmul.bf16.gmra.mxu0 %v4097
    %v4176 = vpop.f32.mrf.mxu0
    %v4177 = vadd.f32 0.0, %v4176
    %v4178 = vpop.f32.mrf.mxu0
    %v4179 = vadd.f32 0.0, %v4178
    %4180 = vmatmul.bf16.gmra.mxu0 %v4101
    %v4181 = vpop.f32.mrf.mxu0
    %v4182 = vadd.f32 0.0, %v4181
    %v4183 = vpop.f32.mrf.mxu0
    %v4184 = vadd.f32 0.0, %v4183
    %4185 = vdwg.mxu0
    %4186 = vmatpush.bf16.msra.mxu0 %v682
    %4187 = vmatpush.bf16.msra.mxu0 %v681
    %4188 = vmatpush.bf16.msra.mxu0 %v680
    %4189 = vmatpush.bf16.msra.mxu0 %v679
    %4190 = vmatpush.bf16.msra.mxu0 %v678
    %4191 = vmatpush.bf16.msra.mxu0 %v677
    %4192 = vmatpush.bf16.msra.mxu0 %v676
    %4193 = vmatpush.bf16.msra.mxu0 %v675
    %4194 = vmatmul.bf16.gmra.mxu0 %v4074
    %v4195 = vpop.f32.mrf.mxu0
    %v4196 = vadd.f32 %v4147, %v4195
    %v4197 = vpop.f32.mrf.mxu0
    %v4198 = vadd.f32 %v4149, %v4197
    %4199 = vmatmul.bf16.gmra.mxu0 %v4078
    %v4200 = vpop.f32.mrf.mxu0
    %v4201 = vadd.f32 %v4152, %v4200
    %v4202 = vpop.f32.mrf.mxu0
    %v4203 = vadd.f32 %v4154, %v4202
    %4204 = vmatmul.bf16.gmra.mxu0 %v4082
    %v4205 = vpop.f32.mrf.mxu0
    %v4206 = vadd.f32 %v4157, %v4205
    %v4207 = vpop.f32.mrf.mxu0
    %v4208 = vadd.f32 %v4159, %v4207
    %4209 = vmatmul.bf16.gmra.mxu0 %v4086
    %v4210 = vpop.f32.mrf.mxu0
    %v4211 = vadd.f32 %v4162, %v4210
    %v4212 = vpop.f32.mrf.mxu0
    %v4213 = vadd.f32 %v4164, %v4212
    %4214 = vmatmul.bf16.gmra.mxu0 %v4090
    %v4215 = vpop.f32.mrf.mxu0
    %v4216 = vadd.f32 %v4167, %v4215
    %v4217 = vpop.f32.mrf.mxu0
    %v4218 = vadd.f32 %v4169, %v4217
    %4219 = vmatmul.bf16.gmra.mxu0 %v4094
    %v4220 = vpop.f32.mrf.mxu0
    %v4221 = vadd.f32 %v4172, %v4220
    %v4222 = vpop.f32.mrf.mxu0
    %v4223 = vadd.f32 %v4174, %v4222
    %4224 = vmatmul.bf16.gmra.mxu0 %v4098
    %v4225 = vpop.f32.mrf.mxu0
    %v4226 = vadd.f32 %v4177, %v4225
    %v4227 = vpop.f32.mrf.mxu0
    %v4228 = vadd.f32 %v4179, %v4227
    %4229 = vmatmul.bf16.gmra.mxu0 %v4102
    %v4230 = vpop.f32.mrf.mxu0
    %v4231 = vadd.f32 %v4182, %v4230
    %v4232 = vpop.f32.mrf.mxu0
    %v4233 = vadd.f32 %v4184, %v4232
    %4234 = vdwg.mxu0
    %4235 = vmatpush.bf16.msra.mxu0 %v690
    %4236 = vmatpush.bf16.msra.mxu0 %v689
    %4237 = vmatpush.bf16.msra.mxu0 %v688
    %4238 = vmatpush.bf16.msra.mxu0 %v687
    %4239 = vmatpush.bf16.msra.mxu0 %v686
    %4240 = vmatpush.bf16.msra.mxu0 %v685
    %4241 = vmatpush.bf16.msra.mxu0 %v684
    %4242 = vmatpush.bf16.msra.mxu0 %v683
    %4243 = vmatmul.bf16.gmra.mxu0 %v4075
    %v4244 = vpop.f32.mrf.mxu0
    %v4245 = vadd.f32 %v4196, %v4244
    %v4246 = vpop.f32.mrf.mxu0
    %v4247 = vadd.f32 %v4198, %v4246
    %4248 = vmatmul.bf16.gmra.mxu0 %v4079
    %v4249 = vpop.f32.mrf.mxu0
    %v4250 = vadd.f32 %v4201, %v4249
    %v4251 = vpop.f32.mrf.mxu0
    %v4252 = vadd.f32 %v4203, %v4251
    %4253 = vmatmul.bf16.gmra.mxu0 %v4083
    %v4254 = vpop.f32.mrf.mxu0
    %v4255 = vadd.f32 %v4206, %v4254
    %v4256 = vpop.f32.mrf.mxu0
    %v4257 = vadd.f32 %v4208, %v4256
    %4258 = vmatmul.bf16.gmra.mxu0 %v4087
    %v4259 = vpop.f32.mrf.mxu0
    %v4260 = vadd.f32 %v4211, %v4259
    %v4261 = vpop.f32.mrf.mxu0
    %v4262 = vadd.f32 %v4213, %v4261
    %4263 = vmatmul.bf16.gmra.mxu0 %v4091
    %v4264 = vpop.f32.mrf.mxu0
    %v4265 = vadd.f32 %v4216, %v4264
    %v4266 = vpop.f32.mrf.mxu0
    %v4267 = vadd.f32 %v4218, %v4266
    %4268 = vmatmul.bf16.gmra.mxu0 %v4095
    %v4269 = vpop.f32.mrf.mxu0
    %v4270 = vadd.f32 %v4221, %v4269
    %v4271 = vpop.f32.mrf.mxu0
    %v4272 = vadd.f32 %v4223, %v4271
    %4273 = vmatmul.bf16.gmra.mxu0 %v4099
    %v4274 = vpop.f32.mrf.mxu0
    %v4275 = vadd.f32 %v4226, %v4274
    %v4276 = vpop.f32.mrf.mxu0
    %v4277 = vadd.f32 %v4228, %v4276
    %4278 = vmatmul.bf16.gmra.mxu0 %v4103
    %v4279 = vpop.f32.mrf.mxu0
    %v4280 = vadd.f32 %v4231, %v4279
    %v4281 = vpop.f32.mrf.mxu0
    %v4282 = vadd.f32 %v4233, %v4281
    %4283 = vdwg.mxu0
    %4284 = vmatpush.bf16.msra.mxu0 %v698
    %4285 = vmatpush.bf16.msra.mxu0 %v697
    %4286 = vmatpush.bf16.msra.mxu0 %v696
    %4287 = vmatpush.bf16.msra.mxu0 %v695
    %4288 = vmatpush.bf16.msra.mxu0 %v694
    %4289 = vmatpush.bf16.msra.mxu0 %v693
    %4290 = vmatpush.bf16.msra.mxu0 %v692
    %4291 = vmatpush.bf16.msra.mxu0 %v691
    %4292 = vmatmul.bf16.gmra.mxu0 %v4076
    %v4293 = vpop.f32.mrf.mxu0
    %v4294 = vadd.f32 %v4245, %v4293
    %v4295 = vpop.f32.mrf.mxu0
    %v4296 = vadd.f32 %v4247, %v4295
    %4297 = vmatmul.bf16.gmra.mxu0 %v4080
    %v4298 = vpop.f32.mrf.mxu0
    %v4299 = vadd.f32 %v4250, %v4298
    %v4300 = vpop.f32.mrf.mxu0
    %v4301 = vadd.f32 %v4252, %v4300
    %4302 = vmatmul.bf16.gmra.mxu0 %v4084
    %v4303 = vpop.f32.mrf.mxu0
    %v4304 = vadd.f32 %v4255, %v4303
    %v4305 = vpop.f32.mrf.mxu0
    %v4306 = vadd.f32 %v4257, %v4305
    %4307 = vmatmul.bf16.gmra.mxu0 %v4088
    %v4308 = vpop.f32.mrf.mxu0
    %v4309 = vadd.f32 %v4260, %v4308
    %v4310 = vpop.f32.mrf.mxu0
    %v4311 = vadd.f32 %v4262, %v4310
    %4312 = vmatmul.bf16.gmra.mxu0 %v4092
    %v4313 = vpop.f32.mrf.mxu0
    %v4314 = vadd.f32 %v4265, %v4313
    %v4315 = vpop.f32.mrf.mxu0
    %v4316 = vadd.f32 %v4267, %v4315
    %4317 = vmatmul.bf16.gmra.mxu0 %v4096
    %v4318 = vpop.f32.mrf.mxu0
    %v4319 = vadd.f32 %v4270, %v4318
    %v4320 = vpop.f32.mrf.mxu0
    %v4321 = vadd.f32 %v4272, %v4320
    %4322 = vmatmul.bf16.gmra.mxu0 %v4100
    %v4323 = vpop.f32.mrf.mxu0
    %v4324 = vadd.f32 %v4275, %v4323
    %v4325 = vpop.f32.mrf.mxu0
    %v4326 = vadd.f32 %v4277, %v4325
    %4327 = vmatmul.bf16.gmra.mxu0 %v4104
    %v4328 = vpop.f32.mrf.mxu0
    %v4329 = vadd.f32 %v4280, %v4328
    %v4330 = vpop.f32.mrf.mxu0
    %v4331 = vadd.f32 %v4282, %v4330
    %4332 = vdwg.mxu0
    %v4333 = vpack.c.bf16 %v4296, %v4294
    %v4334 = vpack.c.bf16 %v4301, %v4299
    %v4335 = vpack.c.bf16 %v4306, %v4304
    %v4336 = vpack.c.bf16 %v4311, %v4309
    %v4337 = vpack.c.bf16 %v4316, %v4314
    %v4338 = vpack.c.bf16 %v4321, %v4319
    %v4339 = vpack.c.bf16 %v4326, %v4324
    %v4340 = vpack.c.bf16 %v4331, %v4329
    %s4341 = scalar_lea.vmem [#allocation4], 28
    %v4342 = vld [vmem:[%s4341] sm:$0x7]
    %v4344 = vsel %vm1335, %v4333, 0
    %v4347 = vsel %vm1335, %v4334, 0
    %v4350 = vsel %vm1335, %v4335, 0
    %v4353 = vsel %vm1335, %v4336, 0
    %v4356 = vsel %vm1335, %v4337, 0
    %v4359 = vsel %vm1335, %v4338, 0
    %v4362 = vsel %vm1335, %v4339, 0
    %v4365 = vsel %vm1335, %v4340, 0
    %v4368 = vsel %vm1360, %v4342, 0
    %4370 = vmatpush.bf16.msra.mxu0 0
    %4371 = vmatpush.bf16.msra.mxu0 0
    %4372 = vmatpush.bf16.msra.mxu0 0
    %4373 = vmatpush.bf16.msra.mxu0 0
    %4374 = vmatpush.bf16.msra.mxu0 0
    %4375 = vmatpush.bf16.msra.mxu0 0
    %4376 = vmatpush.bf16.msra.mxu0 0
    %4377 = vmatpush.bf16.msra.mxu0 %v4368
    %4378 = vmatmul.bf16.gmra.mxu0 %v4344
    %v4379 = vpop.f32.mrf.mxu0
    %v4380 = vadd.f32 0.0, %v4379
    %v4381 = vpop.f32.mrf.mxu0
    %v4382 = vadd.f32 0.0, %v4381
    %4383 = vmatmul.bf16.gmra.mxu0 %v4347
    %v4384 = vpop.f32.mrf.mxu0
    %v4385 = vadd.f32 0.0, %v4384
    %v4386 = vpop.f32.mrf.mxu0
    %v4387 = vadd.f32 0.0, %v4386
    %4388 = vmatmul.bf16.gmra.mxu0 %v4350
    %v4389 = vpop.f32.mrf.mxu0
    %v4390 = vadd.f32 0.0, %v4389
    %v4391 = vpop.f32.mrf.mxu0
    %v4392 = vadd.f32 0.0, %v4391
    %4393 = vmatmul.bf16.gmra.mxu0 %v4353
    %v4394 = vpop.f32.mrf.mxu0
    %v4395 = vadd.f32 0.0, %v4394
    %v4396 = vpop.f32.mrf.mxu0
    %v4397 = vadd.f32 0.0, %v4396
    %4398 = vmatmul.bf16.gmra.mxu0 %v4356
    %v4399 = vpop.f32.mrf.mxu0
    %v4400 = vadd.f32 0.0, %v4399
    %v4401 = vpop.f32.mrf.mxu0
    %v4402 = vadd.f32 0.0, %v4401
    %4403 = vmatmul.bf16.gmra.mxu0 %v4359
    %v4404 = vpop.f32.mrf.mxu0
    %v4405 = vadd.f32 0.0, %v4404
    %v4406 = vpop.f32.mrf.mxu0
    %v4407 = vadd.f32 0.0, %v4406
    %4408 = vmatmul.bf16.gmra.mxu0 %v4362
    %v4409 = vpop.f32.mrf.mxu0
    %v4410 = vadd.f32 0.0, %v4409
    %v4411 = vpop.f32.mrf.mxu0
    %v4412 = vadd.f32 0.0, %v4411
    %4413 = vmatmul.bf16.gmra.mxu0 %v4365
    %v4414 = vpop.f32.mrf.mxu0
    %v4415 = vadd.f32 0.0, %v4414
    %v4416 = vpop.f32.mrf.mxu0
    %v4417 = vadd.f32 0.0, %v4416
    %4418 = vdwg.mxu0
    %v4419 = vadd.f32 %v3928, %v4380
    %v4420 = vadd.f32 %v3929, %v4382
    %v4421 = vadd.f32 %v3930, %v4385
    %v4422 = vadd.f32 %v3931, %v4387
    %v4423 = vadd.f32 %v3932, %v4390
    %v4424 = vadd.f32 %v3933, %v4392
    %v4425 = vadd.f32 %v3934, %v4395
    %v4426 = vadd.f32 %v3935, %v4397
    %v4427 = vadd.f32 %v3936, %v4400
    %v4428 = vadd.f32 %v3937, %v4402
    %v4429 = vadd.f32 %v3938, %v4405
    %v4430 = vadd.f32 %v3939, %v4407
    %v4431 = vadd.f32 %v3940, %v4410
    %v4432 = vadd.f32 %v3941, %v4412
    %v4433 = vadd.f32 %v3942, %v4415
    %v4434 = vadd.f32 %v3943, %v4417
    %s4435 = scalar_lea.vmem [#allocation2], 2048
    %v4436 = vld [vmem:[%s4435] sm:$0xff]
    %v4437 = vld [vmem:[%s4435 + $0x8] sm:$0xff]
    %v4438 = vld [vmem:[%s4435 + $0x10] sm:$0xff]
    %v4439 = vld [vmem:[%s4435 + $0x18] sm:$0xff]
    %v4440 = vld [vmem:[%s4435 + $0x20] sm:$0xff]
    %v4441 = vld [vmem:[%s4435 + $0x28] sm:$0xff]
    %v4442 = vld [vmem:[%s4435 + $0x30] sm:$0xff]
    %v4443 = vld [vmem:[%s4435 + $0x38] sm:$0xff]
    %v4444 = vld [vmem:[%s4435 + $0x40] sm:$0xff]
    %v4445 = vld [vmem:[%s4435 + $0x48] sm:$0xff]
    %v4446 = vld [vmem:[%s4435 + $0x50] sm:$0xff]
    %v4447 = vld [vmem:[%s4435 + $0x58] sm:$0xff]
    %v4448 = vld [vmem:[%s4435 + $0x60] sm:$0xff]
    %v4449 = vld [vmem:[%s4435 + $0x68] sm:$0xff]
    %v4450 = vld [vmem:[%s4435 + $0x70] sm:$0xff]
    %v4451 = vld [vmem:[%s4435 + $0x78] sm:$0xff]
    %v4452 = vld [vmem:[%s4435 + $0x80] sm:$0xff]
    %v4453 = vld [vmem:[%s4435 + $0x88] sm:$0xff]
    %v4454 = vld [vmem:[%s4435 + $0x90] sm:$0xff]
    %v4455 = vld [vmem:[%s4435 + $0x98] sm:$0xff]
    %v4456 = vld [vmem:[%s4435 + $0xa0] sm:$0xff]
    %v4457 = vld [vmem:[%s4435 + $0xa8] sm:$0xff]
    %v4458 = vld [vmem:[%s4435 + $0xb0] sm:$0xff]
    %v4459 = vld [vmem:[%s4435 + $0xb8] sm:$0xff]
    %v4460 = vld [vmem:[%s4435 + $0xc0] sm:$0xff]
    %v4461 = vld [vmem:[%s4435 + $0xc8] sm:$0xff]
    %v4462 = vld [vmem:[%s4435 + $0xd0] sm:$0xff]
    %v4463 = vld [vmem:[%s4435 + $0xd8] sm:$0xff]
    %v4464 = vld [vmem:[%s4435 + $0xe0] sm:$0xff]
    %v4465 = vld [vmem:[%s4435 + $0xe8] sm:$0xff]
    %v4466 = vld [vmem:[%s4435 + $0xf0] sm:$0xff]
    %v4467 = vld [vmem:[%s4435 + $0xf8] sm:$0xff]
    %v4500 = vunpack.c.l.b16 %v4436
    %v4501 = vunpack.c.h.b16 %v4436
    %v4502 = vunpack.c.l.b16 %v4437
    %v4503 = vunpack.c.h.b16 %v4437
    %v4504 = vunpack.c.l.b16 %v4438
    %v4505 = vunpack.c.h.b16 %v4438
    %v4506 = vunpack.c.l.b16 %v4439
    %v4507 = vunpack.c.h.b16 %v4439
    %v4508 = vunpack.c.l.b16 %v4440
    %v4509 = vunpack.c.h.b16 %v4440
    %v4510 = vunpack.c.l.b16 %v4441
    %v4511 = vunpack.c.h.b16 %v4441
    %v4512 = vunpack.c.l.b16 %v4442
    %v4513 = vunpack.c.h.b16 %v4442
    %v4514 = vunpack.c.l.b16 %v4443
    %v4515 = vunpack.c.h.b16 %v4443
    %v4516 = vunpack.c.l.b16 %v4444
    %v4517 = vunpack.c.h.b16 %v4444
    %v4518 = vunpack.c.l.b16 %v4445
    %v4519 = vunpack.c.h.b16 %v4445
    %v4520 = vunpack.c.l.b16 %v4446
    %v4521 = vunpack.c.h.b16 %v4446
    %v4522 = vunpack.c.l.b16 %v4447
    %v4523 = vunpack.c.h.b16 %v4447
    %v4524 = vunpack.c.l.b16 %v4448
    %v4525 = vunpack.c.h.b16 %v4448
    %v4526 = vunpack.c.l.b16 %v4449
    %v4527 = vunpack.c.h.b16 %v4449
    %v4528 = vunpack.c.l.b16 %v4450
    %v4529 = vunpack.c.h.b16 %v4450
    %v4530 = vunpack.c.l.b16 %v4451
    %v4531 = vunpack.c.h.b16 %v4451
    %v4532 = vunpack.c.l.b16 %v4452
    %v4533 = vunpack.c.h.b16 %v4452
    %v4534 = vunpack.c.l.b16 %v4453
    %v4535 = vunpack.c.h.b16 %v4453
    %v4536 = vunpack.c.l.b16 %v4454
    %v4537 = vunpack.c.h.b16 %v4454
    %v4538 = vunpack.c.l.b16 %v4455
    %v4539 = vunpack.c.h.b16 %v4455
    %v4540 = vunpack.c.l.b16 %v4456
    %v4541 = vunpack.c.h.b16 %v4456
    %v4542 = vunpack.c.l.b16 %v4457
    %v4543 = vunpack.c.h.b16 %v4457
    %v4544 = vunpack.c.l.b16 %v4458
    %v4545 = vunpack.c.h.b16 %v4458
    %v4546 = vunpack.c.l.b16 %v4459
    %v4547 = vunpack.c.h.b16 %v4459
    %v4548 = vunpack.c.l.b16 %v4460
    %v4549 = vunpack.c.h.b16 %v4460
    %v4550 = vunpack.c.l.b16 %v4461
    %v4551 = vunpack.c.h.b16 %v4461
    %v4552 = vunpack.c.l.b16 %v4462
    %v4553 = vunpack.c.h.b16 %v4462
    %v4554 = vunpack.c.l.b16 %v4463
    %v4555 = vunpack.c.h.b16 %v4463
    %v4556 = vunpack.c.l.b16 %v4464
    %v4557 = vunpack.c.h.b16 %v4464
    %v4558 = vunpack.c.l.b16 %v4465
    %v4559 = vunpack.c.h.b16 %v4465
    %v4560 = vunpack.c.l.b16 %v4466
    %v4561 = vunpack.c.h.b16 %v4466
    %v4562 = vunpack.c.l.b16 %v4467
    %v4563 = vunpack.c.h.b16 %v4467
    %v4564 = vpack.c.b16 %v4504, %v4500
    %v4565 = vpack.c.b16 %v4505, %v4501
    %v4566 = vpack.c.b16 %v4506, %v4502
    %v4567 = vpack.c.b16 %v4507, %v4503
    %v4568 = vpack.c.b16 %v4512, %v4508
    %v4569 = vpack.c.b16 %v4513, %v4509
    %v4570 = vpack.c.b16 %v4514, %v4510
    %v4571 = vpack.c.b16 %v4515, %v4511
    %v4572 = vpack.c.b16 %v4520, %v4516
    %v4573 = vpack.c.b16 %v4521, %v4517
    %v4574 = vpack.c.b16 %v4522, %v4518
    %v4575 = vpack.c.b16 %v4523, %v4519
    %v4576 = vpack.c.b16 %v4528, %v4524
    %v4577 = vpack.c.b16 %v4529, %v4525
    %v4578 = vpack.c.b16 %v4530, %v4526
    %v4579 = vpack.c.b16 %v4531, %v4527
    %v4580 = vpack.c.b16 %v4536, %v4532
    %v4581 = vpack.c.b16 %v4537, %v4533
    %v4582 = vpack.c.b16 %v4538, %v4534
    %v4583 = vpack.c.b16 %v4539, %v4535
    %v4584 = vpack.c.b16 %v4544, %v4540
    %v4585 = vpack.c.b16 %v4545, %v4541
    %v4586 = vpack.c.b16 %v4546, %v4542
    %v4587 = vpack.c.b16 %v4547, %v4543
    %v4588 = vpack.c.b16 %v4552, %v4548
    %v4589 = vpack.c.b16 %v4553, %v4549
    %v4590 = vpack.c.b16 %v4554, %v4550
    %v4591 = vpack.c.b16 %v4555, %v4551
    %v4592 = vpack.c.b16 %v4560, %v4556
    %v4593 = vpack.c.b16 %v4561, %v4557
    %v4594 = vpack.c.b16 %v4562, %v4558
    %v4595 = vpack.c.b16 %v4563, %v4559
    %4628 = vmatpush.bf16.msra.mxu0 %v674
    %4629 = vmatpush.bf16.msra.mxu0 %v673
    %4630 = vmatpush.bf16.msra.mxu0 %v672
    %4631 = vmatpush.bf16.msra.mxu0 %v671
    %4632 = vmatpush.bf16.msra.mxu0 %v670
    %4633 = vmatpush.bf16.msra.mxu0 %v669
    %4634 = vmatpush.bf16.msra.mxu0 %v668
    %4635 = vmatpush.bf16.msra.mxu0 %v667
    %4636 = vmatmul.bf16.gmra.mxu0 %v4564
    %v4637 = vpop.f32.mrf.mxu0
    %v4638 = vadd.f32 0.0, %v4637
    %v4639 = vpop.f32.mrf.mxu0
    %v4640 = vadd.f32 0.0, %v4639
    %4641 = vmatmul.bf16.gmra.mxu0 %v4568
    %v4642 = vpop.f32.mrf.mxu0
    %v4643 = vadd.f32 0.0, %v4642
    %v4644 = vpop.f32.mrf.mxu0
    %v4645 = vadd.f32 0.0, %v4644
    %4646 = vmatmul.bf16.gmra.mxu0 %v4572
    %v4647 = vpop.f32.mrf.mxu0
    %v4648 = vadd.f32 0.0, %v4647
    %v4649 = vpop.f32.mrf.mxu0
    %v4650 = vadd.f32 0.0, %v4649
    %4651 = vmatmul.bf16.gmra.mxu0 %v4576
    %v4652 = vpop.f32.mrf.mxu0
    %v4653 = vadd.f32 0.0, %v4652
    %v4654 = vpop.f32.mrf.mxu0
    %v4655 = vadd.f32 0.0, %v4654
    %4656 = vmatmul.bf16.gmra.mxu0 %v4580
    %v4657 = vpop.f32.mrf.mxu0
    %v4658 = vadd.f32 0.0, %v4657
    %v4659 = vpop.f32.mrf.mxu0
    %v4660 = vadd.f32 0.0, %v4659
    %4661 = vmatmul.bf16.gmra.mxu0 %v4584
    %v4662 = vpop.f32.mrf.mxu0
    %v4663 = vadd.f32 0.0, %v4662
    %v4664 = vpop.f32.mrf.mxu0
    %v4665 = vadd.f32 0.0, %v4664
    %4666 = vmatmul.bf16.gmra.mxu0 %v4588
    %v4667 = vpop.f32.mrf.mxu0
    %v4668 = vadd.f32 0.0, %v4667
    %v4669 = vpop.f32.mrf.mxu0
    %v4670 = vadd.f32 0.0, %v4669
    %4671 = vmatmul.bf16.gmra.mxu0 %v4592
    %v4672 = vpop.f32.mrf.mxu0
    %v4673 = vadd.f32 0.0, %v4672
    %v4674 = vpop.f32.mrf.mxu0
    %v4675 = vadd.f32 0.0, %v4674
    %4676 = vdwg.mxu0
    %4677 = vmatpush.bf16.msra.mxu0 %v682
    %4678 = vmatpush.bf16.msra.mxu0 %v681
    %4679 = vmatpush.bf16.msra.mxu0 %v680
    %4680 = vmatpush.bf16.msra.mxu0 %v679
    %4681 = vmatpush.bf16.msra.mxu0 %v678
    %4682 = vmatpush.bf16.msra.mxu0 %v677
    %4683 = vmatpush.bf16.msra.mxu0 %v676
    %4684 = vmatpush.bf16.msra.mxu0 %v675
    %4685 = vmatmul.bf16.gmra.mxu0 %v4565
    %v4686 = vpop.f32.mrf.mxu0
    %v4687 = vadd.f32 %v4638, %v4686
    %v4688 = vpop.f32.mrf.mxu0
    %v4689 = vadd.f32 %v4640, %v4688
    %4690 = vmatmul.bf16.gmra.mxu0 %v4569
    %v4691 = vpop.f32.mrf.mxu0
    %v4692 = vadd.f32 %v4643, %v4691
    %v4693 = vpop.f32.mrf.mxu0
    %v4694 = vadd.f32 %v4645, %v4693
    %4695 = vmatmul.bf16.gmra.mxu0 %v4573
    %v4696 = vpop.f32.mrf.mxu0
    %v4697 = vadd.f32 %v4648, %v4696
    %v4698 = vpop.f32.mrf.mxu0
    %v4699 = vadd.f32 %v4650, %v4698
    %4700 = vmatmul.bf16.gmra.mxu0 %v4577
    %v4701 = vpop.f32.mrf.mxu0
    %v4702 = vadd.f32 %v4653, %v4701
    %v4703 = vpop.f32.mrf.mxu0
    %v4704 = vadd.f32 %v4655, %v4703
    %4705 = vmatmul.bf16.gmra.mxu0 %v4581
    %v4706 = vpop.f32.mrf.mxu0
    %v4707 = vadd.f32 %v4658, %v4706
    %v4708 = vpop.f32.mrf.mxu0
    %v4709 = vadd.f32 %v4660, %v4708
    %4710 = vmatmul.bf16.gmra.mxu0 %v4585
    %v4711 = vpop.f32.mrf.mxu0
    %v4712 = vadd.f32 %v4663, %v4711
    %v4713 = vpop.f32.mrf.mxu0
    %v4714 = vadd.f32 %v4665, %v4713
    %4715 = vmatmul.bf16.gmra.mxu0 %v4589
    %v4716 = vpop.f32.mrf.mxu0
    %v4717 = vadd.f32 %v4668, %v4716
    %v4718 = vpop.f32.mrf.mxu0
    %v4719 = vadd.f32 %v4670, %v4718
    %4720 = vmatmul.bf16.gmra.mxu0 %v4593
    %v4721 = vpop.f32.mrf.mxu0
    %v4722 = vadd.f32 %v4673, %v4721
    %v4723 = vpop.f32.mrf.mxu0
    %v4724 = vadd.f32 %v4675, %v4723
    %4725 = vdwg.mxu0
    %4726 = vmatpush.bf16.msra.mxu0 %v690
    %4727 = vmatpush.bf16.msra.mxu0 %v689
    %4728 = vmatpush.bf16.msra.mxu0 %v688
    %4729 = vmatpush.bf16.msra.mxu0 %v687
    %4730 = vmatpush.bf16.msra.mxu0 %v686
    %4731 = vmatpush.bf16.msra.mxu0 %v685
    %4732 = vmatpush.bf16.msra.mxu0 %v684
    %4733 = vmatpush.bf16.msra.mxu0 %v683
    %4734 = vmatmul.bf16.gmra.mxu0 %v4566
    %v4735 = vpop.f32.mrf.mxu0
    %v4736 = vadd.f32 %v4687, %v4735
    %v4737 = vpop.f32.mrf.mxu0
    %v4738 = vadd.f32 %v4689, %v4737
    %4739 = vmatmul.bf16.gmra.mxu0 %v4570
    %v4740 = vpop.f32.mrf.mxu0
    %v4741 = vadd.f32 %v4692, %v4740
    %v4742 = vpop.f32.mrf.mxu0
    %v4743 = vadd.f32 %v4694, %v4742
    %4744 = vmatmul.bf16.gmra.mxu0 %v4574
    %v4745 = vpop.f32.mrf.mxu0
    %v4746 = vadd.f32 %v4697, %v4745
    %v4747 = vpop.f32.mrf.mxu0
    %v4748 = vadd.f32 %v4699, %v4747
    %4749 = vmatmul.bf16.gmra.mxu0 %v4578
    %v4750 = vpop.f32.mrf.mxu0
    %v4751 = vadd.f32 %v4702, %v4750
    %v4752 = vpop.f32.mrf.mxu0
    %v4753 = vadd.f32 %v4704, %v4752
    %4754 = vmatmul.bf16.gmra.mxu0 %v4582
    %v4755 = vpop.f32.mrf.mxu0
    %v4756 = vadd.f32 %v4707, %v4755
    %v4757 = vpop.f32.mrf.mxu0
    %v4758 = vadd.f32 %v4709, %v4757
    %4759 = vmatmul.bf16.gmra.mxu0 %v4586
    %v4760 = vpop.f32.mrf.mxu0
    %v4761 = vadd.f32 %v4712, %v4760
    %v4762 = vpop.f32.mrf.mxu0
    %v4763 = vadd.f32 %v4714, %v4762
    %4764 = vmatmul.bf16.gmra.mxu0 %v4590
    %v4765 = vpop.f32.mrf.mxu0
    %v4766 = vadd.f32 %v4717, %v4765
    %v4767 = vpop.f32.mrf.mxu0
    %v4768 = vadd.f32 %v4719, %v4767
    %4769 = vmatmul.bf16.gmra.mxu0 %v4594
    %v4770 = vpop.f32.mrf.mxu0
    %v4771 = vadd.f32 %v4722, %v4770
    %v4772 = vpop.f32.mrf.mxu0
    %v4773 = vadd.f32 %v4724, %v4772
    %4774 = vdwg.mxu0
    %4775 = vmatpush.bf16.msra.mxu0 %v698
    %4776 = vmatpush.bf16.msra.mxu0 %v697
    %4777 = vmatpush.bf16.msra.mxu0 %v696
    %4778 = vmatpush.bf16.msra.mxu0 %v695
    %4779 = vmatpush.bf16.msra.mxu0 %v694
    %4780 = vmatpush.bf16.msra.mxu0 %v693
    %4781 = vmatpush.bf16.msra.mxu0 %v692
    %4782 = vmatpush.bf16.msra.mxu0 %v691
    %4783 = vmatmul.bf16.gmra.mxu0 %v4567
    %v4784 = vpop.f32.mrf.mxu0
    %v4785 = vadd.f32 %v4736, %v4784
    %v4786 = vpop.f32.mrf.mxu0
    %v4787 = vadd.f32 %v4738, %v4786
    %4788 = vmatmul.bf16.gmra.mxu0 %v4571
    %v4789 = vpop.f32.mrf.mxu0
    %v4790 = vadd.f32 %v4741, %v4789
    %v4791 = vpop.f32.mrf.mxu0
    %v4792 = vadd.f32 %v4743, %v4791
    %4793 = vmatmul.bf16.gmra.mxu0 %v4575
    %v4794 = vpop.f32.mrf.mxu0
    %v4795 = vadd.f32 %v4746, %v4794
    %v4796 = vpop.f32.mrf.mxu0
    %v4797 = vadd.f32 %v4748, %v4796
    %4798 = vmatmul.bf16.gmra.mxu0 %v4579
    %v4799 = vpop.f32.mrf.mxu0
    %v4800 = vadd.f32 %v4751, %v4799
    %v4801 = vpop.f32.mrf.mxu0
    %v4802 = vadd.f32 %v4753, %v4801
    %4803 = vmatmul.bf16.gmra.mxu0 %v4583
    %v4804 = vpop.f32.mrf.mxu0
    %v4805 = vadd.f32 %v4756, %v4804
    %v4806 = vpop.f32.mrf.mxu0
    %v4807 = vadd.f32 %v4758, %v4806
    %4808 = vmatmul.bf16.gmra.mxu0 %v4587
    %v4809 = vpop.f32.mrf.mxu0
    %v4810 = vadd.f32 %v4761, %v4809
    %v4811 = vpop.f32.mrf.mxu0
    %v4812 = vadd.f32 %v4763, %v4811
    %4813 = vmatmul.bf16.gmra.mxu0 %v4591
    %v4814 = vpop.f32.mrf.mxu0
    %v4815 = vadd.f32 %v4766, %v4814
    %v4816 = vpop.f32.mrf.mxu0
    %v4817 = vadd.f32 %v4768, %v4816
    %4818 = vmatmul.bf16.gmra.mxu0 %v4595
    %v4819 = vpop.f32.mrf.mxu0
    %v4820 = vadd.f32 %v4771, %v4819
    %v4821 = vpop.f32.mrf.mxu0
    %v4822 = vadd.f32 %v4773, %v4821
    %4823 = vdwg.mxu0
    %v4824 = vpack.c.bf16 %v4787, %v4785
    %v4825 = vpack.c.bf16 %v4792, %v4790
    %v4826 = vpack.c.bf16 %v4797, %v4795
    %v4827 = vpack.c.bf16 %v4802, %v4800
    %v4828 = vpack.c.bf16 %v4807, %v4805
    %v4829 = vpack.c.bf16 %v4812, %v4810
    %v4830 = vpack.c.bf16 %v4817, %v4815
    %v4831 = vpack.c.bf16 %v4822, %v4820
    %s4832 = scalar_lea.vmem [#allocation4], 32
    %v4833 = vld [vmem:[%s4832] sm:$0x7]
    %v4835 = vsel %vm1335, %v4824, 0
    %v4838 = vsel %vm1335, %v4825, 0
    %v4841 = vsel %vm1335, %v4826, 0
    %v4844 = vsel %vm1335, %v4827, 0
    %v4847 = vsel %vm1335, %v4828, 0
    %v4850 = vsel %vm1335, %v4829, 0
    %v4853 = vsel %vm1335, %v4830, 0
    %v4856 = vsel %vm1335, %v4831, 0
    %v4859 = vsel %vm1360, %v4833, 0
    %4861 = vmatpush.bf16.msra.mxu0 0
    %4862 = vmatpush.bf16.msra.mxu0 0
    %4863 = vmatpush.bf16.msra.mxu0 0
    %4864 = vmatpush.bf16.msra.mxu0 0
    %4865 = vmatpush.bf16.msra.mxu0 0
    %4866 = vmatpush.bf16.msra.mxu0 0
    %4867 = vmatpush.bf16.msra.mxu0 0
    %4868 = vmatpush.bf16.msra.mxu0 %v4859
    %4869 = vmatmul.bf16.gmra.mxu0 %v4835
    %v4870 = vpop.f32.mrf.mxu0
    %v4871 = vadd.f32 0.0, %v4870
    %v4872 = vpop.f32.mrf.mxu0
    %v4873 = vadd.f32 0.0, %v4872
    %4874 = vmatmul.bf16.gmra.mxu0 %v4838
    %v4875 = vpop.f32.mrf.mxu0
    %v4876 = vadd.f32 0.0, %v4875
    %v4877 = vpop.f32.mrf.mxu0
    %v4878 = vadd.f32 0.0, %v4877
    %4879 = vmatmul.bf16.gmra.mxu0 %v4841
    %v4880 = vpop.f32.mrf.mxu0
    %v4881 = vadd.f32 0.0, %v4880
    %v4882 = vpop.f32.mrf.mxu0
    %v4883 = vadd.f32 0.0, %v4882
    %4884 = vmatmul.bf16.gmra.mxu0 %v4844
    %v4885 = vpop.f32.mrf.mxu0
    %v4886 = vadd.f32 0.0, %v4885
    %v4887 = vpop.f32.mrf.mxu0
    %v4888 = vadd.f32 0.0, %v4887
    %4889 = vmatmul.bf16.gmra.mxu0 %v4847
    %v4890 = vpop.f32.mrf.mxu0
    %v4891 = vadd.f32 0.0, %v4890
    %v4892 = vpop.f32.mrf.mxu0
    %v4893 = vadd.f32 0.0, %v4892
    %4894 = vmatmul.bf16.gmra.mxu0 %v4850
    %v4895 = vpop.f32.mrf.mxu0
    %v4896 = vadd.f32 0.0, %v4895
    %v4897 = vpop.f32.mrf.mxu0
    %v4898 = vadd.f32 0.0, %v4897
    %4899 = vmatmul.bf16.gmra.mxu0 %v4853
    %v4900 = vpop.f32.mrf.mxu0
    %v4901 = vadd.f32 0.0, %v4900
    %v4902 = vpop.f32.mrf.mxu0
    %v4903 = vadd.f32 0.0, %v4902
    %4904 = vmatmul.bf16.gmra.mxu0 %v4856
    %v4905 = vpop.f32.mrf.mxu0
    %v4906 = vadd.f32 0.0, %v4905
    %v4907 = vpop.f32.mrf.mxu0
    %v4908 = vadd.f32 0.0, %v4907
    %4909 = vdwg.mxu0
    %v4910 = vadd.f32 %v4419, %v4871
    %v4911 = vadd.f32 %v4420, %v4873
    %v4912 = vadd.f32 %v4421, %v4876
    %v4913 = vadd.f32 %v4422, %v4878
    %v4914 = vadd.f32 %v4423, %v4881
    %v4915 = vadd.f32 %v4424, %v4883
    %v4916 = vadd.f32 %v4425, %v4886
    %v4917 = vadd.f32 %v4426, %v4888
    %v4918 = vadd.f32 %v4427, %v4891
    %v4919 = vadd.f32 %v4428, %v4893
    %v4920 = vadd.f32 %v4429, %v4896
    %v4921 = vadd.f32 %v4430, %v4898
    %v4922 = vadd.f32 %v4431, %v4901
    %v4923 = vadd.f32 %v4432, %v4903
    %v4924 = vadd.f32 %v4433, %v4906
    %v4925 = vadd.f32 %v4434, %v4908
    %v4926 = vld [vmem:[#allocation6] sm:$0x1]
    %v4928 = vperm.slane %v4926, 0
    %v4930 = vadd.f32 %v4910, %v4928
    %v4931 = vadd.f32 %v4911, %v4928
    %v4932 = vadd.f32 %v4912, %v4928
    %v4933 = vadd.f32 %v4913, %v4928
    %v4934 = vadd.f32 %v4914, %v4928
    %v4935 = vadd.f32 %v4915, %v4928
    %v4936 = vadd.f32 %v4916, %v4928
    %v4937 = vadd.f32 %v4917, %v4928
    %v4938 = vadd.f32 %v4918, %v4928
    %v4939 = vadd.f32 %v4919, %v4928
    %v4940 = vadd.f32 %v4920, %v4928
    %v4941 = vadd.f32 %v4921, %v4928
    %v4942 = vadd.f32 %v4922, %v4928
    %v4943 = vadd.f32 %v4923, %v4928
    %v4944 = vadd.f32 %v4924, %v4928
    %v4945 = vadd.f32 %v4925, %v4928
    %v4946 = vmul.f32 %v4930, 0.01
    %v4947 = vmul.f32 %v4931, 0.01
    %v4948 = vmul.f32 %v4932, 0.01
    %v4949 = vmul.f32 %v4933, 0.01
    %v4950 = vmul.f32 %v4934, 0.01
    %v4951 = vmul.f32 %v4935, 0.01
    %v4952 = vmul.f32 %v4936, 0.01
    %v4953 = vmul.f32 %v4937, 0.01
    %v4954 = vmul.f32 %v4938, 0.01
    %v4955 = vmul.f32 %v4939, 0.01
    %v4956 = vmul.f32 %v4940, 0.01
    %v4957 = vmul.f32 %v4941, 0.01
    %v4958 = vmul.f32 %v4942, 0.01
    %v4959 = vmul.f32 %v4943, 0.01
    %v4960 = vmul.f32 %v4944, 0.01
    %v4961 = vmul.f32 %v4945, 0.01
    %v4962 = vmax.f32 %v4930, %v4946
    %v4963 = vmax.f32 %v4931, %v4947
    %v4964 = vmax.f32 %v4932, %v4948
    %v4965 = vmax.f32 %v4933, %v4949
    %v4966 = vmax.f32 %v4934, %v4950
    %v4967 = vmax.f32 %v4935, %v4951
    %v4968 = vmax.f32 %v4936, %v4952
    %v4969 = vmax.f32 %v4937, %v4953
    %v4970 = vmax.f32 %v4938, %v4954
    %v4971 = vmax.f32 %v4939, %v4955
    %v4972 = vmax.f32 %v4940, %v4956
    %v4973 = vmax.f32 %v4941, %v4957
    %v4974 = vmax.f32 %v4942, %v4958
    %v4975 = vmax.f32 %v4943, %v4959
    %v4976 = vmax.f32 %v4944, %v4960
    %v4977 = vmax.f32 %v4945, %v4961
    %v4978 = vpack.c.bf16 %v4963, %v4962
    %v4979 = vpack.c.bf16 %v4965, %v4964
    %v4980 = vpack.c.bf16 %v4967, %v4966
    %v4981 = vpack.c.bf16 %v4969, %v4968
    %v4982 = vpack.c.bf16 %v4971, %v4970
    %v4983 = vpack.c.bf16 %v4973, %v4972
    %v4984 = vpack.c.bf16 %v4975, %v4974
    %v4985 = vpack.c.bf16 %v4977, %v4976
    %v4986 = vld [vmem:[#allocation7] sm:$0xf]
    %v4987 = vld [vmem:[#allocation7 + $0x4] sm:$0xf]
    %v4988 = vld [vmem:[#allocation7 + $0x8] sm:$0xf]
    %v4989 = vld [vmem:[#allocation7 + $0xc] sm:$0xf]
    %v4994 = vunpack.c.l.b16 %v4986
    %v4995 = vunpack.c.l.b16 %v4987
    %v4996 = vunpack.c.l.b16 %v4988
    %v4997 = vunpack.c.l.b16 %v4989
    %v4998 = vpack.c.b16 %v4995, %v4994
    %v4999 = vpack.c.b16 %v4997, %v4996
    %5002 = vmatpush.bf16.msra.mxu0 %v4985
    %5003 = vmatpush.bf16.msra.mxu0 %v4984
    %5004 = vmatpush.bf16.msra.mxu0 %v4983
    %5005 = vmatpush.bf16.msra.mxu0 %v4982
    %5006 = vmatpush.bf16.msra.mxu0 %v4981
    %5007 = vmatpush.bf16.msra.mxu0 %v4980
    %5008 = vmatpush.bf16.msra.mxu0 %v4979
    %5009 = vmatpush.bf16.msra.mxu0 %v4978
    %5010 = vmatmul.bf16.gmra.mxu0 %v4998
    %v5011 = vpop.f32.mrf.mxu0
    %v5012 = vadd.f32 0.0, %v5011
    %v5013 = vpop.f32.mrf.mxu0
    %v5014 = vadd.f32 0.0, %v5013
    %5015 = vmatmul.bf16.gmra.mxu0 %v4999
    %v5016 = vpop.f32.mrf.mxu0
    %v5017 = vadd.f32 0.0, %v5016
    %v5018 = vpop.f32.mrf.mxu0
    %v5019 = vadd.f32 0.0, %v5018
    %5020 = vdwg.mxu0
    %v5021 = vpack.c.bf16 %v5014, %v5012
    %v5022 = vpack.c.bf16 %v5019, %v5017
    %v5023 = vld [vmem:[#allocation9] sm:$0xf]
    %v5024 = vld [vmem:[#allocation9 + $0x4] sm:$0xf]
    %v5025 = vld [vmem:[#allocation9 + $0x8] sm:$0xf]
    %v5026 = vld [vmem:[#allocation9 + $0xc] sm:$0xf]
    %v5027 = vld [vmem:[#allocation9 + $0x10] sm:$0xf]
    %v5028 = vld [vmem:[#allocation9 + $0x14] sm:$0xf]
    %v5029 = vld [vmem:[#allocation9 + $0x18] sm:$0xf]
    %v5030 = vld [vmem:[#allocation9 + $0x1c] sm:$0xf]
    %s5031 = scalar_lea.vmem [#allocation7], 16
    %v5032 = vld [vmem:[%s5031] sm:$0xf]
    %v5033 = vld [vmem:[%s5031 + $0x4] sm:$0xf]
    %v5034 = vld [vmem:[%s5031 + $0x8] sm:$0xf]
    %v5035 = vld [vmem:[%s5031 + $0xc] sm:$0xf]
    %v5040 = vunpack.c.l.b16 %v5032
    %v5041 = vunpack.c.l.b16 %v5033
    %v5042 = vunpack.c.l.b16 %v5034
    %v5043 = vunpack.c.l.b16 %v5035
    %v5044 = vpack.c.b16 %v5041, %v5040
    %v5045 = vpack.c.b16 %v5043, %v5042
    %5048 = vmatpush.bf16.msra.mxu0 %v4985
    %5049 = vmatpush.bf16.msra.mxu0 %v4984
    %5050 = vmatpush.bf16.msra.mxu0 %v4983
    %5051 = vmatpush.bf16.msra.mxu0 %v4982
    %5052 = vmatpush.bf16.msra.mxu0 %v4981
    %5053 = vmatpush.bf16.msra.mxu0 %v4980
    %5054 = vmatpush.bf16.msra.mxu0 %v4979
    %5055 = vmatpush.bf16.msra.mxu0 %v4978
    %5056 = vmatmul.bf16.gmra.mxu0 %v5044
    %v5057 = vpop.f32.mrf.mxu0
    %v5058 = vadd.f32 0.0, %v5057
    %v5059 = vpop.f32.mrf.mxu0
    %v5060 = vadd.f32 0.0, %v5059
    %5061 = vmatmul.bf16.gmra.mxu0 %v5045
    %v5062 = vpop.f32.mrf.mxu0
    %v5063 = vadd.f32 0.0, %v5062
    %v5064 = vpop.f32.mrf.mxu0
    %v5065 = vadd.f32 0.0, %v5064
    %5066 = vdwg.mxu0
    %v5067 = vpack.c.bf16 %v5060, %v5058
    %v5068 = vpack.c.bf16 %v5065, %v5063
    %s5069 = scalar_lea.vmem [#allocation9], 32
    %v5070 = vld [vmem:[%s5069] sm:$0xf]
    %v5071 = vld [vmem:[%s5069 + $0x4] sm:$0xf]
    %v5072 = vld [vmem:[%s5069 + $0x8] sm:$0xf]
    %v5073 = vld [vmem:[%s5069 + $0xc] sm:$0xf]
    %v5074 = vld [vmem:[%s5069 + $0x10] sm:$0xf]
    %v5075 = vld [vmem:[%s5069 + $0x14] sm:$0xf]
    %v5076 = vld [vmem:[%s5069 + $0x18] sm:$0xf]
    %v5077 = vld [vmem:[%s5069 + $0x1c] sm:$0xf]
    %v5086 = vunpack.c.l.b16 %v5070
    %v5087 = vunpack.c.l.b16 %v5071
    %v5088 = vunpack.c.l.b16 %v5072
    %v5089 = vunpack.c.l.b16 %v5073
    %v5090 = vunpack.c.l.b16 %v5074
    %v5091 = vunpack.c.l.b16 %v5075
    %v5092 = vunpack.c.l.b16 %v5076
    %v5093 = vunpack.c.l.b16 %v5077
    %v5094 = vpack.c.b16 %v5087, %v5086
    %v5095 = vpack.c.b16 %v5089, %v5088
    %v5096 = vpack.c.b16 %v5091, %v5090
    %v5097 = vpack.c.b16 %v5093, %v5092
    %vm5102 = vcmask 523264
    %v5104 = vsel %vm5102, %v5067, 0
    %v5107 = vsel %vm5102, %v5068, 0
    %5109 = vmatpush.bf16.msra.mxu0 0
    %5110 = vmatpush.bf16.msra.mxu0 0
    %5111 = vmatpush.bf16.msra.mxu0 0
    %5112 = vmatpush.bf16.msra.mxu0 0
    %5113 = vmatpush.bf16.msra.mxu0 %v5097
    %5114 = vmatpush.bf16.msra.mxu0 %v5096
    %5115 = vmatpush.bf16.msra.mxu0 %v5095
    %5116 = vmatpush.bf16.msra.mxu0 %v5094
    %5117 = vmatmul.bf16.gmra.mxu0 %v5104
    %v5118 = vpop.f32.mrf.mxu0
    %v5119 = vadd.f32 0.0, %v5118
    %v5120 = vpop.f32.mrf.mxu0
    %v5121 = vadd.f32 0.0, %v5120
    %5122 = vmatmul.bf16.gmra.mxu0 %v5107
    %v5123 = vpop.f32.mrf.mxu0
    %v5124 = vadd.f32 0.0, %v5123
    %v5125 = vpop.f32.mrf.mxu0
    %v5126 = vadd.f32 0.0, %v5125
    %5127 = vdwg.mxu0
    %v5136 = vunpack.c.l.b16 %v5023
    %v5137 = vunpack.c.l.b16 %v5024
    %v5138 = vunpack.c.l.b16 %v5025
    %v5139 = vunpack.c.l.b16 %v5026
    %v5140 = vunpack.c.l.b16 %v5027
    %v5141 = vunpack.c.l.b16 %v5028
    %v5142 = vunpack.c.l.b16 %v5029
    %v5143 = vunpack.c.l.b16 %v5030
    %v5144 = vpack.c.b16 %v5137, %v5136
    %v5145 = vpack.c.b16 %v5139, %v5138
    %v5146 = vpack.c.b16 %v5141, %v5140
    %v5147 = vpack.c.b16 %v5143, %v5142
    %v5153 = vsel %vm5102, %v5021, 0
    %v5156 = vsel %vm5102, %v5022, 0
    %5158 = vmatpush.bf16.msra.mxu0 0
    %5159 = vmatpush.bf16.msra.mxu0 0
    %5160 = vmatpush.bf16.msra.mxu0 0
    %5161 = vmatpush.bf16.msra.mxu0 0
    %5162 = vmatpush.bf16.msra.mxu0 %v5147
    %5163 = vmatpush.bf16.msra.mxu0 %v5146
    %5164 = vmatpush.bf16.msra.mxu0 %v5145
    %5165 = vmatpush.bf16.msra.mxu0 %v5144
    %5166 = vmatmul.bf16.gmra.mxu0 %v5153
    %v5167 = vpop.f32.mrf.mxu0
    %v5168 = vadd.f32 %v5119, %v5167
    %v5169 = vpop.f32.mrf.mxu0
    %v5170 = vadd.f32 %v5121, %v5169
    %5171 = vmatmul.bf16.gmra.mxu0 %v5156
    %v5172 = vpop.f32.mrf.mxu0
    %v5173 = vadd.f32 %v5124, %v5172
    %v5174 = vpop.f32.mrf.mxu0
    %v5175 = vadd.f32 %v5126, %v5174
    %5176 = vdwg.mxu0
    %s5177 = scalar_lea.vmem [#allocation7], 32
    %v5178 = vld [vmem:[%s5177] sm:$0xf]
    %v5179 = vld [vmem:[%s5177 + $0x4] sm:$0xf]
    %v5180 = vld [vmem:[%s5177 + $0x8] sm:$0xf]
    %v5181 = vld [vmem:[%s5177 + $0xc] sm:$0xf]
    %v5186 = vunpack.c.l.b16 %v5178
    %v5187 = vunpack.c.l.b16 %v5179
    %v5188 = vunpack.c.l.b16 %v5180
    %v5189 = vunpack.c.l.b16 %v5181
    %v5190 = vpack.c.b16 %v5187, %v5186
    %v5191 = vpack.c.b16 %v5189, %v5188
    %5194 = vmatpush.bf16.msra.mxu0 %v4985
    %5195 = vmatpush.bf16.msra.mxu0 %v4984
    %5196 = vmatpush.bf16.msra.mxu0 %v4983
    %5197 = vmatpush.bf16.msra.mxu0 %v4982
    %5198 = vmatpush.bf16.msra.mxu0 %v4981
    %5199 = vmatpush.bf16.msra.mxu0 %v4980
    %5200 = vmatpush.bf16.msra.mxu0 %v4979
    %5201 = vmatpush.bf16.msra.mxu0 %v4978
    %5202 = vmatmul.bf16.gmra.mxu0 %v5190
    %v5203 = vpop.f32.mrf.mxu0
    %v5204 = vadd.f32 0.0, %v5203
    %v5205 = vpop.f32.mrf.mxu0
    %v5206 = vadd.f32 0.0, %v5205
    %5207 = vmatmul.bf16.gmra.mxu0 %v5191
    %v5208 = vpop.f32.mrf.mxu0
    %v5209 = vadd.f32 0.0, %v5208
    %v5210 = vpop.f32.mrf.mxu0
    %v5211 = vadd.f32 0.0, %v5210
    %5212 = vdwg.mxu0
    %v5213 = vpack.c.bf16 %v5206, %v5204
    %v5214 = vpack.c.bf16 %v5211, %v5209
    %s5215 = scalar_lea.vmem [#allocation9], 64
    %v5216 = vld [vmem:[%s5215] sm:$0xf]
    %v5217 = vld [vmem:[%s5215 + $0x4] sm:$0xf]
    %v5218 = vld [vmem:[%s5215 + $0x8] sm:$0xf]
    %v5219 = vld [vmem:[%s5215 + $0xc] sm:$0xf]
    %v5220 = vld [vmem:[%s5215 + $0x10] sm:$0xf]
    %v5221 = vld [vmem:[%s5215 + $0x14] sm:$0xf]
    %v5222 = vld [vmem:[%s5215 + $0x18] sm:$0xf]
    %v5223 = vld [vmem:[%s5215 + $0x1c] sm:$0xf]
    %v5232 = vunpack.c.l.b16 %v5216
    %v5233 = vunpack.c.l.b16 %v5217
    %v5234 = vunpack.c.l.b16 %v5218
    %v5235 = vunpack.c.l.b16 %v5219
    %v5236 = vunpack.c.l.b16 %v5220
    %v5237 = vunpack.c.l.b16 %v5221
    %v5238 = vunpack.c.l.b16 %v5222
    %v5239 = vunpack.c.l.b16 %v5223
    %v5240 = vpack.c.b16 %v5233, %v5232
    %v5241 = vpack.c.b16 %v5235, %v5234
    %v5242 = vpack.c.b16 %v5237, %v5236
    %v5243 = vpack.c.b16 %v5239, %v5238
    %v5249 = vsel %vm5102, %v5213, 0
    %v5252 = vsel %vm5102, %v5214, 0
    %5254 = vmatpush.bf16.msra.mxu0 0
    %5255 = vmatpush.bf16.msra.mxu0 0
    %5256 = vmatpush.bf16.msra.mxu0 0
    %5257 = vmatpush.bf16.msra.mxu0 0
    %5258 = vmatpush.bf16.msra.mxu0 %v5243
    %5259 = vmatpush.bf16.msra.mxu0 %v5242
    %5260 = vmatpush.bf16.msra.mxu0 %v5241
    %5261 = vmatpush.bf16.msra.mxu0 %v5240
    %5262 = vmatmul.bf16.gmra.mxu0 %v5249
    %v5263 = vpop.f32.mrf.mxu0
    %v5264 = vadd.f32 0.0, %v5263
    %v5265 = vpop.f32.mrf.mxu0
    %v5266 = vadd.f32 0.0, %v5265
    %5267 = vmatmul.bf16.gmra.mxu0 %v5252
    %v5268 = vpop.f32.mrf.mxu0
    %v5269 = vadd.f32 0.0, %v5268
    %v5270 = vpop.f32.mrf.mxu0
    %v5271 = vadd.f32 0.0, %v5270
    %5272 = vdwg.mxu0
    %v5273 = vadd.f32 %v5168, %v5264
    %v5274 = vadd.f32 %v5170, %v5266
    %v5275 = vadd.f32 %v5173, %v5269
    %v5276 = vadd.f32 %v5175, %v5271
    %s5277 = scalar_lea.vmem [#allocation7], 48
    %v5278 = vld [vmem:[%s5277] sm:$0xf]
    %v5279 = vld [vmem:[%s5277 + $0x4] sm:$0xf]
    %v5280 = vld [vmem:[%s5277 + $0x8] sm:$0xf]
    %v5281 = vld [vmem:[%s5277 + $0xc] sm:$0xf]
    %v5286 = vunpack.c.l.b16 %v5278
    %v5287 = vunpack.c.l.b16 %v5279
    %v5288 = vunpack.c.l.b16 %v5280
    %v5289 = vunpack.c.l.b16 %v5281
    %v5290 = vpack.c.b16 %v5287, %v5286
    %v5291 = vpack.c.b16 %v5289, %v5288
    %5294 = vmatpush.bf16.msra.mxu0 %v4985
    %5295 = vmatpush.bf16.msra.mxu0 %v4984
    %5296 = vmatpush.bf16.msra.mxu0 %v4983
    %5297 = vmatpush.bf16.msra.mxu0 %v4982
    %5298 = vmatpush.bf16.msra.mxu0 %v4981
    %5299 = vmatpush.bf16.msra.mxu0 %v4980
    %5300 = vmatpush.bf16.msra.mxu0 %v4979
    %5301 = vmatpush.bf16.msra.mxu0 %v4978
    %5302 = vmatmul.bf16.gmra.mxu0 %v5290
    %v5303 = vpop.f32.mrf.mxu0
    %v5304 = vadd.f32 0.0, %v5303
    %v5305 = vpop.f32.mrf.mxu0
    %v5306 = vadd.f32 0.0, %v5305
    %5307 = vmatmul.bf16.gmra.mxu0 %v5291
    %v5308 = vpop.f32.mrf.mxu0
    %v5309 = vadd.f32 0.0, %v5308
    %v5310 = vpop.f32.mrf.mxu0
    %v5311 = vadd.f32 0.0, %v5310
    %5312 = vdwg.mxu0
    %v5313 = vpack.c.bf16 %v5306, %v5304
    %v5314 = vpack.c.bf16 %v5311, %v5309
    %s5315 = scalar_lea.vmem [#allocation9], 96
    %v5316 = vld [vmem:[%s5315] sm:$0xf]
    %v5317 = vld [vmem:[%s5315 + $0x4] sm:$0xf]
    %v5318 = vld [vmem:[%s5315 + $0x8] sm:$0xf]
    %v5319 = vld [vmem:[%s5315 + $0xc] sm:$0xf]
    %v5320 = vld [vmem:[%s5315 + $0x10] sm:$0xf]
    %v5321 = vld [vmem:[%s5315 + $0x14] sm:$0xf]
    %v5322 = vld [vmem:[%s5315 + $0x18] sm:$0xf]
    %v5323 = vld [vmem:[%s5315 + $0x1c] sm:$0xf]
    %v5332 = vunpack.c.l.b16 %v5316
    %v5333 = vunpack.c.l.b16 %v5317
    %v5334 = vunpack.c.l.b16 %v5318
    %v5335 = vunpack.c.l.b16 %v5319
    %v5336 = vunpack.c.l.b16 %v5320
    %v5337 = vunpack.c.l.b16 %v5321
    %v5338 = vunpack.c.l.b16 %v5322
    %v5339 = vunpack.c.l.b16 %v5323
    %v5340 = vpack.c.b16 %v5333, %v5332
    %v5341 = vpack.c.b16 %v5335, %v5334
    %v5342 = vpack.c.b16 %v5337, %v5336
    %v5343 = vpack.c.b16 %v5339, %v5338
    %v5349 = vsel %vm5102, %v5313, 0
    %v5352 = vsel %vm5102, %v5314, 0
    %5354 = vmatpush.bf16.msra.mxu0 0
    %5355 = vmatpush.bf16.msra.mxu0 0
    %5356 = vmatpush.bf16.msra.mxu0 0
    %5357 = vmatpush.bf16.msra.mxu0 0
    %5358 = vmatpush.bf16.msra.mxu0 %v5343
    %5359 = vmatpush.bf16.msra.mxu0 %v5342
    %5360 = vmatpush.bf16.msra.mxu0 %v5341
    %5361 = vmatpush.bf16.msra.mxu0 %v5340
    %5362 = vmatmul.bf16.gmra.mxu0 %v5349
    %v5363 = vpop.f32.mrf.mxu0
    %v5364 = vadd.f32 0.0, %v5363
    %v5365 = vpop.f32.mrf.mxu0
    %v5366 = vadd.f32 0.0, %v5365
    %5367 = vmatmul.bf16.gmra.mxu0 %v5352
    %v5368 = vpop.f32.mrf.mxu0
    %v5369 = vadd.f32 0.0, %v5368
    %v5370 = vpop.f32.mrf.mxu0
    %v5371 = vadd.f32 0.0, %v5370
    %5372 = vdwg.mxu0
    %v5373 = vadd.f32 %v5273, %v5364
    %v5374 = vadd.f32 %v5274, %v5366
    %v5375 = vadd.f32 %v5275, %v5369
    %v5376 = vadd.f32 %v5276, %v5371
    %s5377 = scalar_lea.vmem [#allocation7], 64
    %v5378 = vld [vmem:[%s5377] sm:$0xf]
    %v5379 = vld [vmem:[%s5377 + $0x4] sm:$0xf]
    %v5380 = vld [vmem:[%s5377 + $0x8] sm:$0xf]
    %v5381 = vld [vmem:[%s5377 + $0xc] sm:$0xf]
    %v5386 = vunpack.c.l.b16 %v5378
    %v5387 = vunpack.c.l.b16 %v5379
    %v5388 = vunpack.c.l.b16 %v5380
    %v5389 = vunpack.c.l.b16 %v5381
    %v5390 = vpack.c.b16 %v5387, %v5386
    %v5391 = vpack.c.b16 %v5389, %v5388
    %5394 = vmatpush.bf16.msra.mxu0 %v4985
    %5395 = vmatpush.bf16.msra.mxu0 %v4984
    %5396 = vmatpush.bf16.msra.mxu0 %v4983
    %5397 = vmatpush.bf16.msra.mxu0 %v4982
    %5398 = vmatpush.bf16.msra.mxu0 %v4981
    %5399 = vmatpush.bf16.msra.mxu0 %v4980
    %5400 = vmatpush.bf16.msra.mxu0 %v4979
    %5401 = vmatpush.bf16.msra.mxu0 %v4978
    %5402 = vmatmul.bf16.gmra.mxu0 %v5390
    %v5403 = vpop.f32.mrf.mxu0
    %v5404 = vadd.f32 0.0, %v5403
    %v5405 = vpop.f32.mrf.mxu0
    %v5406 = vadd.f32 0.0, %v5405
    %5407 = vmatmul.bf16.gmra.mxu0 %v5391
    %v5408 = vpop.f32.mrf.mxu0
    %v5409 = vadd.f32 0.0, %v5408
    %v5410 = vpop.f32.mrf.mxu0
    %v5411 = vadd.f32 0.0, %v5410
    %5412 = vdwg.mxu0
    %v5413 = vpack.c.bf16 %v5406, %v5404
    %v5414 = vpack.c.bf16 %v5411, %v5409
    %s5415 = scalar_lea.vmem [#allocation9], 128
    %v5416 = vld [vmem:[%s5415] sm:$0xf]
    %v5417 = vld [vmem:[%s5415 + $0x4] sm:$0xf]
    %v5418 = vld [vmem:[%s5415 + $0x8] sm:$0xf]
    %v5419 = vld [vmem:[%s5415 + $0xc] sm:$0xf]
    %v5420 = vld [vmem:[%s5415 + $0x10] sm:$0xf]
    %v5421 = vld [vmem:[%s5415 + $0x14] sm:$0xf]
    %v5422 = vld [vmem:[%s5415 + $0x18] sm:$0xf]
    %v5423 = vld [vmem:[%s5415 + $0x1c] sm:$0xf]
    %v5432 = vunpack.c.l.b16 %v5416
    %v5433 = vunpack.c.l.b16 %v5417
    %v5434 = vunpack.c.l.b16 %v5418
    %v5435 = vunpack.c.l.b16 %v5419
    %v5436 = vunpack.c.l.b16 %v5420
    %v5437 = vunpack.c.l.b16 %v5421
    %v5438 = vunpack.c.l.b16 %v5422
    %v5439 = vunpack.c.l.b16 %v5423
    %v5440 = vpack.c.b16 %v5433, %v5432
    %v5441 = vpack.c.b16 %v5435, %v5434
    %v5442 = vpack.c.b16 %v5437, %v5436
    %v5443 = vpack.c.b16 %v5439, %v5438
    %v5449 = vsel %vm5102, %v5413, 0
    %v5452 = vsel %vm5102, %v5414, 0
    %5454 = vmatpush.bf16.msra.mxu0 0
    %5455 = vmatpush.bf16.msra.mxu0 0
    %5456 = vmatpush.bf16.msra.mxu0 0
    %5457 = vmatpush.bf16.msra.mxu0 0
    %5458 = vmatpush.bf16.msra.mxu0 %v5443
    %5459 = vmatpush.bf16.msra.mxu0 %v5442
    %5460 = vmatpush.bf16.msra.mxu0 %v5441
    %5461 = vmatpush.bf16.msra.mxu0 %v5440
    %5462 = vmatmul.bf16.gmra.mxu0 %v5449
    %v5463 = vpop.f32.mrf.mxu0
    %v5464 = vadd.f32 0.0, %v5463
    %v5465 = vpop.f32.mrf.mxu0
    %v5466 = vadd.f32 0.0, %v5465
    %5467 = vmatmul.bf16.gmra.mxu0 %v5452
    %v5468 = vpop.f32.mrf.mxu0
    %v5469 = vadd.f32 0.0, %v5468
    %v5470 = vpop.f32.mrf.mxu0
    %v5471 = vadd.f32 0.0, %v5470
    %5472 = vdwg.mxu0
    %v5473 = vadd.f32 %v5373, %v5464
    %v5474 = vadd.f32 %v5374, %v5466
    %v5475 = vadd.f32 %v5375, %v5469
    %v5476 = vadd.f32 %v5376, %v5471
    %s5477 = scalar_lea.vmem [#allocation7], 80
    %v5478 = vld [vmem:[%s5477] sm:$0xf]
    %v5479 = vld [vmem:[%s5477 + $0x4] sm:$0xf]
    %v5480 = vld [vmem:[%s5477 + $0x8] sm:$0xf]
    %v5481 = vld [vmem:[%s5477 + $0xc] sm:$0xf]
    %v5486 = vunpack.c.l.b16 %v5478
    %v5487 = vunpack.c.l.b16 %v5479
    %v5488 = vunpack.c.l.b16 %v5480
    %v5489 = vunpack.c.l.b16 %v5481
    %v5490 = vpack.c.b16 %v5487, %v5486
    %v5491 = vpack.c.b16 %v5489, %v5488
    %5494 = vmatpush.bf16.msra.mxu0 %v4985
    %5495 = vmatpush.bf16.msra.mxu0 %v4984
    %5496 = vmatpush.bf16.msra.mxu0 %v4983
    %5497 = vmatpush.bf16.msra.mxu0 %v4982
    %5498 = vmatpush.bf16.msra.mxu0 %v4981
    %5499 = vmatpush.bf16.msra.mxu0 %v4980
    %5500 = vmatpush.bf16.msra.mxu0 %v4979
    %5501 = vmatpush.bf16.msra.mxu0 %v4978
    %5502 = vmatmul.bf16.gmra.mxu0 %v5490
    %v5503 = vpop.f32.mrf.mxu0
    %v5504 = vadd.f32 0.0, %v5503
    %v5505 = vpop.f32.mrf.mxu0
    %v5506 = vadd.f32 0.0, %v5505
    %5507 = vmatmul.bf16.gmra.mxu0 %v5491
    %v5508 = vpop.f32.mrf.mxu0
    %v5509 = vadd.f32 0.0, %v5508
    %v5510 = vpop.f32.mrf.mxu0
    %v5511 = vadd.f32 0.0, %v5510
    %5512 = vdwg.mxu0
    %v5513 = vpack.c.bf16 %v5506, %v5504
    %v5514 = vpack.c.bf16 %v5511, %v5509
    %s5515 = scalar_lea.vmem [#allocation9], 160
    %v5516 = vld [vmem:[%s5515] sm:$0xf]
    %v5517 = vld [vmem:[%s5515 + $0x4] sm:$0xf]
    %v5518 = vld [vmem:[%s5515 + $0x8] sm:$0xf]
    %v5519 = vld [vmem:[%s5515 + $0xc] sm:$0xf]
    %v5520 = vld [vmem:[%s5515 + $0x10] sm:$0xf]
    %v5521 = vld [vmem:[%s5515 + $0x14] sm:$0xf]
    %v5522 = vld [vmem:[%s5515 + $0x18] sm:$0xf]
    %v5523 = vld [vmem:[%s5515 + $0x1c] sm:$0xf]
    %v5532 = vunpack.c.l.b16 %v5516
    %v5533 = vunpack.c.l.b16 %v5517
    %v5534 = vunpack.c.l.b16 %v5518
    %v5535 = vunpack.c.l.b16 %v5519
    %v5536 = vunpack.c.l.b16 %v5520
    %v5537 = vunpack.c.l.b16 %v5521
    %v5538 = vunpack.c.l.b16 %v5522
    %v5539 = vunpack.c.l.b16 %v5523
    %v5540 = vpack.c.b16 %v5533, %v5532
    %v5541 = vpack.c.b16 %v5535, %v5534
    %v5542 = vpack.c.b16 %v5537, %v5536
    %v5543 = vpack.c.b16 %v5539, %v5538
    %v5549 = vsel %vm5102, %v5513, 0
    %v5552 = vsel %vm5102, %v5514, 0
    %5554 = vmatpush.bf16.msra.mxu0 0
    %5555 = vmatpush.bf16.msra.mxu0 0
    %5556 = vmatpush.bf16.msra.mxu0 0
    %5557 = vmatpush.bf16.msra.mxu0 0
    %5558 = vmatpush.bf16.msra.mxu0 %v5543
    %5559 = vmatpush.bf16.msra.mxu0 %v5542
    %5560 = vmatpush.bf16.msra.mxu0 %v5541
    %5561 = vmatpush.bf16.msra.mxu0 %v5540
    %5562 = vmatmul.bf16.gmra.mxu0 %v5549
    %v5563 = vpop.f32.mrf.mxu0
    %v5564 = vadd.f32 0.0, %v5563
    %v5565 = vpop.f32.mrf.mxu0
    %v5566 = vadd.f32 0.0, %v5565
    %5567 = vmatmul.bf16.gmra.mxu0 %v5552
    %v5568 = vpop.f32.mrf.mxu0
    %v5569 = vadd.f32 0.0, %v5568
    %v5570 = vpop.f32.mrf.mxu0
    %v5571 = vadd.f32 0.0, %v5570
    %5572 = vdwg.mxu0
    %v5573 = vadd.f32 %v5473, %v5564
    %v5574 = vadd.f32 %v5474, %v5566
    %v5575 = vadd.f32 %v5475, %v5569
    %v5576 = vadd.f32 %v5476, %v5571
    %s5577 = scalar_lea.vmem [#allocation7], 96
    %v5578 = vld [vmem:[%s5577] sm:$0xf]
    %v5579 = vld [vmem:[%s5577 + $0x4] sm:$0xf]
    %v5580 = vld [vmem:[%s5577 + $0x8] sm:$0xf]
    %v5581 = vld [vmem:[%s5577 + $0xc] sm:$0xf]
    %v5586 = vunpack.c.l.b16 %v5578
    %v5587 = vunpack.c.l.b16 %v5579
    %v5588 = vunpack.c.l.b16 %v5580
    %v5589 = vunpack.c.l.b16 %v5581
    %v5590 = vpack.c.b16 %v5587, %v5586
    %v5591 = vpack.c.b16 %v5589, %v5588
    %5594 = vmatpush.bf16.msra.mxu0 %v4985
    %5595 = vmatpush.bf16.msra.mxu0 %v4984
    %5596 = vmatpush.bf16.msra.mxu0 %v4983
    %5597 = vmatpush.bf16.msra.mxu0 %v4982
    %5598 = vmatpush.bf16.msra.mxu0 %v4981
    %5599 = vmatpush.bf16.msra.mxu0 %v4980
    %5600 = vmatpush.bf16.msra.mxu0 %v4979
    %5601 = vmatpush.bf16.msra.mxu0 %v4978
    %5602 = vmatmul.bf16.gmra.mxu0 %v5590
    %v5603 = vpop.f32.mrf.mxu0
    %v5604 = vadd.f32 0.0, %v5603
    %v5605 = vpop.f32.mrf.mxu0
    %v5606 = vadd.f32 0.0, %v5605
    %5607 = vmatmul.bf16.gmra.mxu0 %v5591
    %v5608 = vpop.f32.mrf.mxu0
    %v5609 = vadd.f32 0.0, %v5608
    %v5610 = vpop.f32.mrf.mxu0
    %v5611 = vadd.f32 0.0, %v5610
    %5612 = vdwg.mxu0
    %v5613 = vpack.c.bf16 %v5606, %v5604
    %v5614 = vpack.c.bf16 %v5611, %v5609
    %s5615 = scalar_lea.vmem [#allocation9], 192
    %v5616 = vld [vmem:[%s5615] sm:$0xf]
    %v5617 = vld [vmem:[%s5615 + $0x4] sm:$0xf]
    %v5618 = vld [vmem:[%s5615 + $0x8] sm:$0xf]
    %v5619 = vld [vmem:[%s5615 + $0xc] sm:$0xf]
    %v5620 = vld [vmem:[%s5615 + $0x10] sm:$0xf]
    %v5621 = vld [vmem:[%s5615 + $0x14] sm:$0xf]
    %v5622 = vld [vmem:[%s5615 + $0x18] sm:$0xf]
    %v5623 = vld [vmem:[%s5615 + $0x1c] sm:$0xf]
    %v5632 = vunpack.c.l.b16 %v5616
    %v5633 = vunpack.c.l.b16 %v5617
    %v5634 = vunpack.c.l.b16 %v5618
    %v5635 = vunpack.c.l.b16 %v5619
    %v5636 = vunpack.c.l.b16 %v5620
    %v5637 = vunpack.c.l.b16 %v5621
    %v5638 = vunpack.c.l.b16 %v5622
    %v5639 = vunpack.c.l.b16 %v5623
    %v5640 = vpack.c.b16 %v5633, %v5632
    %v5641 = vpack.c.b16 %v5635, %v5634
    %v5642 = vpack.c.b16 %v5637, %v5636
    %v5643 = vpack.c.b16 %v5639, %v5638
    %v5649 = vsel %vm5102, %v5613, 0
    %v5652 = vsel %vm5102, %v5614, 0
    %5654 = vmatpush.bf16.msra.mxu0 0
    %5655 = vmatpush.bf16.msra.mxu0 0
    %5656 = vmatpush.bf16.msra.mxu0 0
    %5657 = vmatpush.bf16.msra.mxu0 0
    %5658 = vmatpush.bf16.msra.mxu0 %v5643
    %5659 = vmatpush.bf16.msra.mxu0 %v5642
    %5660 = vmatpush.bf16.msra.mxu0 %v5641
    %5661 = vmatpush.bf16.msra.mxu0 %v5640
    %5662 = vmatmul.bf16.gmra.mxu0 %v5649
    %v5663 = vpop.f32.mrf.mxu0
    %v5664 = vadd.f32 0.0, %v5663
    %v5665 = vpop.f32.mrf.mxu0
    %v5666 = vadd.f32 0.0, %v5665
    %5667 = vmatmul.bf16.gmra.mxu0 %v5652
    %v5668 = vpop.f32.mrf.mxu0
    %v5669 = vadd.f32 0.0, %v5668
    %v5670 = vpop.f32.mrf.mxu0
    %v5671 = vadd.f32 0.0, %v5670
    %5672 = vdwg.mxu0
    %v5673 = vadd.f32 %v5573, %v5664
    %v5674 = vadd.f32 %v5574, %v5666
    %v5675 = vadd.f32 %v5575, %v5669
    %v5676 = vadd.f32 %v5576, %v5671
    %s5677 = scalar_lea.vmem [#allocation7], 112
    %v5678 = vld [vmem:[%s5677] sm:$0xf]
    %v5679 = vld [vmem:[%s5677 + $0x4] sm:$0xf]
    %v5680 = vld [vmem:[%s5677 + $0x8] sm:$0xf]
    %v5681 = vld [vmem:[%s5677 + $0xc] sm:$0xf]
    %v5686 = vunpack.c.l.b16 %v5678
    %v5687 = vunpack.c.l.b16 %v5679
    %v5688 = vunpack.c.l.b16 %v5680
    %v5689 = vunpack.c.l.b16 %v5681
    %v5690 = vpack.c.b16 %v5687, %v5686
    %v5691 = vpack.c.b16 %v5689, %v5688
    %5694 = vmatpush.bf16.msra.mxu0 %v4985
    %5695 = vmatpush.bf16.msra.mxu0 %v4984
    %5696 = vmatpush.bf16.msra.mxu0 %v4983
    %5697 = vmatpush.bf16.msra.mxu0 %v4982
    %5698 = vmatpush.bf16.msra.mxu0 %v4981
    %5699 = vmatpush.bf16.msra.mxu0 %v4980
    %5700 = vmatpush.bf16.msra.mxu0 %v4979
    %5701 = vmatpush.bf16.msra.mxu0 %v4978
    %5702 = vmatmul.bf16.gmra.mxu0 %v5690
    %v5703 = vpop.f32.mrf.mxu0
    %v5704 = vadd.f32 0.0, %v5703
    %v5705 = vpop.f32.mrf.mxu0
    %v5706 = vadd.f32 0.0, %v5705
    %5707 = vmatmul.bf16.gmra.mxu0 %v5691
    %v5708 = vpop.f32.mrf.mxu0
    %v5709 = vadd.f32 0.0, %v5708
    %v5710 = vpop.f32.mrf.mxu0
    %v5711 = vadd.f32 0.0, %v5710
    %5712 = vdwg.mxu0
    %v5713 = vpack.c.bf16 %v5706, %v5704
    %v5714 = vpack.c.bf16 %v5711, %v5709
    %s5715 = scalar_lea.vmem [#allocation9], 224
    %v5716 = vld [vmem:[%s5715] sm:$0xf]
    %v5717 = vld [vmem:[%s5715 + $0x4] sm:$0xf]
    %v5718 = vld [vmem:[%s5715 + $0x8] sm:$0xf]
    %v5719 = vld [vmem:[%s5715 + $0xc] sm:$0xf]
    %v5720 = vld [vmem:[%s5715 + $0x10] sm:$0xf]
    %v5721 = vld [vmem:[%s5715 + $0x14] sm:$0xf]
    %v5722 = vld [vmem:[%s5715 + $0x18] sm:$0xf]
    %v5723 = vld [vmem:[%s5715 + $0x1c] sm:$0xf]
    %v5732 = vunpack.c.l.b16 %v5716
    %v5733 = vunpack.c.l.b16 %v5717
    %v5734 = vunpack.c.l.b16 %v5718
    %v5735 = vunpack.c.l.b16 %v5719
    %v5736 = vunpack.c.l.b16 %v5720
    %v5737 = vunpack.c.l.b16 %v5721
    %v5738 = vunpack.c.l.b16 %v5722
    %v5739 = vunpack.c.l.b16 %v5723
    %v5740 = vpack.c.b16 %v5733, %v5732
    %v5741 = vpack.c.b16 %v5735, %v5734
    %v5742 = vpack.c.b16 %v5737, %v5736
    %v5743 = vpack.c.b16 %v5739, %v5738
    %v5749 = vsel %vm5102, %v5713, 0
    %v5752 = vsel %vm5102, %v5714, 0
    %5754 = vmatpush.bf16.msra.mxu0 0
    %5755 = vmatpush.bf16.msra.mxu0 0
    %5756 = vmatpush.bf16.msra.mxu0 0
    %5757 = vmatpush.bf16.msra.mxu0 0
    %5758 = vmatpush.bf16.msra.mxu0 %v5743
    %5759 = vmatpush.bf16.msra.mxu0 %v5742
    %5760 = vmatpush.bf16.msra.mxu0 %v5741
    %5761 = vmatpush.bf16.msra.mxu0 %v5740
    %5762 = vmatmul.bf16.gmra.mxu0 %v5749
    %v5763 = vpop.f32.mrf.mxu0
    %v5764 = vadd.f32 0.0, %v5763
    %v5765 = vpop.f32.mrf.mxu0
    %v5766 = vadd.f32 0.0, %v5765
    %5767 = vmatmul.bf16.gmra.mxu0 %v5752
    %v5768 = vpop.f32.mrf.mxu0
    %v5769 = vadd.f32 0.0, %v5768
    %v5770 = vpop.f32.mrf.mxu0
    %v5771 = vadd.f32 0.0, %v5770
    %5772 = vdwg.mxu0
    %v5773 = vadd.f32 %v5673, %v5764
    %v5774 = vadd.f32 %v5674, %v5766
    %v5775 = vadd.f32 %v5675, %v5769
    %v5776 = vadd.f32 %v5676, %v5771
    %s5777 = scalar_lea.vmem [#allocation7], 128
    %v5778 = vld [vmem:[%s5777] sm:$0xf]
    %v5779 = vld [vmem:[%s5777 + $0x4] sm:$0xf]
    %v5780 = vld [vmem:[%s5777 + $0x8] sm:$0xf]
    %v5781 = vld [vmem:[%s5777 + $0xc] sm:$0xf]
    %v5786 = vunpack.c.l.b16 %v5778
    %v5787 = vunpack.c.l.b16 %v5779
    %v5788 = vunpack.c.l.b16 %v5780
    %v5789 = vunpack.c.l.b16 %v5781
    %v5790 = vpack.c.b16 %v5787, %v5786
    %v5791 = vpack.c.b16 %v5789, %v5788
    %5794 = vmatpush.bf16.msra.mxu0 %v4985
    %5795 = vmatpush.bf16.msra.mxu0 %v4984
    %5796 = vmatpush.bf16.msra.mxu0 %v4983
    %5797 = vmatpush.bf16.msra.mxu0 %v4982
    %5798 = vmatpush.bf16.msra.mxu0 %v4981
    %5799 = vmatpush.bf16.msra.mxu0 %v4980
    %5800 = vmatpush.bf16.msra.mxu0 %v4979
    %5801 = vmatpush.bf16.msra.mxu0 %v4978
    %5802 = vmatmul.bf16.gmra.mxu0 %v5790
    %v5803 = vpop.f32.mrf.mxu0
    %v5804 = vadd.f32 0.0, %v5803
    %v5805 = vpop.f32.mrf.mxu0
    %v5806 = vadd.f32 0.0, %v5805
    %5807 = vmatmul.bf16.gmra.mxu0 %v5791
    %v5808 = vpop.f32.mrf.mxu0
    %v5809 = vadd.f32 0.0, %v5808
    %v5810 = vpop.f32.mrf.mxu0
    %v5811 = vadd.f32 0.0, %v5810
    %5812 = vdwg.mxu0
    %v5813 = vpack.c.bf16 %v5806, %v5804
    %v5814 = vpack.c.bf16 %v5811, %v5809
    %s5815 = scalar_lea.vmem [#allocation9], 256
    %v5816 = vld [vmem:[%s5815] sm:$0xf]
    %v5817 = vld [vmem:[%s5815 + $0x4] sm:$0xf]
    %v5818 = vld [vmem:[%s5815 + $0x8] sm:$0xf]
    %v5819 = vld [vmem:[%s5815 + $0xc] sm:$0xf]
    %v5820 = vld [vmem:[%s5815 + $0x10] sm:$0xf]
    %v5821 = vld [vmem:[%s5815 + $0x14] sm:$0xf]
    %v5822 = vld [vmem:[%s5815 + $0x18] sm:$0xf]
    %v5823 = vld [vmem:[%s5815 + $0x1c] sm:$0xf]
    %v5832 = vunpack.c.l.b16 %v5816
    %v5833 = vunpack.c.l.b16 %v5817
    %v5834 = vunpack.c.l.b16 %v5818
    %v5835 = vunpack.c.l.b16 %v5819
    %v5836 = vunpack.c.l.b16 %v5820
    %v5837 = vunpack.c.l.b16 %v5821
    %v5838 = vunpack.c.l.b16 %v5822
    %v5839 = vunpack.c.l.b16 %v5823
    %v5840 = vpack.c.b16 %v5833, %v5832
    %v5841 = vpack.c.b16 %v5835, %v5834
    %v5842 = vpack.c.b16 %v5837, %v5836
    %v5843 = vpack.c.b16 %v5839, %v5838
    %v5849 = vsel %vm5102, %v5813, 0
    %v5852 = vsel %vm5102, %v5814, 0
    %5854 = vmatpush.bf16.msra.mxu0 0
    %5855 = vmatpush.bf16.msra.mxu0 0
    %5856 = vmatpush.bf16.msra.mxu0 0
    %5857 = vmatpush.bf16.msra.mxu0 0
    %5858 = vmatpush.bf16.msra.mxu0 %v5843
    %5859 = vmatpush.bf16.msra.mxu0 %v5842
    %5860 = vmatpush.bf16.msra.mxu0 %v5841
    %5861 = vmatpush.bf16.msra.mxu0 %v5840
    %5862 = vmatmul.bf16.gmra.mxu0 %v5849
    %v5863 = vpop.f32.mrf.mxu0
    %v5864 = vadd.f32 0.0, %v5863
    %v5865 = vpop.f32.mrf.mxu0
    %v5866 = vadd.f32 0.0, %v5865
    %5867 = vmatmul.bf16.gmra.mxu0 %v5852
    %v5868 = vpop.f32.mrf.mxu0
    %v5869 = vadd.f32 0.0, %v5868
    %v5870 = vpop.f32.mrf.mxu0
    %v5871 = vadd.f32 0.0, %v5870
    %5872 = vdwg.mxu0
    %v5873 = vadd.f32 %v5773, %v5864
    %v5874 = vadd.f32 %v5774, %v5866
    %v5875 = vadd.f32 %v5775, %v5869
    %v5876 = vadd.f32 %v5776, %v5871
    %v5877 = vadd.f32 %v5873, %v5874
    %v5878 = vadd.f32 %v5877, %v5875
    %v5879 = vadd.f32 %v5878, %v5876
    %v5880 = vrot.slane %v5879, 4
    %v5881 = vadd.f32 %v5879, %v5880
    %v5882 = vrot.slane %v5881, 2
    %v5883 = vadd.f32 %v5881, %v5882
    %v5884 = vrot.slane %v5883, 1
    %v5885 = vadd.f32 %v5883, %v5884
    %v5886 = vrcp.pop 32.0
    %v5887 = vmul.f32 32.0, %v5886
    %v5888 = vsub.f32 1.0, %v5887
    %v5889 = vmul.f32 %v5886, %v5888
    %v5890 = vadd.f32 %v5886, %v5889
    %vm5891 = vweird.f32 %v5886
    %v5892 = vsel %vm5891, %v5886, %v5890
    %v5893 = vmul.f32 %v5885, %v5892
    %v5894 = vsub.f32 %v5873, %v5893
    %v5895 = vsub.f32 %v5874, %v5893
    %v5896 = vsub.f32 %v5875, %v5893
    %v5897 = vsub.f32 %v5876, %v5893
    %v5898 = vmul.f32 %v5894, %v5894
    %v5899 = vmul.f32 %v5895, %v5895
    %v5900 = vmul.f32 %v5896, %v5896
    %v5901 = vmul.f32 %v5897, %v5897
    %v5902 = vadd.f32 %v5898, %v5899
    %v5903 = vadd.f32 %v5902, %v5900
    %v5904 = vadd.f32 %v5903, %v5901
    %v5905 = vrot.slane %v5904, 4
    %v5906 = vadd.f32 %v5904, %v5905
    %v5907 = vrot.slane %v5906, 2
    %v5908 = vadd.f32 %v5906, %v5907
    %v5909 = vrot.slane %v5908, 1
    %v5910 = vadd.f32 %v5908, %v5909
    %v5911 = vmul.f32 %v5910, %v5892
    %v5912 = vadd.f32 %v5911, 1e-05
    %v5913 = vrsqrt.pop %v5912
    %v5914 = vmul.f32 %v5913, %v5912
    %v5915 = vmul.f32 %v5914, %v5913
    %v5916 = vmul.f32 0.5, %v5915
    %v5917 = vsub.f32 1.5, %v5916
    %v5918 = vmul.f32 %v5913, %v5917
    %vm5919 = vweird.f32 %v5912
    %vm5920 = vweird.f32 %v5913
    %vm5921 = vmor %vm5919, %vm5920
    %v5922 = vsel %vm5921, %v5913, %v5918
    %v5923 = vmul.f32 %v5894, %v5922
    %v5924 = vmul.f32 %v5895, %v5922
    %v5925 = vmul.f32 %v5896, %v5922
    %v5926 = vmul.f32 %v5897, %v5922
    %v5927 = vld [vmem:[#allocation10] sm:$0x1]
    %v5929 = vperm.slane %v5927, 0
    %v5931 = vmul.f32 %v5923, %v5929
    %v5932 = vmul.f32 %v5924, %v5929
    %v5933 = vmul.f32 %v5925, %v5929
    %v5934 = vmul.f32 %v5926, %v5929
    %s5935 = scalar_lea.vmem [#allocation10], 1
    %v5936 = vld [vmem:[%s5935] sm:$0x1]
    %v5938 = vperm.slane %v5936, 0
    %v5940 = vadd.f32 %v5931, %v5938
    %v5941 = vadd.f32 %v5932, %v5938
    %v5942 = vadd.f32 %v5933, %v5938
    %v5943 = vadd.f32 %v5934, %v5938
    %v5944 = vmul.f32 %v5940, 0.01
    %v5945 = vmul.f32 %v5941, 0.01
    %v5946 = vmul.f32 %v5942, 0.01
    %v5947 = vmul.f32 %v5943, 0.01
    %v5948 = vmax.f32 %v5940, %v5944
    %v5949 = vmax.f32 %v5941, %v5945
    %v5950 = vmax.f32 %v5942, %v5946
    %v5951 = vmax.f32 %v5943, %v5947
    %v5952 = vpack.c.bf16 %v5949, %v5948
    %v5953 = vpack.c.bf16 %v5951, %v5950
    %v5954 = vld [vmem:[#allocation12] sm:$0xf]
    %vm5955 = vcmask 261120
    %v5957 = vsel %vm5955, %v5954, 0
    %5959 = vmatpush.bf16.msra.mxu0 0
    %5960 = vmatpush.bf16.msra.mxu0 0
    %5961 = vmatpush.bf16.msra.mxu0 0
    %5962 = vmatpush.bf16.msra.mxu0 0
    %5963 = vmatpush.bf16.msra.mxu0 0
    %5964 = vmatpush.bf16.msra.mxu0 0
    %5965 = vmatpush.bf16.msra.mxu0 %v5953
    %5966 = vmatpush.bf16.msra.mxu0 %v5952
    %5967 = vmatmul.bf16.gmra.mxu0 %v5957
    %v5968 = vpop.f32.mrf.mxu0
    %v5969 = vadd.f32 0.0, %v5968
    %v5970 = vpop.f32.mrf.mxu0
    %5971 = vdwg.mxu0
    %v5972 = vpack.c.bf16 %v5969, %v5969
    %v5973 = vld [vmem:[#allocation13] sm:$0xff]
    %v5974 = vld [vmem:[#allocation13 + $0x8] sm:$0xff]
    %v5975 = vld [vmem:[#allocation13 + $0x10] sm:$0xff]
    %v5976 = vld [vmem:[#allocation13 + $0x18] sm:$0xff]
    %v5977 = vld [vmem:[#allocation13 + $0x20] sm:$0xff]
    %v5978 = vld [vmem:[#allocation13 + $0x28] sm:$0xff]
    %v5979 = vld [vmem:[#allocation13 + $0x30] sm:$0xff]
    %v5980 = vld [vmem:[#allocation13 + $0x38] sm:$0xff]
    %v5981 = vld [vmem:[#allocation13 + $0x40] sm:$0xff]
    %v5982 = vld [vmem:[#allocation13 + $0x48] sm:$0xff]
    %v5983 = vld [vmem:[#allocation13 + $0x50] sm:$0xff]
    %v5984 = vld [vmem:[#allocation13 + $0x58] sm:$0xff]
    %v5985 = vld [vmem:[#allocation13 + $0x60] sm:$0xff]
    %v5986 = vld [vmem:[#allocation13 + $0x68] sm:$0xff]
    %v5987 = vld [vmem:[#allocation13 + $0x70] sm:$0xff]
    %v5988 = vld [vmem:[#allocation13 + $0x78] sm:$0xff]
    %s5989 = scalar_lea.vmem [#allocation12], 4
    %v5990 = vld [vmem:[%s5989] sm:$0xf]
    %v5992 = vsel %vm5955, %v5990, 0
    %5994 = vmatpush.bf16.msra.mxu0 0
    %5995 = vmatpush.bf16.msra.mxu0 0
    %5996 = vmatpush.bf16.msra.mxu0 0
    %5997 = vmatpush.bf16.msra.mxu0 0
    %5998 = vmatpush.bf16.msra.mxu0 0
    %5999 = vmatpush.bf16.msra.mxu0 0
    %6000 = vmatpush.bf16.msra.mxu0 %v5953
    %6001 = vmatpush.bf16.msra.mxu0 %v5952
    %6002 = vmatmul.bf16.gmra.mxu0 %v5992
    %v6003 = vpop.f32.mrf.mxu0
    %v6004 = vadd.f32 0.0, %v6003
    %v6005 = vpop.f32.mrf.mxu0
    %6006 = vdwg.mxu0
    %v6007 = vpack.c.bf16 %v6004, %v6004
    %s6008 = scalar_lea.vmem [#allocation13], 128
    %v6009 = vld [vmem:[%s6008] sm:$0xff]
    %v6010 = vld [vmem:[%s6008 + $0x8] sm:$0xff]
    %v6011 = vld [vmem:[%s6008 + $0x10] sm:$0xff]
    %v6012 = vld [vmem:[%s6008 + $0x18] sm:$0xff]
    %v6013 = vld [vmem:[%s6008 + $0x20] sm:$0xff]
    %v6014 = vld [vmem:[%s6008 + $0x28] sm:$0xff]
    %v6015 = vld [vmem:[%s6008 + $0x30] sm:$0xff]
    %v6016 = vld [vmem:[%s6008 + $0x38] sm:$0xff]
    %v6017 = vld [vmem:[%s6008 + $0x40] sm:$0xff]
    %v6018 = vld [vmem:[%s6008 + $0x48] sm:$0xff]
    %v6019 = vld [vmem:[%s6008 + $0x50] sm:$0xff]
    %v6020 = vld [vmem:[%s6008 + $0x58] sm:$0xff]
    %v6021 = vld [vmem:[%s6008 + $0x60] sm:$0xff]
    %v6022 = vld [vmem:[%s6008 + $0x68] sm:$0xff]
    %v6023 = vld [vmem:[%s6008 + $0x70] sm:$0xff]
    %v6024 = vld [vmem:[%s6008 + $0x78] sm:$0xff]
    %v6041 = vunpack.c.l.b16 %v6009
    %v6042 = vunpack.c.h.b16 %v6009
    %v6043 = vunpack.c.l.b16 %v6010
    %v6044 = vunpack.c.h.b16 %v6010
    %v6045 = vunpack.c.l.b16 %v6011
    %v6046 = vunpack.c.h.b16 %v6011
    %v6047 = vunpack.c.l.b16 %v6012
    %v6048 = vunpack.c.h.b16 %v6012
    %v6049 = vunpack.c.l.b16 %v6013
    %v6050 = vunpack.c.h.b16 %v6013
    %v6051 = vunpack.c.l.b16 %v6014
    %v6052 = vunpack.c.h.b16 %v6014
    %v6053 = vunpack.c.l.b16 %v6015
    %v6054 = vunpack.c.h.b16 %v6015
    %v6055 = vunpack.c.l.b16 %v6016
    %v6056 = vunpack.c.h.b16 %v6016
    %v6057 = vunpack.c.l.b16 %v6017
    %v6058 = vunpack.c.h.b16 %v6017
    %v6059 = vunpack.c.l.b16 %v6018
    %v6060 = vunpack.c.h.b16 %v6018
    %v6061 = vunpack.c.l.b16 %v6019
    %v6062 = vunpack.c.h.b16 %v6019
    %v6063 = vunpack.c.l.b16 %v6020
    %v6064 = vunpack.c.h.b16 %v6020
    %v6065 = vunpack.c.l.b16 %v6021
    %v6066 = vunpack.c.h.b16 %v6021
    %v6067 = vunpack.c.l.b16 %v6022
    %v6068 = vunpack.c.h.b16 %v6022
    %v6069 = vunpack.c.l.b16 %v6023
    %v6070 = vunpack.c.h.b16 %v6023
    %v6071 = vunpack.c.l.b16 %v6024
    %v6072 = vunpack.c.h.b16 %v6024
    %v6073 = vpack.c.b16 %v6043, %v6041
    %v6074 = vpack.c.b16 %v6044, %v6042
    %v6075 = vpack.c.b16 %v6047, %v6045
    %v6076 = vpack.c.b16 %v6048, %v6046
    %v6077 = vpack.c.b16 %v6051, %v6049
    %v6078 = vpack.c.b16 %v6052, %v6050
    %v6079 = vpack.c.b16 %v6055, %v6053
    %v6080 = vpack.c.b16 %v6056, %v6054
    %v6081 = vpack.c.b16 %v6059, %v6057
    %v6082 = vpack.c.b16 %v6060, %v6058
    %v6083 = vpack.c.b16 %v6063, %v6061
    %v6084 = vpack.c.b16 %v6064, %v6062
    %v6085 = vpack.c.b16 %v6067, %v6065
    %v6086 = vpack.c.b16 %v6068, %v6066
    %v6087 = vpack.c.b16 %v6071, %v6069
    %v6088 = vpack.c.b16 %v6072, %v6070
    %6105 = vmatpush.bf16.msra.mxu0 %v6087
    %6106 = vmatpush.bf16.msra.mxu0 %v6085
    %6107 = vmatpush.bf16.msra.mxu0 %v6083
    %6108 = vmatpush.bf16.msra.mxu0 %v6081
    %6109 = vmatpush.bf16.msra.mxu0 %v6079
    %6110 = vmatpush.bf16.msra.mxu0 %v6077
    %6111 = vmatpush.bf16.msra.mxu0 %v6075
    %6112 = vmatpush.bf16.msra.mxu0 %v6073
    %6113 = vmatmul.bf16.gmra.mxu0 %v6007
    %v6114 = vpop.f32.mrf.mxu0
    %v6115 = vadd.f32 0.0, %v6114
    %v6116 = vpop.f32.mrf.mxu0
    %6117 = vdwg.mxu0
    %6118 = vmatpush.bf16.msra.mxu0 %v6088
    %6119 = vmatpush.bf16.msra.mxu0 %v6086
    %6120 = vmatpush.bf16.msra.mxu0 %v6084
    %6121 = vmatpush.bf16.msra.mxu0 %v6082
    %6122 = vmatpush.bf16.msra.mxu0 %v6080
    %6123 = vmatpush.bf16.msra.mxu0 %v6078
    %6124 = vmatpush.bf16.msra.mxu0 %v6076
    %6125 = vmatpush.bf16.msra.mxu0 %v6074
    %6126 = vmatmul.bf16.gmra.mxu0 %v6007
    %v6127 = vpop.f32.mrf.mxu0
    %v6128 = vadd.f32 0.0, %v6127
    %v6129 = vpop.f32.mrf.mxu0
    %6130 = vdwg.mxu0
    %v6147 = vunpack.c.l.b16 %v5973
    %v6148 = vunpack.c.h.b16 %v5973
    %v6149 = vunpack.c.l.b16 %v5974
    %v6150 = vunpack.c.h.b16 %v5974
    %v6151 = vunpack.c.l.b16 %v5975
    %v6152 = vunpack.c.h.b16 %v5975
    %v6153 = vunpack.c.l.b16 %v5976
    %v6154 = vunpack.c.h.b16 %v5976
    %v6155 = vunpack.c.l.b16 %v5977
    %v6156 = vunpack.c.h.b16 %v5977
    %v6157 = vunpack.c.l.b16 %v5978
    %v6158 = vunpack.c.h.b16 %v5978
    %v6159 = vunpack.c.l.b16 %v5979
    %v6160 = vunpack.c.h.b16 %v5979
    %v6161 = vunpack.c.l.b16 %v5980
    %v6162 = vunpack.c.h.b16 %v5980
    %v6163 = vunpack.c.l.b16 %v5981
    %v6164 = vunpack.c.h.b16 %v5981
    %v6165 = vunpack.c.l.b16 %v5982
    %v6166 = vunpack.c.h.b16 %v5982
    %v6167 = vunpack.c.l.b16 %v5983
    %v6168 = vunpack.c.h.b16 %v5983
    %v6169 = vunpack.c.l.b16 %v5984
    %v6170 = vunpack.c.h.b16 %v5984
    %v6171 = vunpack.c.l.b16 %v5985
    %v6172 = vunpack.c.h.b16 %v5985
    %v6173 = vunpack.c.l.b16 %v5986
    %v6174 = vunpack.c.h.b16 %v5986
    %v6175 = vunpack.c.l.b16 %v5987
    %v6176 = vunpack.c.h.b16 %v5987
    %v6177 = vunpack.c.l.b16 %v5988
    %v6178 = vunpack.c.h.b16 %v5988
    %v6179 = vpack.c.b16 %v6149, %v6147
    %v6180 = vpack.c.b16 %v6150, %v6148
    %v6181 = vpack.c.b16 %v6153, %v6151
    %v6182 = vpack.c.b16 %v6154, %v6152
    %v6183 = vpack.c.b16 %v6157, %v6155
    %v6184 = vpack.c.b16 %v6158, %v6156
    %v6185 = vpack.c.b16 %v6161, %v6159
    %v6186 = vpack.c.b16 %v6162, %v6160
    %v6187 = vpack.c.b16 %v6165, %v6163
    %v6188 = vpack.c.b16 %v6166, %v6164
    %v6189 = vpack.c.b16 %v6169, %v6167
    %v6190 = vpack.c.b16 %v6170, %v6168
    %v6191 = vpack.c.b16 %v6173, %v6171
    %v6192 = vpack.c.b16 %v6174, %v6172
    %v6193 = vpack.c.b16 %v6177, %v6175
    %v6194 = vpack.c.b16 %v6178, %v6176
    %6211 = vmatpush.bf16.msra.mxu0 %v6193
    %6212 = vmatpush.bf16.msra.mxu0 %v6191
    %6213 = vmatpush.bf16.msra.mxu0 %v6189
    %6214 = vmatpush.bf16.msra.mxu0 %v6187
    %6215 = vmatpush.bf16.msra.mxu0 %v6185
    %6216 = vmatpush.bf16.msra.mxu0 %v6183
    %6217 = vmatpush.bf16.msra.mxu0 %v6181
    %6218 = vmatpush.bf16.msra.mxu0 %v6179
    %6219 = vmatmul.bf16.gmra.mxu0 %v5972
    %v6220 = vpop.f32.mrf.mxu0
    %v6221 = vadd.f32 %v6115, %v6220
    %v6222 = vpop.f32.mrf.mxu0
    %6223 = vdwg.mxu0
    %6224 = vmatpush.bf16.msra.mxu0 %v6194
    %6225 = vmatpush.bf16.msra.mxu0 %v6192
    %6226 = vmatpush.bf16.msra.mxu0 %v6190
    %6227 = vmatpush.bf16.msra.mxu0 %v6188
    %6228 = vmatpush.bf16.msra.mxu0 %v6186
    %6229 = vmatpush.bf16.msra.mxu0 %v6184
    %6230 = vmatpush.bf16.msra.mxu0 %v6182
    %6231 = vmatpush.bf16.msra.mxu0 %v6180
    %6232 = vmatmul.bf16.gmra.mxu0 %v5972
    %v6233 = vpop.f32.mrf.mxu0
    %v6234 = vadd.f32 %v6128, %v6233
    %v6235 = vpop.f32.mrf.mxu0
    %6236 = vdwg.mxu0
    %s6237 = scalar_lea.vmem [#allocation12], 8
    %v6238 = vld [vmem:[%s6237] sm:$0xf]
    %v6240 = vsel %vm5955, %v6238, 0
    %6242 = vmatpush.bf16.msra.mxu0 0
    %6243 = vmatpush.bf16.msra.mxu0 0
    %6244 = vmatpush.bf16.msra.mxu0 0
    %6245 = vmatpush.bf16.msra.mxu0 0
    %6246 = vmatpush.bf16.msra.mxu0 0
    %6247 = vmatpush.bf16.msra.mxu0 0
    %6248 = vmatpush.bf16.msra.mxu0 %v5953
    %6249 = vmatpush.bf16.msra.mxu0 %v5952
    %6250 = vmatmul.bf16.gmra.mxu0 %v6240
    %v6251 = vpop.f32.mrf.mxu0
    %v6252 = vadd.f32 0.0, %v6251
    %v6253 = vpop.f32.mrf.mxu0
    %6254 = vdwg.mxu0
    %v6255 = vpack.c.bf16 %v6252, %v6252
    %s6256 = scalar_lea.vmem [#allocation13], 256
    %v6257 = vld [vmem:[%s6256] sm:$0xff]
    %v6258 = vld [vmem:[%s6256 + $0x8] sm:$0xff]
    %v6259 = vld [vmem:[%s6256 + $0x10] sm:$0xff]
    %v6260 = vld [vmem:[%s6256 + $0x18] sm:$0xff]
    %v6261 = vld [vmem:[%s6256 + $0x20] sm:$0xff]
    %v6262 = vld [vmem:[%s6256 + $0x28] sm:$0xff]
    %v6263 = vld [vmem:[%s6256 + $0x30] sm:$0xff]
    %v6264 = vld [vmem:[%s6256 + $0x38] sm:$0xff]
    %v6265 = vld [vmem:[%s6256 + $0x40] sm:$0xff]
    %v6266 = vld [vmem:[%s6256 + $0x48] sm:$0xff]
    %v6267 = vld [vmem:[%s6256 + $0x50] sm:$0xff]
    %v6268 = vld [vmem:[%s6256 + $0x58] sm:$0xff]
    %v6269 = vld [vmem:[%s6256 + $0x60] sm:$0xff]
    %v6270 = vld [vmem:[%s6256 + $0x68] sm:$0xff]
    %v6271 = vld [vmem:[%s6256 + $0x70] sm:$0xff]
    %v6272 = vld [vmem:[%s6256 + $0x78] sm:$0xff]
    %v6289 = vunpack.c.l.b16 %v6257
    %v6290 = vunpack.c.h.b16 %v6257
    %v6291 = vunpack.c.l.b16 %v6258
    %v6292 = vunpack.c.h.b16 %v6258
    %v6293 = vunpack.c.l.b16 %v6259
    %v6294 = vunpack.c.h.b16 %v6259
    %v6295 = vunpack.c.l.b16 %v6260
    %v6296 = vunpack.c.h.b16 %v6260
    %v6297 = vunpack.c.l.b16 %v6261
    %v6298 = vunpack.c.h.b16 %v6261
    %v6299 = vunpack.c.l.b16 %v6262
    %v6300 = vunpack.c.h.b16 %v6262
    %v6301 = vunpack.c.l.b16 %v6263
    %v6302 = vunpack.c.h.b16 %v6263
    %v6303 = vunpack.c.l.b16 %v6264
    %v6304 = vunpack.c.h.b16 %v6264
    %v6305 = vunpack.c.l.b16 %v6265
    %v6306 = vunpack.c.h.b16 %v6265
    %v6307 = vunpack.c.l.b16 %v6266
    %v6308 = vunpack.c.h.b16 %v6266
    %v6309 = vunpack.c.l.b16 %v6267
    %v6310 = vunpack.c.h.b16 %v6267
    %v6311 = vunpack.c.l.b16 %v6268
    %v6312 = vunpack.c.h.b16 %v6268
    %v6313 = vunpack.c.l.b16 %v6269
    %v6314 = vunpack.c.h.b16 %v6269
    %v6315 = vunpack.c.l.b16 %v6270
    %v6316 = vunpack.c.h.b16 %v6270
    %v6317 = vunpack.c.l.b16 %v6271
    %v6318 = vunpack.c.h.b16 %v6271
    %v6319 = vunpack.c.l.b16 %v6272
    %v6320 = vunpack.c.h.b16 %v6272
    %v6321 = vpack.c.b16 %v6291, %v6289
    %v6322 = vpack.c.b16 %v6292, %v6290
    %v6323 = vpack.c.b16 %v6295, %v6293
    %v6324 = vpack.c.b16 %v6296, %v6294
    %v6325 = vpack.c.b16 %v6299, %v6297
    %v6326 = vpack.c.b16 %v6300, %v6298
    %v6327 = vpack.c.b16 %v6303, %v6301
    %v6328 = vpack.c.b16 %v6304, %v6302
    %v6329 = vpack.c.b16 %v6307, %v6305
    %v6330 = vpack.c.b16 %v6308, %v6306
    %v6331 = vpack.c.b16 %v6311, %v6309
    %v6332 = vpack.c.b16 %v6312, %v6310
    %v6333 = vpack.c.b16 %v6315, %v6313
    %v6334 = vpack.c.b16 %v6316, %v6314
    %v6335 = vpack.c.b16 %v6319, %v6317
    %v6336 = vpack.c.b16 %v6320, %v6318
    %6353 = vmatpush.bf16.msra.mxu0 %v6335
    %6354 = vmatpush.bf16.msra.mxu0 %v6333
    %6355 = vmatpush.bf16.msra.mxu0 %v6331
    %6356 = vmatpush.bf16.msra.mxu0 %v6329
    %6357 = vmatpush.bf16.msra.mxu0 %v6327
    %6358 = vmatpush.bf16.msra.mxu0 %v6325
    %6359 = vmatpush.bf16.msra.mxu0 %v6323
    %6360 = vmatpush.bf16.msra.mxu0 %v6321
    %6361 = vmatmul.bf16.gmra.mxu0 %v6255
    %v6362 = vpop.f32.mrf.mxu0
    %v6363 = vadd.f32 0.0, %v6362
    %v6364 = vpop.f32.mrf.mxu0
    %6365 = vdwg.mxu0
    %6366 = vmatpush.bf16.msra.mxu0 %v6336
    %6367 = vmatpush.bf16.msra.mxu0 %v6334
    %6368 = vmatpush.bf16.msra.mxu0 %v6332
    %6369 = vmatpush.bf16.msra.mxu0 %v6330
    %6370 = vmatpush.bf16.msra.mxu0 %v6328
    %6371 = vmatpush.bf16.msra.mxu0 %v6326
    %6372 = vmatpush.bf16.msra.mxu0 %v6324
    %6373 = vmatpush.bf16.msra.mxu0 %v6322
    %6374 = vmatmul.bf16.gmra.mxu0 %v6255
    %v6375 = vpop.f32.mrf.mxu0
    %v6376 = vadd.f32 0.0, %v6375
    %v6377 = vpop.f32.mrf.mxu0
    %6378 = vdwg.mxu0
    %v6379 = vadd.f32 %v6221, %v6363
    %v6380 = vadd.f32 %v6234, %v6376
    %s6381 = scalar_lea.vmem [#allocation12], 12
    %v6382 = vld [vmem:[%s6381] sm:$0xf]
    %v6384 = vsel %vm5955, %v6382, 0
    %6386 = vmatpush.bf16.msra.mxu0 0
    %6387 = vmatpush.bf16.msra.mxu0 0
    %6388 = vmatpush.bf16.msra.mxu0 0
    %6389 = vmatpush.bf16.msra.mxu0 0
    %6390 = vmatpush.bf16.msra.mxu0 0
    %6391 = vmatpush.bf16.msra.mxu0 0
    %6392 = vmatpush.bf16.msra.mxu0 %v5953
    %6393 = vmatpush.bf16.msra.mxu0 %v5952
    %6394 = vmatmul.bf16.gmra.mxu0 %v6384
    %v6395 = vpop.f32.mrf.mxu0
    %v6396 = vadd.f32 0.0, %v6395
    %v6397 = vpop.f32.mrf.mxu0
    %6398 = vdwg.mxu0
    %v6399 = vpack.c.bf16 %v6396, %v6396
    %s6400 = scalar_lea.vmem [#allocation13], 384
    %v6401 = vld [vmem:[%s6400] sm:$0xff]
    %v6402 = vld [vmem:[%s6400 + $0x8] sm:$0xff]
    %v6403 = vld [vmem:[%s6400 + $0x10] sm:$0xff]
    %v6404 = vld [vmem:[%s6400 + $0x18] sm:$0xff]
    %v6405 = vld [vmem:[%s6400 + $0x20] sm:$0xff]
    %v6406 = vld [vmem:[%s6400 + $0x28] sm:$0xff]
    %v6407 = vld [vmem:[%s6400 + $0x30] sm:$0xff]
    %v6408 = vld [vmem:[%s6400 + $0x38] sm:$0xff]
    %v6409 = vld [vmem:[%s6400 + $0x40] sm:$0xff]
    %v6410 = vld [vmem:[%s6400 + $0x48] sm:$0xff]
    %v6411 = vld [vmem:[%s6400 + $0x50] sm:$0xff]
    %v6412 = vld [vmem:[%s6400 + $0x58] sm:$0xff]
    %v6413 = vld [vmem:[%s6400 + $0x60] sm:$0xff]
    %v6414 = vld [vmem:[%s6400 + $0x68] sm:$0xff]
    %v6415 = vld [vmem:[%s6400 + $0x70] sm:$0xff]
    %v6416 = vld [vmem:[%s6400 + $0x78] sm:$0xff]
    %v6433 = vunpack.c.l.b16 %v6401
    %v6434 = vunpack.c.h.b16 %v6401
    %v6435 = vunpack.c.l.b16 %v6402
    %v6436 = vunpack.c.h.b16 %v6402
    %v6437 = vunpack.c.l.b16 %v6403
    %v6438 = vunpack.c.h.b16 %v6403
    %v6439 = vunpack.c.l.b16 %v6404
    %v6440 = vunpack.c.h.b16 %v6404
    %v6441 = vunpack.c.l.b16 %v6405
    %v6442 = vunpack.c.h.b16 %v6405
    %v6443 = vunpack.c.l.b16 %v6406
    %v6444 = vunpack.c.h.b16 %v6406
    %v6445 = vunpack.c.l.b16 %v6407
    %v6446 = vunpack.c.h.b16 %v6407
    %v6447 = vunpack.c.l.b16 %v6408
    %v6448 = vunpack.c.h.b16 %v6408
    %v6449 = vunpack.c.l.b16 %v6409
    %v6450 = vunpack.c.h.b16 %v6409
    %v6451 = vunpack.c.l.b16 %v6410
    %v6452 = vunpack.c.h.b16 %v6410
    %v6453 = vunpack.c.l.b16 %v6411
    %v6454 = vunpack.c.h.b16 %v6411
    %v6455 = vunpack.c.l.b16 %v6412
    %v6456 = vunpack.c.h.b16 %v6412
    %v6457 = vunpack.c.l.b16 %v6413
    %v6458 = vunpack.c.h.b16 %v6413
    %v6459 = vunpack.c.l.b16 %v6414
    %v6460 = vunpack.c.h.b16 %v6414
    %v6461 = vunpack.c.l.b16 %v6415
    %v6462 = vunpack.c.h.b16 %v6415
    %v6463 = vunpack.c.l.b16 %v6416
    %v6464 = vunpack.c.h.b16 %v6416
    %v6465 = vpack.c.b16 %v6435, %v6433
    %v6466 = vpack.c.b16 %v6436, %v6434
    %v6467 = vpack.c.b16 %v6439, %v6437
    %v6468 = vpack.c.b16 %v6440, %v6438
    %v6469 = vpack.c.b16 %v6443, %v6441
    %v6470 = vpack.c.b16 %v6444, %v6442
    %v6471 = vpack.c.b16 %v6447, %v6445
    %v6472 = vpack.c.b16 %v6448, %v6446
    %v6473 = vpack.c.b16 %v6451, %v6449
    %v6474 = vpack.c.b16 %v6452, %v6450
    %v6475 = vpack.c.b16 %v6455, %v6453
    %v6476 = vpack.c.b16 %v6456, %v6454
    %v6477 = vpack.c.b16 %v6459, %v6457
    %v6478 = vpack.c.b16 %v6460, %v6458
    %v6479 = vpack.c.b16 %v6463, %v6461
    %v6480 = vpack.c.b16 %v6464, %v6462
    %6497 = vmatpush.bf16.msra.mxu0 %v6479
    %6498 = vmatpush.bf16.msra.mxu0 %v6477
    %6499 = vmatpush.bf16.msra.mxu0 %v6475
    %6500 = vmatpush.bf16.msra.mxu0 %v6473
    %6501 = vmatpush.bf16.msra.mxu0 %v6471
    %6502 = vmatpush.bf16.msra.mxu0 %v6469
    %6503 = vmatpush.bf16.msra.mxu0 %v6467
    %6504 = vmatpush.bf16.msra.mxu0 %v6465
    %6505 = vmatmul.bf16.gmra.mxu0 %v6399
    %v6506 = vpop.f32.mrf.mxu0
    %v6507 = vadd.f32 0.0, %v6506
    %v6508 = vpop.f32.mrf.mxu0
    %6509 = vdwg.mxu0
    %6510 = vmatpush.bf16.msra.mxu0 %v6480
    %6511 = vmatpush.bf16.msra.mxu0 %v6478
    %6512 = vmatpush.bf16.msra.mxu0 %v6476
    %6513 = vmatpush.bf16.msra.mxu0 %v6474
    %6514 = vmatpush.bf16.msra.mxu0 %v6472
    %6515 = vmatpush.bf16.msra.mxu0 %v6470
    %6516 = vmatpush.bf16.msra.mxu0 %v6468
    %6517 = vmatpush.bf16.msra.mxu0 %v6466
    %6518 = vmatmul.bf16.gmra.mxu0 %v6399
    %v6519 = vpop.f32.mrf.mxu0
    %v6520 = vadd.f32 0.0, %v6519
    %v6521 = vpop.f32.mrf.mxu0
    %6522 = vdwg.mxu0
    %v6523 = vadd.f32 %v6379, %v6507
    %v6524 = vadd.f32 %v6380, %v6520
    %s6525 = scalar_lea.vmem [#allocation12], 16
    %v6526 = vld [vmem:[%s6525] sm:$0xf]
    %v6528 = vsel %vm5955, %v6526, 0
    %6530 = vmatpush.bf16.msra.mxu0 0
    %6531 = vmatpush.bf16.msra.mxu0 0
    %6532 = vmatpush.bf16.msra.mxu0 0
    %6533 = vmatpush.bf16.msra.mxu0 0
    %6534 = vmatpush.bf16.msra.mxu0 0
    %6535 = vmatpush.bf16.msra.mxu0 0
    %6536 = vmatpush.bf16.msra.mxu0 %v5953
    %6537 = vmatpush.bf16.msra.mxu0 %v5952
    %6538 = vmatmul.bf16.gmra.mxu0 %v6528
    %v6539 = vpop.f32.mrf.mxu0
    %v6540 = vadd.f32 0.0, %v6539
    %v6541 = vpop.f32.mrf.mxu0
    %6542 = vdwg.mxu0
    %v6543 = vpack.c.bf16 %v6540, %v6540
    %s6544 = scalar_lea.vmem [#allocation13], 512
    %v6545 = vld [vmem:[%s6544] sm:$0xff]
    %v6546 = vld [vmem:[%s6544 + $0x8] sm:$0xff]
    %v6547 = vld [vmem:[%s6544 + $0x10] sm:$0xff]
    %v6548 = vld [vmem:[%s6544 + $0x18] sm:$0xff]
    %v6549 = vld [vmem:[%s6544 + $0x20] sm:$0xff]
    %v6550 = vld [vmem:[%s6544 + $0x28] sm:$0xff]
    %v6551 = vld [vmem:[%s6544 + $0x30] sm:$0xff]
    %v6552 = vld [vmem:[%s6544 + $0x38] sm:$0xff]
    %v6553 = vld [vmem:[%s6544 + $0x40] sm:$0xff]
    %v6554 = vld [vmem:[%s6544 + $0x48] sm:$0xff]
    %v6555 = vld [vmem:[%s6544 + $0x50] sm:$0xff]
    %v6556 = vld [vmem:[%s6544 + $0x58] sm:$0xff]
    %v6557 = vld [vmem:[%s6544 + $0x60] sm:$0xff]
    %v6558 = vld [vmem:[%s6544 + $0x68] sm:$0xff]
    %v6559 = vld [vmem:[%s6544 + $0x70] sm:$0xff]
    %v6560 = vld [vmem:[%s6544 + $0x78] sm:$0xff]
    %v6577 = vunpack.c.l.b16 %v6545
    %v6578 = vunpack.c.h.b16 %v6545
    %v6579 = vunpack.c.l.b16 %v6546
    %v6580 = vunpack.c.h.b16 %v6546
    %v6581 = vunpack.c.l.b16 %v6547
    %v6582 = vunpack.c.h.b16 %v6547
    %v6583 = vunpack.c.l.b16 %v6548
    %v6584 = vunpack.c.h.b16 %v6548
    %v6585 = vunpack.c.l.b16 %v6549
    %v6586 = vunpack.c.h.b16 %v6549
    %v6587 = vunpack.c.l.b16 %v6550
    %v6588 = vunpack.c.h.b16 %v6550
    %v6589 = vunpack.c.l.b16 %v6551
    %v6590 = vunpack.c.h.b16 %v6551
    %v6591 = vunpack.c.l.b16 %v6552
    %v6592 = vunpack.c.h.b16 %v6552
    %v6593 = vunpack.c.l.b16 %v6553
    %v6594 = vunpack.c.h.b16 %v6553
    %v6595 = vunpack.c.l.b16 %v6554
    %v6596 = vunpack.c.h.b16 %v6554
    %v6597 = vunpack.c.l.b16 %v6555
    %v6598 = vunpack.c.h.b16 %v6555
    %v6599 = vunpack.c.l.b16 %v6556
    %v6600 = vunpack.c.h.b16 %v6556
    %v6601 = vunpack.c.l.b16 %v6557
    %v6602 = vunpack.c.h.b16 %v6557
    %v6603 = vunpack.c.l.b16 %v6558
    %v6604 = vunpack.c.h.b16 %v6558
    %v6605 = vunpack.c.l.b16 %v6559
    %v6606 = vunpack.c.h.b16 %v6559
    %v6607 = vunpack.c.l.b16 %v6560
    %v6608 = vunpack.c.h.b16 %v6560
    %v6609 = vpack.c.b16 %v6579, %v6577
    %v6610 = vpack.c.b16 %v6580, %v6578
    %v6611 = vpack.c.b16 %v6583, %v6581
    %v6612 = vpack.c.b16 %v6584, %v6582
    %v6613 = vpack.c.b16 %v6587, %v6585
    %v6614 = vpack.c.b16 %v6588, %v6586
    %v6615 = vpack.c.b16 %v6591, %v6589
    %v6616 = vpack.c.b16 %v6592, %v6590
    %v6617 = vpack.c.b16 %v6595, %v6593
    %v6618 = vpack.c.b16 %v6596, %v6594
    %v6619 = vpack.c.b16 %v6599, %v6597
    %v6620 = vpack.c.b16 %v6600, %v6598
    %v6621 = vpack.c.b16 %v6603, %v6601
    %v6622 = vpack.c.b16 %v6604, %v6602
    %v6623 = vpack.c.b16 %v6607, %v6605
    %v6624 = vpack.c.b16 %v6608, %v6606
    %6641 = vmatpush.bf16.msra.mxu0 %v6623
    %6642 = vmatpush.bf16.msra.mxu0 %v6621
    %6643 = vmatpush.bf16.msra.mxu0 %v6619
    %6644 = vmatpush.bf16.msra.mxu0 %v6617
    %6645 = vmatpush.bf16.msra.mxu0 %v6615
    %6646 = vmatpush.bf16.msra.mxu0 %v6613
    %6647 = vmatpush.bf16.msra.mxu0 %v6611
    %6648 = vmatpush.bf16.msra.mxu0 %v6609
    %6649 = vmatmul.bf16.gmra.mxu0 %v6543
    %v6650 = vpop.f32.mrf.mxu0
    %v6651 = vadd.f32 0.0, %v6650
    %v6652 = vpop.f32.mrf.mxu0
    %6653 = vdwg.mxu0
    %6654 = vmatpush.bf16.msra.mxu0 %v6624
    %6655 = vmatpush.bf16.msra.mxu0 %v6622
    %6656 = vmatpush.bf16.msra.mxu0 %v6620
    %6657 = vmatpush.bf16.msra.mxu0 %v6618
    %6658 = vmatpush.bf16.msra.mxu0 %v6616
    %6659 = vmatpush.bf16.msra.mxu0 %v6614
    %6660 = vmatpush.bf16.msra.mxu0 %v6612
    %6661 = vmatpush.bf16.msra.mxu0 %v6610
    %6662 = vmatmul.bf16.gmra.mxu0 %v6543
    %v6663 = vpop.f32.mrf.mxu0
    %v6664 = vadd.f32 0.0, %v6663
    %v6665 = vpop.f32.mrf.mxu0
    %6666 = vdwg.mxu0
    %v6667 = vadd.f32 %v6523, %v6651
    %v6668 = vadd.f32 %v6524, %v6664
    %s6669 = scalar_lea.vmem [#allocation12], 20
    %v6670 = vld [vmem:[%s6669] sm:$0xf]
    %v6672 = vsel %vm5955, %v6670, 0
    %6674 = vmatpush.bf16.msra.mxu0 0
    %6675 = vmatpush.bf16.msra.mxu0 0
    %6676 = vmatpush.bf16.msra.mxu0 0
    %6677 = vmatpush.bf16.msra.mxu0 0
    %6678 = vmatpush.bf16.msra.mxu0 0
    %6679 = vmatpush.bf16.msra.mxu0 0
    %6680 = vmatpush.bf16.msra.mxu0 %v5953
    %6681 = vmatpush.bf16.msra.mxu0 %v5952
    %6682 = vmatmul.bf16.gmra.mxu0 %v6672
    %v6683 = vpop.f32.mrf.mxu0
    %v6684 = vadd.f32 0.0, %v6683
    %v6685 = vpop.f32.mrf.mxu0
    %6686 = vdwg.mxu0
    %v6687 = vpack.c.bf16 %v6684, %v6684
    %s6688 = scalar_lea.vmem [#allocation13], 640
    %v6689 = vld [vmem:[%s6688] sm:$0xff]
    %v6690 = vld [vmem:[%s6688 + $0x8] sm:$0xff]
    %v6691 = vld [vmem:[%s6688 + $0x10] sm:$0xff]
    %v6692 = vld [vmem:[%s6688 + $0x18] sm:$0xff]
    %v6693 = vld [vmem:[%s6688 + $0x20] sm:$0xff]
    %v6694 = vld [vmem:[%s6688 + $0x28] sm:$0xff]
    %v6695 = vld [vmem:[%s6688 + $0x30] sm:$0xff]
    %v6696 = vld [vmem:[%s6688 + $0x38] sm:$0xff]
    %v6697 = vld [vmem:[%s6688 + $0x40] sm:$0xff]
    %v6698 = vld [vmem:[%s6688 + $0x48] sm:$0xff]
    %v6699 = vld [vmem:[%s6688 + $0x50] sm:$0xff]
    %v6700 = vld [vmem:[%s6688 + $0x58] sm:$0xff]
    %v6701 = vld [vmem:[%s6688 + $0x60] sm:$0xff]
    %v6702 = vld [vmem:[%s6688 + $0x68] sm:$0xff]
    %v6703 = vld [vmem:[%s6688 + $0x70] sm:$0xff]
    %v6704 = vld [vmem:[%s6688 + $0x78] sm:$0xff]
    %v6721 = vunpack.c.l.b16 %v6689
    %v6722 = vunpack.c.h.b16 %v6689
    %v6723 = vunpack.c.l.b16 %v6690
    %v6724 = vunpack.c.h.b16 %v6690
    %v6725 = vunpack.c.l.b16 %v6691
    %v6726 = vunpack.c.h.b16 %v6691
    %v6727 = vunpack.c.l.b16 %v6692
    %v6728 = vunpack.c.h.b16 %v6692
    %v6729 = vunpack.c.l.b16 %v6693
    %v6730 = vunpack.c.h.b16 %v6693
    %v6731 = vunpack.c.l.b16 %v6694
    %v6732 = vunpack.c.h.b16 %v6694
    %v6733 = vunpack.c.l.b16 %v6695
    %v6734 = vunpack.c.h.b16 %v6695
    %v6735 = vunpack.c.l.b16 %v6696
    %v6736 = vunpack.c.h.b16 %v6696
    %v6737 = vunpack.c.l.b16 %v6697
    %v6738 = vunpack.c.h.b16 %v6697
    %v6739 = vunpack.c.l.b16 %v6698
    %v6740 = vunpack.c.h.b16 %v6698
    %v6741 = vunpack.c.l.b16 %v6699
    %v6742 = vunpack.c.h.b16 %v6699
    %v6743 = vunpack.c.l.b16 %v6700
    %v6744 = vunpack.c.h.b16 %v6700
    %v6745 = vunpack.c.l.b16 %v6701
    %v6746 = vunpack.c.h.b16 %v6701
    %v6747 = vunpack.c.l.b16 %v6702
    %v6748 = vunpack.c.h.b16 %v6702
    %v6749 = vunpack.c.l.b16 %v6703
    %v6750 = vunpack.c.h.b16 %v6703
    %v6751 = vunpack.c.l.b16 %v6704
    %v6752 = vunpack.c.h.b16 %v6704
    %v6753 = vpack.c.b16 %v6723, %v6721
    %v6754 = vpack.c.b16 %v6724, %v6722
    %v6755 = vpack.c.b16 %v6727, %v6725
    %v6756 = vpack.c.b16 %v6728, %v6726
    %v6757 = vpack.c.b16 %v6731, %v6729
    %v6758 = vpack.c.b16 %v6732, %v6730
    %v6759 = vpack.c.b16 %v6735, %v6733
    %v6760 = vpack.c.b16 %v6736, %v6734
    %v6761 = vpack.c.b16 %v6739, %v6737
    %v6762 = vpack.c.b16 %v6740, %v6738
    %v6763 = vpack.c.b16 %v6743, %v6741
    %v6764 = vpack.c.b16 %v6744, %v6742
    %v6765 = vpack.c.b16 %v6747, %v6745
    %v6766 = vpack.c.b16 %v6748, %v6746
    %v6767 = vpack.c.b16 %v6751, %v6749
    %v6768 = vpack.c.b16 %v6752, %v6750
    %6785 = vmatpush.bf16.msra.mxu0 %v6767
    %6786 = vmatpush.bf16.msra.mxu0 %v6765
    %6787 = vmatpush.bf16.msra.mxu0 %v6763
    %6788 = vmatpush.bf16.msra.mxu0 %v6761
    %6789 = vmatpush.bf16.msra.mxu0 %v6759
    %6790 = vmatpush.bf16.msra.mxu0 %v6757
    %6791 = vmatpush.bf16.msra.mxu0 %v6755
    %6792 = vmatpush.bf16.msra.mxu0 %v6753
    %6793 = vmatmul.bf16.gmra.mxu0 %v6687
    %v6794 = vpop.f32.mrf.mxu0
    %v6795 = vadd.f32 0.0, %v6794
    %v6796 = vpop.f32.mrf.mxu0
    %6797 = vdwg.mxu0
    %6798 = vmatpush.bf16.msra.mxu0 %v6768
    %6799 = vmatpush.bf16.msra.mxu0 %v6766
    %6800 = vmatpush.bf16.msra.mxu0 %v6764
    %6801 = vmatpush.bf16.msra.mxu0 %v6762
    %6802 = vmatpush.bf16.msra.mxu0 %v6760
    %6803 = vmatpush.bf16.msra.mxu0 %v6758
    %6804 = vmatpush.bf16.msra.mxu0 %v6756
    %6805 = vmatpush.bf16.msra.mxu0 %v6754
    %6806 = vmatmul.bf16.gmra.mxu0 %v6687
    %v6807 = vpop.f32.mrf.mxu0
    %v6808 = vadd.f32 0.0, %v6807
    %v6809 = vpop.f32.mrf.mxu0
    %6810 = vdwg.mxu0
    %v6811 = vadd.f32 %v6667, %v6795
    %v6812 = vadd.f32 %v6668, %v6808
    %s6813 = scalar_lea.vmem [#allocation12], 24
    %v6814 = vld [vmem:[%s6813] sm:$0xf]
    %v6816 = vsel %vm5955, %v6814, 0
    %6818 = vmatpush.bf16.msra.mxu0 0
    %6819 = vmatpush.bf16.msra.mxu0 0
    %6820 = vmatpush.bf16.msra.mxu0 0
    %6821 = vmatpush.bf16.msra.mxu0 0
    %6822 = vmatpush.bf16.msra.mxu0 0
    %6823 = vmatpush.bf16.msra.mxu0 0
    %6824 = vmatpush.bf16.msra.mxu0 %v5953
    %6825 = vmatpush.bf16.msra.mxu0 %v5952
    %6826 = vmatmul.bf16.gmra.mxu0 %v6816
    %v6827 = vpop.f32.mrf.mxu0
    %v6828 = vadd.f32 0.0, %v6827
    %v6829 = vpop.f32.mrf.mxu0
    %6830 = vdwg.mxu0
    %v6831 = vpack.c.bf16 %v6828, %v6828
    %s6832 = scalar_lea.vmem [#allocation13], 768
    %v6833 = vld [vmem:[%s6832] sm:$0xff]
    %v6834 = vld [vmem:[%s6832 + $0x8] sm:$0xff]
    %v6835 = vld [vmem:[%s6832 + $0x10] sm:$0xff]
    %v6836 = vld [vmem:[%s6832 + $0x18] sm:$0xff]
    %v6837 = vld [vmem:[%s6832 + $0x20] sm:$0xff]
    %v6838 = vld [vmem:[%s6832 + $0x28] sm:$0xff]
    %v6839 = vld [vmem:[%s6832 + $0x30] sm:$0xff]
    %v6840 = vld [vmem:[%s6832 + $0x38] sm:$0xff]
    %v6841 = vld [vmem:[%s6832 + $0x40] sm:$0xff]
    %v6842 = vld [vmem:[%s6832 + $0x48] sm:$0xff]
    %v6843 = vld [vmem:[%s6832 + $0x50] sm:$0xff]
    %v6844 = vld [vmem:[%s6832 + $0x58] sm:$0xff]
    %v6845 = vld [vmem:[%s6832 + $0x60] sm:$0xff]
    %v6846 = vld [vmem:[%s6832 + $0x68] sm:$0xff]
    %v6847 = vld [vmem:[%s6832 + $0x70] sm:$0xff]
    %v6848 = vld [vmem:[%s6832 + $0x78] sm:$0xff]
    %v6865 = vunpack.c.l.b16 %v6833
    %v6866 = vunpack.c.h.b16 %v6833
    %v6867 = vunpack.c.l.b16 %v6834
    %v6868 = vunpack.c.h.b16 %v6834
    %v6869 = vunpack.c.l.b16 %v6835
    %v6870 = vunpack.c.h.b16 %v6835
    %v6871 = vunpack.c.l.b16 %v6836
    %v6872 = vunpack.c.h.b16 %v6836
    %v6873 = vunpack.c.l.b16 %v6837
    %v6874 = vunpack.c.h.b16 %v6837
    %v6875 = vunpack.c.l.b16 %v6838
    %v6876 = vunpack.c.h.b16 %v6838
    %v6877 = vunpack.c.l.b16 %v6839
    %v6878 = vunpack.c.h.b16 %v6839
    %v6879 = vunpack.c.l.b16 %v6840
    %v6880 = vunpack.c.h.b16 %v6840
    %v6881 = vunpack.c.l.b16 %v6841
    %v6882 = vunpack.c.h.b16 %v6841
    %v6883 = vunpack.c.l.b16 %v6842
    %v6884 = vunpack.c.h.b16 %v6842
    %v6885 = vunpack.c.l.b16 %v6843
    %v6886 = vunpack.c.h.b16 %v6843
    %v6887 = vunpack.c.l.b16 %v6844
    %v6888 = vunpack.c.h.b16 %v6844
    %v6889 = vunpack.c.l.b16 %v6845
    %v6890 = vunpack.c.h.b16 %v6845
    %v6891 = vunpack.c.l.b16 %v6846
    %v6892 = vunpack.c.h.b16 %v6846
    %v6893 = vunpack.c.l.b16 %v6847
    %v6894 = vunpack.c.h.b16 %v6847
    %v6895 = vunpack.c.l.b16 %v6848
    %v6896 = vunpack.c.h.b16 %v6848
    %v6897 = vpack.c.b16 %v6867, %v6865
    %v6898 = vpack.c.b16 %v6868, %v6866
    %v6899 = vpack.c.b16 %v6871, %v6869
    %v6900 = vpack.c.b16 %v6872, %v6870
    %v6901 = vpack.c.b16 %v6875, %v6873
    %v6902 = vpack.c.b16 %v6876, %v6874
    %v6903 = vpack.c.b16 %v6879, %v6877
    %v6904 = vpack.c.b16 %v6880, %v6878
    %v6905 = vpack.c.b16 %v6883, %v6881
    %v6906 = vpack.c.b16 %v6884, %v6882
    %v6907 = vpack.c.b16 %v6887, %v6885
    %v6908 = vpack.c.b16 %v6888, %v6886
    %v6909 = vpack.c.b16 %v6891, %v6889
    %v6910 = vpack.c.b16 %v6892, %v6890
    %v6911 = vpack.c.b16 %v6895, %v6893
    %v6912 = vpack.c.b16 %v6896, %v6894
    %6929 = vmatpush.bf16.msra.mxu0 %v6911
    %6930 = vmatpush.bf16.msra.mxu0 %v6909
    %6931 = vmatpush.bf16.msra.mxu0 %v6907
    %6932 = vmatpush.bf16.msra.mxu0 %v6905
    %6933 = vmatpush.bf16.msra.mxu0 %v6903
    %6934 = vmatpush.bf16.msra.mxu0 %v6901
    %6935 = vmatpush.bf16.msra.mxu0 %v6899
    %6936 = vmatpush.bf16.msra.mxu0 %v6897
    %6937 = vmatmul.bf16.gmra.mxu0 %v6831
    %v6938 = vpop.f32.mrf.mxu0
    %v6939 = vadd.f32 0.0, %v6938
    %v6940 = vpop.f32.mrf.mxu0
    %6941 = vdwg.mxu0
    %6942 = vmatpush.bf16.msra.mxu0 %v6912
    %6943 = vmatpush.bf16.msra.mxu0 %v6910
    %6944 = vmatpush.bf16.msra.mxu0 %v6908
    %6945 = vmatpush.bf16.msra.mxu0 %v6906
    %6946 = vmatpush.bf16.msra.mxu0 %v6904
    %6947 = vmatpush.bf16.msra.mxu0 %v6902
    %6948 = vmatpush.bf16.msra.mxu0 %v6900
    %6949 = vmatpush.bf16.msra.mxu0 %v6898
    %6950 = vmatmul.bf16.gmra.mxu0 %v6831
    %v6951 = vpop.f32.mrf.mxu0
    %v6952 = vadd.f32 0.0, %v6951
    %v6953 = vpop.f32.mrf.mxu0
    %6954 = vdwg.mxu0
    %v6955 = vadd.f32 %v6811, %v6939
    %v6956 = vadd.f32 %v6812, %v6952
    %s6957 = scalar_lea.vmem [#allocation12], 28
    %v6958 = vld [vmem:[%s6957] sm:$0xf]
    %v6960 = vsel %vm5955, %v6958, 0
    %6962 = vmatpush.bf16.msra.mxu0 0
    %6963 = vmatpush.bf16.msra.mxu0 0
    %6964 = vmatpush.bf16.msra.mxu0 0
    %6965 = vmatpush.bf16.msra.mxu0 0
    %6966 = vmatpush.bf16.msra.mxu0 0
    %6967 = vmatpush.bf16.msra.mxu0 0
    %6968 = vmatpush.bf16.msra.mxu0 %v5953
    %6969 = vmatpush.bf16.msra.mxu0 %v5952
    %6970 = vmatmul.bf16.gmra.mxu0 %v6960
    %v6971 = vpop.f32.mrf.mxu0
    %v6972 = vadd.f32 0.0, %v6971
    %v6973 = vpop.f32.mrf.mxu0
    %6974 = vdwg.mxu0
    %v6975 = vpack.c.bf16 %v6972, %v6972
    %s6976 = scalar_lea.vmem [#allocation13], 896
    %v6977 = vld [vmem:[%s6976] sm:$0xff]
    %v6978 = vld [vmem:[%s6976 + $0x8] sm:$0xff]
    %v6979 = vld [vmem:[%s6976 + $0x10] sm:$0xff]
    %v6980 = vld [vmem:[%s6976 + $0x18] sm:$0xff]
    %v6981 = vld [vmem:[%s6976 + $0x20] sm:$0xff]
    %v6982 = vld [vmem:[%s6976 + $0x28] sm:$0xff]
    %v6983 = vld [vmem:[%s6976 + $0x30] sm:$0xff]
    %v6984 = vld [vmem:[%s6976 + $0x38] sm:$0xff]
    %v6985 = vld [vmem:[%s6976 + $0x40] sm:$0xff]
    %v6986 = vld [vmem:[%s6976 + $0x48] sm:$0xff]
    %v6987 = vld [vmem:[%s6976 + $0x50] sm:$0xff]
    %v6988 = vld [vmem:[%s6976 + $0x58] sm:$0xff]
    %v6989 = vld [vmem:[%s6976 + $0x60] sm:$0xff]
    %v6990 = vld [vmem:[%s6976 + $0x68] sm:$0xff]
    %v6991 = vld [vmem:[%s6976 + $0x70] sm:$0xff]
    %v6992 = vld [vmem:[%s6976 + $0x78] sm:$0xff]
    %v7009 = vunpack.c.l.b16 %v6977
    %v7010 = vunpack.c.h.b16 %v6977
    %v7011 = vunpack.c.l.b16 %v6978
    %v7012 = vunpack.c.h.b16 %v6978
    %v7013 = vunpack.c.l.b16 %v6979
    %v7014 = vunpack.c.h.b16 %v6979
    %v7015 = vunpack.c.l.b16 %v6980
    %v7016 = vunpack.c.h.b16 %v6980
    %v7017 = vunpack.c.l.b16 %v6981
    %v7018 = vunpack.c.h.b16 %v6981
    %v7019 = vunpack.c.l.b16 %v6982
    %v7020 = vunpack.c.h.b16 %v6982
    %v7021 = vunpack.c.l.b16 %v6983
    %v7022 = vunpack.c.h.b16 %v6983
    %v7023 = vunpack.c.l.b16 %v6984
    %v7024 = vunpack.c.h.b16 %v6984
    %v7025 = vunpack.c.l.b16 %v6985
    %v7026 = vunpack.c.h.b16 %v6985
    %v7027 = vunpack.c.l.b16 %v6986
    %v7028 = vunpack.c.h.b16 %v6986
    %v7029 = vunpack.c.l.b16 %v6987
    %v7030 = vunpack.c.h.b16 %v6987
    %v7031 = vunpack.c.l.b16 %v6988
    %v7032 = vunpack.c.h.b16 %v6988
    %v7033 = vunpack.c.l.b16 %v6989
    %v7034 = vunpack.c.h.b16 %v6989
    %v7035 = vunpack.c.l.b16 %v6990
    %v7036 = vunpack.c.h.b16 %v6990
    %v7037 = vunpack.c.l.b16 %v6991
    %v7038 = vunpack.c.h.b16 %v6991
    %v7039 = vunpack.c.l.b16 %v6992
    %v7040 = vunpack.c.h.b16 %v6992
    %v7041 = vpack.c.b16 %v7011, %v7009
    %v7042 = vpack.c.b16 %v7012, %v7010
    %v7043 = vpack.c.b16 %v7015, %v7013
    %v7044 = vpack.c.b16 %v7016, %v7014
    %v7045 = vpack.c.b16 %v7019, %v7017
    %v7046 = vpack.c.b16 %v7020, %v7018
    %v7047 = vpack.c.b16 %v7023, %v7021
    %v7048 = vpack.c.b16 %v7024, %v7022
    %v7049 = vpack.c.b16 %v7027, %v7025
    %v7050 = vpack.c.b16 %v7028, %v7026
    %v7051 = vpack.c.b16 %v7031, %v7029
    %v7052 = vpack.c.b16 %v7032, %v7030
    %v7053 = vpack.c.b16 %v7035, %v7033
    %v7054 = vpack.c.b16 %v7036, %v7034
    %v7055 = vpack.c.b16 %v7039, %v7037
    %v7056 = vpack.c.b16 %v7040, %v7038
    %7073 = vmatpush.bf16.msra.mxu0 %v7055
    %7074 = vmatpush.bf16.msra.mxu0 %v7053
    %7075 = vmatpush.bf16.msra.mxu0 %v7051
    %7076 = vmatpush.bf16.msra.mxu0 %v7049
    %7077 = vmatpush.bf16.msra.mxu0 %v7047
    %7078 = vmatpush.bf16.msra.mxu0 %v7045
    %7079 = vmatpush.bf16.msra.mxu0 %v7043
    %7080 = vmatpush.bf16.msra.mxu0 %v7041
    %7081 = vmatmul.bf16.gmra.mxu0 %v6975
    %v7082 = vpop.f32.mrf.mxu0
    %v7083 = vadd.f32 0.0, %v7082
    %v7084 = vpop.f32.mrf.mxu0
    %7085 = vdwg.mxu0
    %7086 = vmatpush.bf16.msra.mxu0 %v7056
    %7087 = vmatpush.bf16.msra.mxu0 %v7054
    %7088 = vmatpush.bf16.msra.mxu0 %v7052
    %7089 = vmatpush.bf16.msra.mxu0 %v7050
    %7090 = vmatpush.bf16.msra.mxu0 %v7048
    %7091 = vmatpush.bf16.msra.mxu0 %v7046
    %7092 = vmatpush.bf16.msra.mxu0 %v7044
    %7093 = vmatpush.bf16.msra.mxu0 %v7042
    %7094 = vmatmul.bf16.gmra.mxu0 %v6975
    %v7095 = vpop.f32.mrf.mxu0
    %v7096 = vadd.f32 0.0, %v7095
    %v7097 = vpop.f32.mrf.mxu0
    %7098 = vdwg.mxu0
    %v7099 = vadd.f32 %v6955, %v7083
    %v7100 = vadd.f32 %v6956, %v7096
    %s7101 = scalar_lea.vmem [#allocation12], 32
    %v7102 = vld [vmem:[%s7101] sm:$0xf]
    %v7104 = vsel %vm5955, %v7102, 0
    %7106 = vmatpush.bf16.msra.mxu0 0
    %7107 = vmatpush.bf16.msra.mxu0 0
    %7108 = vmatpush.bf16.msra.mxu0 0
    %7109 = vmatpush.bf16.msra.mxu0 0
    %7110 = vmatpush.bf16.msra.mxu0 0
    %7111 = vmatpush.bf16.msra.mxu0 0
    %7112 = vmatpush.bf16.msra.mxu0 %v5953
    %7113 = vmatpush.bf16.msra.mxu0 %v5952
    %7114 = vmatmul.bf16.gmra.mxu0 %v7104
    %v7115 = vpop.f32.mrf.mxu0
    %v7116 = vadd.f32 0.0, %v7115
    %v7117 = vpop.f32.mrf.mxu0
    %7118 = vdwg.mxu0
    %v7119 = vpack.c.bf16 %v7116, %v7116
    %s7120 = scalar_lea.vmem [#allocation13], 1024
    %v7121 = vld [vmem:[%s7120] sm:$0xff]
    %v7122 = vld [vmem:[%s7120 + $0x8] sm:$0xff]
    %v7123 = vld [vmem:[%s7120 + $0x10] sm:$0xff]
    %v7124 = vld [vmem:[%s7120 + $0x18] sm:$0xff]
    %v7125 = vld [vmem:[%s7120 + $0x20] sm:$0xff]
    %v7126 = vld [vmem:[%s7120 + $0x28] sm:$0xff]
    %v7127 = vld [vmem:[%s7120 + $0x30] sm:$0xff]
    %v7128 = vld [vmem:[%s7120 + $0x38] sm:$0xff]
    %v7129 = vld [vmem:[%s7120 + $0x40] sm:$0xff]
    %v7130 = vld [vmem:[%s7120 + $0x48] sm:$0xff]
    %v7131 = vld [vmem:[%s7120 + $0x50] sm:$0xff]
    %v7132 = vld [vmem:[%s7120 + $0x58] sm:$0xff]
    %v7133 = vld [vmem:[%s7120 + $0x60] sm:$0xff]
    %v7134 = vld [vmem:[%s7120 + $0x68] sm:$0xff]
    %v7135 = vld [vmem:[%s7120 + $0x70] sm:$0xff]
    %v7136 = vld [vmem:[%s7120 + $0x78] sm:$0xff]
    %v7153 = vunpack.c.l.b16 %v7121
    %v7154 = vunpack.c.h.b16 %v7121
    %v7155 = vunpack.c.l.b16 %v7122
    %v7156 = vunpack.c.h.b16 %v7122
    %v7157 = vunpack.c.l.b16 %v7123
    %v7158 = vunpack.c.h.b16 %v7123
    %v7159 = vunpack.c.l.b16 %v7124
    %v7160 = vunpack.c.h.b16 %v7124
    %v7161 = vunpack.c.l.b16 %v7125
    %v7162 = vunpack.c.h.b16 %v7125
    %v7163 = vunpack.c.l.b16 %v7126
    %v7164 = vunpack.c.h.b16 %v7126
    %v7165 = vunpack.c.l.b16 %v7127
    %v7166 = vunpack.c.h.b16 %v7127
    %v7167 = vunpack.c.l.b16 %v7128
    %v7168 = vunpack.c.h.b16 %v7128
    %v7169 = vunpack.c.l.b16 %v7129
    %v7170 = vunpack.c.h.b16 %v7129
    %v7171 = vunpack.c.l.b16 %v7130
    %v7172 = vunpack.c.h.b16 %v7130
    %v7173 = vunpack.c.l.b16 %v7131
    %v7174 = vunpack.c.h.b16 %v7131
    %v7175 = vunpack.c.l.b16 %v7132
    %v7176 = vunpack.c.h.b16 %v7132
    %v7177 = vunpack.c.l.b16 %v7133
    %v7178 = vunpack.c.h.b16 %v7133
    %v7179 = vunpack.c.l.b16 %v7134
    %v7180 = vunpack.c.h.b16 %v7134
    %v7181 = vunpack.c.l.b16 %v7135
    %v7182 = vunpack.c.h.b16 %v7135
    %v7183 = vunpack.c.l.b16 %v7136
    %v7184 = vunpack.c.h.b16 %v7136
    %v7185 = vpack.c.b16 %v7155, %v7153
    %v7186 = vpack.c.b16 %v7156, %v7154
    %v7187 = vpack.c.b16 %v7159, %v7157
    %v7188 = vpack.c.b16 %v7160, %v7158
    %v7189 = vpack.c.b16 %v7163, %v7161
    %v7190 = vpack.c.b16 %v7164, %v7162
    %v7191 = vpack.c.b16 %v7167, %v7165
    %v7192 = vpack.c.b16 %v7168, %v7166
    %v7193 = vpack.c.b16 %v7171, %v7169
    %v7194 = vpack.c.b16 %v7172, %v7170
    %v7195 = vpack.c.b16 %v7175, %v7173
    %v7196 = vpack.c.b16 %v7176, %v7174
    %v7197 = vpack.c.b16 %v7179, %v7177
    %v7198 = vpack.c.b16 %v7180, %v7178
    %v7199 = vpack.c.b16 %v7183, %v7181
    %v7200 = vpack.c.b16 %v7184, %v7182
    %7217 = vmatpush.bf16.msra.mxu0 %v7199
    %7218 = vmatpush.bf16.msra.mxu0 %v7197
    %7219 = vmatpush.bf16.msra.mxu0 %v7195
    %7220 = vmatpush.bf16.msra.mxu0 %v7193
    %7221 = vmatpush.bf16.msra.mxu0 %v7191
    %7222 = vmatpush.bf16.msra.mxu0 %v7189
    %7223 = vmatpush.bf16.msra.mxu0 %v7187
    %7224 = vmatpush.bf16.msra.mxu0 %v7185
    %7225 = vmatmul.bf16.gmra.mxu0 %v7119
    %v7226 = vpop.f32.mrf.mxu0
    %v7227 = vadd.f32 0.0, %v7226
    %v7228 = vpop.f32.mrf.mxu0
    %7229 = vdwg.mxu0
    %7230 = vmatpush.bf16.msra.mxu0 %v7200
    %7231 = vmatpush.bf16.msra.mxu0 %v7198
    %7232 = vmatpush.bf16.msra.mxu0 %v7196
    %7233 = vmatpush.bf16.msra.mxu0 %v7194
    %7234 = vmatpush.bf16.msra.mxu0 %v7192
    %7235 = vmatpush.bf16.msra.mxu0 %v7190
    %7236 = vmatpush.bf16.msra.mxu0 %v7188
    %7237 = vmatpush.bf16.msra.mxu0 %v7186
    %7238 = vmatmul.bf16.gmra.mxu0 %v7119
    %v7239 = vpop.f32.mrf.mxu0
    %v7240 = vadd.f32 0.0, %v7239
    %v7241 = vpop.f32.mrf.mxu0
    %7242 = vdwg.mxu0
    %v7243 = vadd.f32 %v7099, %v7227
    %v7244 = vadd.f32 %v7100, %v7240
    %v7245 = vrot.slane %v7243, 4
    %v7246 = vadd.f32 %v7243, %v7245
    %v7247 = vrot.slane %v7246, 2
    %v7248 = vadd.f32 %v7246, %v7247
    %v7249 = vrot.slane %v7248, 1
    %v7250 = vadd.f32 %v7248, %v7249
    %v7251 = vrot.slane %v7244, 4
    %v7252 = vadd.f32 %v7244, %v7251
    %v7253 = vrot.slane %v7252, 2
    %v7254 = vadd.f32 %v7252, %v7253
    %v7255 = vrot.slane %v7254, 1
    %v7256 = vadd.f32 %v7254, %v7255
    %v7257 = vrcp.pop 8.0
    %v7258 = vmul.f32 8.0, %v7257
    %v7259 = vsub.f32 1.0, %v7258
    %v7260 = vmul.f32 %v7257, %v7259
    %v7261 = vadd.f32 %v7257, %v7260
    %vm7262 = vweird.f32 %v7257
    %v7263 = vsel %vm7262, %v7257, %v7261
    %v7264 = vmul.f32 %v7250, %v7263
    %v7265 = vmul.f32 %v7256, %v7263
    %v7266 = vsub.f32 %v7243, %v7264
    %v7267 = vsub.f32 %v7244, %v7265
    %v7268 = vmul.f32 %v7266, %v7266
    %v7269 = vmul.f32 %v7267, %v7267
    %v7270 = vrot.slane %v7268, 4
    %v7271 = vadd.f32 %v7268, %v7270
    %v7272 = vrot.slane %v7271, 2
    %v7273 = vadd.f32 %v7271, %v7272
    %v7274 = vrot.slane %v7273, 1
    %v7275 = vadd.f32 %v7273, %v7274
    %v7276 = vrot.slane %v7269, 4
    %v7277 = vadd.f32 %v7269, %v7276
    %v7278 = vrot.slane %v7277, 2
    %v7279 = vadd.f32 %v7277, %v7278
    %v7280 = vrot.slane %v7279, 1
    %v7281 = vadd.f32 %v7279, %v7280
    %v7282 = vmul.f32 %v7275, %v7263
    %v7283 = vmul.f32 %v7281, %v7263
    %v7284 = vadd.f32 %v7282, 1e-05
    %v7285 = vadd.f32 %v7283, 1e-05
    %v7286 = vrsqrt.pop %v7284
    %v7287 = vmul.f32 %v7286, %v7284
    %v7288 = vmul.f32 %v7287, %v7286
    %v7289 = vmul.f32 0.5, %v7288
    %v7290 = vsub.f32 1.5, %v7289
    %v7291 = vmul.f32 %v7286, %v7290
    %vm7292 = vweird.f32 %v7284
    %vm7293 = vweird.f32 %v7286
    %vm7294 = vmor %vm7292, %vm7293
    %v7295 = vsel %vm7294, %v7286, %v7291
    %v7296 = vrsqrt.pop %v7285
    %v7297 = vmul.f32 %v7296, %v7285
    %v7298 = vmul.f32 %v7297, %v7296
    %v7299 = vmul.f32 0.5, %v7298
    %v7300 = vsub.f32 1.5, %v7299
    %v7301 = vmul.f32 %v7296, %v7300
    %vm7302 = vweird.f32 %v7285
    %vm7303 = vweird.f32 %v7296
    %vm7304 = vmor %vm7302, %vm7303
    %v7305 = vsel %vm7304, %v7296, %v7301
    %v7306 = vmul.f32 %v7266, %v7295
    %v7307 = vmul.f32 %v7267, %v7305
    %v7308 = vld [vmem:[#allocation15] sm:$0x3]
    %v7310 = vperm.slane %v7308, 0
    %v7311 = vperm.slane %v7308, 1
    %v7314 = vmul.f32 %v7306, %v7310
    %v7315 = vmul.f32 %v7307, %v7311
    %s7316 = scalar_lea.vmem [#allocation15], 2
    %v7317 = vld [vmem:[%s7316] sm:$0x3]
    %v7319 = vperm.slane %v7317, 0
    %v7320 = vperm.slane %v7317, 1
    %v7323 = vadd.f32 %v7314, %v7319
    %v7324 = vadd.f32 %v7315, %v7320
    %v7325 = vmul.f32 %v7323, 0.01
    %v7326 = vmul.f32 %v7324, 0.01
    %v7327 = vmax.f32 %v7323, %v7325
    %v7328 = vmax.f32 %v7324, %v7326
    %v7329 = vpack.c.bf16 %v7327, %v7327
    %v7330 = vpack.c.bf16 %v7328, %v7328
    %v7331 = vld [vmem:[#allocation16] sm:$0x1]
    %vm7332 = vcmask 64512
    %v7334 = vsel %vm7332, %v7331, 0
    %vm7336 = vcmask 1043456
    %v7338 = vsel %vm7336, %v7329, 0
    %v7341 = vsel %vm7336, %v7330, 0
    %7343 = vmatpush.bf16.msra.mxu0 0
    %7344 = vmatpush.bf16.msra.mxu0 0
    %7345 = vmatpush.bf16.msra.mxu0 0
    %7346 = vmatpush.bf16.msra.mxu0 0
    %7347 = vmatpush.bf16.msra.mxu0 0
    %7348 = vmatpush.bf16.msra.mxu0 0
    %7349 = vmatpush.bf16.msra.mxu0 0
    %7350 = vmatpush.bf16.msra.mxu0 %v7338
    %7351 = vmatmul.bf16.gmra.mxu0 %v7334
    %v7352 = vpop.f32.mrf.mxu0
    %v7353 = vadd.f32 0.0, %v7352
    %v7354 = vpop.f32.mrf.mxu0
    %7355 = vdwg.mxu0
    %7356 = vmatpush.bf16.msra.mxu0 0
    %7357 = vmatpush.bf16.msra.mxu0 0
    %7358 = vmatpush.bf16.msra.mxu0 0
    %7359 = vmatpush.bf16.msra.mxu0 0
    %7360 = vmatpush.bf16.msra.mxu0 0
    %7361 = vmatpush.bf16.msra.mxu0 0
    %7362 = vmatpush.bf16.msra.mxu0 0
    %7363 = vmatpush.bf16.msra.mxu0 %v7341
    %7364 = vmatmul.bf16.gmra.mxu0 %v7334
    %v7365 = vpop.f32.mrf.mxu0
    %v7366 = vadd.f32 0.0, %v7365
    %v7367 = vpop.f32.mrf.mxu0
    %7368 = vdwg.mxu0
    %v7369 = vpack.c.bf16 %v7353, %v7353
    %v7370 = vpack.c.bf16 %v7366, %v7366
    %v7371 = vld [vmem:[#allocation18] sm:$0xff]
    %v7372 = vld [vmem:[#allocation18 + $0x8] sm:$0xff]
    %v7373 = vld [vmem:[#allocation18 + $0x10] sm:$0xff]
    %v7374 = vld [vmem:[#allocation18 + $0x18] sm:$0xff]
    %v7375 = vld [vmem:[#allocation18 + $0x20] sm:$0xff]
    %v7376 = vld [vmem:[#allocation18 + $0x28] sm:$0xff]
    %v7377 = vld [vmem:[#allocation18 + $0x30] sm:$0xff]
    %v7378 = vld [vmem:[#allocation18 + $0x38] sm:$0xff]
    %v7379 = vld [vmem:[#allocation18 + $0x40] sm:$0xff]
    %v7380 = vld [vmem:[#allocation18 + $0x48] sm:$0xff]
    %v7381 = vld [vmem:[#allocation18 + $0x50] sm:$0xff]
    %v7382 = vld [vmem:[#allocation18 + $0x58] sm:$0xff]
    %v7383 = vld [vmem:[#allocation18 + $0x60] sm:$0xff]
    %v7384 = vld [vmem:[#allocation18 + $0x68] sm:$0xff]
    %v7385 = vld [vmem:[#allocation18 + $0x70] sm:$0xff]
    %v7386 = vld [vmem:[#allocation18 + $0x78] sm:$0xff]
    %v7387 = vld [vmem:[#allocation18 + $0x80] sm:$0xff]
    %v7388 = vld [vmem:[#allocation18 + $0x88] sm:$0xff]
    %v7389 = vld [vmem:[#allocation18 + $0x90] sm:$0xff]
    %v7390 = vld [vmem:[#allocation18 + $0x98] sm:$0xff]
    %v7391 = vld [vmem:[#allocation18 + $0xa0] sm:$0xff]
    %v7392 = vld [vmem:[#allocation18 + $0xa8] sm:$0xff]
    %v7393 = vld [vmem:[#allocation18 + $0xb0] sm:$0xff]
    %v7394 = vld [vmem:[#allocation18 + $0xb8] sm:$0xff]
    %v7395 = vld [vmem:[#allocation18 + $0xc0] sm:$0xff]
    %v7396 = vld [vmem:[#allocation18 + $0xc8] sm:$0xff]
    %v7397 = vld [vmem:[#allocation18 + $0xd0] sm:$0xff]
    %v7398 = vld [vmem:[#allocation18 + $0xd8] sm:$0xff]
    %v7399 = vld [vmem:[#allocation18 + $0xe0] sm:$0xff]
    %v7400 = vld [vmem:[#allocation18 + $0xe8] sm:$0xff]
    %v7401 = vld [vmem:[#allocation18 + $0xf0] sm:$0xff]
    %v7402 = vld [vmem:[#allocation18 + $0xf8] sm:$0xff]
    %v7403 = vld [vmem:[#allocation18 + $0x100] sm:$0xff]
    %v7404 = vld [vmem:[#allocation18 + $0x108] sm:$0xff]
    %v7405 = vld [vmem:[#allocation18 + $0x110] sm:$0xff]
    %v7406 = vld [vmem:[#allocation18 + $0x118] sm:$0xff]
    %v7407 = vld [vmem:[#allocation18 + $0x120] sm:$0xff]
    %v7408 = vld [vmem:[#allocation18 + $0x128] sm:$0xff]
    %v7409 = vld [vmem:[#allocation18 + $0x130] sm:$0xff]
    %v7410 = vld [vmem:[#allocation18 + $0x138] sm:$0xff]
    %v7411 = vld [vmem:[#allocation18 + $0x140] sm:$0xff]
    %v7412 = vld [vmem:[#allocation18 + $0x148] sm:$0xff]
    %v7413 = vld [vmem:[#allocation18 + $0x150] sm:$0xff]
    %v7414 = vld [vmem:[#allocation18 + $0x158] sm:$0xff]
    %v7415 = vld [vmem:[#allocation18 + $0x160] sm:$0xff]
    %v7416 = vld [vmem:[#allocation18 + $0x168] sm:$0xff]
    %v7417 = vld [vmem:[#allocation18 + $0x170] sm:$0xff]
    %v7418 = vld [vmem:[#allocation18 + $0x178] sm:$0xff]
    %v7419 = vld [vmem:[#allocation18 + $0x180] sm:$0xff]
    %v7420 = vld [vmem:[#allocation18 + $0x188] sm:$0xff]
    %v7421 = vld [vmem:[#allocation18 + $0x190] sm:$0xff]
    %v7422 = vld [vmem:[#allocation18 + $0x198] sm:$0xff]
    %v7423 = vld [vmem:[#allocation18 + $0x1a0] sm:$0xff]
    %v7424 = vld [vmem:[#allocation18 + $0x1a8] sm:$0xff]
    %v7425 = vld [vmem:[#allocation18 + $0x1b0] sm:$0xff]
    %v7426 = vld [vmem:[#allocation18 + $0x1b8] sm:$0xff]
    %v7427 = vld [vmem:[#allocation18 + $0x1c0] sm:$0xff]
    %v7428 = vld [vmem:[#allocation18 + $0x1c8] sm:$0xff]
    %v7429 = vld [vmem:[#allocation18 + $0x1d0] sm:$0xff]
    %v7430 = vld [vmem:[#allocation18 + $0x1d8] sm:$0xff]
    %v7431 = vld [vmem:[#allocation18 + $0x1e0] sm:$0xff]
    %v7432 = vld [vmem:[#allocation18 + $0x1e8] sm:$0xff]
    %v7433 = vld [vmem:[#allocation18 + $0x1f0] sm:$0xff]
    %v7434 = vld [vmem:[#allocation18 + $0x1f8] sm:$0xff]
    %s7435 = scalar_lea.vmem [#allocation16], 1
    %v7436 = vld [vmem:[%s7435] sm:$0x1]
    %v7438 = vsel %vm7332, %v7436, 0
    %7440 = vmatpush.bf16.msra.mxu0 0
    %7441 = vmatpush.bf16.msra.mxu0 0
    %7442 = vmatpush.bf16.msra.mxu0 0
    %7443 = vmatpush.bf16.msra.mxu0 0
    %7444 = vmatpush.bf16.msra.mxu0 0
    %7445 = vmatpush.bf16.msra.mxu0 0
    %7446 = vmatpush.bf16.msra.mxu0 0
    %7447 = vmatpush.bf16.msra.mxu0 %v7338
    %7448 = vmatmul.bf16.gmra.mxu0 %v7438
    %v7449 = vpop.f32.mrf.mxu0
    %v7450 = vadd.f32 0.0, %v7449
    %v7451 = vpop.f32.mrf.mxu0
    %7452 = vdwg.mxu0
    %7453 = vmatpush.bf16.msra.mxu0 0
    %7454 = vmatpush.bf16.msra.mxu0 0
    %7455 = vmatpush.bf16.msra.mxu0 0
    %7456 = vmatpush.bf16.msra.mxu0 0
    %7457 = vmatpush.bf16.msra.mxu0 0
    %7458 = vmatpush.bf16.msra.mxu0 0
    %7459 = vmatpush.bf16.msra.mxu0 0
    %7460 = vmatpush.bf16.msra.mxu0 %v7341
    %7461 = vmatmul.bf16.gmra.mxu0 %v7438
    %v7462 = vpop.f32.mrf.mxu0
    %v7463 = vadd.f32 0.0, %v7462
    %v7464 = vpop.f32.mrf.mxu0
    %7465 = vdwg.mxu0
    %v7466 = vpack.c.bf16 %v7450, %v7450
    %v7467 = vpack.c.bf16 %v7463, %v7463
    %s7468 = scalar_lea.vmem [#allocation18], 512
    %v7469 = vld [vmem:[%s7468] sm:$0xff]
    %v7470 = vld [vmem:[%s7468 + $0x8] sm:$0xff]
    %v7471 = vld [vmem:[%s7468 + $0x10] sm:$0xff]
    %v7472 = vld [vmem:[%s7468 + $0x18] sm:$0xff]
    %v7473 = vld [vmem:[%s7468 + $0x20] sm:$0xff]
    %v7474 = vld [vmem:[%s7468 + $0x28] sm:$0xff]
    %v7475 = vld [vmem:[%s7468 + $0x30] sm:$0xff]
    %v7476 = vld [vmem:[%s7468 + $0x38] sm:$0xff]
    %v7477 = vld [vmem:[%s7468 + $0x40] sm:$0xff]
    %v7478 = vld [vmem:[%s7468 + $0x48] sm:$0xff]
    %v7479 = vld [vmem:[%s7468 + $0x50] sm:$0xff]
    %v7480 = vld [vmem:[%s7468 + $0x58] sm:$0xff]
    %v7481 = vld [vmem:[%s7468 + $0x60] sm:$0xff]
    %v7482 = vld [vmem:[%s7468 + $0x68] sm:$0xff]
    %v7483 = vld [vmem:[%s7468 + $0x70] sm:$0xff]
    %v7484 = vld [vmem:[%s7468 + $0x78] sm:$0xff]
    %v7485 = vld [vmem:[%s7468 + $0x80] sm:$0xff]
    %v7486 = vld [vmem:[%s7468 + $0x88] sm:$0xff]
    %v7487 = vld [vmem:[%s7468 + $0x90] sm:$0xff]
    %v7488 = vld [vmem:[%s7468 + $0x98] sm:$0xff]
    %v7489 = vld [vmem:[%s7468 + $0xa0] sm:$0xff]
    %v7490 = vld [vmem:[%s7468 + $0xa8] sm:$0xff]
    %v7491 = vld [vmem:[%s7468 + $0xb0] sm:$0xff]
    %v7492 = vld [vmem:[%s7468 + $0xb8] sm:$0xff]
    %v7493 = vld [vmem:[%s7468 + $0xc0] sm:$0xff]
    %v7494 = vld [vmem:[%s7468 + $0xc8] sm:$0xff]
    %v7495 = vld [vmem:[%s7468 + $0xd0] sm:$0xff]
    %v7496 = vld [vmem:[%s7468 + $0xd8] sm:$0xff]
    %v7497 = vld [vmem:[%s7468 + $0xe0] sm:$0xff]
    %v7498 = vld [vmem:[%s7468 + $0xe8] sm:$0xff]
    %v7499 = vld [vmem:[%s7468 + $0xf0] sm:$0xff]
    %v7500 = vld [vmem:[%s7468 + $0xf8] sm:$0xff]
    %v7501 = vld [vmem:[%s7468 + $0x100] sm:$0xff]
    %v7502 = vld [vmem:[%s7468 + $0x108] sm:$0xff]
    %v7503 = vld [vmem:[%s7468 + $0x110] sm:$0xff]
    %v7504 = vld [vmem:[%s7468 + $0x118] sm:$0xff]
    %v7505 = vld [vmem:[%s7468 + $0x120] sm:$0xff]
    %v7506 = vld [vmem:[%s7468 + $0x128] sm:$0xff]
    %v7507 = vld [vmem:[%s7468 + $0x130] sm:$0xff]
    %v7508 = vld [vmem:[%s7468 + $0x138] sm:$0xff]
    %v7509 = vld [vmem:[%s7468 + $0x140] sm:$0xff]
    %v7510 = vld [vmem:[%s7468 + $0x148] sm:$0xff]
    %v7511 = vld [vmem:[%s7468 + $0x150] sm:$0xff]
    %v7512 = vld [vmem:[%s7468 + $0x158] sm:$0xff]
    %v7513 = vld [vmem:[%s7468 + $0x160] sm:$0xff]
    %v7514 = vld [vmem:[%s7468 + $0x168] sm:$0xff]
    %v7515 = vld [vmem:[%s7468 + $0x170] sm:$0xff]
    %v7516 = vld [vmem:[%s7468 + $0x178] sm:$0xff]
    %v7517 = vld [vmem:[%s7468 + $0x180] sm:$0xff]
    %v7518 = vld [vmem:[%s7468 + $0x188] sm:$0xff]
    %v7519 = vld [vmem:[%s7468 + $0x190] sm:$0xff]
    %v7520 = vld [vmem:[%s7468 + $0x198] sm:$0xff]
    %v7521 = vld [vmem:[%s7468 + $0x1a0] sm:$0xff]
    %v7522 = vld [vmem:[%s7468 + $0x1a8] sm:$0xff]
    %v7523 = vld [vmem:[%s7468 + $0x1b0] sm:$0xff]
    %v7524 = vld [vmem:[%s7468 + $0x1b8] sm:$0xff]
    %v7525 = vld [vmem:[%s7468 + $0x1c0] sm:$0xff]
    %v7526 = vld [vmem:[%s7468 + $0x1c8] sm:$0xff]
    %v7527 = vld [vmem:[%s7468 + $0x1d0] sm:$0xff]
    %v7528 = vld [vmem:[%s7468 + $0x1d8] sm:$0xff]
    %v7529 = vld [vmem:[%s7468 + $0x1e0] sm:$0xff]
    %v7530 = vld [vmem:[%s7468 + $0x1e8] sm:$0xff]
    %v7531 = vld [vmem:[%s7468 + $0x1f0] sm:$0xff]
    %v7532 = vld [vmem:[%s7468 + $0x1f8] sm:$0xff]
    %v7597 = vunpack.c.l.b16 %v7469
    %v7598 = vunpack.c.h.b16 %v7469
    %v7599 = vunpack.c.l.b16 %v7470
    %v7600 = vunpack.c.h.b16 %v7470
    %v7601 = vunpack.c.l.b16 %v7471
    %v7602 = vunpack.c.h.b16 %v7471
    %v7603 = vunpack.c.l.b16 %v7472
    %v7604 = vunpack.c.h.b16 %v7472
    %v7605 = vunpack.c.l.b16 %v7473
    %v7606 = vunpack.c.h.b16 %v7473
    %v7607 = vunpack.c.l.b16 %v7474
    %v7608 = vunpack.c.h.b16 %v7474
    %v7609 = vunpack.c.l.b16 %v7475
    %v7610 = vunpack.c.h.b16 %v7475
    %v7611 = vunpack.c.l.b16 %v7476
    %v7612 = vunpack.c.h.b16 %v7476
    %v7613 = vunpack.c.l.b16 %v7477
    %v7614 = vunpack.c.h.b16 %v7477
    %v7615 = vunpack.c.l.b16 %v7478
    %v7616 = vunpack.c.h.b16 %v7478
    %v7617 = vunpack.c.l.b16 %v7479
    %v7618 = vunpack.c.h.b16 %v7479
    %v7619 = vunpack.c.l.b16 %v7480
    %v7620 = vunpack.c.h.b16 %v7480
    %v7621 = vunpack.c.l.b16 %v7481
    %v7622 = vunpack.c.h.b16 %v7481
    %v7623 = vunpack.c.l.b16 %v7482
    %v7624 = vunpack.c.h.b16 %v7482
    %v7625 = vunpack.c.l.b16 %v7483
    %v7626 = vunpack.c.h.b16 %v7483
    %v7627 = vunpack.c.l.b16 %v7484
    %v7628 = vunpack.c.h.b16 %v7484
    %v7629 = vunpack.c.l.b16 %v7485
    %v7630 = vunpack.c.h.b16 %v7485
    %v7631 = vunpack.c.l.b16 %v7486
    %v7632 = vunpack.c.h.b16 %v7486
    %v7633 = vunpack.c.l.b16 %v7487
    %v7634 = vunpack.c.h.b16 %v7487
    %v7635 = vunpack.c.l.b16 %v7488
    %v7636 = vunpack.c.h.b16 %v7488
    %v7637 = vunpack.c.l.b16 %v7489
    %v7638 = vunpack.c.h.b16 %v7489
    %v7639 = vunpack.c.l.b16 %v7490
    %v7640 = vunpack.c.h.b16 %v7490
    %v7641 = vunpack.c.l.b16 %v7491
    %v7642 = vunpack.c.h.b16 %v7491
    %v7643 = vunpack.c.l.b16 %v7492
    %v7644 = vunpack.c.h.b16 %v7492
    %v7645 = vunpack.c.l.b16 %v7493
    %v7646 = vunpack.c.h.b16 %v7493
    %v7647 = vunpack.c.l.b16 %v7494
    %v7648 = vunpack.c.h.b16 %v7494
    %v7649 = vunpack.c.l.b16 %v7495
    %v7650 = vunpack.c.h.b16 %v7495
    %v7651 = vunpack.c.l.b16 %v7496
    %v7652 = vunpack.c.h.b16 %v7496
    %v7653 = vunpack.c.l.b16 %v7497
    %v7654 = vunpack.c.h.b16 %v7497
    %v7655 = vunpack.c.l.b16 %v7498
    %v7656 = vunpack.c.h.b16 %v7498
    %v7657 = vunpack.c.l.b16 %v7499
    %v7658 = vunpack.c.h.b16 %v7499
    %v7659 = vunpack.c.l.b16 %v7500
    %v7660 = vunpack.c.h.b16 %v7500
    %v7661 = vunpack.c.l.b16 %v7501
    %v7662 = vunpack.c.h.b16 %v7501
    %v7663 = vunpack.c.l.b16 %v7502
    %v7664 = vunpack.c.h.b16 %v7502
    %v7665 = vunpack.c.l.b16 %v7503
    %v7666 = vunpack.c.h.b16 %v7503
    %v7667 = vunpack.c.l.b16 %v7504
    %v7668 = vunpack.c.h.b16 %v7504
    %v7669 = vunpack.c.l.b16 %v7505
    %v7670 = vunpack.c.h.b16 %v7505
    %v7671 = vunpack.c.l.b16 %v7506
    %v7672 = vunpack.c.h.b16 %v7506
    %v7673 = vunpack.c.l.b16 %v7507
    %v7674 = vunpack.c.h.b16 %v7507
    %v7675 = vunpack.c.l.b16 %v7508
    %v7676 = vunpack.c.h.b16 %v7508
    %v7677 = vunpack.c.l.b16 %v7509
    %v7678 = vunpack.c.h.b16 %v7509
    %v7679 = vunpack.c.l.b16 %v7510
    %v7680 = vunpack.c.h.b16 %v7510
    %v7681 = vunpack.c.l.b16 %v7511
    %v7682 = vunpack.c.h.b16 %v7511
    %v7683 = vunpack.c.l.b16 %v7512
    %v7684 = vunpack.c.h.b16 %v7512
    %v7685 = vunpack.c.l.b16 %v7513
    %v7686 = vunpack.c.h.b16 %v7513
    %v7687 = vunpack.c.l.b16 %v7514
    %v7688 = vunpack.c.h.b16 %v7514
    %v7689 = vunpack.c.l.b16 %v7515
    %v7690 = vunpack.c.h.b16 %v7515
    %v7691 = vunpack.c.l.b16 %v7516
    %v7692 = vunpack.c.h.b16 %v7516
    %v7693 = vunpack.c.l.b16 %v7517
    %v7694 = vunpack.c.h.b16 %v7517
    %v7695 = vunpack.c.l.b16 %v7518
    %v7696 = vunpack.c.h.b16 %v7518
    %v7697 = vunpack.c.l.b16 %v7519
    %v7698 = vunpack.c.h.b16 %v7519
    %v7699 = vunpack.c.l.b16 %v7520
    %v7700 = vunpack.c.h.b16 %v7520
    %v7701 = vunpack.c.l.b16 %v7521
    %v7702 = vunpack.c.h.b16 %v7521
    %v7703 = vunpack.c.l.b16 %v7522
    %v7704 = vunpack.c.h.b16 %v7522
    %v7705 = vunpack.c.l.b16 %v7523
    %v7706 = vunpack.c.h.b16 %v7523
    %v7707 = vunpack.c.l.b16 %v7524
    %v7708 = vunpack.c.h.b16 %v7524
    %v7709 = vunpack.c.l.b16 %v7525
    %v7710 = vunpack.c.h.b16 %v7525
    %v7711 = vunpack.c.l.b16 %v7526
    %v7712 = vunpack.c.h.b16 %v7526
    %v7713 = vunpack.c.l.b16 %v7527
    %v7714 = vunpack.c.h.b16 %v7527
    %v7715 = vunpack.c.l.b16 %v7528
    %v7716 = vunpack.c.h.b16 %v7528
    %v7717 = vunpack.c.l.b16 %v7529
    %v7718 = vunpack.c.h.b16 %v7529
    %v7719 = vunpack.c.l.b16 %v7530
    %v7720 = vunpack.c.h.b16 %v7530
    %v7721 = vunpack.c.l.b16 %v7531
    %v7722 = vunpack.c.h.b16 %v7531
    %v7723 = vunpack.c.l.b16 %v7532
    %v7724 = vunpack.c.h.b16 %v7532
    %v7725 = vpack.c.b16 %v7601, %v7597
    %v7726 = vpack.c.b16 %v7602, %v7598
    %v7727 = vpack.c.b16 %v7603, %v7599
    %v7728 = vpack.c.b16 %v7604, %v7600
    %v7729 = vpack.c.b16 %v7609, %v7605
    %v7730 = vpack.c.b16 %v7610, %v7606
    %v7731 = vpack.c.b16 %v7611, %v7607
    %v7732 = vpack.c.b16 %v7612, %v7608
    %v7733 = vpack.c.b16 %v7617, %v7613
    %v7734 = vpack.c.b16 %v7618, %v7614
    %v7735 = vpack.c.b16 %v7619, %v7615
    %v7736 = vpack.c.b16 %v7620, %v7616
    %v7737 = vpack.c.b16 %v7625, %v7621
    %v7738 = vpack.c.b16 %v7626, %v7622
    %v7739 = vpack.c.b16 %v7627, %v7623
    %v7740 = vpack.c.b16 %v7628, %v7624
    %v7741 = vpack.c.b16 %v7633, %v7629
    %v7742 = vpack.c.b16 %v7634, %v7630
    %v7743 = vpack.c.b16 %v7635, %v7631
    %v7744 = vpack.c.b16 %v7636, %v7632
    %v7745 = vpack.c.b16 %v7641, %v7637
    %v7746 = vpack.c.b16 %v7642, %v7638
    %v7747 = vpack.c.b16 %v7643, %v7639
    %v7748 = vpack.c.b16 %v7644, %v7640
    %v7749 = vpack.c.b16 %v7649, %v7645
    %v7750 = vpack.c.b16 %v7650, %v7646
    %v7751 = vpack.c.b16 %v7651, %v7647
    %v7752 = vpack.c.b16 %v7652, %v7648
    %v7753 = vpack.c.b16 %v7657, %v7653
    %v7754 = vpack.c.b16 %v7658, %v7654
    %v7755 = vpack.c.b16 %v7659, %v7655
    %v7756 = vpack.c.b16 %v7660, %v7656
    %v7757 = vpack.c.b16 %v7665, %v7661
    %v7758 = vpack.c.b16 %v7666, %v7662
    %v7759 = vpack.c.b16 %v7667, %v7663
    %v7760 = vpack.c.b16 %v7668, %v7664
    %v7761 = vpack.c.b16 %v7673, %v7669
    %v7762 = vpack.c.b16 %v7674, %v7670
    %v7763 = vpack.c.b16 %v7675, %v7671
    %v7764 = vpack.c.b16 %v7676, %v7672
    %v7765 = vpack.c.b16 %v7681, %v7677
    %v7766 = vpack.c.b16 %v7682, %v7678
    %v7767 = vpack.c.b16 %v7683, %v7679
    %v7768 = vpack.c.b16 %v7684, %v7680
    %v7769 = vpack.c.b16 %v7689, %v7685
    %v7770 = vpack.c.b16 %v7690, %v7686
    %v7771 = vpack.c.b16 %v7691, %v7687
    %v7772 = vpack.c.b16 %v7692, %v7688
    %v7773 = vpack.c.b16 %v7697, %v7693
    %v7774 = vpack.c.b16 %v7698, %v7694
    %v7775 = vpack.c.b16 %v7699, %v7695
    %v7776 = vpack.c.b16 %v7700, %v7696
    %v7777 = vpack.c.b16 %v7705, %v7701
    %v7778 = vpack.c.b16 %v7706, %v7702
    %v7779 = vpack.c.b16 %v7707, %v7703
    %v7780 = vpack.c.b16 %v7708, %v7704
    %v7781 = vpack.c.b16 %v7713, %v7709
    %v7782 = vpack.c.b16 %v7714, %v7710
    %v7783 = vpack.c.b16 %v7715, %v7711
    %v7784 = vpack.c.b16 %v7716, %v7712
    %v7785 = vpack.c.b16 %v7721, %v7717
    %v7786 = vpack.c.b16 %v7722, %v7718
    %v7787 = vpack.c.b16 %v7723, %v7719
    %v7788 = vpack.c.b16 %v7724, %v7720
    %7853 = vmatpush.bf16.msra.mxu0 %v7753
    %7854 = vmatpush.bf16.msra.mxu0 %v7749
    %7855 = vmatpush.bf16.msra.mxu0 %v7745
    %7856 = vmatpush.bf16.msra.mxu0 %v7741
    %7857 = vmatpush.bf16.msra.mxu0 %v7737
    %7858 = vmatpush.bf16.msra.mxu0 %v7733
    %7859 = vmatpush.bf16.msra.mxu0 %v7729
    %7860 = vmatpush.bf16.msra.mxu0 %v7725
    %7861 = vmatmul.bf16.gmra.mxu0 %v7466
    %v7862 = vpop.f32.mrf.mxu0
    %v7863 = vadd.f32 0.0, %v7862
    %v7864 = vpop.f32.mrf.mxu0
    %7865 = vdwg.mxu0
    %7866 = vmatpush.bf16.msra.mxu0 %v7785
    %7867 = vmatpush.bf16.msra.mxu0 %v7781
    %7868 = vmatpush.bf16.msra.mxu0 %v7777
    %7869 = vmatpush.bf16.msra.mxu0 %v7773
    %7870 = vmatpush.bf16.msra.mxu0 %v7769
    %7871 = vmatpush.bf16.msra.mxu0 %v7765
    %7872 = vmatpush.bf16.msra.mxu0 %v7761
    %7873 = vmatpush.bf16.msra.mxu0 %v7757
    %7874 = vmatmul.bf16.gmra.mxu0 %v7467
    %v7875 = vpop.f32.mrf.mxu0
    %v7876 = vadd.f32 %v7863, %v7875
    %v7877 = vpop.f32.mrf.mxu0
    %7878 = vdwg.mxu0
    %7879 = vmatpush.bf16.msra.mxu0 %v7754
    %7880 = vmatpush.bf16.msra.mxu0 %v7750
    %7881 = vmatpush.bf16.msra.mxu0 %v7746
    %7882 = vmatpush.bf16.msra.mxu0 %v7742
    %7883 = vmatpush.bf16.msra.mxu0 %v7738
    %7884 = vmatpush.bf16.msra.mxu0 %v7734
    %7885 = vmatpush.bf16.msra.mxu0 %v7730
    %7886 = vmatpush.bf16.msra.mxu0 %v7726
    %7887 = vmatmul.bf16.gmra.mxu0 %v7466
    %v7888 = vpop.f32.mrf.mxu0
    %v7889 = vadd.f32 0.0, %v7888
    %v7890 = vpop.f32.mrf.mxu0
    %7891 = vdwg.mxu0
    %7892 = vmatpush.bf16.msra.mxu0 %v7786
    %7893 = vmatpush.bf16.msra.mxu0 %v7782
    %7894 = vmatpush.bf16.msra.mxu0 %v7778
    %7895 = vmatpush.bf16.msra.mxu0 %v7774
    %7896 = vmatpush.bf16.msra.mxu0 %v7770
    %7897 = vmatpush.bf16.msra.mxu0 %v7766
    %7898 = vmatpush.bf16.msra.mxu0 %v7762
    %7899 = vmatpush.bf16.msra.mxu0 %v7758
    %7900 = vmatmul.bf16.gmra.mxu0 %v7467
    %v7901 = vpop.f32.mrf.mxu0
    %v7902 = vadd.f32 %v7889, %v7901
    %v7903 = vpop.f32.mrf.mxu0
    %7904 = vdwg.mxu0
    %7905 = vmatpush.bf16.msra.mxu0 %v7755
    %7906 = vmatpush.bf16.msra.mxu0 %v7751
    %7907 = vmatpush.bf16.msra.mxu0 %v7747
    %7908 = vmatpush.bf16.msra.mxu0 %v7743
    %7909 = vmatpush.bf16.msra.mxu0 %v7739
    %7910 = vmatpush.bf16.msra.mxu0 %v7735
    %7911 = vmatpush.bf16.msra.mxu0 %v7731
    %7912 = vmatpush.bf16.msra.mxu0 %v7727
    %7913 = vmatmul.bf16.gmra.mxu0 %v7466
    %v7914 = vpop.f32.mrf.mxu0
    %v7915 = vadd.f32 0.0, %v7914
    %v7916 = vpop.f32.mrf.mxu0
    %7917 = vdwg.mxu0
    %7918 = vmatpush.bf16.msra.mxu0 %v7787
    %7919 = vmatpush.bf16.msra.mxu0 %v7783
    %7920 = vmatpush.bf16.msra.mxu0 %v7779
    %7921 = vmatpush.bf16.msra.mxu0 %v7775
    %7922 = vmatpush.bf16.msra.mxu0 %v7771
    %7923 = vmatpush.bf16.msra.mxu0 %v7767
    %7924 = vmatpush.bf16.msra.mxu0 %v7763
    %7925 = vmatpush.bf16.msra.mxu0 %v7759
    %7926 = vmatmul.bf16.gmra.mxu0 %v7467
    %v7927 = vpop.f32.mrf.mxu0
    %v7928 = vadd.f32 %v7915, %v7927
    %v7929 = vpop.f32.mrf.mxu0
    %7930 = vdwg.mxu0
    %7931 = vmatpush.bf16.msra.mxu0 %v7756
    %7932 = vmatpush.bf16.msra.mxu0 %v7752
    %7933 = vmatpush.bf16.msra.mxu0 %v7748
    %7934 = vmatpush.bf16.msra.mxu0 %v7744
    %7935 = vmatpush.bf16.msra.mxu0 %v7740
    %7936 = vmatpush.bf16.msra.mxu0 %v7736
    %7937 = vmatpush.bf16.msra.mxu0 %v7732
    %7938 = vmatpush.bf16.msra.mxu0 %v7728
    %7939 = vmatmul.bf16.gmra.mxu0 %v7466
    %v7940 = vpop.f32.mrf.mxu0
    %v7941 = vadd.f32 0.0, %v7940
    %v7942 = vpop.f32.mrf.mxu0
    %7943 = vdwg.mxu0
    %7944 = vmatpush.bf16.msra.mxu0 %v7788
    %7945 = vmatpush.bf16.msra.mxu0 %v7784
    %7946 = vmatpush.bf16.msra.mxu0 %v7780
    %7947 = vmatpush.bf16.msra.mxu0 %v7776
    %7948 = vmatpush.bf16.msra.mxu0 %v7772
    %7949 = vmatpush.bf16.msra.mxu0 %v7768
    %7950 = vmatpush.bf16.msra.mxu0 %v7764
    %7951 = vmatpush.bf16.msra.mxu0 %v7760
    %7952 = vmatmul.bf16.gmra.mxu0 %v7467
    %v7953 = vpop.f32.mrf.mxu0
    %v7954 = vadd.f32 %v7941, %v7953
    %v7955 = vpop.f32.mrf.mxu0
    %7956 = vdwg.mxu0
    %v8021 = vunpack.c.l.b16 %v7371
    %v8022 = vunpack.c.h.b16 %v7371
    %v8023 = vunpack.c.l.b16 %v7372
    %v8024 = vunpack.c.h.b16 %v7372
    %v8025 = vunpack.c.l.b16 %v7373
    %v8026 = vunpack.c.h.b16 %v7373
    %v8027 = vunpack.c.l.b16 %v7374
    %v8028 = vunpack.c.h.b16 %v7374
    %v8029 = vunpack.c.l.b16 %v7375
    %v8030 = vunpack.c.h.b16 %v7375
    %v8031 = vunpack.c.l.b16 %v7376
    %v8032 = vunpack.c.h.b16 %v7376
    %v8033 = vunpack.c.l.b16 %v7377
    %v8034 = vunpack.c.h.b16 %v7377
    %v8035 = vunpack.c.l.b16 %v7378
    %v8036 = vunpack.c.h.b16 %v7378
    %v8037 = vunpack.c.l.b16 %v7379
    %v8038 = vunpack.c.h.b16 %v7379
    %v8039 = vunpack.c.l.b16 %v7380
    %v8040 = vunpack.c.h.b16 %v7380
    %v8041 = vunpack.c.l.b16 %v7381
    %v8042 = vunpack.c.h.b16 %v7381
    %v8043 = vunpack.c.l.b16 %v7382
    %v8044 = vunpack.c.h.b16 %v7382
    %v8045 = vunpack.c.l.b16 %v7383
    %v8046 = vunpack.c.h.b16 %v7383
    %v8047 = vunpack.c.l.b16 %v7384
    %v8048 = vunpack.c.h.b16 %v7384
    %v8049 = vunpack.c.l.b16 %v7385
    %v8050 = vunpack.c.h.b16 %v7385
    %v8051 = vunpack.c.l.b16 %v7386
    %v8052 = vunpack.c.h.b16 %v7386
    %v8053 = vunpack.c.l.b16 %v7387
    %v8054 = vunpack.c.h.b16 %v7387
    %v8055 = vunpack.c.l.b16 %v7388
    %v8056 = vunpack.c.h.b16 %v7388
    %v8057 = vunpack.c.l.b16 %v7389
    %v8058 = vunpack.c.h.b16 %v7389
    %v8059 = vunpack.c.l.b16 %v7390
    %v8060 = vunpack.c.h.b16 %v7390
    %v8061 = vunpack.c.l.b16 %v7391
    %v8062 = vunpack.c.h.b16 %v7391
    %v8063 = vunpack.c.l.b16 %v7392
    %v8064 = vunpack.c.h.b16 %v7392
    %v8065 = vunpack.c.l.b16 %v7393
    %v8066 = vunpack.c.h.b16 %v7393
    %v8067 = vunpack.c.l.b16 %v7394
    %v8068 = vunpack.c.h.b16 %v7394
    %v8069 = vunpack.c.l.b16 %v7395
    %v8070 = vunpack.c.h.b16 %v7395
    %v8071 = vunpack.c.l.b16 %v7396
    %v8072 = vunpack.c.h.b16 %v7396
    %v8073 = vunpack.c.l.b16 %v7397
    %v8074 = vunpack.c.h.b16 %v7397
    %v8075 = vunpack.c.l.b16 %v7398
    %v8076 = vunpack.c.h.b16 %v7398
    %v8077 = vunpack.c.l.b16 %v7399
    %v8078 = vunpack.c.h.b16 %v7399
    %v8079 = vunpack.c.l.b16 %v7400
    %v8080 = vunpack.c.h.b16 %v7400
    %v8081 = vunpack.c.l.b16 %v7401
    %v8082 = vunpack.c.h.b16 %v7401
    %v8083 = vunpack.c.l.b16 %v7402
    %v8084 = vunpack.c.h.b16 %v7402
    %v8085 = vunpack.c.l.b16 %v7403
    %v8086 = vunpack.c.h.b16 %v7403
    %v8087 = vunpack.c.l.b16 %v7404
    %v8088 = vunpack.c.h.b16 %v7404
    %v8089 = vunpack.c.l.b16 %v7405
    %v8090 = vunpack.c.h.b16 %v7405
    %v8091 = vunpack.c.l.b16 %v7406
    %v8092 = vunpack.c.h.b16 %v7406
    %v8093 = vunpack.c.l.b16 %v7407
    %v8094 = vunpack.c.h.b16 %v7407
    %v8095 = vunpack.c.l.b16 %v7408
    %v8096 = vunpack.c.h.b16 %v7408
    %v8097 = vunpack.c.l.b16 %v7409
    %v8098 = vunpack.c.h.b16 %v7409
    %v8099 = vunpack.c.l.b16 %v7410
    %v8100 = vunpack.c.h.b16 %v7410
    %v8101 = vunpack.c.l.b16 %v7411
    %v8102 = vunpack.c.h.b16 %v7411
    %v8103 = vunpack.c.l.b16 %v7412
    %v8104 = vunpack.c.h.b16 %v7412
    %v8105 = vunpack.c.l.b16 %v7413
    %v8106 = vunpack.c.h.b16 %v7413
    %v8107 = vunpack.c.l.b16 %v7414
    %v8108 = vunpack.c.h.b16 %v7414
    %v8109 = vunpack.c.l.b16 %v7415
    %v8110 = vunpack.c.h.b16 %v7415
    %v8111 = vunpack.c.l.b16 %v7416
    %v8112 = vunpack.c.h.b16 %v7416
    %v8113 = vunpack.c.l.b16 %v7417
    %v8114 = vunpack.c.h.b16 %v7417
    %v8115 = vunpack.c.l.b16 %v7418
    %v8116 = vunpack.c.h.b16 %v7418
    %v8117 = vunpack.c.l.b16 %v7419
    %v8118 = vunpack.c.h.b16 %v7419
    %v8119 = vunpack.c.l.b16 %v7420
    %v8120 = vunpack.c.h.b16 %v7420
    %v8121 = vunpack.c.l.b16 %v7421
    %v8122 = vunpack.c.h.b16 %v7421
    %v8123 = vunpack.c.l.b16 %v7422
    %v8124 = vunpack.c.h.b16 %v7422
    %v8125 = vunpack.c.l.b16 %v7423
    %v8126 = vunpack.c.h.b16 %v7423
    %v8127 = vunpack.c.l.b16 %v7424
    %v8128 = vunpack.c.h.b16 %v7424
    %v8129 = vunpack.c.l.b16 %v7425
    %v8130 = vunpack.c.h.b16 %v7425
    %v8131 = vunpack.c.l.b16 %v7426
    %v8132 = vunpack.c.h.b16 %v7426
    %v8133 = vunpack.c.l.b16 %v7427
    %v8134 = vunpack.c.h.b16 %v7427
    %v8135 = vunpack.c.l.b16 %v7428
    %v8136 = vunpack.c.h.b16 %v7428
    %v8137 = vunpack.c.l.b16 %v7429
    %v8138 = vunpack.c.h.b16 %v7429
    %v8139 = vunpack.c.l.b16 %v7430
    %v8140 = vunpack.c.h.b16 %v7430
    %v8141 = vunpack.c.l.b16 %v7431
    %v8142 = vunpack.c.h.b16 %v7431
    %v8143 = vunpack.c.l.b16 %v7432
    %v8144 = vunpack.c.h.b16 %v7432
    %v8145 = vunpack.c.l.b16 %v7433
    %v8146 = vunpack.c.h.b16 %v7433
    %v8147 = vunpack.c.l.b16 %v7434
    %v8148 = vunpack.c.h.b16 %v7434
    %v8149 = vpack.c.b16 %v8025, %v8021
    %v8150 = vpack.c.b16 %v8026, %v8022
    %v8151 = vpack.c.b16 %v8027, %v8023
    %v8152 = vpack.c.b16 %v8028, %v8024
    %v8153 = vpack.c.b16 %v8033, %v8029
    %v8154 = vpack.c.b16 %v8034, %v8030
    %v8155 = vpack.c.b16 %v8035, %v8031
    %v8156 = vpack.c.b16 %v8036, %v8032
    %v8157 = vpack.c.b16 %v8041, %v8037
    %v8158 = vpack.c.b16 %v8042, %v8038
    %v8159 = vpack.c.b16 %v8043, %v8039
    %v8160 = vpack.c.b16 %v8044, %v8040
    %v8161 = vpack.c.b16 %v8049, %v8045
    %v8162 = vpack.c.b16 %v8050, %v8046
    %v8163 = vpack.c.b16 %v8051, %v8047
    %v8164 = vpack.c.b16 %v8052, %v8048
    %v8165 = vpack.c.b16 %v8057, %v8053
    %v8166 = vpack.c.b16 %v8058, %v8054
    %v8167 = vpack.c.b16 %v8059, %v8055
    %v8168 = vpack.c.b16 %v8060, %v8056
    %v8169 = vpack.c.b16 %v8065, %v8061
    %v8170 = vpack.c.b16 %v8066, %v8062
    %v8171 = vpack.c.b16 %v8067, %v8063
    %v8172 = vpack.c.b16 %v8068, %v8064
    %v8173 = vpack.c.b16 %v8073, %v8069
    %v8174 = vpack.c.b16 %v8074, %v8070
    %v8175 = vpack.c.b16 %v8075, %v8071
    %v8176 = vpack.c.b16 %v8076, %v8072
    %v8177 = vpack.c.b16 %v8081, %v8077
    %v8178 = vpack.c.b16 %v8082, %v8078
    %v8179 = vpack.c.b16 %v8083, %v8079
    %v8180 = vpack.c.b16 %v8084, %v8080
    %v8181 = vpack.c.b16 %v8089, %v8085
    %v8182 = vpack.c.b16 %v8090, %v8086
    %v8183 = vpack.c.b16 %v8091, %v8087
    %v8184 = vpack.c.b16 %v8092, %v8088
    %v8185 = vpack.c.b16 %v8097, %v8093
    %v8186 = vpack.c.b16 %v8098, %v8094
    %v8187 = vpack.c.b16 %v8099, %v8095
    %v8188 = vpack.c.b16 %v8100, %v8096
    %v8189 = vpack.c.b16 %v8105, %v8101
    %v8190 = vpack.c.b16 %v8106, %v8102
    %v8191 = vpack.c.b16 %v8107, %v8103
    %v8192 = vpack.c.b16 %v8108, %v8104
    %v8193 = vpack.c.b16 %v8113, %v8109
    %v8194 = vpack.c.b16 %v8114, %v8110
    %v8195 = vpack.c.b16 %v8115, %v8111
    %v8196 = vpack.c.b16 %v8116, %v8112
    %v8197 = vpack.c.b16 %v8121, %v8117
    %v8198 = vpack.c.b16 %v8122, %v8118
    %v8199 = vpack.c.b16 %v8123, %v8119
    %v8200 = vpack.c.b16 %v8124, %v8120
    %v8201 = vpack.c.b16 %v8129, %v8125
    %v8202 = vpack.c.b16 %v8130, %v8126
    %v8203 = vpack.c.b16 %v8131, %v8127
    %v8204 = vpack.c.b16 %v8132, %v8128
    %v8205 = vpack.c.b16 %v8137, %v8133
    %v8206 = vpack.c.b16 %v8138, %v8134
    %v8207 = vpack.c.b16 %v8139, %v8135
    %v8208 = vpack.c.b16 %v8140, %v8136
    %v8209 = vpack.c.b16 %v8145, %v8141
    %v8210 = vpack.c.b16 %v8146, %v8142
    %v8211 = vpack.c.b16 %v8147, %v8143
    %v8212 = vpack.c.b16 %v8148, %v8144
    %8277 = vmatpush.bf16.msra.mxu0 %v8177
    %8278 = vmatpush.bf16.msra.mxu0 %v8173
    %8279 = vmatpush.bf16.msra.mxu0 %v8169
    %8280 = vmatpush.bf16.msra.mxu0 %v8165
    %8281 = vmatpush.bf16.msra.mxu0 %v8161
    %8282 = vmatpush.bf16.msra.mxu0 %v8157
    %8283 = vmatpush.bf16.msra.mxu0 %v8153
    %8284 = vmatpush.bf16.msra.mxu0 %v8149
    %8285 = vmatmul.bf16.gmra.mxu0 %v7369
    %v8286 = vpop.f32.mrf.mxu0
    %v8287 = vadd.f32 %v7876, %v8286
    %v8288 = vpop.f32.mrf.mxu0
    %8289 = vdwg.mxu0
    %8290 = vmatpush.bf16.msra.mxu0 %v8209
    %8291 = vmatpush.bf16.msra.mxu0 %v8205
    %8292 = vmatpush.bf16.msra.mxu0 %v8201
    %8293 = vmatpush.bf16.msra.mxu0 %v8197
    %8294 = vmatpush.bf16.msra.mxu0 %v8193
    %8295 = vmatpush.bf16.msra.mxu0 %v8189
    %8296 = vmatpush.bf16.msra.mxu0 %v8185
    %8297 = vmatpush.bf16.msra.mxu0 %v8181
    %8298 = vmatmul.bf16.gmra.mxu0 %v7370
    %v8299 = vpop.f32.mrf.mxu0
    %v8300 = vadd.f32 %v8287, %v8299
    %v8301 = vpop.f32.mrf.mxu0
    %8302 = vdwg.mxu0
    %8303 = vmatpush.bf16.msra.mxu0 %v8178
    %8304 = vmatpush.bf16.msra.mxu0 %v8174
    %8305 = vmatpush.bf16.msra.mxu0 %v8170
    %8306 = vmatpush.bf16.msra.mxu0 %v8166
    %8307 = vmatpush.bf16.msra.mxu0 %v8162
    %8308 = vmatpush.bf16.msra.mxu0 %v8158
    %8309 = vmatpush.bf16.msra.mxu0 %v8154
    %8310 = vmatpush.bf16.msra.mxu0 %v8150
    %8311 = vmatmul.bf16.gmra.mxu0 %v7369
    %v8312 = vpop.f32.mrf.mxu0
    %v8313 = vadd.f32 %v7902, %v8312
    %v8314 = vpop.f32.mrf.mxu0
    %8315 = vdwg.mxu0
    %8316 = vmatpush.bf16.msra.mxu0 %v8210
    %8317 = vmatpush.bf16.msra.mxu0 %v8206
    %8318 = vmatpush.bf16.msra.mxu0 %v8202
    %8319 = vmatpush.bf16.msra.mxu0 %v8198
    %8320 = vmatpush.bf16.msra.mxu0 %v8194
    %8321 = vmatpush.bf16.msra.mxu0 %v8190
    %8322 = vmatpush.bf16.msra.mxu0 %v8186
    %8323 = vmatpush.bf16.msra.mxu0 %v8182
    %8324 = vmatmul.bf16.gmra.mxu0 %v7370
    %v8325 = vpop.f32.mrf.mxu0
    %v8326 = vadd.f32 %v8313, %v8325
    %v8327 = vpop.f32.mrf.mxu0
    %8328 = vdwg.mxu0
    %8329 = vmatpush.bf16.msra.mxu0 %v8179
    %8330 = vmatpush.bf16.msra.mxu0 %v8175
    %8331 = vmatpush.bf16.msra.mxu0 %v8171
    %8332 = vmatpush.bf16.msra.mxu0 %v8167
    %8333 = vmatpush.bf16.msra.mxu0 %v8163
    %8334 = vmatpush.bf16.msra.mxu0 %v8159
    %8335 = vmatpush.bf16.msra.mxu0 %v8155
    %8336 = vmatpush.bf16.msra.mxu0 %v8151
    %8337 = vmatmul.bf16.gmra.mxu0 %v7369
    %v8338 = vpop.f32.mrf.mxu0
    %v8339 = vadd.f32 %v7928, %v8338
    %v8340 = vpop.f32.mrf.mxu0
    %8341 = vdwg.mxu0
    %8342 = vmatpush.bf16.msra.mxu0 %v8211
    %8343 = vmatpush.bf16.msra.mxu0 %v8207
    %8344 = vmatpush.bf16.msra.mxu0 %v8203
    %8345 = vmatpush.bf16.msra.mxu0 %v8199
    %8346 = vmatpush.bf16.msra.mxu0 %v8195
    %8347 = vmatpush.bf16.msra.mxu0 %v8191
    %8348 = vmatpush.bf16.msra.mxu0 %v8187
    %8349 = vmatpush.bf16.msra.mxu0 %v8183
    %8350 = vmatmul.bf16.gmra.mxu0 %v7370
    %v8351 = vpop.f32.mrf.mxu0
    %v8352 = vadd.f32 %v8339, %v8351
    %v8353 = vpop.f32.mrf.mxu0
    %8354 = vdwg.mxu0
    %8355 = vmatpush.bf16.msra.mxu0 %v8180
    %8356 = vmatpush.bf16.msra.mxu0 %v8176
    %8357 = vmatpush.bf16.msra.mxu0 %v8172
    %8358 = vmatpush.bf16.msra.mxu0 %v8168
    %8359 = vmatpush.bf16.msra.mxu0 %v8164
    %8360 = vmatpush.bf16.msra.mxu0 %v8160
    %8361 = vmatpush.bf16.msra.mxu0 %v8156
    %8362 = vmatpush.bf16.msra.mxu0 %v8152
    %8363 = vmatmul.bf16.gmra.mxu0 %v7369
    %v8364 = vpop.f32.mrf.mxu0
    %v8365 = vadd.f32 %v7954, %v8364
    %v8366 = vpop.f32.mrf.mxu0
    %8367 = vdwg.mxu0
    %8368 = vmatpush.bf16.msra.mxu0 %v8212
    %8369 = vmatpush.bf16.msra.mxu0 %v8208
    %8370 = vmatpush.bf16.msra.mxu0 %v8204
    %8371 = vmatpush.bf16.msra.mxu0 %v8200
    %8372 = vmatpush.bf16.msra.mxu0 %v8196
    %8373 = vmatpush.bf16.msra.mxu0 %v8192
    %8374 = vmatpush.bf16.msra.mxu0 %v8188
    %8375 = vmatpush.bf16.msra.mxu0 %v8184
    %8376 = vmatmul.bf16.gmra.mxu0 %v7370
    %v8377 = vpop.f32.mrf.mxu0
    %v8378 = vadd.f32 %v8365, %v8377
    %v8379 = vpop.f32.mrf.mxu0
    %8380 = vdwg.mxu0
    %s8381 = scalar_lea.vmem [#allocation16], 2
    %v8382 = vld [vmem:[%s8381] sm:$0x1]
    %v8384 = vsel %vm7332, %v8382, 0
    %8386 = vmatpush.bf16.msra.mxu0 0
    %8387 = vmatpush.bf16.msra.mxu0 0
    %8388 = vmatpush.bf16.msra.mxu0 0
    %8389 = vmatpush.bf16.msra.mxu0 0
    %8390 = vmatpush.bf16.msra.mxu0 0
    %8391 = vmatpush.bf16.msra.mxu0 0
    %8392 = vmatpush.bf16.msra.mxu0 0
    %8393 = vmatpush.bf16.msra.mxu0 %v7338
    %8394 = vmatmul.bf16.gmra.mxu0 %v8384
    %v8395 = vpop.f32.mrf.mxu0
    %v8396 = vadd.f32 0.0, %v8395
    %v8397 = vpop.f32.mrf.mxu0
    %8398 = vdwg.mxu0
    %8399 = vmatpush.bf16.msra.mxu0 0
    %8400 = vmatpush.bf16.msra.mxu0 0
    %8401 = vmatpush.bf16.msra.mxu0 0
    %8402 = vmatpush.bf16.msra.mxu0 0
    %8403 = vmatpush.bf16.msra.mxu0 0
    %8404 = vmatpush.bf16.msra.mxu0 0
    %8405 = vmatpush.bf16.msra.mxu0 0
    %8406 = vmatpush.bf16.msra.mxu0 %v7341
    %8407 = vmatmul.bf16.gmra.mxu0 %v8384
    %v8408 = vpop.f32.mrf.mxu0
    %v8409 = vadd.f32 0.0, %v8408
    %v8410 = vpop.f32.mrf.mxu0
    %8411 = vdwg.mxu0
    %v8412 = vpack.c.bf16 %v8396, %v8396
    %v8413 = vpack.c.bf16 %v8409, %v8409
    %s8414 = scalar_lea.vmem [#allocation18], 1024
    %v8415 = vld [vmem:[%s8414] sm:$0xff]
    %v8416 = vld [vmem:[%s8414 + $0x8] sm:$0xff]
    %v8417 = vld [vmem:[%s8414 + $0x10] sm:$0xff]
    %v8418 = vld [vmem:[%s8414 + $0x18] sm:$0xff]
    %v8419 = vld [vmem:[%s8414 + $0x20] sm:$0xff]
    %v8420 = vld [vmem:[%s8414 + $0x28] sm:$0xff]
    %v8421 = vld [vmem:[%s8414 + $0x30] sm:$0xff]
    %v8422 = vld [vmem:[%s8414 + $0x38] sm:$0xff]
    %v8423 = vld [vmem:[%s8414 + $0x40] sm:$0xff]
    %v8424 = vld [vmem:[%s8414 + $0x48] sm:$0xff]
    %v8425 = vld [vmem:[%s8414 + $0x50] sm:$0xff]
    %v8426 = vld [vmem:[%s8414 + $0x58] sm:$0xff]
    %v8427 = vld [vmem:[%s8414 + $0x60] sm:$0xff]
    %v8428 = vld [vmem:[%s8414 + $0x68] sm:$0xff]
    %v8429 = vld [vmem:[%s8414 + $0x70] sm:$0xff]
    %v8430 = vld [vmem:[%s8414 + $0x78] sm:$0xff]
    %v8431 = vld [vmem:[%s8414 + $0x80] sm:$0xff]
    %v8432 = vld [vmem:[%s8414 + $0x88] sm:$0xff]
    %v8433 = vld [vmem:[%s8414 + $0x90] sm:$0xff]
    %v8434 = vld [vmem:[%s8414 + $0x98] sm:$0xff]
    %v8435 = vld [vmem:[%s8414 + $0xa0] sm:$0xff]
    %v8436 = vld [vmem:[%s8414 + $0xa8] sm:$0xff]
    %v8437 = vld [vmem:[%s8414 + $0xb0] sm:$0xff]
    %v8438 = vld [vmem:[%s8414 + $0xb8] sm:$0xff]
    %v8439 = vld [vmem:[%s8414 + $0xc0] sm:$0xff]
    %v8440 = vld [vmem:[%s8414 + $0xc8] sm:$0xff]
    %v8441 = vld [vmem:[%s8414 + $0xd0] sm:$0xff]
    %v8442 = vld [vmem:[%s8414 + $0xd8] sm:$0xff]
    %v8443 = vld [vmem:[%s8414 + $0xe0] sm:$0xff]
    %v8444 = vld [vmem:[%s8414 + $0xe8] sm:$0xff]
    %v8445 = vld [vmem:[%s8414 + $0xf0] sm:$0xff]
    %v8446 = vld [vmem:[%s8414 + $0xf8] sm:$0xff]
    %v8447 = vld [vmem:[%s8414 + $0x100] sm:$0xff]
    %v8448 = vld [vmem:[%s8414 + $0x108] sm:$0xff]
    %v8449 = vld [vmem:[%s8414 + $0x110] sm:$0xff]
    %v8450 = vld [vmem:[%s8414 + $0x118] sm:$0xff]
    %v8451 = vld [vmem:[%s8414 + $0x120] sm:$0xff]
    %v8452 = vld [vmem:[%s8414 + $0x128] sm:$0xff]
    %v8453 = vld [vmem:[%s8414 + $0x130] sm:$0xff]
    %v8454 = vld [vmem:[%s8414 + $0x138] sm:$0xff]
    %v8455 = vld [vmem:[%s8414 + $0x140] sm:$0xff]
    %v8456 = vld [vmem:[%s8414 + $0x148] sm:$0xff]
    %v8457 = vld [vmem:[%s8414 + $0x150] sm:$0xff]
    %v8458 = vld [vmem:[%s8414 + $0x158] sm:$0xff]
    %v8459 = vld [vmem:[%s8414 + $0x160] sm:$0xff]
    %v8460 = vld [vmem:[%s8414 + $0x168] sm:$0xff]
    %v8461 = vld [vmem:[%s8414 + $0x170] sm:$0xff]
    %v8462 = vld [vmem:[%s8414 + $0x178] sm:$0xff]
    %v8463 = vld [vmem:[%s8414 + $0x180] sm:$0xff]
    %v8464 = vld [vmem:[%s8414 + $0x188] sm:$0xff]
    %v8465 = vld [vmem:[%s8414 + $0x190] sm:$0xff]
    %v8466 = vld [vmem:[%s8414 + $0x198] sm:$0xff]
    %v8467 = vld [vmem:[%s8414 + $0x1a0] sm:$0xff]
    %v8468 = vld [vmem:[%s8414 + $0x1a8] sm:$0xff]
    %v8469 = vld [vmem:[%s8414 + $0x1b0] sm:$0xff]
    %v8470 = vld [vmem:[%s8414 + $0x1b8] sm:$0xff]
    %v8471 = vld [vmem:[%s8414 + $0x1c0] sm:$0xff]
    %v8472 = vld [vmem:[%s8414 + $0x1c8] sm:$0xff]
    %v8473 = vld [vmem:[%s8414 + $0x1d0] sm:$0xff]
    %v8474 = vld [vmem:[%s8414 + $0x1d8] sm:$0xff]
    %v8475 = vld [vmem:[%s8414 + $0x1e0] sm:$0xff]
    %v8476 = vld [vmem:[%s8414 + $0x1e8] sm:$0xff]
    %v8477 = vld [vmem:[%s8414 + $0x1f0] sm:$0xff]
    %v8478 = vld [vmem:[%s8414 + $0x1f8] sm:$0xff]
    %v8543 = vunpack.c.l.b16 %v8415
    %v8544 = vunpack.c.h.b16 %v8415
    %v8545 = vunpack.c.l.b16 %v8416
    %v8546 = vunpack.c.h.b16 %v8416
    %v8547 = vunpack.c.l.b16 %v8417
    %v8548 = vunpack.c.h.b16 %v8417
    %v8549 = vunpack.c.l.b16 %v8418
    %v8550 = vunpack.c.h.b16 %v8418
    %v8551 = vunpack.c.l.b16 %v8419
    %v8552 = vunpack.c.h.b16 %v8419
    %v8553 = vunpack.c.l.b16 %v8420
    %v8554 = vunpack.c.h.b16 %v8420
    %v8555 = vunpack.c.l.b16 %v8421
    %v8556 = vunpack.c.h.b16 %v8421
    %v8557 = vunpack.c.l.b16 %v8422
    %v8558 = vunpack.c.h.b16 %v8422
    %v8559 = vunpack.c.l.b16 %v8423
    %v8560 = vunpack.c.h.b16 %v8423
    %v8561 = vunpack.c.l.b16 %v8424
    %v8562 = vunpack.c.h.b16 %v8424
    %v8563 = vunpack.c.l.b16 %v8425
    %v8564 = vunpack.c.h.b16 %v8425
    %v8565 = vunpack.c.l.b16 %v8426
    %v8566 = vunpack.c.h.b16 %v8426
    %v8567 = vunpack.c.l.b16 %v8427
    %v8568 = vunpack.c.h.b16 %v8427
    %v8569 = vunpack.c.l.b16 %v8428
    %v8570 = vunpack.c.h.b16 %v8428
    %v8571 = vunpack.c.l.b16 %v8429
    %v8572 = vunpack.c.h.b16 %v8429
    %v8573 = vunpack.c.l.b16 %v8430
    %v8574 = vunpack.c.h.b16 %v8430
    %v8575 = vunpack.c.l.b16 %v8431
    %v8576 = vunpack.c.h.b16 %v8431
    %v8577 = vunpack.c.l.b16 %v8432
    %v8578 = vunpack.c.h.b16 %v8432
    %v8579 = vunpack.c.l.b16 %v8433
    %v8580 = vunpack.c.h.b16 %v8433
    %v8581 = vunpack.c.l.b16 %v8434
    %v8582 = vunpack.c.h.b16 %v8434
    %v8583 = vunpack.c.l.b16 %v8435
    %v8584 = vunpack.c.h.b16 %v8435
    %v8585 = vunpack.c.l.b16 %v8436
    %v8586 = vunpack.c.h.b16 %v8436
    %v8587 = vunpack.c.l.b16 %v8437
    %v8588 = vunpack.c.h.b16 %v8437
    %v8589 = vunpack.c.l.b16 %v8438
    %v8590 = vunpack.c.h.b16 %v8438
    %v8591 = vunpack.c.l.b16 %v8439
    %v8592 = vunpack.c.h.b16 %v8439
    %v8593 = vunpack.c.l.b16 %v8440
    %v8594 = vunpack.c.h.b16 %v8440
    %v8595 = vunpack.c.l.b16 %v8441
    %v8596 = vunpack.c.h.b16 %v8441
    %v8597 = vunpack.c.l.b16 %v8442
    %v8598 = vunpack.c.h.b16 %v8442
    %v8599 = vunpack.c.l.b16 %v8443
    %v8600 = vunpack.c.h.b16 %v8443
    %v8601 = vunpack.c.l.b16 %v8444
    %v8602 = vunpack.c.h.b16 %v8444
    %v8603 = vunpack.c.l.b16 %v8445
    %v8604 = vunpack.c.h.b16 %v8445
    %v8605 = vunpack.c.l.b16 %v8446
    %v8606 = vunpack.c.h.b16 %v8446
    %v8607 = vunpack.c.l.b16 %v8447
    %v8608 = vunpack.c.h.b16 %v8447
    %v8609 = vunpack.c.l.b16 %v8448
    %v8610 = vunpack.c.h.b16 %v8448
    %v8611 = vunpack.c.l.b16 %v8449
    %v8612 = vunpack.c.h.b16 %v8449
    %v8613 = vunpack.c.l.b16 %v8450
    %v8614 = vunpack.c.h.b16 %v8450
    %v8615 = vunpack.c.l.b16 %v8451
    %v8616 = vunpack.c.h.b16 %v8451
    %v8617 = vunpack.c.l.b16 %v8452
    %v8618 = vunpack.c.h.b16 %v8452
    %v8619 = vunpack.c.l.b16 %v8453
    %v8620 = vunpack.c.h.b16 %v8453
    %v8621 = vunpack.c.l.b16 %v8454
    %v8622 = vunpack.c.h.b16 %v8454
    %v8623 = vunpack.c.l.b16 %v8455
    %v8624 = vunpack.c.h.b16 %v8455
    %v8625 = vunpack.c.l.b16 %v8456
    %v8626 = vunpack.c.h.b16 %v8456
    %v8627 = vunpack.c.l.b16 %v8457
    %v8628 = vunpack.c.h.b16 %v8457
    %v8629 = vunpack.c.l.b16 %v8458
    %v8630 = vunpack.c.h.b16 %v8458
    %v8631 = vunpack.c.l.b16 %v8459
    %v8632 = vunpack.c.h.b16 %v8459
    %v8633 = vunpack.c.l.b16 %v8460
    %v8634 = vunpack.c.h.b16 %v8460
    %v8635 = vunpack.c.l.b16 %v8461
    %v8636 = vunpack.c.h.b16 %v8461
    %v8637 = vunpack.c.l.b16 %v8462
    %v8638 = vunpack.c.h.b16 %v8462
    %v8639 = vunpack.c.l.b16 %v8463
    %v8640 = vunpack.c.h.b16 %v8463
    %v8641 = vunpack.c.l.b16 %v8464
    %v8642 = vunpack.c.h.b16 %v8464
    %v8643 = vunpack.c.l.b16 %v8465
    %v8644 = vunpack.c.h.b16 %v8465
    %v8645 = vunpack.c.l.b16 %v8466
    %v8646 = vunpack.c.h.b16 %v8466
    %v8647 = vunpack.c.l.b16 %v8467
    %v8648 = vunpack.c.h.b16 %v8467
    %v8649 = vunpack.c.l.b16 %v8468
    %v8650 = vunpack.c.h.b16 %v8468
    %v8651 = vunpack.c.l.b16 %v8469
    %v8652 = vunpack.c.h.b16 %v8469
    %v8653 = vunpack.c.l.b16 %v8470
    %v8654 = vunpack.c.h.b16 %v8470
    %v8655 = vunpack.c.l.b16 %v8471
    %v8656 = vunpack.c.h.b16 %v8471
    %v8657 = vunpack.c.l.b16 %v8472
    %v8658 = vunpack.c.h.b16 %v8472
    %v8659 = vunpack.c.l.b16 %v8473
    %v8660 = vunpack.c.h.b16 %v8473
    %v8661 = vunpack.c.l.b16 %v8474
    %v8662 = vunpack.c.h.b16 %v8474
    %v8663 = vunpack.c.l.b16 %v8475
    %v8664 = vunpack.c.h.b16 %v8475
    %v8665 = vunpack.c.l.b16 %v8476
    %v8666 = vunpack.c.h.b16 %v8476
    %v8667 = vunpack.c.l.b16 %v8477
    %v8668 = vunpack.c.h.b16 %v8477
    %v8669 = vunpack.c.l.b16 %v8478
    %v8670 = vunpack.c.h.b16 %v8478
    %v8671 = vpack.c.b16 %v8547, %v8543
    %v8672 = vpack.c.b16 %v8548, %v8544
    %v8673 = vpack.c.b16 %v8549, %v8545
    %v8674 = vpack.c.b16 %v8550, %v8546
    %v8675 = vpack.c.b16 %v8555, %v8551
    %v8676 = vpack.c.b16 %v8556, %v8552
    %v8677 = vpack.c.b16 %v8557, %v8553
    %v8678 = vpack.c.b16 %v8558, %v8554
    %v8679 = vpack.c.b16 %v8563, %v8559
    %v8680 = vpack.c.b16 %v8564, %v8560
    %v8681 = vpack.c.b16 %v8565, %v8561
    %v8682 = vpack.c.b16 %v8566, %v8562
    %v8683 = vpack.c.b16 %v8571, %v8567
    %v8684 = vpack.c.b16 %v8572, %v8568
    %v8685 = vpack.c.b16 %v8573, %v8569
    %v8686 = vpack.c.b16 %v8574, %v8570
    %v8687 = vpack.c.b16 %v8579, %v8575
    %v8688 = vpack.c.b16 %v8580, %v8576
    %v8689 = vpack.c.b16 %v8581, %v8577
    %v8690 = vpack.c.b16 %v8582, %v8578
    %v8691 = vpack.c.b16 %v8587, %v8583
    %v8692 = vpack.c.b16 %v8588, %v8584
    %v8693 = vpack.c.b16 %v8589, %v8585
    %v8694 = vpack.c.b16 %v8590, %v8586
    %v8695 = vpack.c.b16 %v8595, %v8591
    %v8696 = vpack.c.b16 %v8596, %v8592
    %v8697 = vpack.c.b16 %v8597, %v8593
    %v8698 = vpack.c.b16 %v8598, %v8594
    %v8699 = vpack.c.b16 %v8603, %v8599
    %v8700 = vpack.c.b16 %v8604, %v8600
    %v8701 = vpack.c.b16 %v8605, %v8601
    %v8702 = vpack.c.b16 %v8606, %v8602
    %v8703 = vpack.c.b16 %v8611, %v8607
    %v8704 = vpack.c.b16 %v8612, %v8608
    %v8705 = vpack.c.b16 %v8613, %v8609
    %v8706 = vpack.c.b16 %v8614, %v8610
    %v8707 = vpack.c.b16 %v8619, %v8615
    %v8708 = vpack.c.b16 %v8620, %v8616
    %v8709 = vpack.c.b16 %v8621, %v8617
    %v8710 = vpack.c.b16 %v8622, %v8618
    %v8711 = vpack.c.b16 %v8627, %v8623
    %v8712 = vpack.c.b16 %v8628, %v8624
    %v8713 = vpack.c.b16 %v8629, %v8625
    %v8714 = vpack.c.b16 %v8630, %v8626
    %v8715 = vpack.c.b16 %v8635, %v8631
    %v8716 = vpack.c.b16 %v8636, %v8632
    %v8717 = vpack.c.b16 %v8637, %v8633
    %v8718 = vpack.c.b16 %v8638, %v8634
    %v8719 = vpack.c.b16 %v8643, %v8639
    %v8720 = vpack.c.b16 %v8644, %v8640
    %v8721 = vpack.c.b16 %v8645, %v8641
    %v8722 = vpack.c.b16 %v8646, %v8642
    %v8723 = vpack.c.b16 %v8651, %v8647
    %v8724 = vpack.c.b16 %v8652, %v8648
    %v8725 = vpack.c.b16 %v8653, %v8649
    %v8726 = vpack.c.b16 %v8654, %v8650
    %v8727 = vpack.c.b16 %v8659, %v8655
    %v8728 = vpack.c.b16 %v8660, %v8656
    %v8729 = vpack.c.b16 %v8661, %v8657
    %v8730 = vpack.c.b16 %v8662, %v8658
    %v8731 = vpack.c.b16 %v8667, %v8663
    %v8732 = vpack.c.b16 %v8668, %v8664
    %v8733 = vpack.c.b16 %v8669, %v8665
    %v8734 = vpack.c.b16 %v8670, %v8666
    %8799 = vmatpush.bf16.msra.mxu0 %v8699
    %8800 = vmatpush.bf16.msra.mxu0 %v8695
    %8801 = vmatpush.bf16.msra.mxu0 %v8691
    %8802 = vmatpush.bf16.msra.mxu0 %v8687
    %8803 = vmatpush.bf16.msra.mxu0 %v8683
    %8804 = vmatpush.bf16.msra.mxu0 %v8679
    %8805 = vmatpush.bf16.msra.mxu0 %v8675
    %8806 = vmatpush.bf16.msra.mxu0 %v8671
    %8807 = vmatmul.bf16.gmra.mxu0 %v8412
    %v8808 = vpop.f32.mrf.mxu0
    %v8809 = vadd.f32 0.0, %v8808
    %v8810 = vpop.f32.mrf.mxu0
    %8811 = vdwg.mxu0
    %8812 = vmatpush.bf16.msra.mxu0 %v8731
    %8813 = vmatpush.bf16.msra.mxu0 %v8727
    %8814 = vmatpush.bf16.msra.mxu0 %v8723
    %8815 = vmatpush.bf16.msra.mxu0 %v8719
    %8816 = vmatpush.bf16.msra.mxu0 %v8715
    %8817 = vmatpush.bf16.msra.mxu0 %v8711
    %8818 = vmatpush.bf16.msra.mxu0 %v8707
    %8819 = vmatpush.bf16.msra.mxu0 %v8703
    %8820 = vmatmul.bf16.gmra.mxu0 %v8413
    %v8821 = vpop.f32.mrf.mxu0
    %v8822 = vadd.f32 %v8809, %v8821
    %v8823 = vpop.f32.mrf.mxu0
    %8824 = vdwg.mxu0
    %8825 = vmatpush.bf16.msra.mxu0 %v8700
    %8826 = vmatpush.bf16.msra.mxu0 %v8696
    %8827 = vmatpush.bf16.msra.mxu0 %v8692
    %8828 = vmatpush.bf16.msra.mxu0 %v8688
    %8829 = vmatpush.bf16.msra.mxu0 %v8684
    %8830 = vmatpush.bf16.msra.mxu0 %v8680
    %8831 = vmatpush.bf16.msra.mxu0 %v8676
    %8832 = vmatpush.bf16.msra.mxu0 %v8672
    %8833 = vmatmul.bf16.gmra.mxu0 %v8412
    %v8834 = vpop.f32.mrf.mxu0
    %v8835 = vadd.f32 0.0, %v8834
    %v8836 = vpop.f32.mrf.mxu0
    %8837 = vdwg.mxu0
    %8838 = vmatpush.bf16.msra.mxu0 %v8732
    %8839 = vmatpush.bf16.msra.mxu0 %v8728
    %8840 = vmatpush.bf16.msra.mxu0 %v8724
    %8841 = vmatpush.bf16.msra.mxu0 %v8720
    %8842 = vmatpush.bf16.msra.mxu0 %v8716
    %8843 = vmatpush.bf16.msra.mxu0 %v8712
    %8844 = vmatpush.bf16.msra.mxu0 %v8708
    %8845 = vmatpush.bf16.msra.mxu0 %v8704
    %8846 = vmatmul.bf16.gmra.mxu0 %v8413
    %v8847 = vpop.f32.mrf.mxu0
    %v8848 = vadd.f32 %v8835, %v8847
    %v8849 = vpop.f32.mrf.mxu0
    %8850 = vdwg.mxu0
    %8851 = vmatpush.bf16.msra.mxu0 %v8701
    %8852 = vmatpush.bf16.msra.mxu0 %v8697
    %8853 = vmatpush.bf16.msra.mxu0 %v8693
    %8854 = vmatpush.bf16.msra.mxu0 %v8689
    %8855 = vmatpush.bf16.msra.mxu0 %v8685
    %8856 = vmatpush.bf16.msra.mxu0 %v8681
    %8857 = vmatpush.bf16.msra.mxu0 %v8677
    %8858 = vmatpush.bf16.msra.mxu0 %v8673
    %8859 = vmatmul.bf16.gmra.mxu0 %v8412
    %v8860 = vpop.f32.mrf.mxu0
    %v8861 = vadd.f32 0.0, %v8860
    %v8862 = vpop.f32.mrf.mxu0
    %8863 = vdwg.mxu0
    %8864 = vmatpush.bf16.msra.mxu0 %v8733
    %8865 = vmatpush.bf16.msra.mxu0 %v8729
    %8866 = vmatpush.bf16.msra.mxu0 %v8725
    %8867 = vmatpush.bf16.msra.mxu0 %v8721
    %8868 = vmatpush.bf16.msra.mxu0 %v8717
    %8869 = vmatpush.bf16.msra.mxu0 %v8713
    %8870 = vmatpush.bf16.msra.mxu0 %v8709
    %8871 = vmatpush.bf16.msra.mxu0 %v8705
    %8872 = vmatmul.bf16.gmra.mxu0 %v8413
    %v8873 = vpop.f32.mrf.mxu0
    %v8874 = vadd.f32 %v8861, %v8873
    %v8875 = vpop.f32.mrf.mxu0
    %8876 = vdwg.mxu0
    %8877 = vmatpush.bf16.msra.mxu0 %v8702
    %8878 = vmatpush.bf16.msra.mxu0 %v8698
    %8879 = vmatpush.bf16.msra.mxu0 %v8694
    %8880 = vmatpush.bf16.msra.mxu0 %v8690
    %8881 = vmatpush.bf16.msra.mxu0 %v8686
    %8882 = vmatpush.bf16.msra.mxu0 %v8682
    %8883 = vmatpush.bf16.msra.mxu0 %v8678
    %8884 = vmatpush.bf16.msra.mxu0 %v8674
    %8885 = vmatmul.bf16.gmra.mxu0 %v8412
    %v8886 = vpop.f32.mrf.mxu0
    %v8887 = vadd.f32 0.0, %v8886
    %v8888 = vpop.f32.mrf.mxu0
    %8889 = vdwg.mxu0
    %8890 = vmatpush.bf16.msra.mxu0 %v8734
    %8891 = vmatpush.bf16.msra.mxu0 %v8730
    %8892 = vmatpush.bf16.msra.mxu0 %v8726
    %8893 = vmatpush.bf16.msra.mxu0 %v8722
    %8894 = vmatpush.bf16.msra.mxu0 %v8718
    %8895 = vmatpush.bf16.msra.mxu0 %v8714
    %8896 = vmatpush.bf16.msra.mxu0 %v8710
    %8897 = vmatpush.bf16.msra.mxu0 %v8706
    %8898 = vmatmul.bf16.gmra.mxu0 %v8413
    %v8899 = vpop.f32.mrf.mxu0
    %v8900 = vadd.f32 %v8887, %v8899
    %v8901 = vpop.f32.mrf.mxu0
    %8902 = vdwg.mxu0
    %v8903 = vadd.f32 %v8300, %v8822
    %v8904 = vadd.f32 %v8326, %v8848
    %v8905 = vadd.f32 %v8352, %v8874
    %v8906 = vadd.f32 %v8378, %v8900
    %s8907 = scalar_lea.vmem [#allocation16], 3
    %v8908 = vld [vmem:[%s8907] sm:$0x1]
    %v8910 = vsel %vm7332, %v8908, 0
    %8912 = vmatpush.bf16.msra.mxu0 0
    %8913 = vmatpush.bf16.msra.mxu0 0
    %8914 = vmatpush.bf16.msra.mxu0 0
    %8915 = vmatpush.bf16.msra.mxu0 0
    %8916 = vmatpush.bf16.msra.mxu0 0
    %8917 = vmatpush.bf16.msra.mxu0 0
    %8918 = vmatpush.bf16.msra.mxu0 0
    %8919 = vmatpush.bf16.msra.mxu0 %v7338
    %8920 = vmatmul.bf16.gmra.mxu0 %v8910
    %v8921 = vpop.f32.mrf.mxu0
    %v8922 = vadd.f32 0.0, %v8921
    %v8923 = vpop.f32.mrf.mxu0
    %8924 = vdwg.mxu0
    %8925 = vmatpush.bf16.msra.mxu0 0
    %8926 = vmatpush.bf16.msra.mxu0 0
    %8927 = vmatpush.bf16.msra.mxu0 0
    %8928 = vmatpush.bf16.msra.mxu0 0
    %8929 = vmatpush.bf16.msra.mxu0 0
    %8930 = vmatpush.bf16.msra.mxu0 0
    %8931 = vmatpush.bf16.msra.mxu0 0
    %8932 = vmatpush.bf16.msra.mxu0 %v7341
    %8933 = vmatmul.bf16.gmra.mxu0 %v8910
    %v8934 = vpop.f32.mrf.mxu0
    %v8935 = vadd.f32 0.0, %v8934
    %v8936 = vpop.f32.mrf.mxu0
    %8937 = vdwg.mxu0
    %v8938 = vpack.c.bf16 %v8922, %v8922
    %v8939 = vpack.c.bf16 %v8935, %v8935
    %s8940 = scalar_lea.vmem [#allocation18], 1536
    %v8941 = vld [vmem:[%s8940] sm:$0xff]
    %v8942 = vld [vmem:[%s8940 + $0x8] sm:$0xff]
    %v8943 = vld [vmem:[%s8940 + $0x10] sm:$0xff]
    %v8944 = vld [vmem:[%s8940 + $0x18] sm:$0xff]
    %v8945 = vld [vmem:[%s8940 + $0x20] sm:$0xff]
    %v8946 = vld [vmem:[%s8940 + $0x28] sm:$0xff]
    %v8947 = vld [vmem:[%s8940 + $0x30] sm:$0xff]
    %v8948 = vld [vmem:[%s8940 + $0x38] sm:$0xff]
    %v8949 = vld [vmem:[%s8940 + $0x40] sm:$0xff]
    %v8950 = vld [vmem:[%s8940 + $0x48] sm:$0xff]
    %v8951 = vld [vmem:[%s8940 + $0x50] sm:$0xff]
    %v8952 = vld [vmem:[%s8940 + $0x58] sm:$0xff]
    %v8953 = vld [vmem:[%s8940 + $0x60] sm:$0xff]
    %v8954 = vld [vmem:[%s8940 + $0x68] sm:$0xff]
    %v8955 = vld [vmem:[%s8940 + $0x70] sm:$0xff]
    %v8956 = vld [vmem:[%s8940 + $0x78] sm:$0xff]
    %v8957 = vld [vmem:[%s8940 + $0x80] sm:$0xff]
    %v8958 = vld [vmem:[%s8940 + $0x88] sm:$0xff]
    %v8959 = vld [vmem:[%s8940 + $0x90] sm:$0xff]
    %v8960 = vld [vmem:[%s8940 + $0x98] sm:$0xff]
    %v8961 = vld [vmem:[%s8940 + $0xa0] sm:$0xff]
    %v8962 = vld [vmem:[%s8940 + $0xa8] sm:$0xff]
    %v8963 = vld [vmem:[%s8940 + $0xb0] sm:$0xff]
    %v8964 = vld [vmem:[%s8940 + $0xb8] sm:$0xff]
    %v8965 = vld [vmem:[%s8940 + $0xc0] sm:$0xff]
    %v8966 = vld [vmem:[%s8940 + $0xc8] sm:$0xff]
    %v8967 = vld [vmem:[%s8940 + $0xd0] sm:$0xff]
    %v8968 = vld [vmem:[%s8940 + $0xd8] sm:$0xff]
    %v8969 = vld [vmem:[%s8940 + $0xe0] sm:$0xff]
    %v8970 = vld [vmem:[%s8940 + $0xe8] sm:$0xff]
    %v8971 = vld [vmem:[%s8940 + $0xf0] sm:$0xff]
    %v8972 = vld [vmem:[%s8940 + $0xf8] sm:$0xff]
    %v8973 = vld [vmem:[%s8940 + $0x100] sm:$0xff]
    %v8974 = vld [vmem:[%s8940 + $0x108] sm:$0xff]
    %v8975 = vld [vmem:[%s8940 + $0x110] sm:$0xff]
    %v8976 = vld [vmem:[%s8940 + $0x118] sm:$0xff]
    %v8977 = vld [vmem:[%s8940 + $0x120] sm:$0xff]
    %v8978 = vld [vmem:[%s8940 + $0x128] sm:$0xff]
    %v8979 = vld [vmem:[%s8940 + $0x130] sm:$0xff]
    %v8980 = vld [vmem:[%s8940 + $0x138] sm:$0xff]
    %v8981 = vld [vmem:[%s8940 + $0x140] sm:$0xff]
    %v8982 = vld [vmem:[%s8940 + $0x148] sm:$0xff]
    %v8983 = vld [vmem:[%s8940 + $0x150] sm:$0xff]
    %v8984 = vld [vmem:[%s8940 + $0x158] sm:$0xff]
    %v8985 = vld [vmem:[%s8940 + $0x160] sm:$0xff]
    %v8986 = vld [vmem:[%s8940 + $0x168] sm:$0xff]
    %v8987 = vld [vmem:[%s8940 + $0x170] sm:$0xff]
    %v8988 = vld [vmem:[%s8940 + $0x178] sm:$0xff]
    %v8989 = vld [vmem:[%s8940 + $0x180] sm:$0xff]
    %v8990 = vld [vmem:[%s8940 + $0x188] sm:$0xff]
    %v8991 = vld [vmem:[%s8940 + $0x190] sm:$0xff]
    %v8992 = vld [vmem:[%s8940 + $0x198] sm:$0xff]
    %v8993 = vld [vmem:[%s8940 + $0x1a0] sm:$0xff]
    %v8994 = vld [vmem:[%s8940 + $0x1a8] sm:$0xff]
    %v8995 = vld [vmem:[%s8940 + $0x1b0] sm:$0xff]
    %v8996 = vld [vmem:[%s8940 + $0x1b8] sm:$0xff]
    %v8997 = vld [vmem:[%s8940 + $0x1c0] sm:$0xff]
    %v8998 = vld [vmem:[%s8940 + $0x1c8] sm:$0xff]
    %v8999 = vld [vmem:[%s8940 + $0x1d0] sm:$0xff]
    %v9000 = vld [vmem:[%s8940 + $0x1d8] sm:$0xff]
    %v9001 = vld [vmem:[%s8940 + $0x1e0] sm:$0xff]
    %v9002 = vld [vmem:[%s8940 + $0x1e8] sm:$0xff]
    %v9003 = vld [vmem:[%s8940 + $0x1f0] sm:$0xff]
    %v9004 = vld [vmem:[%s8940 + $0x1f8] sm:$0xff]
    %v9069 = vunpack.c.l.b16 %v8941
    %v9070 = vunpack.c.h.b16 %v8941
    %v9071 = vunpack.c.l.b16 %v8942
    %v9072 = vunpack.c.h.b16 %v8942
    %v9073 = vunpack.c.l.b16 %v8943
    %v9074 = vunpack.c.h.b16 %v8943
    %v9075 = vunpack.c.l.b16 %v8944
    %v9076 = vunpack.c.h.b16 %v8944
    %v9077 = vunpack.c.l.b16 %v8945
    %v9078 = vunpack.c.h.b16 %v8945
    %v9079 = vunpack.c.l.b16 %v8946
    %v9080 = vunpack.c.h.b16 %v8946
    %v9081 = vunpack.c.l.b16 %v8947
    %v9082 = vunpack.c.h.b16 %v8947
    %v9083 = vunpack.c.l.b16 %v8948
    %v9084 = vunpack.c.h.b16 %v8948
    %v9085 = vunpack.c.l.b16 %v8949
    %v9086 = vunpack.c.h.b16 %v8949
    %v9087 = vunpack.c.l.b16 %v8950
    %v9088 = vunpack.c.h.b16 %v8950
    %v9089 = vunpack.c.l.b16 %v8951
    %v9090 = vunpack.c.h.b16 %v8951
    %v9091 = vunpack.c.l.b16 %v8952
    %v9092 = vunpack.c.h.b16 %v8952
    %v9093 = vunpack.c.l.b16 %v8953
    %v9094 = vunpack.c.h.b16 %v8953
    %v9095 = vunpack.c.l.b16 %v8954
    %v9096 = vunpack.c.h.b16 %v8954
    %v9097 = vunpack.c.l.b16 %v8955
    %v9098 = vunpack.c.h.b16 %v8955
    %v9099 = vunpack.c.l.b16 %v8956
    %v9100 = vunpack.c.h.b16 %v8956
    %v9101 = vunpack.c.l.b16 %v8957
    %v9102 = vunpack.c.h.b16 %v8957
    %v9103 = vunpack.c.l.b16 %v8958
    %v9104 = vunpack.c.h.b16 %v8958
    %v9105 = vunpack.c.l.b16 %v8959
    %v9106 = vunpack.c.h.b16 %v8959
    %v9107 = vunpack.c.l.b16 %v8960
    %v9108 = vunpack.c.h.b16 %v8960
    %v9109 = vunpack.c.l.b16 %v8961
    %v9110 = vunpack.c.h.b16 %v8961
    %v9111 = vunpack.c.l.b16 %v8962
    %v9112 = vunpack.c.h.b16 %v8962
    %v9113 = vunpack.c.l.b16 %v8963
    %v9114 = vunpack.c.h.b16 %v8963
    %v9115 = vunpack.c.l.b16 %v8964
    %v9116 = vunpack.c.h.b16 %v8964
    %v9117 = vunpack.c.l.b16 %v8965
    %v9118 = vunpack.c.h.b16 %v8965
    %v9119 = vunpack.c.l.b16 %v8966
    %v9120 = vunpack.c.h.b16 %v8966
    %v9121 = vunpack.c.l.b16 %v8967
    %v9122 = vunpack.c.h.b16 %v8967
    %v9123 = vunpack.c.l.b16 %v8968
    %v9124 = vunpack.c.h.b16 %v8968
    %v9125 = vunpack.c.l.b16 %v8969
    %v9126 = vunpack.c.h.b16 %v8969
    %v9127 = vunpack.c.l.b16 %v8970
    %v9128 = vunpack.c.h.b16 %v8970
    %v9129 = vunpack.c.l.b16 %v8971
    %v9130 = vunpack.c.h.b16 %v8971
    %v9131 = vunpack.c.l.b16 %v8972
    %v9132 = vunpack.c.h.b16 %v8972
    %v9133 = vunpack.c.l.b16 %v8973
    %v9134 = vunpack.c.h.b16 %v8973
    %v9135 = vunpack.c.l.b16 %v8974
    %v9136 = vunpack.c.h.b16 %v8974
    %v9137 = vunpack.c.l.b16 %v8975
    %v9138 = vunpack.c.h.b16 %v8975
    %v9139 = vunpack.c.l.b16 %v8976
    %v9140 = vunpack.c.h.b16 %v8976
    %v9141 = vunpack.c.l.b16 %v8977
    %v9142 = vunpack.c.h.b16 %v8977
    %v9143 = vunpack.c.l.b16 %v8978
    %v9144 = vunpack.c.h.b16 %v8978
    %v9145 = vunpack.c.l.b16 %v8979
    %v9146 = vunpack.c.h.b16 %v8979
    %v9147 = vunpack.c.l.b16 %v8980
    %v9148 = vunpack.c.h.b16 %v8980
    %v9149 = vunpack.c.l.b16 %v8981
    %v9150 = vunpack.c.h.b16 %v8981
    %v9151 = vunpack.c.l.b16 %v8982
    %v9152 = vunpack.c.h.b16 %v8982
    %v9153 = vunpack.c.l.b16 %v8983
    %v9154 = vunpack.c.h.b16 %v8983
    %v9155 = vunpack.c.l.b16 %v8984
    %v9156 = vunpack.c.h.b16 %v8984
    %v9157 = vunpack.c.l.b16 %v8985
    %v9158 = vunpack.c.h.b16 %v8985
    %v9159 = vunpack.c.l.b16 %v8986
    %v9160 = vunpack.c.h.b16 %v8986
    %v9161 = vunpack.c.l.b16 %v8987
    %v9162 = vunpack.c.h.b16 %v8987
    %v9163 = vunpack.c.l.b16 %v8988
    %v9164 = vunpack.c.h.b16 %v8988
    %v9165 = vunpack.c.l.b16 %v8989
    %v9166 = vunpack.c.h.b16 %v8989
    %v9167 = vunpack.c.l.b16 %v8990
    %v9168 = vunpack.c.h.b16 %v8990
    %v9169 = vunpack.c.l.b16 %v8991
    %v9170 = vunpack.c.h.b16 %v8991
    %v9171 = vunpack.c.l.b16 %v8992
    %v9172 = vunpack.c.h.b16 %v8992
    %v9173 = vunpack.c.l.b16 %v8993
    %v9174 = vunpack.c.h.b16 %v8993
    %v9175 = vunpack.c.l.b16 %v8994
    %v9176 = vunpack.c.h.b16 %v8994
    %v9177 = vunpack.c.l.b16 %v8995
    %v9178 = vunpack.c.h.b16 %v8995
    %v9179 = vunpack.c.l.b16 %v8996
    %v9180 = vunpack.c.h.b16 %v8996
    %v9181 = vunpack.c.l.b16 %v8997
    %v9182 = vunpack.c.h.b16 %v8997
    %v9183 = vunpack.c.l.b16 %v8998
    %v9184 = vunpack.c.h.b16 %v8998
    %v9185 = vunpack.c.l.b16 %v8999
    %v9186 = vunpack.c.h.b16 %v8999
    %v9187 = vunpack.c.l.b16 %v9000
    %v9188 = vunpack.c.h.b16 %v9000
    %v9189 = vunpack.c.l.b16 %v9001
    %v9190 = vunpack.c.h.b16 %v9001
    %v9191 = vunpack.c.l.b16 %v9002
    %v9192 = vunpack.c.h.b16 %v9002
    %v9193 = vunpack.c.l.b16 %v9003
    %v9194 = vunpack.c.h.b16 %v9003
    %v9195 = vunpack.c.l.b16 %v9004
    %v9196 = vunpack.c.h.b16 %v9004
    %v9197 = vpack.c.b16 %v9073, %v9069
    %v9198 = vpack.c.b16 %v9074, %v9070
    %v9199 = vpack.c.b16 %v9075, %v9071
    %v9200 = vpack.c.b16 %v9076, %v9072
    %v9201 = vpack.c.b16 %v9081, %v9077
    %v9202 = vpack.c.b16 %v9082, %v9078
    %v9203 = vpack.c.b16 %v9083, %v9079
    %v9204 = vpack.c.b16 %v9084, %v9080
    %v9205 = vpack.c.b16 %v9089, %v9085
    %v9206 = vpack.c.b16 %v9090, %v9086
    %v9207 = vpack.c.b16 %v9091, %v9087
    %v9208 = vpack.c.b16 %v9092, %v9088
    %v9209 = vpack.c.b16 %v9097, %v9093
    %v9210 = vpack.c.b16 %v9098, %v9094
    %v9211 = vpack.c.b16 %v9099, %v9095
    %v9212 = vpack.c.b16 %v9100, %v9096
    %v9213 = vpack.c.b16 %v9105, %v9101
    %v9214 = vpack.c.b16 %v9106, %v9102
    %v9215 = vpack.c.b16 %v9107, %v9103
    %v9216 = vpack.c.b16 %v9108, %v9104
    %v9217 = vpack.c.b16 %v9113, %v9109
    %v9218 = vpack.c.b16 %v9114, %v9110
    %v9219 = vpack.c.b16 %v9115, %v9111
    %v9220 = vpack.c.b16 %v9116, %v9112
    %v9221 = vpack.c.b16 %v9121, %v9117
    %v9222 = vpack.c.b16 %v9122, %v9118
    %v9223 = vpack.c.b16 %v9123, %v9119
    %v9224 = vpack.c.b16 %v9124, %v9120
    %v9225 = vpack.c.b16 %v9129, %v9125
    %v9226 = vpack.c.b16 %v9130, %v9126
    %v9227 = vpack.c.b16 %v9131, %v9127
    %v9228 = vpack.c.b16 %v9132, %v9128
    %v9229 = vpack.c.b16 %v9137, %v9133
    %v9230 = vpack.c.b16 %v9138, %v9134
    %v9231 = vpack.c.b16 %v9139, %v9135
    %v9232 = vpack.c.b16 %v9140, %v9136
    %v9233 = vpack.c.b16 %v9145, %v9141
    %v9234 = vpack.c.b16 %v9146, %v9142
    %v9235 = vpack.c.b16 %v9147, %v9143
    %v9236 = vpack.c.b16 %v9148, %v9144
    %v9237 = vpack.c.b16 %v9153, %v9149
    %v9238 = vpack.c.b16 %v9154, %v9150
    %v9239 = vpack.c.b16 %v9155, %v9151
    %v9240 = vpack.c.b16 %v9156, %v9152
    %v9241 = vpack.c.b16 %v9161, %v9157
    %v9242 = vpack.c.b16 %v9162, %v9158
    %v9243 = vpack.c.b16 %v9163, %v9159
    %v9244 = vpack.c.b16 %v9164, %v9160
    %v9245 = vpack.c.b16 %v9169, %v9165
    %v9246 = vpack.c.b16 %v9170, %v9166
    %v9247 = vpack.c.b16 %v9171, %v9167
    %v9248 = vpack.c.b16 %v9172, %v9168
    %v9249 = vpack.c.b16 %v9177, %v9173
    %v9250 = vpack.c.b16 %v9178, %v9174
    %v9251 = vpack.c.b16 %v9179, %v9175
    %v9252 = vpack.c.b16 %v9180, %v9176
    %v9253 = vpack.c.b16 %v9185, %v9181
    %v9254 = vpack.c.b16 %v9186, %v9182
    %v9255 = vpack.c.b16 %v9187, %v9183
    %v9256 = vpack.c.b16 %v9188, %v9184
    %v9257 = vpack.c.b16 %v9193, %v9189
    %v9258 = vpack.c.b16 %v9194, %v9190
    %v9259 = vpack.c.b16 %v9195, %v9191
    %v9260 = vpack.c.b16 %v9196, %v9192
    %9325 = vmatpush.bf16.msra.mxu0 %v9225
    %9326 = vmatpush.bf16.msra.mxu0 %v9221
    %9327 = vmatpush.bf16.msra.mxu0 %v9217
    %9328 = vmatpush.bf16.msra.mxu0 %v9213
    %9329 = vmatpush.bf16.msra.mxu0 %v9209
    %9330 = vmatpush.bf16.msra.mxu0 %v9205
    %9331 = vmatpush.bf16.msra.mxu0 %v9201
    %9332 = vmatpush.bf16.msra.mxu0 %v9197
    %9333 = vmatmul.bf16.gmra.mxu0 %v8938
    %v9334 = vpop.f32.mrf.mxu0
    %v9335 = vadd.f32 0.0, %v9334
    %v9336 = vpop.f32.mrf.mxu0
    %9337 = vdwg.mxu0
    %9338 = vmatpush.bf16.msra.mxu0 %v9257
    %9339 = vmatpush.bf16.msra.mxu0 %v9253
    %9340 = vmatpush.bf16.msra.mxu0 %v9249
    %9341 = vmatpush.bf16.msra.mxu0 %v9245
    %9342 = vmatpush.bf16.msra.mxu0 %v9241
    %9343 = vmatpush.bf16.msra.mxu0 %v9237
    %9344 = vmatpush.bf16.msra.mxu0 %v9233
    %9345 = vmatpush.bf16.msra.mxu0 %v9229
    %9346 = vmatmul.bf16.gmra.mxu0 %v8939
    %v9347 = vpop.f32.mrf.mxu0
    %v9348 = vadd.f32 %v9335, %v9347
    %v9349 = vpop.f32.mrf.mxu0
    %9350 = vdwg.mxu0
    %9351 = vmatpush.bf16.msra.mxu0 %v9226
    %9352 = vmatpush.bf16.msra.mxu0 %v9222
    %9353 = vmatpush.bf16.msra.mxu0 %v9218
    %9354 = vmatpush.bf16.msra.mxu0 %v9214
    %9355 = vmatpush.bf16.msra.mxu0 %v9210
    %9356 = vmatpush.bf16.msra.mxu0 %v9206
    %9357 = vmatpush.bf16.msra.mxu0 %v9202
    %9358 = vmatpush.bf16.msra.mxu0 %v9198
    %9359 = vmatmul.bf16.gmra.mxu0 %v8938
    %v9360 = vpop.f32.mrf.mxu0
    %v9361 = vadd.f32 0.0, %v9360
    %v9362 = vpop.f32.mrf.mxu0
    %9363 = vdwg.mxu0
    %9364 = vmatpush.bf16.msra.mxu0 %v9258
    %9365 = vmatpush.bf16.msra.mxu0 %v9254
    %9366 = vmatpush.bf16.msra.mxu0 %v9250
    %9367 = vmatpush.bf16.msra.mxu0 %v9246
    %9368 = vmatpush.bf16.msra.mxu0 %v9242
    %9369 = vmatpush.bf16.msra.mxu0 %v9238
    %9370 = vmatpush.bf16.msra.mxu0 %v9234
    %9371 = vmatpush.bf16.msra.mxu0 %v9230
    %9372 = vmatmul.bf16.gmra.mxu0 %v8939
    %v9373 = vpop.f32.mrf.mxu0
    %v9374 = vadd.f32 %v9361, %v9373
    %v9375 = vpop.f32.mrf.mxu0
    %9376 = vdwg.mxu0
    %9377 = vmatpush.bf16.msra.mxu0 %v9227
    %9378 = vmatpush.bf16.msra.mxu0 %v9223
    %9379 = vmatpush.bf16.msra.mxu0 %v9219
    %9380 = vmatpush.bf16.msra.mxu0 %v9215
    %9381 = vmatpush.bf16.msra.mxu0 %v9211
    %9382 = vmatpush.bf16.msra.mxu0 %v9207
    %9383 = vmatpush.bf16.msra.mxu0 %v9203
    %9384 = vmatpush.bf16.msra.mxu0 %v9199
    %9385 = vmatmul.bf16.gmra.mxu0 %v8938
    %v9386 = vpop.f32.mrf.mxu0
    %v9387 = vadd.f32 0.0, %v9386
    %v9388 = vpop.f32.mrf.mxu0
    %9389 = vdwg.mxu0
    %9390 = vmatpush.bf16.msra.mxu0 %v9259
    %9391 = vmatpush.bf16.msra.mxu0 %v9255
    %9392 = vmatpush.bf16.msra.mxu0 %v9251
    %9393 = vmatpush.bf16.msra.mxu0 %v9247
    %9394 = vmatpush.bf16.msra.mxu0 %v9243
    %9395 = vmatpush.bf16.msra.mxu0 %v9239
    %9396 = vmatpush.bf16.msra.mxu0 %v9235
    %9397 = vmatpush.bf16.msra.mxu0 %v9231
    %9398 = vmatmul.bf16.gmra.mxu0 %v8939
    %v9399 = vpop.f32.mrf.mxu0
    %v9400 = vadd.f32 %v9387, %v9399
    %v9401 = vpop.f32.mrf.mxu0
    %9402 = vdwg.mxu0
    %9403 = vmatpush.bf16.msra.mxu0 %v9228
    %9404 = vmatpush.bf16.msra.mxu0 %v9224
    %9405 = vmatpush.bf16.msra.mxu0 %v9220
    %9406 = vmatpush.bf16.msra.mxu0 %v9216
    %9407 = vmatpush.bf16.msra.mxu0 %v9212
    %9408 = vmatpush.bf16.msra.mxu0 %v9208
    %9409 = vmatpush.bf16.msra.mxu0 %v9204
    %9410 = vmatpush.bf16.msra.mxu0 %v9200
    %9411 = vmatmul.bf16.gmra.mxu0 %v8938
    %v9412 = vpop.f32.mrf.mxu0
    %v9413 = vadd.f32 0.0, %v9412
    %v9414 = vpop.f32.mrf.mxu0
    %9415 = vdwg.mxu0
    %9416 = vmatpush.bf16.msra.mxu0 %v9260
    %9417 = vmatpush.bf16.msra.mxu0 %v9256
    %9418 = vmatpush.bf16.msra.mxu0 %v9252
    %9419 = vmatpush.bf16.msra.mxu0 %v9248
    %9420 = vmatpush.bf16.msra.mxu0 %v9244
    %9421 = vmatpush.bf16.msra.mxu0 %v9240
    %9422 = vmatpush.bf16.msra.mxu0 %v9236
    %9423 = vmatpush.bf16.msra.mxu0 %v9232
    %9424 = vmatmul.bf16.gmra.mxu0 %v8939
    %v9425 = vpop.f32.mrf.mxu0
    %v9426 = vadd.f32 %v9413, %v9425
    %v9427 = vpop.f32.mrf.mxu0
    %9428 = vdwg.mxu0
    %v9429 = vadd.f32 %v8903, %v9348
    %v9430 = vadd.f32 %v8904, %v9374
    %v9431 = vadd.f32 %v8905, %v9400
    %v9432 = vadd.f32 %v8906, %v9426
    %vm9433 = vcmask 1041408
    %v9434 = vsel %vm9433, %v9429, 0.0
    %v9435 = vrot.slane %v9434, 4
    %v9436 = vadd.f32 %v9434, %v9435
    %v9437 = vrot.slane %v9436, 2
    %v9438 = vadd.f32 %v9436, %v9437
    %v9439 = vrot.slane %v9438, 1
    %v9440 = vadd.f32 %v9438, %v9439
    %v9441 = vsel %vm9433, %v9430, 0.0
    %v9442 = vrot.slane %v9441, 4
    %v9443 = vadd.f32 %v9441, %v9442
    %v9444 = vrot.slane %v9443, 2
    %v9445 = vadd.f32 %v9443, %v9444
    %v9446 = vrot.slane %v9445, 1
    %v9447 = vadd.f32 %v9445, %v9446
    %v9448 = vsel %vm9433, %v9431, 0.0
    %v9449 = vrot.slane %v9448, 4
    %v9450 = vadd.f32 %v9448, %v9449
    %v9451 = vrot.slane %v9450, 2
    %v9452 = vadd.f32 %v9450, %v9451
    %v9453 = vrot.slane %v9452, 1
    %v9454 = vadd.f32 %v9452, %v9453
    %v9455 = vsel %vm9433, %v9432, 0.0
    %v9456 = vrot.slane %v9455, 4
    %v9457 = vadd.f32 %v9455, %v9456
    %v9458 = vrot.slane %v9457, 2
    %v9459 = vadd.f32 %v9457, %v9458
    %v9460 = vrot.slane %v9459, 1
    %v9461 = vadd.f32 %v9459, %v9460
    %v9462 = vrcp.pop 2.0
    %v9463 = vmul.f32 2.0, %v9462
    %v9464 = vsub.f32 1.0, %v9463
    %v9465 = vmul.f32 %v9462, %v9464
    %v9466 = vadd.f32 %v9462, %v9465
    %vm9467 = vweird.f32 %v9462
    %v9468 = vsel %vm9467, %v9462, %v9466
    %v9469 = vmul.f32 %v9440, %v9468
    %v9470 = vmul.f32 %v9447, %v9468
    %v9471 = vmul.f32 %v9454, %v9468
    %v9472 = vmul.f32 %v9461, %v9468
    %v9473 = vsub.f32 %v9429, %v9469
    %v9474 = vsub.f32 %v9430, %v9470
    %v9475 = vsub.f32 %v9431, %v9471
    %v9476 = vsub.f32 %v9432, %v9472
    %v9477 = vmul.f32 %v9473, %v9473
    %v9478 = vmul.f32 %v9474, %v9474
    %v9479 = vmul.f32 %v9475, %v9475
    %v9480 = vmul.f32 %v9476, %v9476
    %v9481 = vsel %vm9433, %v9477, 0.0
    %v9482 = vrot.slane %v9481, 4
    %v9483 = vadd.f32 %v9481, %v9482
    %v9484 = vrot.slane %v9483, 2
    %v9485 = vadd.f32 %v9483, %v9484
    %v9486 = vrot.slane %v9485, 1
    %v9487 = vadd.f32 %v9485, %v9486
    %v9488 = vsel %vm9433, %v9478, 0.0
    %v9489 = vrot.slane %v9488, 4
    %v9490 = vadd.f32 %v9488, %v9489
    %v9491 = vrot.slane %v9490, 2
    %v9492 = vadd.f32 %v9490, %v9491
    %v9493 = vrot.slane %v9492, 1
    %v9494 = vadd.f32 %v9492, %v9493
    %v9495 = vsel %vm9433, %v9479, 0.0
    %v9496 = vrot.slane %v9495, 4
    %v9497 = vadd.f32 %v9495, %v9496
    %v9498 = vrot.slane %v9497, 2
    %v9499 = vadd.f32 %v9497, %v9498
    %v9500 = vrot.slane %v9499, 1
    %v9501 = vadd.f32 %v9499, %v9500
    %v9502 = vsel %vm9433, %v9480, 0.0
    %v9503 = vrot.slane %v9502, 4
    %v9504 = vadd.f32 %v9502, %v9503
    %v9505 = vrot.slane %v9504, 2
    %v9506 = vadd.f32 %v9504, %v9505
    %v9507 = vrot.slane %v9506, 1
    %v9508 = vadd.f32 %v9506, %v9507
    %v9509 = vmul.f32 %v9487, %v9468
    %v9510 = vmul.f32 %v9494, %v9468
    %v9511 = vmul.f32 %v9501, %v9468
    %v9512 = vmul.f32 %v9508, %v9468
    %v9513 = vadd.f32 %v9509, 1e-05
    %v9514 = vadd.f32 %v9510, 1e-05
    %v9515 = vadd.f32 %v9511, 1e-05
    %v9516 = vadd.f32 %v9512, 1e-05
    %v9517 = vrsqrt.pop %v9513
    %v9518 = vmul.f32 %v9517, %v9513
    %v9519 = vmul.f32 %v9518, %v9517
    %v9520 = vmul.f32 0.5, %v9519
    %v9521 = vsub.f32 1.5, %v9520
    %v9522 = vmul.f32 %v9517, %v9521
    %vm9523 = vweird.f32 %v9513
    %vm9524 = vweird.f32 %v9517
    %vm9525 = vmor %vm9523, %vm9524
    %v9526 = vsel %vm9525, %v9517, %v9522
    %v9527 = vrsqrt.pop %v9514
    %v9528 = vmul.f32 %v9527, %v9514
    %v9529 = vmul.f32 %v9528, %v9527
    %v9530 = vmul.f32 0.5, %v9529
    %v9531 = vsub.f32 1.5, %v9530
    %v9532 = vmul.f32 %v9527, %v9531
    %vm9533 = vweird.f32 %v9514
    %vm9534 = vweird.f32 %v9527
    %vm9535 = vmor %vm9533, %vm9534
    %v9536 = vsel %vm9535, %v9527, %v9532
    %v9537 = vrsqrt.pop %v9515
    %v9538 = vmul.f32 %v9537, %v9515
    %v9539 = vmul.f32 %v9538, %v9537
    %v9540 = vmul.f32 0.5, %v9539
    %v9541 = vsub.f32 1.5, %v9540
    %v9542 = vmul.f32 %v9537, %v9541
    %vm9543 = vweird.f32 %v9515
    %vm9544 = vweird.f32 %v9537
    %vm9545 = vmor %vm9543, %vm9544
    %v9546 = vsel %vm9545, %v9537, %v9542
    %v9547 = vrsqrt.pop %v9516
    %v9548 = vmul.f32 %v9547, %v9516
    %v9549 = vmul.f32 %v9548, %v9547
    %v9550 = vmul.f32 0.5, %v9549
    %v9551 = vsub.f32 1.5, %v9550
    %v9552 = vmul.f32 %v9547, %v9551
    %vm9553 = vweird.f32 %v9516
    %vm9554 = vweird.f32 %v9547
    %vm9555 = vmor %vm9553, %vm9554
    %v9556 = vsel %vm9555, %v9547, %v9552
    %v9557 = vmul.f32 %v9473, %v9526
    %v9558 = vmul.f32 %v9474, %v9536
    %v9559 = vmul.f32 %v9475, %v9546
    %v9560 = vmul.f32 %v9476, %v9556
    %v9561 = vld [vmem:[#allocation19] sm:$0xf]
    %v9563 = vperm.slane %v9561, 0
    %v9564 = vperm.slane %v9561, 1
    %v9565 = vperm.slane %v9561, 2
    %v9566 = vperm.slane %v9561, 3
    %v9571 = vmul.f32 %v9557, %v9563
    %v9572 = vmul.f32 %v9558, %v9564
    %v9573 = vmul.f32 %v9559, %v9565
    %v9574 = vmul.f32 %v9560, %v9566
    %s9575 = scalar_lea.vmem [#allocation19], 4
    %v9576 = vld [vmem:[%s9575] sm:$0xf]
    %v9578 = vperm.slane %v9576, 0
    %v9579 = vperm.slane %v9576, 1
    %v9580 = vperm.slane %v9576, 2
    %v9581 = vperm.slane %v9576, 3
    %v9586 = vadd.f32 %v9571, %v9578
    %v9587 = vadd.f32 %v9572, %v9579
    %v9588 = vadd.f32 %v9573, %v9580
    %v9589 = vadd.f32 %v9574, %v9581
    %v9590 = vmul.f32 %v9586, 0.01
    %v9591 = vmul.f32 %v9587, 0.01
    %v9592 = vmul.f32 %v9588, 0.01
    %v9593 = vmul.f32 %v9589, 0.01
    %v9594 = vmax.f32 %v9586, %v9590
    %v9595 = vmax.f32 %v9587, %v9591
    %v9596 = vmax.f32 %v9588, %v9592
    %v9597 = vmax.f32 %v9589, %v9593
    %v9598 = vpack.c.bf16 %v9594, %v9594
    %v9599 = vpack.c.bf16 %v9595, %v9595
    %v9600 = vpack.c.bf16 %v9596, %v9596
    %v9601 = vpack.c.bf16 %v9597, %v9597
    %v9602 = vld [vmem:[#allocation21] sm:$0x1]
    %vm9603 = vcmask 15360
    %v9605 = vsel %vm9603, %v9602, 0
    %vm9607 = vcmask 1040384
    %v9609 = vsel %vm9607, %v9598, 0
    %v9612 = vsel %vm9607, %v9599, 0
    %v9615 = vsel %vm9607, %v9600, 0
    %v9618 = vsel %vm9607, %v9601, 0
    %9620 = vmatpush.bf16.msra.mxu0 0
    %9621 = vmatpush.bf16.msra.mxu0 0
    %9622 = vmatpush.bf16.msra.mxu0 0
    %9623 = vmatpush.bf16.msra.mxu0 0
    %9624 = vmatpush.bf16.msra.mxu0 0
    %9625 = vmatpush.bf16.msra.mxu0 0
    %9626 = vmatpush.bf16.msra.mxu0 0
    %9627 = vmatpush.bf16.msra.mxu0 %v9609
    %9628 = vmatmul.bf16.gmra.mxu0 %v9605
    %v9629 = vpop.f32.mrf.mxu0
    %v9630 = vadd.f32 0.0, %v9629
    %v9631 = vpop.f32.mrf.mxu0
    %9632 = vdwg.mxu0
    %9633 = vmatpush.bf16.msra.mxu0 0
    %9634 = vmatpush.bf16.msra.mxu0 0
    %9635 = vmatpush.bf16.msra.mxu0 0
    %9636 = vmatpush.bf16.msra.mxu0 0
    %9637 = vmatpush.bf16.msra.mxu0 0
    %9638 = vmatpush.bf16.msra.mxu0 0
    %9639 = vmatpush.bf16.msra.mxu0 0
    %9640 = vmatpush.bf16.msra.mxu0 %v9612
    %9641 = vmatmul.bf16.gmra.mxu0 %v9605
    %v9642 = vpop.f32.mrf.mxu0
    %v9643 = vadd.f32 0.0, %v9642
    %v9644 = vpop.f32.mrf.mxu0
    %9645 = vdwg.mxu0
    %9646 = vmatpush.bf16.msra.mxu0 0
    %9647 = vmatpush.bf16.msra.mxu0 0
    %9648 = vmatpush.bf16.msra.mxu0 0
    %9649 = vmatpush.bf16.msra.mxu0 0
    %9650 = vmatpush.bf16.msra.mxu0 0
    %9651 = vmatpush.bf16.msra.mxu0 0
    %9652 = vmatpush.bf16.msra.mxu0 0
    %9653 = vmatpush.bf16.msra.mxu0 %v9615
    %9654 = vmatmul.bf16.gmra.mxu0 %v9605
    %v9655 = vpop.f32.mrf.mxu0
    %v9656 = vadd.f32 0.0, %v9655
    %v9657 = vpop.f32.mrf.mxu0
    %9658 = vdwg.mxu0
    %9659 = vmatpush.bf16.msra.mxu0 0
    %9660 = vmatpush.bf16.msra.mxu0 0
    %9661 = vmatpush.bf16.msra.mxu0 0
    %9662 = vmatpush.bf16.msra.mxu0 0
    %9663 = vmatpush.bf16.msra.mxu0 0
    %9664 = vmatpush.bf16.msra.mxu0 0
    %9665 = vmatpush.bf16.msra.mxu0 0
    %9666 = vmatpush.bf16.msra.mxu0 %v9618
    %9667 = vmatmul.bf16.gmra.mxu0 %v9605
    %v9668 = vpop.f32.mrf.mxu0
    %v9669 = vadd.f32 0.0, %v9668
    %v9670 = vpop.f32.mrf.mxu0
    %9671 = vdwg.mxu0
    %v9672 = vpack.c.bf16 %v9630, %v9630
    %v9673 = vpack.c.bf16 %v9643, %v9643
    %v9674 = vpack.c.bf16 %v9656, %v9656
    %v9675 = vpack.c.bf16 %v9669, %v9669
    %v9676 = vld [vmem:[#allocation22] sm:$0xf]
    %v9677 = vld [vmem:[#allocation22 + $0x4] sm:$0xf]
    %v9678 = vld [vmem:[#allocation22 + $0x8] sm:$0xf]
    %v9679 = vld [vmem:[#allocation22 + $0xc] sm:$0xf]
    %v9680 = vld [vmem:[#allocation22 + $0x10] sm:$0xf]
    %v9681 = vld [vmem:[#allocation22 + $0x14] sm:$0xf]
    %v9682 = vld [vmem:[#allocation22 + $0x18] sm:$0xf]
    %v9683 = vld [vmem:[#allocation22 + $0x1c] sm:$0xf]
    %v9684 = vld [vmem:[#allocation22 + $0x20] sm:$0xf]
    %v9685 = vld [vmem:[#allocation22 + $0x24] sm:$0xf]
    %v9686 = vld [vmem:[#allocation22 + $0x28] sm:$0xf]
    %v9687 = vld [vmem:[#allocation22 + $0x2c] sm:$0xf]
    %v9688 = vld [vmem:[#allocation22 + $0x30] sm:$0xf]
    %v9689 = vld [vmem:[#allocation22 + $0x34] sm:$0xf]
    %v9690 = vld [vmem:[#allocation22 + $0x38] sm:$0xf]
    %v9691 = vld [vmem:[#allocation22 + $0x3c] sm:$0xf]
    %v9692 = vld [vmem:[#allocation22 + $0x40] sm:$0xf]
    %v9693 = vld [vmem:[#allocation22 + $0x44] sm:$0xf]
    %v9694 = vld [vmem:[#allocation22 + $0x48] sm:$0xf]
    %v9695 = vld [vmem:[#allocation22 + $0x4c] sm:$0xf]
    %v9696 = vld [vmem:[#allocation22 + $0x50] sm:$0xf]
    %v9697 = vld [vmem:[#allocation22 + $0x54] sm:$0xf]
    %v9698 = vld [vmem:[#allocation22 + $0x58] sm:$0xf]
    %v9699 = vld [vmem:[#allocation22 + $0x5c] sm:$0xf]
    %v9700 = vld [vmem:[#allocation22 + $0x60] sm:$0xf]
    %v9701 = vld [vmem:[#allocation22 + $0x64] sm:$0xf]
    %v9702 = vld [vmem:[#allocation22 + $0x68] sm:$0xf]
    %v9703 = vld [vmem:[#allocation22 + $0x6c] sm:$0xf]
    %v9704 = vld [vmem:[#allocation22 + $0x70] sm:$0xf]
    %v9705 = vld [vmem:[#allocation22 + $0x74] sm:$0xf]
    %v9706 = vld [vmem:[#allocation22 + $0x78] sm:$0xf]
    %v9707 = vld [vmem:[#allocation22 + $0x7c] sm:$0xf]
    %v9708 = vld [vmem:[#allocation22 + $0x80] sm:$0xf]
    %v9709 = vld [vmem:[#allocation22 + $0x84] sm:$0xf]
    %v9710 = vld [vmem:[#allocation22 + $0x88] sm:$0xf]
    %v9711 = vld [vmem:[#allocation22 + $0x8c] sm:$0xf]
    %v9712 = vld [vmem:[#allocation22 + $0x90] sm:$0xf]
    %v9713 = vld [vmem:[#allocation22 + $0x94] sm:$0xf]
    %v9714 = vld [vmem:[#allocation22 + $0x98] sm:$0xf]
    %v9715 = vld [vmem:[#allocation22 + $0x9c] sm:$0xf]
    %v9716 = vld [vmem:[#allocation22 + $0xa0] sm:$0xf]
    %v9717 = vld [vmem:[#allocation22 + $0xa4] sm:$0xf]
    %v9718 = vld [vmem:[#allocation22 + $0xa8] sm:$0xf]
    %v9719 = vld [vmem:[#allocation22 + $0xac] sm:$0xf]
    %v9720 = vld [vmem:[#allocation22 + $0xb0] sm:$0xf]
    %v9721 = vld [vmem:[#allocation22 + $0xb4] sm:$0xf]
    %v9722 = vld [vmem:[#allocation22 + $0xb8] sm:$0xf]
    %v9723 = vld [vmem:[#allocation22 + $0xbc] sm:$0xf]
    %v9724 = vld [vmem:[#allocation22 + $0xc0] sm:$0xf]
    %v9725 = vld [vmem:[#allocation22 + $0xc4] sm:$0xf]
    %v9726 = vld [vmem:[#allocation22 + $0xc8] sm:$0xf]
    %v9727 = vld [vmem:[#allocation22 + $0xcc] sm:$0xf]
    %v9728 = vld [vmem:[#allocation22 + $0xd0] sm:$0xf]
    %v9729 = vld [vmem:[#allocation22 + $0xd4] sm:$0xf]
    %v9730 = vld [vmem:[#allocation22 + $0xd8] sm:$0xf]
    %v9731 = vld [vmem:[#allocation22 + $0xdc] sm:$0xf]
    %v9732 = vld [vmem:[#allocation22 + $0xe0] sm:$0xf]
    %v9733 = vld [vmem:[#allocation22 + $0xe4] sm:$0xf]
    %v9734 = vld [vmem:[#allocation22 + $0xe8] sm:$0xf]
    %v9735 = vld [vmem:[#allocation22 + $0xec] sm:$0xf]
    %v9736 = vld [vmem:[#allocation22 + $0xf0] sm:$0xf]
    %v9737 = vld [vmem:[#allocation22 + $0xf4] sm:$0xf]
    %v9738 = vld [vmem:[#allocation22 + $0xf8] sm:$0xf]
    %v9739 = vld [vmem:[#allocation22 + $0xfc] sm:$0xf]
    %v9804 = vunpack.c.l.b16 %v9676
    %v9805 = vunpack.c.l.b16 %v9677
    %v9806 = vunpack.c.l.b16 %v9678
    %v9807 = vunpack.c.l.b16 %v9679
    %v9808 = vunpack.c.l.b16 %v9680
    %v9809 = vunpack.c.l.b16 %v9681
    %v9810 = vunpack.c.l.b16 %v9682
    %v9811 = vunpack.c.l.b16 %v9683
    %v9812 = vunpack.c.l.b16 %v9684
    %v9813 = vunpack.c.l.b16 %v9685
    %v9814 = vunpack.c.l.b16 %v9686
    %v9815 = vunpack.c.l.b16 %v9687
    %v9816 = vunpack.c.l.b16 %v9688
    %v9817 = vunpack.c.l.b16 %v9689
    %v9818 = vunpack.c.l.b16 %v9690
    %v9819 = vunpack.c.l.b16 %v9691
    %v9820 = vunpack.c.l.b16 %v9692
    %v9821 = vunpack.c.l.b16 %v9693
    %v9822 = vunpack.c.l.b16 %v9694
    %v9823 = vunpack.c.l.b16 %v9695
    %v9824 = vunpack.c.l.b16 %v9696
    %v9825 = vunpack.c.l.b16 %v9697
    %v9826 = vunpack.c.l.b16 %v9698
    %v9827 = vunpack.c.l.b16 %v9699
    %v9828 = vunpack.c.l.b16 %v9700
    %v9829 = vunpack.c.l.b16 %v9701
    %v9830 = vunpack.c.l.b16 %v9702
    %v9831 = vunpack.c.l.b16 %v9703
    %v9832 = vunpack.c.l.b16 %v9704
    %v9833 = vunpack.c.l.b16 %v9705
    %v9834 = vunpack.c.l.b16 %v9706
    %v9835 = vunpack.c.l.b16 %v9707
    %v9836 = vunpack.c.l.b16 %v9708
    %v9837 = vunpack.c.l.b16 %v9709
    %v9838 = vunpack.c.l.b16 %v9710
    %v9839 = vunpack.c.l.b16 %v9711
    %v9840 = vunpack.c.l.b16 %v9712
    %v9841 = vunpack.c.l.b16 %v9713
    %v9842 = vunpack.c.l.b16 %v9714
    %v9843 = vunpack.c.l.b16 %v9715
    %v9844 = vunpack.c.l.b16 %v9716
    %v9845 = vunpack.c.l.b16 %v9717
    %v9846 = vunpack.c.l.b16 %v9718
    %v9847 = vunpack.c.l.b16 %v9719
    %v9848 = vunpack.c.l.b16 %v9720
    %v9849 = vunpack.c.l.b16 %v9721
    %v9850 = vunpack.c.l.b16 %v9722
    %v9851 = vunpack.c.l.b16 %v9723
    %v9852 = vunpack.c.l.b16 %v9724
    %v9853 = vunpack.c.l.b16 %v9725
    %v9854 = vunpack.c.l.b16 %v9726
    %v9855 = vunpack.c.l.b16 %v9727
    %v9856 = vunpack.c.l.b16 %v9728
    %v9857 = vunpack.c.l.b16 %v9729
    %v9858 = vunpack.c.l.b16 %v9730
    %v9859 = vunpack.c.l.b16 %v9731
    %v9860 = vunpack.c.l.b16 %v9732
    %v9861 = vunpack.c.l.b16 %v9733
    %v9862 = vunpack.c.l.b16 %v9734
    %v9863 = vunpack.c.l.b16 %v9735
    %v9864 = vunpack.c.l.b16 %v9736
    %v9865 = vunpack.c.l.b16 %v9737
    %v9866 = vunpack.c.l.b16 %v9738
    %v9867 = vunpack.c.l.b16 %v9739
    %v9868 = vpack.c.b16 %v9805, %v9804
    %v9869 = vpack.c.b16 %v9807, %v9806
    %v9870 = vpack.c.b16 %v9809, %v9808
    %v9871 = vpack.c.b16 %v9811, %v9810
    %v9872 = vpack.c.b16 %v9813, %v9812
    %v9873 = vpack.c.b16 %v9815, %v9814
    %v9874 = vpack.c.b16 %v9817, %v9816
    %v9875 = vpack.c.b16 %v9819, %v9818
    %v9876 = vpack.c.b16 %v9821, %v9820
    %v9877 = vpack.c.b16 %v9823, %v9822
    %v9878 = vpack.c.b16 %v9825, %v9824
    %v9879 = vpack.c.b16 %v9827, %v9826
    %v9880 = vpack.c.b16 %v9829, %v9828
    %v9881 = vpack.c.b16 %v9831, %v9830
    %v9882 = vpack.c.b16 %v9833, %v9832
    %v9883 = vpack.c.b16 %v9835, %v9834
    %v9884 = vpack.c.b16 %v9837, %v9836
    %v9885 = vpack.c.b16 %v9839, %v9838
    %v9886 = vpack.c.b16 %v9841, %v9840
    %v9887 = vpack.c.b16 %v9843, %v9842
    %v9888 = vpack.c.b16 %v9845, %v9844
    %v9889 = vpack.c.b16 %v9847, %v9846
    %v9890 = vpack.c.b16 %v9849, %v9848
    %v9891 = vpack.c.b16 %v9851, %v9850
    %v9892 = vpack.c.b16 %v9853, %v9852
    %v9893 = vpack.c.b16 %v9855, %v9854
    %v9894 = vpack.c.b16 %v9857, %v9856
    %v9895 = vpack.c.b16 %v9859, %v9858
    %v9896 = vpack.c.b16 %v9861, %v9860
    %v9897 = vpack.c.b16 %v9863, %v9862
    %v9898 = vpack.c.b16 %v9865, %v9864
    %v9899 = vpack.c.b16 %v9867, %v9866
    %9932 = vmatpush.bf16.msra.mxu0 %v9875
    %9933 = vmatpush.bf16.msra.mxu0 %v9874
    %9934 = vmatpush.bf16.msra.mxu0 %v9873
    %9935 = vmatpush.bf16.msra.mxu0 %v9872
    %9936 = vmatpush.bf16.msra.mxu0 %v9871
    %9937 = vmatpush.bf16.msra.mxu0 %v9870
    %9938 = vmatpush.bf16.msra.mxu0 %v9869
    %9939 = vmatpush.bf16.msra.mxu0 %v9868
    %9940 = vmatmul.bf16.gmra.mxu0 %v9672
    %v9941 = vpop.f32.mrf.mxu0
    %v9942 = vadd.f32 0.0, %v9941
    %v9943 = vpop.f32.mrf.mxu0
    %9944 = vdwg.mxu0
    %9945 = vmatpush.bf16.msra.mxu0 %v9883
    %9946 = vmatpush.bf16.msra.mxu0 %v9882
    %9947 = vmatpush.bf16.msra.mxu0 %v9881
    %9948 = vmatpush.bf16.msra.mxu0 %v9880
    %9949 = vmatpush.bf16.msra.mxu0 %v9879
    %9950 = vmatpush.bf16.msra.mxu0 %v9878
    %9951 = vmatpush.bf16.msra.mxu0 %v9877
    %9952 = vmatpush.bf16.msra.mxu0 %v9876
    %9953 = vmatmul.bf16.gmra.mxu0 %v9673
    %v9954 = vpop.f32.mrf.mxu0
    %v9955 = vadd.f32 %v9942, %v9954
    %v9956 = vpop.f32.mrf.mxu0
    %9957 = vdwg.mxu0
    %9958 = vmatpush.bf16.msra.mxu0 %v9891
    %9959 = vmatpush.bf16.msra.mxu0 %v9890
    %9960 = vmatpush.bf16.msra.mxu0 %v9889
    %9961 = vmatpush.bf16.msra.mxu0 %v9888
    %9962 = vmatpush.bf16.msra.mxu0 %v9887
    %9963 = vmatpush.bf16.msra.mxu0 %v9886
    %9964 = vmatpush.bf16.msra.mxu0 %v9885
    %9965 = vmatpush.bf16.msra.mxu0 %v9884
    %9966 = vmatmul.bf16.gmra.mxu0 %v9674
    %v9967 = vpop.f32.mrf.mxu0
    %v9968 = vadd.f32 %v9955, %v9967
    %v9969 = vpop.f32.mrf.mxu0
    %9970 = vdwg.mxu0
    %9971 = vmatpush.bf16.msra.mxu0 %v9899
    %9972 = vmatpush.bf16.msra.mxu0 %v9898
    %9973 = vmatpush.bf16.msra.mxu0 %v9897
    %9974 = vmatpush.bf16.msra.mxu0 %v9896
    %9975 = vmatpush.bf16.msra.mxu0 %v9895
    %9976 = vmatpush.bf16.msra.mxu0 %v9894
    %9977 = vmatpush.bf16.msra.mxu0 %v9893
    %9978 = vmatpush.bf16.msra.mxu0 %v9892
    %9979 = vmatmul.bf16.gmra.mxu0 %v9675
    %v9980 = vpop.f32.mrf.mxu0
    %v9981 = vadd.f32 %v9968, %v9980
    %v9982 = vpop.f32.mrf.mxu0
    %9983 = vdwg.mxu0
    %v9984 = vsel %vm9433, %v9981, 0.0
    %v9985 = vrot.slane %v9984, 4
    %v9986 = vadd.f32 %v9984, %v9985
    %v9987 = vrot.slane %v9986, 2
    %v9988 = vadd.f32 %v9986, %v9987
    %v9989 = vrot.slane %v9988, 1
    %v9990 = vadd.f32 %v9988, %v9989
    %v9991 = vmul.f32 %v9990, %v9468
    %v9992 = vsub.f32 %v9981, %v9991
    %v9993 = vmul.f32 %v9992, %v9992
    %v9994 = vsel %vm9433, %v9993, 0.0
    %v9995 = vrot.slane %v9994, 4
    %v9996 = vadd.f32 %v9994, %v9995
    %v9997 = vrot.slane %v9996, 2
    %v9998 = vadd.f32 %v9996, %v9997
    %v9999 = vrot.slane %v9998, 1
    %v10000 = vadd.f32 %v9998, %v9999
    %v10001 = vmul.f32 %v10000, %v9468
    %v10002 = vadd.f32 %v10001, 1e-05
    %v10003 = vrsqrt.pop %v10002
    %v10004 = vmul.f32 %v10003, %v10002
    %v10005 = vmul.f32 %v10004, %v10003
    %v10006 = vmul.f32 0.5, %v10005
    %v10007 = vsub.f32 1.5, %v10006
    %v10008 = vmul.f32 %v10003, %v10007
    %vm10009 = vweird.f32 %v10002
    %vm10010 = vweird.f32 %v10003
    %vm10011 = vmor %vm10009, %vm10010
    %v10012 = vsel %vm10011, %v10003, %v10008
    %v10013 = vmul.f32 %v9992, %v10012
    %v10014 = vld [vmem:[#allocation24] sm:$0x1]
    %v10016 = vperm.slane %v10014, 0
    %v10018 = vmul.f32 %v10013, %v10016
    %s10019 = scalar_lea.vmem [#allocation24], 1
    %v10020 = vld [vmem:[%s10019] sm:$0x1]
    %v10022 = vperm.slane %v10020, 0
    %v10024 = vadd.f32 %v10018, %v10022
    %v10025 = vxor.u32 %v10024, 2147483648
    %v10026 = vmul.f32 %v10025, 1.442695
    %v10027 = vpow.pop %v10026
    %v10028 = vadd.f32 %v10027, 1.0
    %v10029 = vrcp.pop %v10028
    %v10030 = vmul.f32 %v10028, %v10029
    %v10031 = vsub.f32 1.0, %v10030
    %v10032 = vmul.f32 %v10029, %v10031
    %v10033 = vadd.f32 %v10029, %v10032
    %vm10034 = vweird.f32 %v10028
    %vm10035 = vweird.f32 %v10029
    %vm10036 = vmor %vm10034, %vm10035
    %v10037 = vsel %vm10036, %v10029, %v10033
    %v10038 = vand.u32 2147483647, %v10028
    %vm10039 = vcmp.eq.f32.partialorder %v10038, 8.507059e+37
    %v10040 = vand.u32 %v10028, 2147483648
    %v10041 = vor.u32 1.1754944e-38, %v10040
    %v10042 = vsel %vm10039, %v10041, %v10037
    %v10043 = vmul.f32 1.0, %v10042
    %10044 = vst [vmem:[%s16] sm:$0x3] %v10043
    // Predicated region
    $region126: #{forward.1} parent=1 // pred_check
      _
    $region127: #{forward.1} parent=1 // pred_check_branch
      %10046 = sbr.rel (0) target = $region129
    $region128: #{forward.1} parent=1 // pred_region
      _
    $region129: #{forward.1} parent=1 // pred_fallthru
      _
    // Predicated region
    $region130: #{forward.1} parent=1 // pred_check
      _
    $region131: #{forward.1} parent=1 // pred_check_branch
      %10048 = sbr.rel (0) target = $region133
    $region132: #{forward.1} parent=1 // pred_region
      _
    $region133: #{forward.1} parent=1 // pred_fallthru
      _
    %10049 = vsyncpa [#allocation3], 1
    %10050 = vsyncpa [#allocation5], 1
    %10051 = vsyncpa [#allocation8], 1
    %10052 = vsyncpa [#allocation11], 1
    %10053 = vsyncpa [#allocation14], 1
    %10054 = vsyncpa [#allocation17], 1
    %10055 = vsyncpa [#allocation20], 1
    %10056 = vsyncpa [#allocation23], 1

</llo_original>
